<compile_context>
chip_gen: v6e
topology: v6e:2x2x1
jax: 0.10.0
libtpu: 0.0.40
codegen_flags: <defaults>
</compile_context>

<pallas_src>
import functools

import jax
import jax.numpy as jnp
import numpy as np
from jax.experimental import pallas as pl
from jax.experimental.pallas import tpu as pltpu


# ---------------------------------------------------------------------------
# Static index tables (built once at import time).
#
# conv1 im2col row layout (built by ONE gather in the wrapper):
#   x_cat[b, t*8 + a, ki*28 + j] = image[b, 4*a + t + ki, j]
# for t in 0..3 (conv-row mod 4), a in 0..5 (6 conv rows per parity block),
# ki in 0..4; rows t*8+6 and t*8+7 are zero padding.  Row t*8+a of the conv1
# matmul output therefore holds conv row i = 4*a + t, which turns the 2x2
# max-pool into an elementwise max of four 8-aligned 6-row blocks.
# ---------------------------------------------------------------------------
def _build_im2col_rows():
    idx = np.zeros((32, 5), np.int32)
    valid = np.zeros((32, 1), np.float32)
    for t in range(4):
        for a in range(6):
            r = t * 8 + a
            valid[r, 0] = 1.0
            for ki in range(5):
                idx[r, ki] = 4 * a + t + ki
    return idx, valid


_IM2COL_IDX, _IM2COL_VALID = _build_im2col_rows()


# ---------------------------------------------------------------------------
# Fused kernel: one batch tile of TB images per grid step.
# ---------------------------------------------------------------------------
def fused_net_kernel(x_ref, w1c_ref, b1t_ref, w2c_ref, b2t_ref, gfc_ref, bfc_ref,
                     o_ref, p1_ref):
    """Layouts (every lane group starts on a 128-lane boundary):
      x_ref   (TB, 32, 140) bf16  conv1 im2col rows (see _build_im2col_rows)
      w1c_ref (140, 256)    bf16  [ki*28 + j,          dj*128 + q*10 + oc ]
      w2c_ref (640, 256)    bf16  [ki*128 + q*10 + ic, dj*128 + q2*20 + oc2]
      gfc_ref (512, 128)    bf16  [h2*128 + q2*20 + oc2, class] (cols 10.. = 0)
      p1_ref  (TB, 16, 128) f32   pooled conv1: rows 0..5 = pooled rows
                                  0,2,..,10; rows 8..13 = 1,3,..,11;
                                  rows 6,7,14,15 never written or read.
      o_ref   (TB, 128)     f32   log-probs in lanes 0..9 (pad lanes ~ -1e9).
    """
    tb = x_ref.shape[0]
    f32 = jnp.float32
    bf16 = jnp.bfloat16

    # ---- conv1: one im2col matmul (M = TB*32, K = 140, N = 2*128) ------------
    z1 = jnp.dot(x_ref[...].reshape(tb * 32, 140), w1c_ref[...],
                 preferred_element_type=f32).reshape(tb, 32, 256)
    # z1[b, t*8+a, dj*128 + q*10 + oc] = conv1(row 4a+t, col 2q+dj, chan oc).
    # 2x2 max-pool = max over conv-row pairs (t blocks) and column parities (dj).
    even = jnp.maximum(jnp.maximum(z1[:, 0:6, 0:128], z1[:, 0:6, 128:256]),
                       jnp.maximum(z1[:, 8:14, 0:128], z1[:, 8:14, 128:256]))
    odd = jnp.maximum(jnp.maximum(z1[:, 16:22, 0:128], z1[:, 16:22, 128:256]),
                      jnp.maximum(z1[:, 24:30, 0:128], z1[:, 24:30, 128:256]))
    # Pad lanes 120..127 stay exactly 0 (zero weight columns, zero bias pad).
    p1_ref[:, 0:6, :] = jnp.maximum(even + b1t_ref[...], 0.0)    # pooled rows 0,2,..,10
    p1_ref[:, 8:14, :] = jnp.maximum(odd + b1t_ref[...], 0.0)    # pooled rows 1,3,..,11

    # ---- conv2: two im2col matmuls (even / odd conv2 rows), K = 5*128 --------
    def conv2_rows(row0):
        parts = []
        for ki in range(5):
            r = row0 + ki                                  # pooled row needed at r2 = 0
            s = (0 if r % 2 == 0 else 8) + r // 2          # p1 storage row of that block
            parts.append(p1_ref[:, s:s + 4, :])            # (TB, 4, 128), contiguous
        b_blk = jnp.concatenate(parts, axis=-1)            # (TB, 4, 640), 128-aligned
        return jnp.dot(b_blk.reshape(tb * 4, 640).astype(bf16), w2c_ref[...],
                       preferred_element_type=f32).reshape(tb, 4, 256)

    z_e = conv2_rows(0)    # conv2 rows 0,2,4,6
    z_o = conv2_rows(1)    # conv2 rows 1,3,5,7
    pooled2 = jnp.maximum(jnp.maximum(z_e[:, :, 0:128], z_e[:, :, 128:256]),
                          jnp.maximum(z_o[:, :, 0:128], z_o[:, :, 128:256]))
    p2 = jnp.maximum(pooled2 + b2t_ref[...], 0.0)          # (TB, 4, 128); lanes 80.. = 0

    # ---- fc + log_softmax (output lane-padded to 128) ------------------------
    flat = p2.reshape(tb, 512).astype(bf16)                # lane = h2*128 + q2*20 + oc2
    logits = jnp.dot(flat, gfc_ref[...], preferred_element_type=f32) + bfc_ref[...]
    m = jnp.max(logits, axis=-1, keepdims=True)            # pad lanes sit at ~-1e9
    zl = logits - m
    lse = jnp.log(jnp.sum(jnp.exp(zl), axis=-1, keepdims=True))
    o_ref[...] = zl - lse


# ---------------------------------------------------------------------------
# One-time weight re-packs (hoisted off the per-call latency path).
# ---------------------------------------------------------------------------
def _pack_w1(w1):
    """(10,1,5,5) -> (140,256): row = ki*28 + j, col = dj*128 + q*10 + oc."""
    w1 = np.asarray(w1, np.float32)
    out = np.zeros((140, 256), np.float32)
    for ki in range(5):
        for q in range(12):
            for dj in range(2):
                for kj in range(5):
                    j = 2 * q + dj + kj
                    out[ki * 28 + j,
                        dj * 128 + q * 10:dj * 128 + q * 10 + 10] = w1[:, 0, ki, kj]
    return out


def _pack_w2(w2):
    """(20,10,5,5) -> (640,256): row = ki*128 + q*10 + ic, col = dj*128 + q2*20 + oc2."""
    w2 = np.asarray(w2, np.float32)
    out = np.zeros((640, 256), np.float32)
    for ki in range(5):
        for q2 in range(4):
            for dj in range(2):
                for kj in range(5):
                    q = 2 * q2 + dj + kj
                    for ic in range(10):
                        out[ki * 128 + q * 10 + ic,
                            dj * 128 + q2 * 20:dj * 128 + q2 * 20 + 20] = w2[:, ic, ki, kj]
    return out


def _pack_fc(fc_w):
    """(10,320) [class, c*16 + h*4 + w] -> (512,128): row = h*128 + w*20 + c."""
    fc_w = np.asarray(fc_w, np.float32)
    out = np.zeros((512, 128), np.float32)
    for h in range(4):
        for w in range(4):
            for c in range(20):
                out[h * 128 + w * 20 + c, 0:10] = fc_w[:, c * 16 + h * 4 + w]
    return out


def pack_params(params):
    """Pack once; pass the result to every net_forward call."""
    w1, b1, w2, b2, fc_w, fc_b = params
    b1t = np.zeros((1, 128), np.float32)
    b1t[0, :120] = np.tile(np.asarray(b1, np.float32), 12)
    b2t = np.zeros((1, 128), np.float32)
    b2t[0, :80] = np.tile(np.asarray(b2, np.float32), 4)
    bfc = np.full((1, 128), -1e9, np.float32)   # pad classes never win max / lse
    bfc[0, :10] = np.asarray(fc_b, np.float32)
    return (jnp.asarray(_pack_w1(w1), jnp.bfloat16),
            jnp.asarray(b1t),
            jnp.asarray(_pack_w2(w2), jnp.bfloat16),
            jnp.asarray(b2t),
            jnp.asarray(_pack_fc(fc_w), jnp.bfloat16),
            jnp.asarray(bfc))


# ---------------------------------------------------------------------------
# Full forward pass.
# ---------------------------------------------------------------------------
@functools.partial(jax.jit, static_argnames=("tb",))
def net_forward(x, packed, tb=64):
    """x: (B, 1, 28, 28) float32 NCHW -> (B, 10) log-probabilities.

    tb (static): batch tile.  64 keeps >= 2 grid steps at B >= 128 so both v7x
    TensorCores get work via the "parallel" axis; on single-TC v5e/v6e raise to
    128/256 (and scale vmem_limit_bytes) to amortize per-step overhead and fill
    the MXU M dimension.
    """
    w1c, b1t, w2c, b2t, gfc, bfc = packed
    B = x.shape[0]

    # Per-call input plumbing: ONE gather builds the conv1 im2col rows.
    x0 = x.reshape(B, 28, 28)
    xc = x0[:, jnp.asarray(_IM2COL_IDX), :].reshape(B, 32, 140)
    xc = (xc * jnp.asarray(_IM2COL_VALID)).astype(jnp.bfloat16)

    Bp = -(-B // tb) * tb
    if Bp != B:
        xc = jnp.pad(xc, ((0, Bp - B), (0, 0), (0, 0)))

    out = pl.pallas_call(
        fused_net_kernel,
        out_shape=jax.ShapeDtypeStruct((Bp, 128), jnp.float32),
        grid=(Bp // tb,),
        in_specs=[
            pl.BlockSpec((tb, 32, 140), lambda i: (i, 0, 0)),
            pl.BlockSpec((140, 256), lambda i: (0, 0)),
            pl.BlockSpec((1, 128), lambda i: (0, 0)),
            pl.BlockSpec((640, 256), lambda i: (0, 0)),
            pl.BlockSpec((1, 128), lambda i: (0, 0)),
            pl.BlockSpec((512, 128), lambda i: (0, 0)),
            pl.BlockSpec((1, 128), lambda i: (0, 0)),
        ],
        out_specs=pl.BlockSpec((tb, 128), lambda i: (i, 0)),
        scratch_shapes=[pltpu.VMEM((tb, 16, 128), jnp.float32)],
        compiler_params=pltpu.CompilerParams(
            dimension_semantics=("parallel",),
            vmem_limit_bytes=32 * 1024 * 1024,
        ),
    )(xc, w1c, b1t, w2c, b2t, gfc, bfc)
    return out[:B, :10]


# ---------------------------------------------------------------------------
# Deterministic parameter init (PyTorch-style uniform(-1/sqrt(fan_in), ...)).
# ---------------------------------------------------------------------------
def init_params(key):
    k1, k2, k3, k4, k5, k6 = jax.random.split(key, 6)

    def u(k, shape, fan_in):
        b = 1.0 / np.sqrt(fan_in)
        return jax.random.uniform(k, shape, jnp.float32, -b, b)

    w1 = u(k1, (10, 1, 5, 5), 1 * 5 * 5)
    b1 = u(k2, (10,), 1 * 5 * 5)
    w2 = u(k3, (20, 10, 5, 5), 10 * 5 * 5)
    b2 = u(k4, (20,), 10 * 5 * 5)
    fc_w = u(k5, (10, 320), 320)
    fc_b = u(k6, (10,), 320)
    return (w1, b1, w2, b2, fc_w, fc_b)


# ---------------------------------------------------------------------------
# Pure-JAX reference (correctness check).
# ---------------------------------------------------------------------------
def reference_forward(x, params):
    w1, b1, w2, b2, fc_w, fc_b = params
    dn = ("NCHW", "OIHW", "NCHW")
    hi = jax.lax.Precision.HIGHEST

    y = jax.lax.conv_general_dilated(x, w1, (1, 1), "VALID",
                                     dimension_numbers=dn, precision=hi)
    y = y + b1[None, :, None, None]
    B, C, H, W = y.shape
    y = jnp.maximum(y.reshape(B, C, H // 2, 2, W // 2, 2).max(axis=(3, 5)), 0.0)

    y = jax.lax.conv_general_dilated(y, w2, (1, 1), "VALID",
                                     dimension_numbers=dn, precision=hi)
    y = y + b2[None, :, None, None]
    B, C, H, W = y.shape
    y = jnp.maximum(y.reshape(B, C, H // 2, 2, W // 2, 2).max(axis=(3, 5)), 0.0)

    logits = jnp.dot(y.reshape(B, -1), fc_w.T, precision=hi) + fc_b
    return jax.nn.log_softmax(logits, axis=-1)


if __name__ == "__main__":
    key = jax.random.PRNGKey(0)
    pkey, xkey = jax.random.split(key)
    params = init_params(pkey)
    packed = pack_params(params)           # one-time re-pack, off the call path

    # MNIST-shaped input: fc(320, 10) forces (B, 1, 28, 28).  B=128 with TB=64
    # gives two grid steps (exercises the parallel batch-tile axis / megacore).
    x = jax.random.normal(xkey, (128, 1, 28, 28), jnp.float32)

    out = jax.block_until_ready(net_forward(x, packed))
    assert out.shape == (128, 10)

    ref = jax.block_until_ready(reference_forward(x, params))
    # bf16 MXU operands (f32 accumulate): validate at 2e-2 instead of 1e-3.
    np.testing.assert_allclose(np.asarray(out), np.asarray(ref), atol=2e-2, rtol=2e-2)

    print("KERNEL_OK")
</pallas_src>

<mosaic_0001>
module attributes {stable_mosaic.version = 11 : i64} {
  func.func @fused_net_kernel(%arg0: i32, %arg1: memref<64x32x140xbf16, #tpu.memory_space<vmem>>, %arg2: memref<140x256xbf16, #tpu.memory_space<vmem>>, %arg3: memref<1x128xf32, #tpu.memory_space<vmem>>, %arg4: memref<640x256xbf16, #tpu.memory_space<vmem>>, %arg5: memref<1x128xf32, #tpu.memory_space<vmem>>, %arg6: memref<512x128xbf16, #tpu.memory_space<vmem>>, %arg7: memref<1x128xf32, #tpu.memory_space<vmem>>, %arg8: memref<64x128xf32, #tpu.memory_space<vmem>>, %arg9: memref<64x16x128xf32, #tpu.memory_space<vmem>>) attributes {dimension_semantics = [#tpu.dimension_semantics<parallel>], iteration_bounds = array<i64: 2>, scalar_prefetch = 0 : i64, scratch_operands = 1 : i64, tpu.core_type = #tpu.core_type<tc>, window_params = [{transform_indices = @transform_0, window_bounds = array<i64: 64, 32, 140>}, {pipeline_mode = #tpu.pipeline_mode<synchronous>, transform_indices = @transform_1, window_bounds = array<i64: 140, 256>}, {pipeline_mode = #tpu.pipeline_mode<synchronous>, transform_indices = @transform_2, window_bounds = array<i64: 1, 128>}, {pipeline_mode = #tpu.pipeline_mode<synchronous>, transform_indices = @transform_3, window_bounds = array<i64: 640, 256>}, {pipeline_mode = #tpu.pipeline_mode<synchronous>, transform_indices = @transform_4, window_bounds = array<i64: 1, 128>}, {pipeline_mode = #tpu.pipeline_mode<synchronous>, transform_indices = @transform_5, window_bounds = array<i64: 512, 128>}, {pipeline_mode = #tpu.pipeline_mode<synchronous>, transform_indices = @transform_6, window_bounds = array<i64: 1, 128>}, {transform_indices = @transform_7, window_bounds = array<i64: 64, 128>}]} {
    %c0 = arith.constant 0 : index
    %c0_0 = arith.constant 0 : index
    %c0_1 = arith.constant 0 : index
    %0 = vector.load %arg1[%c0, %c0_0, %c0_1] : memref<64x32x140xbf16, #tpu.memory_space<vmem>>, vector<64x32x140xbf16>
    %1 = vector.shape_cast %0 : vector<64x32x140xbf16> to vector<2048x140xbf16>
    %c0_2 = arith.constant 0 : index
    %c0_3 = arith.constant 0 : index
    %2 = vector.load %arg2[%c0_2, %c0_3] : memref<140x256xbf16, #tpu.memory_space<vmem>>, vector<140x256xbf16>
    %cst = arith.constant dense<0.000000e+00> : vector<2048x256xf32>
    %3 = tpu.matmul %1, %2, %cst {dimension_numbers = #tpu.dot_dimension_numbers<[1], [0], [0], [1], [0, 0, 1, 1], [], []>} : vector<2048x140xbf16>, vector<140x256xbf16>, vector<2048x256xf32> -> vector<2048x256xf32>
    %4 = vector.shape_cast %3 : vector<2048x256xf32> to vector<64x32x256xf32>
    %5 = vector.extract_strided_slice %4 {offsets = [0, 0, 0], sizes = [64, 6, 128], strides = [1, 1, 1]} : vector<64x32x256xf32> to vector<64x6x128xf32>
    %6 = vector.extract_strided_slice %4 {offsets = [0, 0, 128], sizes = [64, 6, 128], strides = [1, 1, 1]} : vector<64x32x256xf32> to vector<64x6x128xf32>
    %7 = arith.maximumf %5, %6 : vector<64x6x128xf32>
    %8 = vector.extract_strided_slice %4 {offsets = [0, 8, 0], sizes = [64, 6, 128], strides = [1, 1, 1]} : vector<64x32x256xf32> to vector<64x6x128xf32>
    %9 = vector.extract_strided_slice %4 {offsets = [0, 8, 128], sizes = [64, 6, 128], strides = [1, 1, 1]} : vector<64x32x256xf32> to vector<64x6x128xf32>
    %10 = arith.maximumf %8, %9 : vector<64x6x128xf32>
    %11 = arith.maximumf %7, %10 : vector<64x6x128xf32>
    %12 = vector.extract_strided_slice %4 {offsets = [0, 16, 0], sizes = [64, 6, 128], strides = [1, 1, 1]} : vector<64x32x256xf32> to vector<64x6x128xf32>
    %13 = vector.extract_strided_slice %4 {offsets = [0, 16, 128], sizes = [64, 6, 128], strides = [1, 1, 1]} : vector<64x32x256xf32> to vector<64x6x128xf32>
    %14 = arith.maximumf %12, %13 : vector<64x6x128xf32>
    %15 = vector.extract_strided_slice %4 {offsets = [0, 24, 0], sizes = [64, 6, 128], strides = [1, 1, 1]} : vector<64x32x256xf32> to vector<64x6x128xf32>
    %16 = vector.extract_strided_slice %4 {offsets = [0, 24, 128], sizes = [64, 6, 128], strides = [1, 1, 1]} : vector<64x32x256xf32> to vector<64x6x128xf32>
    %17 = arith.maximumf %15, %16 : vector<64x6x128xf32>
    %18 = arith.maximumf %14, %17 : vector<64x6x128xf32>
    %c0_4 = arith.constant 0 : index
    %c0_5 = arith.constant 0 : index
    %19 = vector.load %arg3[%c0_4, %c0_5] : memref<1x128xf32, #tpu.memory_space<vmem>>, vector<1x128xf32>
    %20 = vector.shape_cast %19 : vector<1x128xf32> to vector<1x1x128xf32>
    %21 = vector.broadcast %20 : vector<1x1x128xf32> to vector<64x6x128xf32>
    %22 = arith.addf %11, %21 : vector<64x6x128xf32>
    %cst_6 = arith.constant 0.000000e+00 : f32
    %23 = vector.broadcast %cst_6 : f32 to vector<64x6x128xf32>
    %24 = arith.maximumf %22, %23 : vector<64x6x128xf32>
    %c0_7 = arith.constant 0 : index
    %c0_8 = arith.constant 0 : index
    %c0_9 = arith.constant 0 : index
    %25 = vector.load %arg9[%c0_7, %c0_8, %c0_9] : memref<64x16x128xf32, #tpu.memory_space<vmem>>, vector<64x6x128xf32>
    tpu.vector_store %arg9[%c0_7, %c0_8, %c0_9], %24 {strides = array<i32>} : memref<64x16x128xf32, #tpu.memory_space<vmem>>, vector<64x6x128xf32>,
    %c0_10 = arith.constant 0 : index
    %c0_11 = arith.constant 0 : index
    %26 = vector.load %arg3[%c0_10, %c0_11] : memref<1x128xf32, #tpu.memory_space<vmem>>, vector<1x128xf32>
    %27 = vector.shape_cast %26 : vector<1x128xf32> to vector<1x1x128xf32>
    %28 = vector.broadcast %27 : vector<1x1x128xf32> to vector<64x6x128xf32>
    %29 = arith.addf %18, %28 : vector<64x6x128xf32>
    %cst_12 = arith.constant 0.000000e+00 : f32
    %30 = vector.broadcast %cst_12 : f32 to vector<64x6x128xf32>
    %31 = arith.maximumf %29, %30 : vector<64x6x128xf32>
    %c0_13 = arith.constant 0 : index
    %c8 = arith.constant 8 : index
    %c0_14 = arith.constant 0 : index
    %32 = vector.load %arg9[%c0_13, %c8, %c0_14] : memref<64x16x128xf32, #tpu.memory_space<vmem>>, vector<64x6x128xf32>
    tpu.vector_store %arg9[%c0_13, %c8, %c0_14], %31 {strides = array<i32>} : memref<64x16x128xf32, #tpu.memory_space<vmem>>, vector<64x6x128xf32>,
    %c0_15 = arith.constant 0 : index
    %c0_16 = arith.constant 0 : index
    %c0_17 = arith.constant 0 : index
    %33 = vector.load %arg9[%c0_15, %c0_16, %c0_17] : memref<64x16x128xf32, #tpu.memory_space<vmem>>, vector<64x4x128xf32>
    %c0_18 = arith.constant 0 : index
    %c8_19 = arith.constant 8 : index
    %c0_20 = arith.constant 0 : index
    %34 = vector.load %arg9[%c0_18, %c8_19, %c0_20] : memref<64x16x128xf32, #tpu.memory_space<vmem>>, vector<64x4x128xf32>
    %c0_21 = arith.constant 0 : index
    %c1 = arith.constant 1 : index
    %c0_22 = arith.constant 0 : index
    %35 = vector.load %arg9[%c0_21, %c1, %c0_22] : memref<64x16x128xf32, #tpu.memory_space<vmem>>, vector<64x4x128xf32>
    %c0_23 = arith.constant 0 : index
    %c9 = arith.constant 9 : index
    %c0_24 = arith.constant 0 : index
    %36 = vector.load %arg9[%c0_23, %c9, %c0_24] : memref<64x16x128xf32, #tpu.memory_space<vmem>>, vector<64x4x128xf32>
    %c0_25 = arith.constant 0 : index
    %c2 = arith.constant 2 : index
    %c0_26 = arith.constant 0 : index
    %37 = vector.load %arg9[%c0_25, %c2, %c0_26] : memref<64x16x128xf32, #tpu.memory_space<vmem>>, vector<64x4x128xf32>
    %38 = tpu.concatenate %33, %34, %35, %36, %37 in 2 : vector<64x4x128xf32>, vector<64x4x128xf32>, vector<64x4x128xf32>, vector<64x4x128xf32>, vector<64x4x128xf32> -> vector<64x4x640xf32>
    %39 = vector.shape_cast %38 : vector<64x4x640xf32> to vector<256x640xf32>
    %40 = arith.truncf %39 : vector<256x640xf32> to vector<256x640xbf16>
    %c0_27 = arith.constant 0 : index
    %c0_28 = arith.constant 0 : index
    %41 = vector.load %arg4[%c0_27, %c0_28] : memref<640x256xbf16, #tpu.memory_space<vmem>>, vector<640x256xbf16>
    %cst_29 = arith.constant dense<0.000000e+00> : vector<256x256xf32>
    %42 = tpu.matmul %40, %41, %cst_29 {dimension_numbers = #tpu.dot_dimension_numbers<[1], [0], [0], [1], [0, 0, 1, 1], [], []>} : vector<256x640xbf16>, vector<640x256xbf16>, vector<256x256xf32> -> vector<256x256xf32>
    %43 = vector.shape_cast %42 : vector<256x256xf32> to vector<64x4x256xf32>
    %c0_30 = arith.constant 0 : index
    %c8_31 = arith.constant 8 : index
    %c0_32 = arith.constant 0 : index
    %44 = vector.load %arg9[%c0_30, %c8_31, %c0_32] : memref<64x16x128xf32, #tpu.memory_space<vmem>>, vector<64x4x128xf32>
    %c0_33 = arith.constant 0 : index
    %c1_34 = arith.constant 1 : index
    %c0_35 = arith.constant 0 : index
    %45 = vector.load %arg9[%c0_33, %c1_34, %c0_35] : memref<64x16x128xf32, #tpu.memory_space<vmem>>, vector<64x4x128xf32>
    %c0_36 = arith.constant 0 : index
    %c9_37 = arith.constant 9 : index
    %c0_38 = arith.constant 0 : index
    %46 = vector.load %arg9[%c0_36, %c9_37, %c0_38] : memref<64x16x128xf32, #tpu.memory_space<vmem>>, vector<64x4x128xf32>
    %c0_39 = arith.constant 0 : index
    %c2_40 = arith.constant 2 : index
    %c0_41 = arith.constant 0 : index
    %47 = vector.load %arg9[%c0_39, %c2_40, %c0_41] : memref<64x16x128xf32, #tpu.memory_space<vmem>>, vector<64x4x128xf32>
    %c0_42 = arith.constant 0 : index
    %c10 = arith.constant 10 : index
    %c0_43 = arith.constant 0 : index
    %48 = vector.load %arg9[%c0_42, %c10, %c0_43] : memref<64x16x128xf32, #tpu.memory_space<vmem>>, vector<64x4x128xf32>
    %49 = tpu.concatenate %44, %45, %46, %47, %48 in 2 : vector<64x4x128xf32>, vector<64x4x128xf32>, vector<64x4x128xf32>, vector<64x4x128xf32>, vector<64x4x128xf32> -> vector<64x4x640xf32>
    %50 = vector.shape_cast %49 : vector<64x4x640xf32> to vector<256x640xf32>
    %51 = arith.truncf %50 : vector<256x640xf32> to vector<256x640xbf16>
    %c0_44 = arith.constant 0 : index
    %c0_45 = arith.constant 0 : index
    %52 = vector.load %arg4[%c0_44, %c0_45] : memref<640x256xbf16, #tpu.memory_space<vmem>>, vector<640x256xbf16>
    %cst_46 = arith.constant dense<0.000000e+00> : vector<256x256xf32>
    %53 = tpu.matmul %51, %52, %cst_46 {dimension_numbers = #tpu.dot_dimension_numbers<[1], [0], [0], [1], [0, 0, 1, 1], [], []>} : vector<256x640xbf16>, vector<640x256xbf16>, vector<256x256xf32> -> vector<256x256xf32>
    %54 = vector.shape_cast %53 : vector<256x256xf32> to vector<64x4x256xf32>
    %55 = vector.extract_strided_slice %43 {offsets = [0, 0, 0], sizes = [64, 4, 128], strides = [1, 1, 1]} : vector<64x4x256xf32> to vector<64x4x128xf32>
    %56 = vector.extract_strided_slice %43 {offsets = [0, 0, 128], sizes = [64, 4, 128], strides = [1, 1, 1]} : vector<64x4x256xf32> to vector<64x4x128xf32>
    %57 = arith.maximumf %55, %56 : vector<64x4x128xf32>
    %58 = vector.extract_strided_slice %54 {offsets = [0, 0, 0], sizes = [64, 4, 128], strides = [1, 1, 1]} : vector<64x4x256xf32> to vector<64x4x128xf32>
    %59 = vector.extract_strided_slice %54 {offsets = [0, 0, 128], sizes = [64, 4, 128], strides = [1, 1, 1]} : vector<64x4x256xf32> to vector<64x4x128xf32>
    %60 = arith.maximumf %58, %59 : vector<64x4x128xf32>
    %61 = arith.maximumf %57, %60 : vector<64x4x128xf32>
    %c0_47 = arith.constant 0 : index
    %c0_48 = arith.constant 0 : index
    %62 = vector.load %arg5[%c0_47, %c0_48] : memref<1x128xf32, #tpu.memory_space<vmem>>, vector<1x128xf32>
    %63 = vector.shape_cast %62 : vector<1x128xf32> to vector<1x1x128xf32>
    %64 = vector.broadcast %63 : vector<1x1x128xf32> to vector<64x4x128xf32>
    %65 = arith.addf %61, %64 : vector<64x4x128xf32>
    %cst_49 = arith.constant 0.000000e+00 : f32
    %66 = vector.broadcast %cst_49 : f32 to vector<64x4x128xf32>
    %67 = arith.maximumf %65, %66 : vector<64x4x128xf32>
    %68 = vector.shape_cast %67 : vector<64x4x128xf32> to vector<64x512xf32>
    %69 = arith.truncf %68 : vector<64x512xf32> to vector<64x512xbf16>
    %c0_50 = arith.constant 0 : index
    %c0_51 = arith.constant 0 : index
    %70 = vector.load %arg6[%c0_50, %c0_51] : memref<512x128xbf16, #tpu.memory_space<vmem>>, vector<512x128xbf16>
    %cst_52 = arith.constant dense<0.000000e+00> : vector<64x128xf32>
    %71 = tpu.matmul %69, %70, %cst_52 {dimension_numbers = #tpu.dot_dimension_numbers<[1], [0], [0], [1], [0, 0, 1, 1], [], []>} : vector<64x512xbf16>, vector<512x128xbf16>, vector<64x128xf32> -> vector<64x128xf32>
    %c0_53 = arith.constant 0 : index
    %c0_54 = arith.constant 0 : index
    %72 = vector.load %arg7[%c0_53, %c0_54] : memref<1x128xf32, #tpu.memory_space<vmem>>, vector<1x128xf32>
    %73 = vector.broadcast %72 : vector<1x128xf32> to vector<64x128xf32>
    %74 = arith.addf %71, %73 : vector<64x128xf32>
    %cst_55 = arith.constant dense<0xFF800000> : vector<64xf32>
    %75 = vector.multi_reduction <maximumf>, %74, %cst_55 [1] : vector<64x128xf32> to vector<64xf32>
    %76 = vector.shape_cast %75 : vector<64xf32> to vector<64x1xf32>
    %77 = vector.broadcast %76 : vector<64x1xf32> to vector<64x128xf32>
    %78 = arith.subf %74, %77 : vector<64x128xf32>
    %79 = math.exp %78 : vector<64x128xf32>
    %cst_56 = arith.constant dense<0.000000e+00> : vector<64xf32>
    %80 = vector.multi_reduction <add>, %79, %cst_56 [1] : vector<64x128xf32> to vector<64xf32>
    %81 = vector.shape_cast %80 : vector<64xf32> to vector<64x1xf32>
    %82 = math.log %81 : vector<64x1xf32>
    %83 = vector.broadcast %82 : vector<64x1xf32> to vector<64x128xf32>
    %84 = arith.subf %78, %83 : vector<64x128xf32>
    %c0_57 = arith.constant 0 : index
    %c0_58 = arith.constant 0 : index
    %85 = vector.load %arg8[%c0_57, %c0_58] : memref<64x128xf32, #tpu.memory_space<vmem>>, vector<64x128xf32>
    tpu.vector_store %arg8[%c0_57, %c0_58], %84 {strides = array<i32>} : memref<64x128xf32, #tpu.memory_space<vmem>>, vector<64x128xf32>,
    return
  }
  func.func @transform_0(%arg0: i32) -> (i32, i32, i32) {
    %c0_i32 = arith.constant 0 : i32
    %c0_i32_0 = arith.constant 0 : i32
    %c0_i32_1 = arith.constant 0 : i32
    return %arg0, %c0_i32, %c0_i32_0 : i32, i32, i32
  }
  func.func @transform_1(%arg0: i32) -> (i32, i32) {
    %c0_i32 = arith.constant 0 : i32
    %c0_i32_0 = arith.constant 0 : i32
    %c0_i32_1 = arith.constant 0 : i32
    return %c0_i32, %c0_i32_0 : i32, i32
  }
  func.func @transform_2(%arg0: i32) -> (i32, i32) {
    %c0_i32 = arith.constant 0 : i32
    %c0_i32_0 = arith.constant 0 : i32
    %c0_i32_1 = arith.constant 0 : i32
    return %c0_i32, %c0_i32_0 : i32, i32
  }
  func.func @transform_3(%arg0: i32) -> (i32, i32) {
    %c0_i32 = arith.constant 0 : i32
    %c0_i32_0 = arith.constant 0 : i32
    %c0_i32_1 = arith.constant 0 : i32
    return %c0_i32, %c0_i32_0 : i32, i32
  }
  func.func @transform_4(%arg0: i32) -> (i32, i32) {
    %c0_i32 = arith.constant 0 : i32
    %c0_i32_0 = arith.constant 0 : i32
    %c0_i32_1 = arith.constant 0 : i32
    return %c0_i32, %c0_i32_0 : i32, i32
  }
  func.func @transform_5(%arg0: i32) -> (i32, i32) {
    %c0_i32 = arith.constant 0 : i32
    %c0_i32_0 = arith.constant 0 : i32
    %c0_i32_1 = arith.constant 0 : i32
    return %c0_i32, %c0_i32_0 : i32, i32
  }
  func.func @transform_6(%arg0: i32) -> (i32, i32) {
    %c0_i32 = arith.constant 0 : i32
    %c0_i32_0 = arith.constant 0 : i32
    %c0_i32_1 = arith.constant 0 : i32
    return %c0_i32, %c0_i32_0 : i32, i32
  }
  func.func @transform_7(%arg0: i32) -> (i32, i32) {
    %c0_i32 = arith.constant 0 : i32
    %c0_i32_0 = arith.constant 0 : i32
    return %arg0, %c0_i32 : i32, i32
  }
}

</mosaic_0001>

<llo_original>
// kernel: net_forward.1
$region0: #{net_forward.1}
  #allocation0 [shape = 'u32[]', space=smem, size = 0x4, offset = 0x4, fixed_abs, tag = 'smem constant byte address 0x4 - core index']
  #allocation1 [shape = 'u32[144,128]{1,0:T(1,128)}', space=vmem, size = 0x12000, scoped, tag = 'internal scratch']
  #allocation2 [shape = 'f32[64,16,128]{2,1,0:T(8,128)}', space=vmem, size = 0x80000, scoped, tag = 'scratch operand']
  %s0 = inlined_call_operand.vmem [shape: bf16[128,32,140], index: 0, kind: input, shape index: {}]
  %s1 = inlined_call_operand.vmem [shape: bf16[140,256], index: 1, kind: input, shape index: {}]
  %s2 = inlined_call_operand.vmem [shape: f32[1,128], index: 2, kind: input, shape index: {}]
  %s3 = inlined_call_operand.vmem [shape: bf16[640,256], index: 3, kind: input, shape index: {}]
  %s4 = inlined_call_operand.vmem [shape: f32[1,128], index: 4, kind: input, shape index: {}]
  %s5 = inlined_call_operand.vmem [shape: bf16[512,128], index: 5, kind: input, shape index: {}]
  %s6 = inlined_call_operand.vmem [shape: f32[1,128], index: 6, kind: input, shape index: {}]
  %s7 = inlined_call_operand.vmem [shape: f32[128,128], index: 7, kind: output, shape index: {}]
  %s8 = sld [smem:[#allocation0]]
  $region61: #{net_forward.1} parent=0
    _
  %s10 = ssub.s32 1, %s8
  %s11 = scalar_select 0, %s10, %s8
  loop: start=0, step=1, limit=4
  $region2: #{net_forward.1} parent=0 // loop_pre_header
    _
  $region3: #{net_forward.1} parent=0 // loop_header
    %s13 = sphi 0, %s17
    %p14 = scmp.ge.s32.totalorder %s13, 4
    %s23 = sphi 0, %s25
    %s26 = sphi 0, %s23
    %s27 = sphi 0, %s26
    %s43 = sphi 0, %s27
    %s47 = sphi 0, %s47
    %s49 = sphi 0, %s47
    %s50 = sphi 0, %s49
    %s64 = sphi 0, %s50
    %s68 = sphi 0, %s68
    %s70 = sphi 0, %s68
    %s71 = sphi 0, %s70
    %s85 = sphi 0, %s71
    %s89 = sphi 0, %s89
    %s91 = sphi 0, %s89
    %s92 = sphi 0, %s91
    %s106 = sphi 0, %s92
    %s110 = sphi 0, %s110
    %s112 = sphi 0, %s110
    %s113 = sphi 0, %s112
    %s127 = sphi 0, %s113
    %s131 = sphi 0, %s131
    %s133 = sphi 0, %s131
    %s134 = sphi 0, %s133
    %s148 = sphi 0, %s134
    %s152 = sphi 0, %s152
    %s154 = sphi 0, %s152
    %s155 = sphi 0, %s154
    %s169 = sphi 0, %s155
    %s175 = sphi 0, %s177
    %s178 = sphi 0, %s175
    %s179 = sphi 0, %s178
    %s195 = sphi 0, %s179
  $region4: #{net_forward.1} parent=0 // loop_header_branch
    %16 = sbr.rel (%p14) target = $region8
  $region5: #{net_forward.1} parent=0 // loop_body
    %s18 = ssub.s32 %s13, 1
    %s19 = ssub.s32 %s13, 2
    %s20 = sadd.s32 %s13, 1
    %s21 = ssub.s32 %s13, %s20
    %p22 = scmp.eq.s32.totalorder %s21, 0
    %s24 = sadd.s32 %s23, 1
    %s25 = scalar_select %p22, %s23, %s24
    %p28 = pneg %p22
    %p29 = scmp.eq.s32.totalorder %s13, 1
    %p30 = por %p28, %p29
    %p31 = scmp.ne.s32.totalorder %s23, %s26
    %p32 = scmp.eq.s32.totalorder %s13, 0
    %p33 = por %p31, %p32
    %p34 = scmp.ne.s32.totalorder %s23, %s26
    %p35 = scmp.eq.s32.totalorder %s18, 1
    %p36 = por %p34, %p35
    %p37 = scmp.ne.s32.totalorder %s26, %s27
    %p38 = scmp.eq.s32.totalorder %s18, 0
    %p39 = por %p37, %p38
    %p40 = scmp.ne.s32.totalorder %s26, %s27
    %p41 = scmp.eq.s32.totalorder %s19, 1
    %p42 = por %p40, %p41
    %p44 = scmp.ne.s32.totalorder %s27, %s43
    %p45 = scmp.eq.s32.totalorder %s19, 0
    %p46 = por %p44, %p45
    %s48 = sadd.s32 %s47, 1
    %p51 = scmp.eq.s32.totalorder %s13, 1
    %p52 = scmp.ne.s32.totalorder %s47, %s49
    %p53 = scmp.eq.s32.totalorder %s13, 0
    %p54 = por %p52, %p53
    %p55 = scmp.ne.s32.totalorder %s47, %s49
    %p56 = scmp.eq.s32.totalorder %s18, 1
    %p57 = por %p55, %p56
    %p58 = scmp.ne.s32.totalorder %s49, %s50
    %p59 = scmp.eq.s32.totalorder %s18, 0
    %p60 = por %p58, %p59
    %p61 = scmp.ne.s32.totalorder %s49, %s50
    %p62 = scmp.eq.s32.totalorder %s19, 1
    %p63 = por %p61, %p62
    %p65 = scmp.ne.s32.totalorder %s50, %s64
    %p66 = scmp.eq.s32.totalorder %s19, 0
    %p67 = por %p65, %p66
    %s69 = sadd.s32 %s68, 1
    %p72 = scmp.eq.s32.totalorder %s13, 1
    %p73 = scmp.ne.s32.totalorder %s68, %s70
    %p74 = scmp.eq.s32.totalorder %s13, 0
    %p75 = por %p73, %p74
    %p76 = scmp.ne.s32.totalorder %s68, %s70
    %p77 = scmp.eq.s32.totalorder %s18, 1
    %p78 = por %p76, %p77
    %p79 = scmp.ne.s32.totalorder %s70, %s71
    %p80 = scmp.eq.s32.totalorder %s18, 0
    %p81 = por %p79, %p80
    %p82 = scmp.ne.s32.totalorder %s70, %s71
    %p83 = scmp.eq.s32.totalorder %s19, 1
    %p84 = por %p82, %p83
    %p86 = scmp.ne.s32.totalorder %s71, %s85
    %p87 = scmp.eq.s32.totalorder %s19, 0
    %p88 = por %p86, %p87
    %s90 = sadd.s32 %s89, 1
    %p93 = scmp.eq.s32.totalorder %s13, 1
    %p94 = scmp.ne.s32.totalorder %s89, %s91
    %p95 = scmp.eq.s32.totalorder %s13, 0
    %p96 = por %p94, %p95
    %p97 = scmp.ne.s32.totalorder %s89, %s91
    %p98 = scmp.eq.s32.totalorder %s18, 1
    %p99 = por %p97, %p98
    %p100 = scmp.ne.s32.totalorder %s91, %s92
    %p101 = scmp.eq.s32.totalorder %s18, 0
    %p102 = por %p100, %p101
    %p103 = scmp.ne.s32.totalorder %s91, %s92
    %p104 = scmp.eq.s32.totalorder %s19, 1
    %p105 = por %p103, %p104
    %p107 = scmp.ne.s32.totalorder %s92, %s106
    %p108 = scmp.eq.s32.totalorder %s19, 0
    %p109 = por %p107, %p108
    %s111 = sadd.s32 %s110, 1
    %p114 = scmp.eq.s32.totalorder %s13, 1
    %p115 = scmp.ne.s32.totalorder %s110, %s112
    %p116 = scmp.eq.s32.totalorder %s13, 0
    %p117 = por %p115, %p116
    %p118 = scmp.ne.s32.totalorder %s110, %s112
    %p119 = scmp.eq.s32.totalorder %s18, 1
    %p120 = por %p118, %p119
    %p121 = scmp.ne.s32.totalorder %s112, %s113
    %p122 = scmp.eq.s32.totalorder %s18, 0
    %p123 = por %p121, %p122
    %p124 = scmp.ne.s32.totalorder %s112, %s113
    %p125 = scmp.eq.s32.totalorder %s19, 1
    %p126 = por %p124, %p125
    %p128 = scmp.ne.s32.totalorder %s113, %s127
    %p129 = scmp.eq.s32.totalorder %s19, 0
    %p130 = por %p128, %p129
    %s132 = sadd.s32 %s131, 1
    %p135 = scmp.eq.s32.totalorder %s13, 1
    %p136 = scmp.ne.s32.totalorder %s131, %s133
    %p137 = scmp.eq.s32.totalorder %s13, 0
    %p138 = por %p136, %p137
    %p139 = scmp.ne.s32.totalorder %s131, %s133
    %p140 = scmp.eq.s32.totalorder %s18, 1
    %p141 = por %p139, %p140
    %p142 = scmp.ne.s32.totalorder %s133, %s134
    %p143 = scmp.eq.s32.totalorder %s18, 0
    %p144 = por %p142, %p143
    %p145 = scmp.ne.s32.totalorder %s133, %s134
    %p146 = scmp.eq.s32.totalorder %s19, 1
    %p147 = por %p145, %p146
    %p149 = scmp.ne.s32.totalorder %s134, %s148
    %p150 = scmp.eq.s32.totalorder %s19, 0
    %p151 = por %p149, %p150
    %s153 = sadd.s32 %s152, 1
    %p156 = scmp.eq.s32.totalorder %s13, 1
    %p157 = scmp.ne.s32.totalorder %s152, %s154
    %p158 = scmp.eq.s32.totalorder %s13, 0
    %p159 = por %p157, %p158
    %p160 = scmp.ne.s32.totalorder %s152, %s154
    %p161 = scmp.eq.s32.totalorder %s18, 1
    %p162 = por %p160, %p161
    %p163 = scmp.ne.s32.totalorder %s154, %s155
    %p164 = scmp.eq.s32.totalorder %s18, 0
    %p165 = por %p163, %p164
    %p166 = scmp.ne.s32.totalorder %s154, %s155
    %p167 = scmp.eq.s32.totalorder %s19, 1
    %p168 = por %p166, %p167
    %p170 = scmp.ne.s32.totalorder %s155, %s169
    %p171 = scmp.eq.s32.totalorder %s19, 0
    %p172 = por %p170, %p171
    %s173 = ssub.s32 %s13, %s20
    %p174 = scmp.eq.s32.totalorder %s173, 0
    %s176 = sadd.s32 %s175, 1
    %s177 = scalar_select %p174, %s175, %s176
    %p180 = pneg %p174
    %p181 = scmp.eq.s32.totalorder %s13, 1
    %p182 = por %p180, %p181
    %p183 = scmp.ne.s32.totalorder %s175, %s178
    %p184 = scmp.eq.s32.totalorder %s13, 0
    %p185 = por %p183, %p184
    %p186 = scmp.ne.s32.totalorder %s175, %s178
    %p187 = scmp.eq.s32.totalorder %s18, 1
    %p188 = por %p186, %p187
    %p189 = scmp.ne.s32.totalorder %s178, %s179
    %p190 = scmp.eq.s32.totalorder %s18, 0
    %p191 = por %p189, %p190
    %p192 = scmp.ne.s32.totalorder %s178, %s179
    %p193 = scmp.eq.s32.totalorder %s19, 1
    %p194 = por %p192, %p193
    %p196 = scmp.ne.s32.totalorder %s179, %s195
    %p197 = scmp.eq.s32.totalorder %s19, 0
    %p198 = por %p196, %p197
    %p199 = scmp.le.s32.totalorder 1, %s13
    %p200 = scmp.lt.s32.totalorder %s13, 3
    %p201 = pnand %p199, %p200
    %p202 = pneg %p201
    // Predicated region
    $region9: #{net_forward.1} parent=5 // pred_check
      _
    $region10: #{net_forward.1} parent=5 // pred_check_branch
      %204 = sbr.rel (%p201) target = $region12
    $region11: #{net_forward.1} parent=5 // pred_region
      %s205 = ssub.s32 %s13, 1
      // Predicated region
      $region13: #{net_forward.1} parent=11 // pred_check
        %p206 = pneg %p60
      $region14: #{net_forward.1} parent=11 // pred_check_branch
        %208 = sbr.rel (%p206) target = $region16
      $region15: #{net_forward.1} parent=11 // pred_region
        _
      $region16: #{net_forward.1} parent=11 // pred_fallthru
        _
      // Predicated region
      $region17: #{net_forward.1} parent=11 // pred_check
        %p209 = pneg %p81
      $region18: #{net_forward.1} parent=11 // pred_check_branch
        %211 = sbr.rel (%p209) target = $region20
      $region19: #{net_forward.1} parent=11 // pred_region
        _
      $region20: #{net_forward.1} parent=11 // pred_fallthru
        _
      // Predicated region
      $region21: #{net_forward.1} parent=11 // pred_check
        %p212 = pneg %p102
      $region22: #{net_forward.1} parent=11 // pred_check_branch
        %214 = sbr.rel (%p212) target = $region24
      $region23: #{net_forward.1} parent=11 // pred_region
        _
      $region24: #{net_forward.1} parent=11 // pred_fallthru
        _
      // Predicated region
      $region25: #{net_forward.1} parent=11 // pred_check
        %p215 = pneg %p123
      $region26: #{net_forward.1} parent=11 // pred_check_branch
        %217 = sbr.rel (%p215) target = $region28
      $region27: #{net_forward.1} parent=11 // pred_region
        _
      $region28: #{net_forward.1} parent=11 // pred_fallthru
        _
      // Predicated region
      $region29: #{net_forward.1} parent=11 // pred_check
        %p218 = pneg %p144
      $region30: #{net_forward.1} parent=11 // pred_check_branch
        %220 = sbr.rel (%p218) target = $region32
      $region31: #{net_forward.1} parent=11 // pred_region
        _
      $region32: #{net_forward.1} parent=11 // pred_fallthru
        _
      // Predicated region
      $region33: #{net_forward.1} parent=11 // pred_check
        %p221 = pneg %p165
      $region34: #{net_forward.1} parent=11 // pred_check_branch
        %223 = sbr.rel (%p221) target = $region36
      $region35: #{net_forward.1} parent=11 // pred_region
        _
      $region36: #{net_forward.1} parent=11 // pred_fallthru
        _
    $region12: #{net_forward.1} parent=5 // pred_fallthru
      _
    %p224 = scmp.lt.s32.totalorder %s13, 2
    // Predicated region
    $region37: #{net_forward.1} parent=5 // pred_check
      %p225 = pneg %p224
    $region38: #{net_forward.1} parent=5 // pred_check_branch
      %227 = sbr.rel (%p225) target = $region40
    $region39: #{net_forward.1} parent=5 // pred_region
      // Predicated region
      $region41: #{net_forward.1} parent=39 // pred_check
        %p228 = pneg %p33
      $region42: #{net_forward.1} parent=39 // pred_check_branch
        %230 = sbr.rel (%p228) target = $region44
      $region43: #{net_forward.1} parent=39 // pred_region
        %s231 = smul.u32 64, %s13
        %p232 = scmp.lt.s32.totalorder %s231, 127
        %s233 = scalar_select %p232, %s231, 127
        %s234 = smul.addr %s233, 8
        %s235 = smul.addr %s234, 4
        %s236 = scalar_lea.vmem %s0, %s235
        %s237 = smul.u32 64, %s13
      $region44: #{net_forward.1} parent=39 // pred_fallthru
        _
    $region40: #{net_forward.1} parent=5 // pred_fallthru
      _
    %p238 = scmp.le.s32.totalorder 1, %s13
    %p239 = scmp.lt.s32.totalorder %s13, 3
    %p240 = pnand %p238, %p239
    %p241 = pneg %p240
    // Predicated region
    $region45: #{net_forward.1} parent=5 // pred_check
      _
    $region46: #{net_forward.1} parent=5 // pred_check_branch
      %243 = sbr.rel (%p240) target = $region48
    $region47: #{net_forward.1} parent=5 // pred_region
      %s244 = ssub.s32 %s13, 1
      %s245 = smul.u32 64, %s18
      %p246 = scmp.lt.s32.totalorder %s245, 127
      %s247 = scalar_select %p246, %s245, 127
      %s248 = smul.addr %s247, 8
      %s249 = smul.addr %s248, 4
      %s250 = scalar_lea.vmem %s0, %s249
      %p251 = pneg %p39
      %p252 = pneg %p36
      %p253 = pneg %p60
      %p254 = pneg %p57
      %p255 = pneg %p81
      %p256 = pneg %p78
      %p257 = pneg %p102
      %p258 = pneg %p99
      %p259 = pneg %p123
      %p260 = pneg %p120
      %p261 = pneg %p144
      %p262 = pneg %p141
      %p263 = pneg %p165
      %p264 = pneg %p162
      %p265 = pneg %p191
      %p266 = pneg %p188
      %s267 = smul.u32 8, %s18
      %p268 = scmp.lt.s32.totalorder %s267, 15
      %s269 = scalar_select %p268, %s267, 15
      %s270 = smul.addr %s269, 8
      %s271 = scalar_lea.vmem %s7, %s270
      %s272 = smul.u32 64, %s18
      %p273 = scmp.lt.s32.totalorder %s272, 127
      %s274 = scalar_select %p273, %s272, 127
      %s275 = smul.addr %s274, 8
      %s276 = smul.addr %s275, 4
      %s277 = scalar_lea.vmem %s0, %s276
      %s278 = smul.u32 64, %s18
      %s279 = smul.u32 8, %s18
      %p280 = scmp.lt.s32.totalorder %s279, 15
      %s281 = scalar_select %p280, %s279, 15
      %s282 = smul.addr %s281, 8
      %s283 = scalar_lea.vmem %s7, %s282
      %s284 = smul.u32 8, %s18
      %v286 = vld [vmem:[%s277] sm:$0xff]
      %v287 = vld [vmem:[%s277 + $0x8] sm:$0xff]
      %v288 = vld [vmem:[%s277 + $0x10] sm:$0xff]
      %v289 = vld [vmem:[%s277 + $0x18] sm:$0xff]
      %v290 = vld [vmem:[%s277 + $0x20] sm:$0xff]
      %v291 = vld [vmem:[%s277 + $0x28] sm:$0xff]
      %v292 = vld [vmem:[%s277 + $0x30] sm:$0xff]
      %v293 = vld [vmem:[%s277 + $0x38] sm:$0xff]
      %v294 = vld [vmem:[%s277 + $0x40] sm:$0xff]
      %v295 = vld [vmem:[%s277 + $0x48] sm:$0xff]
      %v296 = vld [vmem:[%s277 + $0x50] sm:$0xff]
      %v297 = vld [vmem:[%s277 + $0x58] sm:$0xff]
      %v298 = vld [vmem:[%s277 + $0x60] sm:$0xff]
      %v299 = vld [vmem:[%s277 + $0x68] sm:$0xff]
      %v300 = vld [vmem:[%s277 + $0x70] sm:$0xff]
      %v301 = vld [vmem:[%s277 + $0x78] sm:$0xff]
      %v302 = vld [vmem:[%s277 + $0x80] sm:$0xff]
      %v303 = vld [vmem:[%s277 + $0x88] sm:$0xff]
      %v304 = vld [vmem:[%s277 + $0x90] sm:$0xff]
      %v305 = vld [vmem:[%s277 + $0x98] sm:$0xff]
      %v306 = vld [vmem:[%s277 + $0xa0] sm:$0xff]
      %v307 = vld [vmem:[%s277 + $0xa8] sm:$0xff]
      %v308 = vld [vmem:[%s277 + $0xb0] sm:$0xff]
      %v309 = vld [vmem:[%s277 + $0xb8] sm:$0xff]
      %v310 = vld [vmem:[%s277 + $0xc0] sm:$0xff]
      %v311 = vld [vmem:[%s277 + $0xc8] sm:$0xff]
      %v312 = vld [vmem:[%s277 + $0xd0] sm:$0xff]
      %v313 = vld [vmem:[%s277 + $0xd8] sm:$0xff]
      %v314 = vld [vmem:[%s277 + $0xe0] sm:$0xff]
      %v315 = vld [vmem:[%s277 + $0xe8] sm:$0xff]
      %v316 = vld [vmem:[%s277 + $0xf0] sm:$0xff]
      %v317 = vld [vmem:[%s277 + $0xf8] sm:$0xff]
      %v318 = vld [vmem:[%s277 + $0x100] sm:$0xff]
      %v319 = vld [vmem:[%s277 + $0x108] sm:$0xff]
      %v320 = vld [vmem:[%s277 + $0x110] sm:$0xff]
      %v321 = vld [vmem:[%s277 + $0x118] sm:$0xff]
      %v322 = vld [vmem:[%s277 + $0x120] sm:$0xff]
      %v323 = vld [vmem:[%s277 + $0x128] sm:$0xff]
      %v324 = vld [vmem:[%s277 + $0x130] sm:$0xff]
      %v325 = vld [vmem:[%s277 + $0x138] sm:$0xff]
      %v326 = vld [vmem:[%s277 + $0x140] sm:$0xff]
      %v327 = vld [vmem:[%s277 + $0x148] sm:$0xff]
      %v328 = vld [vmem:[%s277 + $0x150] sm:$0xff]
      %v329 = vld [vmem:[%s277 + $0x158] sm:$0xff]
      %v330 = vld [vmem:[%s277 + $0x160] sm:$0xff]
      %v331 = vld [vmem:[%s277 + $0x168] sm:$0xff]
      %v332 = vld [vmem:[%s277 + $0x170] sm:$0xff]
      %v333 = vld [vmem:[%s277 + $0x178] sm:$0xff]
      %v334 = vld [vmem:[%s277 + $0x180] sm:$0xff]
      %v335 = vld [vmem:[%s277 + $0x188] sm:$0xff]
      %v336 = vld [vmem:[%s277 + $0x190] sm:$0xff]
      %v337 = vld [vmem:[%s277 + $0x198] sm:$0xff]
      %v338 = vld [vmem:[%s277 + $0x1a0] sm:$0xff]
      %v339 = vld [vmem:[%s277 + $0x1a8] sm:$0xff]
      %v340 = vld [vmem:[%s277 + $0x1b0] sm:$0xff]
      %v341 = vld [vmem:[%s277 + $0x1b8] sm:$0xff]
      %v342 = vld [vmem:[%s277 + $0x1c0] sm:$0xff]
      %v343 = vld [vmem:[%s277 + $0x1c8] sm:$0xff]
      %v344 = vld [vmem:[%s277 + $0x1d0] sm:$0xff]
      %v345 = vld [vmem:[%s277 + $0x1d8] sm:$0xff]
      %v346 = vld [vmem:[%s277 + $0x1e0] sm:$0xff]
      %v347 = vld [vmem:[%s277 + $0x1e8] sm:$0xff]
      %v348 = vld [vmem:[%s277 + $0x1f0] sm:$0xff]
      %v349 = vld [vmem:[%s277 + $0x1f8] sm:$0xff]
      %v350 = vld [vmem:[%s277 + $0x200] sm:$0xff]
      %v351 = vld [vmem:[%s277 + $0x208] sm:$0xff]
      %v352 = vld [vmem:[%s277 + $0x210] sm:$0xff]
      %v353 = vld [vmem:[%s277 + $0x218] sm:$0xff]
      %v354 = vld [vmem:[%s277 + $0x220] sm:$0xff]
      %v355 = vld [vmem:[%s277 + $0x228] sm:$0xff]
      %v356 = vld [vmem:[%s277 + $0x230] sm:$0xff]
      %v357 = vld [vmem:[%s277 + $0x238] sm:$0xff]
      %v358 = vld [vmem:[%s277 + $0x240] sm:$0xff]
      %v359 = vld [vmem:[%s277 + $0x248] sm:$0xff]
      %v360 = vld [vmem:[%s277 + $0x250] sm:$0xff]
      %v361 = vld [vmem:[%s277 + $0x258] sm:$0xff]
      %v362 = vld [vmem:[%s277 + $0x260] sm:$0xff]
      %v363 = vld [vmem:[%s277 + $0x268] sm:$0xff]
      %v364 = vld [vmem:[%s277 + $0x270] sm:$0xff]
      %v365 = vld [vmem:[%s277 + $0x278] sm:$0xff]
      %v366 = vld [vmem:[%s277 + $0x280] sm:$0xff]
      %v367 = vld [vmem:[%s277 + $0x288] sm:$0xff]
      %v368 = vld [vmem:[%s277 + $0x290] sm:$0xff]
      %v369 = vld [vmem:[%s277 + $0x298] sm:$0xff]
      %v370 = vld [vmem:[%s277 + $0x2a0] sm:$0xff]
      %v371 = vld [vmem:[%s277 + $0x2a8] sm:$0xff]
      %v372 = vld [vmem:[%s277 + $0x2b0] sm:$0xff]
      %v373 = vld [vmem:[%s277 + $0x2b8] sm:$0xff]
      %v374 = vld [vmem:[%s277 + $0x2c0] sm:$0xff]
      %v375 = vld [vmem:[%s277 + $0x2c8] sm:$0xff]
      %v376 = vld [vmem:[%s277 + $0x2d0] sm:$0xff]
      %v377 = vld [vmem:[%s277 + $0x2d8] sm:$0xff]
      %v378 = vld [vmem:[%s277 + $0x2e0] sm:$0xff]
      %v379 = vld [vmem:[%s277 + $0x2e8] sm:$0xff]
      %v380 = vld [vmem:[%s277 + $0x2f0] sm:$0xff]
      %v381 = vld [vmem:[%s277 + $0x2f8] sm:$0xff]
      %v382 = vld [vmem:[%s277 + $0x300] sm:$0xff]
      %v383 = vld [vmem:[%s277 + $0x308] sm:$0xff]
      %v384 = vld [vmem:[%s277 + $0x310] sm:$0xff]
      %v385 = vld [vmem:[%s277 + $0x318] sm:$0xff]
      %v386 = vld [vmem:[%s277 + $0x320] sm:$0xff]
      %v387 = vld [vmem:[%s277 + $0x328] sm:$0xff]
      %v388 = vld [vmem:[%s277 + $0x330] sm:$0xff]
      %v389 = vld [vmem:[%s277 + $0x338] sm:$0xff]
      %v390 = vld [vmem:[%s277 + $0x340] sm:$0xff]
      %v391 = vld [vmem:[%s277 + $0x348] sm:$0xff]
      %v392 = vld [vmem:[%s277 + $0x350] sm:$0xff]
      %v393 = vld [vmem:[%s277 + $0x358] sm:$0xff]
      %v394 = vld [vmem:[%s277 + $0x360] sm:$0xff]
      %v395 = vld [vmem:[%s277 + $0x368] sm:$0xff]
      %v396 = vld [vmem:[%s277 + $0x370] sm:$0xff]
      %v397 = vld [vmem:[%s277 + $0x378] sm:$0xff]
      %v398 = vld [vmem:[%s277 + $0x380] sm:$0xff]
      %v399 = vld [vmem:[%s277 + $0x388] sm:$0xff]
      %v400 = vld [vmem:[%s277 + $0x390] sm:$0xff]
      %v401 = vld [vmem:[%s277 + $0x398] sm:$0xff]
      %v402 = vld [vmem:[%s277 + $0x3a0] sm:$0xff]
      %v403 = vld [vmem:[%s277 + $0x3a8] sm:$0xff]
      %v404 = vld [vmem:[%s277 + $0x3b0] sm:$0xff]
      %v405 = vld [vmem:[%s277 + $0x3b8] sm:$0xff]
      %v406 = vld [vmem:[%s277 + $0x3c0] sm:$0xff]
      %v407 = vld [vmem:[%s277 + $0x3c8] sm:$0xff]
      %v408 = vld [vmem:[%s277 + $0x3d0] sm:$0xff]
      %v409 = vld [vmem:[%s277 + $0x3d8] sm:$0xff]
      %v410 = vld [vmem:[%s277 + $0x3e0] sm:$0xff]
      %v411 = vld [vmem:[%s277 + $0x3e8] sm:$0xff]
      %v412 = vld [vmem:[%s277 + $0x3f0] sm:$0xff]
      %v413 = vld [vmem:[%s277 + $0x3f8] sm:$0xff]
      %v414 = vld [vmem:[%s277 + $0x400] sm:$0xff]
      %v415 = vld [vmem:[%s277 + $0x408] sm:$0xff]
      %v416 = vld [vmem:[%s277 + $0x410] sm:$0xff]
      %v417 = vld [vmem:[%s277 + $0x418] sm:$0xff]
      %v418 = vld [vmem:[%s277 + $0x420] sm:$0xff]
      %v419 = vld [vmem:[%s277 + $0x428] sm:$0xff]
      %v420 = vld [vmem:[%s277 + $0x430] sm:$0xff]
      %v421 = vld [vmem:[%s277 + $0x438] sm:$0xff]
      %v422 = vld [vmem:[%s277 + $0x440] sm:$0xff]
      %v423 = vld [vmem:[%s277 + $0x448] sm:$0xff]
      %v424 = vld [vmem:[%s277 + $0x450] sm:$0xff]
      %v425 = vld [vmem:[%s277 + $0x458] sm:$0xff]
      %v426 = vld [vmem:[%s277 + $0x460] sm:$0xff]
      %v427 = vld [vmem:[%s277 + $0x468] sm:$0xff]
      %v428 = vld [vmem:[%s277 + $0x470] sm:$0xff]
      %v429 = vld [vmem:[%s277 + $0x478] sm:$0xff]
      %v430 = vld [vmem:[%s277 + $0x480] sm:$0xff]
      %v431 = vld [vmem:[%s277 + $0x488] sm:$0xff]
      %v432 = vld [vmem:[%s277 + $0x490] sm:$0xff]
      %v433 = vld [vmem:[%s277 + $0x498] sm:$0xff]
      %v434 = vld [vmem:[%s277 + $0x4a0] sm:$0xff]
      %v435 = vld [vmem:[%s277 + $0x4a8] sm:$0xff]
      %v436 = vld [vmem:[%s277 + $0x4b0] sm:$0xff]
      %v437 = vld [vmem:[%s277 + $0x4b8] sm:$0xff]
      %v438 = vld [vmem:[%s277 + $0x4c0] sm:$0xff]
      %v439 = vld [vmem:[%s277 + $0x4c8] sm:$0xff]
      %v440 = vld [vmem:[%s277 + $0x4d0] sm:$0xff]
      %v441 = vld [vmem:[%s277 + $0x4d8] sm:$0xff]
      %v442 = vld [vmem:[%s277 + $0x4e0] sm:$0xff]
      %v443 = vld [vmem:[%s277 + $0x4e8] sm:$0xff]
      %v444 = vld [vmem:[%s277 + $0x4f0] sm:$0xff]
      %v445 = vld [vmem:[%s277 + $0x4f8] sm:$0xff]
      %v446 = vld [vmem:[%s277 + $0x500] sm:$0xff]
      %v447 = vld [vmem:[%s277 + $0x508] sm:$0xff]
      %v448 = vld [vmem:[%s277 + $0x510] sm:$0xff]
      %v449 = vld [vmem:[%s277 + $0x518] sm:$0xff]
      %v450 = vld [vmem:[%s277 + $0x520] sm:$0xff]
      %v451 = vld [vmem:[%s277 + $0x528] sm:$0xff]
      %v452 = vld [vmem:[%s277 + $0x530] sm:$0xff]
      %v453 = vld [vmem:[%s277 + $0x538] sm:$0xff]
      %v454 = vld [vmem:[%s277 + $0x540] sm:$0xff]
      %v455 = vld [vmem:[%s277 + $0x548] sm:$0xff]
      %v456 = vld [vmem:[%s277 + $0x550] sm:$0xff]
      %v457 = vld [vmem:[%s277 + $0x558] sm:$0xff]
      %v458 = vld [vmem:[%s277 + $0x560] sm:$0xff]
      %v459 = vld [vmem:[%s277 + $0x568] sm:$0xff]
      %v460 = vld [vmem:[%s277 + $0x570] sm:$0xff]
      %v461 = vld [vmem:[%s277 + $0x578] sm:$0xff]
      %v462 = vld [vmem:[%s277 + $0x580] sm:$0xff]
      %v463 = vld [vmem:[%s277 + $0x588] sm:$0xff]
      %v464 = vld [vmem:[%s277 + $0x590] sm:$0xff]
      %v465 = vld [vmem:[%s277 + $0x598] sm:$0xff]
      %v466 = vld [vmem:[%s277 + $0x5a0] sm:$0xff]
      %v467 = vld [vmem:[%s277 + $0x5a8] sm:$0xff]
      %v468 = vld [vmem:[%s277 + $0x5b0] sm:$0xff]
      %v469 = vld [vmem:[%s277 + $0x5b8] sm:$0xff]
      %v470 = vld [vmem:[%s277 + $0x5c0] sm:$0xff]
      %v471 = vld [vmem:[%s277 + $0x5c8] sm:$0xff]
      %v472 = vld [vmem:[%s277 + $0x5d0] sm:$0xff]
      %v473 = vld [vmem:[%s277 + $0x5d8] sm:$0xff]
      %v474 = vld [vmem:[%s277 + $0x5e0] sm:$0xff]
      %v475 = vld [vmem:[%s277 + $0x5e8] sm:$0xff]
      %v476 = vld [vmem:[%s277 + $0x5f0] sm:$0xff]
      %v477 = vld [vmem:[%s277 + $0x5f8] sm:$0xff]
      %v478 = vld [vmem:[%s277 + $0x600] sm:$0xff]
      %v479 = vld [vmem:[%s277 + $0x608] sm:$0xff]
      %v480 = vld [vmem:[%s277 + $0x610] sm:$0xff]
      %v481 = vld [vmem:[%s277 + $0x618] sm:$0xff]
      %v482 = vld [vmem:[%s277 + $0x620] sm:$0xff]
      %v483 = vld [vmem:[%s277 + $0x628] sm:$0xff]
      %v484 = vld [vmem:[%s277 + $0x630] sm:$0xff]
      %v485 = vld [vmem:[%s277 + $0x638] sm:$0xff]
      %v486 = vld [vmem:[%s277 + $0x640] sm:$0xff]
      %v487 = vld [vmem:[%s277 + $0x648] sm:$0xff]
      %v488 = vld [vmem:[%s277 + $0x650] sm:$0xff]
      %v489 = vld [vmem:[%s277 + $0x658] sm:$0xff]
      %v490 = vld [vmem:[%s277 + $0x660] sm:$0xff]
      %v491 = vld [vmem:[%s277 + $0x668] sm:$0xff]
      %v492 = vld [vmem:[%s277 + $0x670] sm:$0xff]
      %v493 = vld [vmem:[%s277 + $0x678] sm:$0xff]
      %v494 = vld [vmem:[%s277 + $0x680] sm:$0xff]
      %v495 = vld [vmem:[%s277 + $0x688] sm:$0xff]
      %v496 = vld [vmem:[%s277 + $0x690] sm:$0xff]
      %v497 = vld [vmem:[%s277 + $0x698] sm:$0xff]
      %v498 = vld [vmem:[%s277 + $0x6a0] sm:$0xff]
      %v499 = vld [vmem:[%s277 + $0x6a8] sm:$0xff]
      %v500 = vld [vmem:[%s277 + $0x6b0] sm:$0xff]
      %v501 = vld [vmem:[%s277 + $0x6b8] sm:$0xff]
      %v502 = vld [vmem:[%s277 + $0x6c0] sm:$0xff]
      %v503 = vld [vmem:[%s277 + $0x6c8] sm:$0xff]
      %v504 = vld [vmem:[%s277 + $0x6d0] sm:$0xff]
      %v505 = vld [vmem:[%s277 + $0x6d8] sm:$0xff]
      %v506 = vld [vmem:[%s277 + $0x6e0] sm:$0xff]
      %v507 = vld [vmem:[%s277 + $0x6e8] sm:$0xff]
      %v508 = vld [vmem:[%s277 + $0x6f0] sm:$0xff]
      %v509 = vld [vmem:[%s277 + $0x6f8] sm:$0xff]
      %v510 = vld [vmem:[%s277 + $0x700] sm:$0xff]
      %v511 = vld [vmem:[%s277 + $0x708] sm:$0xff]
      %v512 = vld [vmem:[%s277 + $0x710] sm:$0xff]
      %v513 = vld [vmem:[%s277 + $0x718] sm:$0xff]
      %v514 = vld [vmem:[%s277 + $0x720] sm:$0xff]
      %v515 = vld [vmem:[%s277 + $0x728] sm:$0xff]
      %v516 = vld [vmem:[%s277 + $0x730] sm:$0xff]
      %v517 = vld [vmem:[%s277 + $0x738] sm:$0xff]
      %v518 = vld [vmem:[%s277 + $0x740] sm:$0xff]
      %v519 = vld [vmem:[%s277 + $0x748] sm:$0xff]
      %v520 = vld [vmem:[%s277 + $0x750] sm:$0xff]
      %v521 = vld [vmem:[%s277 + $0x758] sm:$0xff]
      %v522 = vld [vmem:[%s277 + $0x760] sm:$0xff]
      %v523 = vld [vmem:[%s277 + $0x768] sm:$0xff]
      %v524 = vld [vmem:[%s277 + $0x770] sm:$0xff]
      %v525 = vld [vmem:[%s277 + $0x778] sm:$0xff]
      %v526 = vld [vmem:[%s277 + $0x780] sm:$0xff]
      %v527 = vld [vmem:[%s277 + $0x788] sm:$0xff]
      %v528 = vld [vmem:[%s277 + $0x790] sm:$0xff]
      %v529 = vld [vmem:[%s277 + $0x798] sm:$0xff]
      %v530 = vld [vmem:[%s277 + $0x7a0] sm:$0xff]
      %v531 = vld [vmem:[%s277 + $0x7a8] sm:$0xff]
      %v532 = vld [vmem:[%s277 + $0x7b0] sm:$0xff]
      %v533 = vld [vmem:[%s277 + $0x7b8] sm:$0xff]
      %v534 = vld [vmem:[%s277 + $0x7c0] sm:$0xff]
      %v535 = vld [vmem:[%s277 + $0x7c8] sm:$0xff]
      %v536 = vld [vmem:[%s277 + $0x7d0] sm:$0xff]
      %v537 = vld [vmem:[%s277 + $0x7d8] sm:$0xff]
      %v538 = vld [vmem:[%s277 + $0x7e0] sm:$0xff]
      %v539 = vld [vmem:[%s277 + $0x7e8] sm:$0xff]
      %v540 = vld [vmem:[%s277 + $0x7f0] sm:$0xff]
      %v541 = vld [vmem:[%s277 + $0x7f8] sm:$0xff]
      %v542 = vld [vmem:[%s1] sm:$0xff]
      %v543 = vld [vmem:[%s1 + $0x8] sm:$0xff]
      %v544 = vld [vmem:[%s1 + $0x10] sm:$0xff]
      %v545 = vld [vmem:[%s1 + $0x18] sm:$0xff]
      %v546 = vld [vmem:[%s1 + $0x20] sm:$0xff]
      %v547 = vld [vmem:[%s1 + $0x28] sm:$0xff]
      %v548 = vld [vmem:[%s1 + $0x30] sm:$0xff]
      %v549 = vld [vmem:[%s1 + $0x38] sm:$0xff]
      %v550 = vld [vmem:[%s1 + $0x40] sm:$0xff]
      %v551 = vld [vmem:[%s1 + $0x48] sm:$0xff]
      %v552 = vld [vmem:[%s1 + $0x50] sm:$0xff]
      %v553 = vld [vmem:[%s1 + $0x58] sm:$0xff]
      %v554 = vld [vmem:[%s1 + $0x60] sm:$0xff]
      %v555 = vld [vmem:[%s1 + $0x68] sm:$0xff]
      %v556 = vld [vmem:[%s1 + $0x70] sm:$0xff]
      %v557 = vld [vmem:[%s1 + $0x78] sm:$0xff]
      %v558 = vld [vmem:[%s1 + $0x80] sm:$0xff]
      %v559 = vld [vmem:[%s1 + $0x88] sm:$0x33]
      %v816 = vunpack.c.l.b16 %v286
      %v817 = vunpack.c.h.b16 %v286
      %v818 = vunpack.c.l.b16 %v287
      %v819 = vunpack.c.h.b16 %v287
      %v820 = vunpack.c.l.b16 %v288
      %v821 = vunpack.c.h.b16 %v288
      %v822 = vunpack.c.l.b16 %v289
      %v823 = vunpack.c.h.b16 %v289
      %v824 = vunpack.c.l.b16 %v290
      %v825 = vunpack.c.h.b16 %v290
      %v826 = vunpack.c.l.b16 %v291
      %v827 = vunpack.c.h.b16 %v291
      %v828 = vunpack.c.l.b16 %v292
      %v829 = vunpack.c.h.b16 %v292
      %v830 = vunpack.c.l.b16 %v293
      %v831 = vunpack.c.h.b16 %v293
      %v832 = vunpack.c.l.b16 %v294
      %v833 = vunpack.c.h.b16 %v294
      %v834 = vunpack.c.l.b16 %v295
      %v835 = vunpack.c.h.b16 %v295
      %v836 = vunpack.c.l.b16 %v296
      %v837 = vunpack.c.h.b16 %v296
      %v838 = vunpack.c.l.b16 %v297
      %v839 = vunpack.c.h.b16 %v297
      %v840 = vunpack.c.l.b16 %v298
      %v841 = vunpack.c.h.b16 %v298
      %v842 = vunpack.c.l.b16 %v299
      %v843 = vunpack.c.h.b16 %v299
      %v844 = vunpack.c.l.b16 %v300
      %v845 = vunpack.c.h.b16 %v300
      %v846 = vunpack.c.l.b16 %v301
      %v847 = vunpack.c.h.b16 %v301
      %v848 = vunpack.c.l.b16 %v302
      %v849 = vunpack.c.h.b16 %v302
      %v850 = vunpack.c.l.b16 %v303
      %v851 = vunpack.c.h.b16 %v303
      %v852 = vunpack.c.l.b16 %v304
      %v853 = vunpack.c.h.b16 %v304
      %v854 = vunpack.c.l.b16 %v305
      %v855 = vunpack.c.h.b16 %v305
      %v856 = vunpack.c.l.b16 %v306
      %v857 = vunpack.c.h.b16 %v306
      %v858 = vunpack.c.l.b16 %v307
      %v859 = vunpack.c.h.b16 %v307
      %v860 = vunpack.c.l.b16 %v308
      %v861 = vunpack.c.h.b16 %v308
      %v862 = vunpack.c.l.b16 %v309
      %v863 = vunpack.c.h.b16 %v309
      %v864 = vunpack.c.l.b16 %v310
      %v865 = vunpack.c.h.b16 %v310
      %v866 = vunpack.c.l.b16 %v311
      %v867 = vunpack.c.h.b16 %v311
      %v868 = vunpack.c.l.b16 %v312
      %v869 = vunpack.c.h.b16 %v312
      %v870 = vunpack.c.l.b16 %v313
      %v871 = vunpack.c.h.b16 %v313
      %v872 = vunpack.c.l.b16 %v314
      %v873 = vunpack.c.h.b16 %v314
      %v874 = vunpack.c.l.b16 %v315
      %v875 = vunpack.c.h.b16 %v315
      %v876 = vunpack.c.l.b16 %v316
      %v877 = vunpack.c.h.b16 %v316
      %v878 = vunpack.c.l.b16 %v317
      %v879 = vunpack.c.h.b16 %v317
      %v880 = vunpack.c.l.b16 %v318
      %v881 = vunpack.c.h.b16 %v318
      %v882 = vunpack.c.l.b16 %v319
      %v883 = vunpack.c.h.b16 %v319
      %v884 = vunpack.c.l.b16 %v320
      %v885 = vunpack.c.h.b16 %v320
      %v886 = vunpack.c.l.b16 %v321
      %v887 = vunpack.c.h.b16 %v321
      %v888 = vunpack.c.l.b16 %v322
      %v889 = vunpack.c.h.b16 %v322
      %v890 = vunpack.c.l.b16 %v323
      %v891 = vunpack.c.h.b16 %v323
      %v892 = vunpack.c.l.b16 %v324
      %v893 = vunpack.c.h.b16 %v324
      %v894 = vunpack.c.l.b16 %v325
      %v895 = vunpack.c.h.b16 %v325
      %v896 = vunpack.c.l.b16 %v326
      %v897 = vunpack.c.h.b16 %v326
      %v898 = vunpack.c.l.b16 %v327
      %v899 = vunpack.c.h.b16 %v327
      %v900 = vunpack.c.l.b16 %v328
      %v901 = vunpack.c.h.b16 %v328
      %v902 = vunpack.c.l.b16 %v329
      %v903 = vunpack.c.h.b16 %v329
      %v904 = vunpack.c.l.b16 %v330
      %v905 = vunpack.c.h.b16 %v330
      %v906 = vunpack.c.l.b16 %v331
      %v907 = vunpack.c.h.b16 %v331
      %v908 = vunpack.c.l.b16 %v332
      %v909 = vunpack.c.h.b16 %v332
      %v910 = vunpack.c.l.b16 %v333
      %v911 = vunpack.c.h.b16 %v333
      %v912 = vunpack.c.l.b16 %v334
      %v913 = vunpack.c.h.b16 %v334
      %v914 = vunpack.c.l.b16 %v335
      %v915 = vunpack.c.h.b16 %v335
      %v916 = vunpack.c.l.b16 %v336
      %v917 = vunpack.c.h.b16 %v336
      %v918 = vunpack.c.l.b16 %v337
      %v919 = vunpack.c.h.b16 %v337
      %v920 = vunpack.c.l.b16 %v338
      %v921 = vunpack.c.h.b16 %v338
      %v922 = vunpack.c.l.b16 %v339
      %v923 = vunpack.c.h.b16 %v339
      %v924 = vunpack.c.l.b16 %v340
      %v925 = vunpack.c.h.b16 %v340
      %v926 = vunpack.c.l.b16 %v341
      %v927 = vunpack.c.h.b16 %v341
      %v928 = vunpack.c.l.b16 %v342
      %v929 = vunpack.c.h.b16 %v342
      %v930 = vunpack.c.l.b16 %v343
      %v931 = vunpack.c.h.b16 %v343
      %v932 = vunpack.c.l.b16 %v344
      %v933 = vunpack.c.h.b16 %v344
      %v934 = vunpack.c.l.b16 %v345
      %v935 = vunpack.c.h.b16 %v345
      %v936 = vunpack.c.l.b16 %v346
      %v937 = vunpack.c.h.b16 %v346
      %v938 = vunpack.c.l.b16 %v347
      %v939 = vunpack.c.h.b16 %v347
      %v940 = vunpack.c.l.b16 %v348
      %v941 = vunpack.c.h.b16 %v348
      %v942 = vunpack.c.l.b16 %v349
      %v943 = vunpack.c.h.b16 %v349
      %v944 = vunpack.c.l.b16 %v350
      %v945 = vunpack.c.h.b16 %v350
      %v946 = vunpack.c.l.b16 %v351
      %v947 = vunpack.c.h.b16 %v351
      %v948 = vunpack.c.l.b16 %v352
      %v949 = vunpack.c.h.b16 %v352
      %v950 = vunpack.c.l.b16 %v353
      %v951 = vunpack.c.h.b16 %v353
      %v952 = vunpack.c.l.b16 %v354
      %v953 = vunpack.c.h.b16 %v354
      %v954 = vunpack.c.l.b16 %v355
      %v955 = vunpack.c.h.b16 %v355
      %v956 = vunpack.c.l.b16 %v356
      %v957 = vunpack.c.h.b16 %v356
      %v958 = vunpack.c.l.b16 %v357
      %v959 = vunpack.c.h.b16 %v357
      %v960 = vunpack.c.l.b16 %v358
      %v961 = vunpack.c.h.b16 %v358
      %v962 = vunpack.c.l.b16 %v359
      %v963 = vunpack.c.h.b16 %v359
      %v964 = vunpack.c.l.b16 %v360
      %v965 = vunpack.c.h.b16 %v360
      %v966 = vunpack.c.l.b16 %v361
      %v967 = vunpack.c.h.b16 %v361
      %v968 = vunpack.c.l.b16 %v362
      %v969 = vunpack.c.h.b16 %v362
      %v970 = vunpack.c.l.b16 %v363
      %v971 = vunpack.c.h.b16 %v363
      %v972 = vunpack.c.l.b16 %v364
      %v973 = vunpack.c.h.b16 %v364
      %v974 = vunpack.c.l.b16 %v365
      %v975 = vunpack.c.h.b16 %v365
      %v976 = vunpack.c.l.b16 %v366
      %v977 = vunpack.c.h.b16 %v366
      %v978 = vunpack.c.l.b16 %v367
      %v979 = vunpack.c.h.b16 %v367
      %v980 = vunpack.c.l.b16 %v368
      %v981 = vunpack.c.h.b16 %v368
      %v982 = vunpack.c.l.b16 %v369
      %v983 = vunpack.c.h.b16 %v369
      %v984 = vunpack.c.l.b16 %v370
      %v985 = vunpack.c.h.b16 %v370
      %v986 = vunpack.c.l.b16 %v371
      %v987 = vunpack.c.h.b16 %v371
      %v988 = vunpack.c.l.b16 %v372
      %v989 = vunpack.c.h.b16 %v372
      %v990 = vunpack.c.l.b16 %v373
      %v991 = vunpack.c.h.b16 %v373
      %v992 = vunpack.c.l.b16 %v374
      %v993 = vunpack.c.h.b16 %v374
      %v994 = vunpack.c.l.b16 %v375
      %v995 = vunpack.c.h.b16 %v375
      %v996 = vunpack.c.l.b16 %v376
      %v997 = vunpack.c.h.b16 %v376
      %v998 = vunpack.c.l.b16 %v377
      %v999 = vunpack.c.h.b16 %v377
      %v1000 = vunpack.c.l.b16 %v378
      %v1001 = vunpack.c.h.b16 %v378
      %v1002 = vunpack.c.l.b16 %v379
      %v1003 = vunpack.c.h.b16 %v379
      %v1004 = vunpack.c.l.b16 %v380
      %v1005 = vunpack.c.h.b16 %v380
      %v1006 = vunpack.c.l.b16 %v381
      %v1007 = vunpack.c.h.b16 %v381
      %v1008 = vunpack.c.l.b16 %v382
      %v1009 = vunpack.c.h.b16 %v382
      %v1010 = vunpack.c.l.b16 %v383
      %v1011 = vunpack.c.h.b16 %v383
      %v1012 = vunpack.c.l.b16 %v384
      %v1013 = vunpack.c.h.b16 %v384
      %v1014 = vunpack.c.l.b16 %v385
      %v1015 = vunpack.c.h.b16 %v385
      %v1016 = vunpack.c.l.b16 %v386
      %v1017 = vunpack.c.h.b16 %v386
      %v1018 = vunpack.c.l.b16 %v387
      %v1019 = vunpack.c.h.b16 %v387
      %v1020 = vunpack.c.l.b16 %v388
      %v1021 = vunpack.c.h.b16 %v388
      %v1022 = vunpack.c.l.b16 %v389
      %v1023 = vunpack.c.h.b16 %v389
      %v1024 = vunpack.c.l.b16 %v390
      %v1025 = vunpack.c.h.b16 %v390
      %v1026 = vunpack.c.l.b16 %v391
      %v1027 = vunpack.c.h.b16 %v391
      %v1028 = vunpack.c.l.b16 %v392
      %v1029 = vunpack.c.h.b16 %v392
      %v1030 = vunpack.c.l.b16 %v393
      %v1031 = vunpack.c.h.b16 %v393
      %v1032 = vunpack.c.l.b16 %v394
      %v1033 = vunpack.c.h.b16 %v394
      %v1034 = vunpack.c.l.b16 %v395
      %v1035 = vunpack.c.h.b16 %v395
      %v1036 = vunpack.c.l.b16 %v396
      %v1037 = vunpack.c.h.b16 %v396
      %v1038 = vunpack.c.l.b16 %v397
      %v1039 = vunpack.c.h.b16 %v397
      %v1040 = vunpack.c.l.b16 %v398
      %v1041 = vunpack.c.h.b16 %v398
      %v1042 = vunpack.c.l.b16 %v399
      %v1043 = vunpack.c.h.b16 %v399
      %v1044 = vunpack.c.l.b16 %v400
      %v1045 = vunpack.c.h.b16 %v400
      %v1046 = vunpack.c.l.b16 %v401
      %v1047 = vunpack.c.h.b16 %v401
      %v1048 = vunpack.c.l.b16 %v402
      %v1049 = vunpack.c.h.b16 %v402
      %v1050 = vunpack.c.l.b16 %v403
      %v1051 = vunpack.c.h.b16 %v403
      %v1052 = vunpack.c.l.b16 %v404
      %v1053 = vunpack.c.h.b16 %v404
      %v1054 = vunpack.c.l.b16 %v405
      %v1055 = vunpack.c.h.b16 %v405
      %v1056 = vunpack.c.l.b16 %v406
      %v1057 = vunpack.c.h.b16 %v406
      %v1058 = vunpack.c.l.b16 %v407
      %v1059 = vunpack.c.h.b16 %v407
      %v1060 = vunpack.c.l.b16 %v408
      %v1061 = vunpack.c.h.b16 %v408
      %v1062 = vunpack.c.l.b16 %v409
      %v1063 = vunpack.c.h.b16 %v409
      %v1064 = vunpack.c.l.b16 %v410
      %v1065 = vunpack.c.h.b16 %v410
      %v1066 = vunpack.c.l.b16 %v411
      %v1067 = vunpack.c.h.b16 %v411
      %v1068 = vunpack.c.l.b16 %v412
      %v1069 = vunpack.c.h.b16 %v412
      %v1070 = vunpack.c.l.b16 %v413
      %v1071 = vunpack.c.h.b16 %v413
      %v1072 = vunpack.c.l.b16 %v414
      %v1073 = vunpack.c.h.b16 %v414
      %v1074 = vunpack.c.l.b16 %v415
      %v1075 = vunpack.c.h.b16 %v415
      %v1076 = vunpack.c.l.b16 %v416
      %v1077 = vunpack.c.h.b16 %v416
      %v1078 = vunpack.c.l.b16 %v417
      %v1079 = vunpack.c.h.b16 %v417
      %v1080 = vunpack.c.l.b16 %v418
      %v1081 = vunpack.c.h.b16 %v418
      %v1082 = vunpack.c.l.b16 %v419
      %v1083 = vunpack.c.h.b16 %v419
      %v1084 = vunpack.c.l.b16 %v420
      %v1085 = vunpack.c.h.b16 %v420
      %v1086 = vunpack.c.l.b16 %v421
      %v1087 = vunpack.c.h.b16 %v421
      %v1088 = vunpack.c.l.b16 %v422
      %v1089 = vunpack.c.h.b16 %v422
      %v1090 = vunpack.c.l.b16 %v423
      %v1091 = vunpack.c.h.b16 %v423
      %v1092 = vunpack.c.l.b16 %v424
      %v1093 = vunpack.c.h.b16 %v424
      %v1094 = vunpack.c.l.b16 %v425
      %v1095 = vunpack.c.h.b16 %v425
      %v1096 = vunpack.c.l.b16 %v426
      %v1097 = vunpack.c.h.b16 %v426
      %v1098 = vunpack.c.l.b16 %v427
      %v1099 = vunpack.c.h.b16 %v427
      %v1100 = vunpack.c.l.b16 %v428
      %v1101 = vunpack.c.h.b16 %v428
      %v1102 = vunpack.c.l.b16 %v429
      %v1103 = vunpack.c.h.b16 %v429
      %v1104 = vunpack.c.l.b16 %v430
      %v1105 = vunpack.c.h.b16 %v430
      %v1106 = vunpack.c.l.b16 %v431
      %v1107 = vunpack.c.h.b16 %v431
      %v1108 = vunpack.c.l.b16 %v432
      %v1109 = vunpack.c.h.b16 %v432
      %v1110 = vunpack.c.l.b16 %v433
      %v1111 = vunpack.c.h.b16 %v433
      %v1112 = vunpack.c.l.b16 %v434
      %v1113 = vunpack.c.h.b16 %v434
      %v1114 = vunpack.c.l.b16 %v435
      %v1115 = vunpack.c.h.b16 %v435
      %v1116 = vunpack.c.l.b16 %v436
      %v1117 = vunpack.c.h.b16 %v436
      %v1118 = vunpack.c.l.b16 %v437
      %v1119 = vunpack.c.h.b16 %v437
      %v1120 = vunpack.c.l.b16 %v438
      %v1121 = vunpack.c.h.b16 %v438
      %v1122 = vunpack.c.l.b16 %v439
      %v1123 = vunpack.c.h.b16 %v439
      %v1124 = vunpack.c.l.b16 %v440
      %v1125 = vunpack.c.h.b16 %v440
      %v1126 = vunpack.c.l.b16 %v441
      %v1127 = vunpack.c.h.b16 %v441
      %v1128 = vunpack.c.l.b16 %v442
      %v1129 = vunpack.c.h.b16 %v442
      %v1130 = vunpack.c.l.b16 %v443
      %v1131 = vunpack.c.h.b16 %v443
      %v1132 = vunpack.c.l.b16 %v444
      %v1133 = vunpack.c.h.b16 %v444
      %v1134 = vunpack.c.l.b16 %v445
      %v1135 = vunpack.c.h.b16 %v445
      %v1136 = vunpack.c.l.b16 %v446
      %v1137 = vunpack.c.h.b16 %v446
      %v1138 = vunpack.c.l.b16 %v447
      %v1139 = vunpack.c.h.b16 %v447
      %v1140 = vunpack.c.l.b16 %v448
      %v1141 = vunpack.c.h.b16 %v448
      %v1142 = vunpack.c.l.b16 %v449
      %v1143 = vunpack.c.h.b16 %v449
      %v1144 = vunpack.c.l.b16 %v450
      %v1145 = vunpack.c.h.b16 %v450
      %v1146 = vunpack.c.l.b16 %v451
      %v1147 = vunpack.c.h.b16 %v451
      %v1148 = vunpack.c.l.b16 %v452
      %v1149 = vunpack.c.h.b16 %v452
      %v1150 = vunpack.c.l.b16 %v453
      %v1151 = vunpack.c.h.b16 %v453
      %v1152 = vunpack.c.l.b16 %v454
      %v1153 = vunpack.c.h.b16 %v454
      %v1154 = vunpack.c.l.b16 %v455
      %v1155 = vunpack.c.h.b16 %v455
      %v1156 = vunpack.c.l.b16 %v456
      %v1157 = vunpack.c.h.b16 %v456
      %v1158 = vunpack.c.l.b16 %v457
      %v1159 = vunpack.c.h.b16 %v457
      %v1160 = vunpack.c.l.b16 %v458
      %v1161 = vunpack.c.h.b16 %v458
      %v1162 = vunpack.c.l.b16 %v459
      %v1163 = vunpack.c.h.b16 %v459
      %v1164 = vunpack.c.l.b16 %v460
      %v1165 = vunpack.c.h.b16 %v460
      %v1166 = vunpack.c.l.b16 %v461
      %v1167 = vunpack.c.h.b16 %v461
      %v1168 = vunpack.c.l.b16 %v462
      %v1169 = vunpack.c.h.b16 %v462
      %v1170 = vunpack.c.l.b16 %v463
      %v1171 = vunpack.c.h.b16 %v463
      %v1172 = vunpack.c.l.b16 %v464
      %v1173 = vunpack.c.h.b16 %v464
      %v1174 = vunpack.c.l.b16 %v465
      %v1175 = vunpack.c.h.b16 %v465
      %v1176 = vunpack.c.l.b16 %v466
      %v1177 = vunpack.c.h.b16 %v466
      %v1178 = vunpack.c.l.b16 %v467
      %v1179 = vunpack.c.h.b16 %v467
      %v1180 = vunpack.c.l.b16 %v468
      %v1181 = vunpack.c.h.b16 %v468
      %v1182 = vunpack.c.l.b16 %v469
      %v1183 = vunpack.c.h.b16 %v469
      %v1184 = vunpack.c.l.b16 %v470
      %v1185 = vunpack.c.h.b16 %v470
      %v1186 = vunpack.c.l.b16 %v471
      %v1187 = vunpack.c.h.b16 %v471
      %v1188 = vunpack.c.l.b16 %v472
      %v1189 = vunpack.c.h.b16 %v472
      %v1190 = vunpack.c.l.b16 %v473
      %v1191 = vunpack.c.h.b16 %v473
      %v1192 = vunpack.c.l.b16 %v474
      %v1193 = vunpack.c.h.b16 %v474
      %v1194 = vunpack.c.l.b16 %v475
      %v1195 = vunpack.c.h.b16 %v475
      %v1196 = vunpack.c.l.b16 %v476
      %v1197 = vunpack.c.h.b16 %v476
      %v1198 = vunpack.c.l.b16 %v477
      %v1199 = vunpack.c.h.b16 %v477
      %v1200 = vunpack.c.l.b16 %v478
      %v1201 = vunpack.c.h.b16 %v478
      %v1202 = vunpack.c.l.b16 %v479
      %v1203 = vunpack.c.h.b16 %v479
      %v1204 = vunpack.c.l.b16 %v480
      %v1205 = vunpack.c.h.b16 %v480
      %v1206 = vunpack.c.l.b16 %v481
      %v1207 = vunpack.c.h.b16 %v481
      %v1208 = vunpack.c.l.b16 %v482
      %v1209 = vunpack.c.h.b16 %v482
      %v1210 = vunpack.c.l.b16 %v483
      %v1211 = vunpack.c.h.b16 %v483
      %v1212 = vunpack.c.l.b16 %v484
      %v1213 = vunpack.c.h.b16 %v484
      %v1214 = vunpack.c.l.b16 %v485
      %v1215 = vunpack.c.h.b16 %v485
      %v1216 = vunpack.c.l.b16 %v486
      %v1217 = vunpack.c.h.b16 %v486
      %v1218 = vunpack.c.l.b16 %v487
      %v1219 = vunpack.c.h.b16 %v487
      %v1220 = vunpack.c.l.b16 %v488
      %v1221 = vunpack.c.h.b16 %v488
      %v1222 = vunpack.c.l.b16 %v489
      %v1223 = vunpack.c.h.b16 %v489
      %v1224 = vunpack.c.l.b16 %v490
      %v1225 = vunpack.c.h.b16 %v490
      %v1226 = vunpack.c.l.b16 %v491
      %v1227 = vunpack.c.h.b16 %v491
      %v1228 = vunpack.c.l.b16 %v492
      %v1229 = vunpack.c.h.b16 %v492
      %v1230 = vunpack.c.l.b16 %v493
      %v1231 = vunpack.c.h.b16 %v493
      %v1232 = vunpack.c.l.b16 %v494
      %v1233 = vunpack.c.h.b16 %v494
      %v1234 = vunpack.c.l.b16 %v495
      %v1235 = vunpack.c.h.b16 %v495
      %v1236 = vunpack.c.l.b16 %v496
      %v1237 = vunpack.c.h.b16 %v496
      %v1238 = vunpack.c.l.b16 %v497
      %v1239 = vunpack.c.h.b16 %v497
      %v1240 = vunpack.c.l.b16 %v498
      %v1241 = vunpack.c.h.b16 %v498
      %v1242 = vunpack.c.l.b16 %v499
      %v1243 = vunpack.c.h.b16 %v499
      %v1244 = vunpack.c.l.b16 %v500
      %v1245 = vunpack.c.h.b16 %v500
      %v1246 = vunpack.c.l.b16 %v501
      %v1247 = vunpack.c.h.b16 %v501
      %v1248 = vunpack.c.l.b16 %v502
      %v1249 = vunpack.c.h.b16 %v502
      %v1250 = vunpack.c.l.b16 %v503
      %v1251 = vunpack.c.h.b16 %v503
      %v1252 = vunpack.c.l.b16 %v504
      %v1253 = vunpack.c.h.b16 %v504
      %v1254 = vunpack.c.l.b16 %v505
      %v1255 = vunpack.c.h.b16 %v505
      %v1256 = vunpack.c.l.b16 %v506
      %v1257 = vunpack.c.h.b16 %v506
      %v1258 = vunpack.c.l.b16 %v507
      %v1259 = vunpack.c.h.b16 %v507
      %v1260 = vunpack.c.l.b16 %v508
      %v1261 = vunpack.c.h.b16 %v508
      %v1262 = vunpack.c.l.b16 %v509
      %v1263 = vunpack.c.h.b16 %v509
      %v1264 = vunpack.c.l.b16 %v510
      %v1265 = vunpack.c.h.b16 %v510
      %v1266 = vunpack.c.l.b16 %v511
      %v1267 = vunpack.c.h.b16 %v511
      %v1268 = vunpack.c.l.b16 %v512
      %v1269 = vunpack.c.h.b16 %v512
      %v1270 = vunpack.c.l.b16 %v513
      %v1271 = vunpack.c.h.b16 %v513
      %v1272 = vunpack.c.l.b16 %v514
      %v1273 = vunpack.c.h.b16 %v514
      %v1274 = vunpack.c.l.b16 %v515
      %v1275 = vunpack.c.h.b16 %v515
      %v1276 = vunpack.c.l.b16 %v516
      %v1277 = vunpack.c.h.b16 %v516
      %v1278 = vunpack.c.l.b16 %v517
      %v1279 = vunpack.c.h.b16 %v517
      %v1280 = vunpack.c.l.b16 %v518
      %v1281 = vunpack.c.h.b16 %v518
      %v1282 = vunpack.c.l.b16 %v519
      %v1283 = vunpack.c.h.b16 %v519
      %v1284 = vunpack.c.l.b16 %v520
      %v1285 = vunpack.c.h.b16 %v520
      %v1286 = vunpack.c.l.b16 %v521
      %v1287 = vunpack.c.h.b16 %v521
      %v1288 = vunpack.c.l.b16 %v522
      %v1289 = vunpack.c.h.b16 %v522
      %v1290 = vunpack.c.l.b16 %v523
      %v1291 = vunpack.c.h.b16 %v523
      %v1292 = vunpack.c.l.b16 %v524
      %v1293 = vunpack.c.h.b16 %v524
      %v1294 = vunpack.c.l.b16 %v525
      %v1295 = vunpack.c.h.b16 %v525
      %v1296 = vunpack.c.l.b16 %v526
      %v1297 = vunpack.c.h.b16 %v526
      %v1298 = vunpack.c.l.b16 %v527
      %v1299 = vunpack.c.h.b16 %v527
      %v1300 = vunpack.c.l.b16 %v528
      %v1301 = vunpack.c.h.b16 %v528
      %v1302 = vunpack.c.l.b16 %v529
      %v1303 = vunpack.c.h.b16 %v529
      %v1304 = vunpack.c.l.b16 %v530
      %v1305 = vunpack.c.h.b16 %v530
      %v1306 = vunpack.c.l.b16 %v531
      %v1307 = vunpack.c.h.b16 %v531
      %v1308 = vunpack.c.l.b16 %v532
      %v1309 = vunpack.c.h.b16 %v532
      %v1310 = vunpack.c.l.b16 %v533
      %v1311 = vunpack.c.h.b16 %v533
      %v1312 = vunpack.c.l.b16 %v534
      %v1313 = vunpack.c.h.b16 %v534
      %v1314 = vunpack.c.l.b16 %v535
      %v1315 = vunpack.c.h.b16 %v535
      %v1316 = vunpack.c.l.b16 %v536
      %v1317 = vunpack.c.h.b16 %v536
      %v1318 = vunpack.c.l.b16 %v537
      %v1319 = vunpack.c.h.b16 %v537
      %v1320 = vunpack.c.l.b16 %v538
      %v1321 = vunpack.c.h.b16 %v538
      %v1322 = vunpack.c.l.b16 %v539
      %v1323 = vunpack.c.h.b16 %v539
      %v1324 = vunpack.c.l.b16 %v540
      %v1325 = vunpack.c.h.b16 %v540
      %v1326 = vunpack.c.l.b16 %v541
      %v1327 = vunpack.c.h.b16 %v541
      %v1328 = vpack.c.b16 %v818, %v816
      %v1329 = vpack.c.b16 %v819, %v817
      %v1330 = vpack.c.b16 %v822, %v820
      %v1331 = vpack.c.b16 %v823, %v821
      %v1332 = vpack.c.b16 %v826, %v824
      %v1333 = vpack.c.b16 %v827, %v825
      %v1334 = vpack.c.b16 %v830, %v828
      %v1335 = vpack.c.b16 %v831, %v829
      %v1336 = vpack.c.b16 %v834, %v832
      %v1337 = vpack.c.b16 %v835, %v833
      %v1338 = vpack.c.b16 %v838, %v836
      %v1339 = vpack.c.b16 %v839, %v837
      %v1340 = vpack.c.b16 %v842, %v840
      %v1341 = vpack.c.b16 %v843, %v841
      %v1342 = vpack.c.b16 %v846, %v844
      %v1343 = vpack.c.b16 %v847, %v845
      %v1344 = vpack.c.b16 %v850, %v848
      %v1345 = vpack.c.b16 %v851, %v849
      %v1346 = vpack.c.b16 %v854, %v852
      %v1347 = vpack.c.b16 %v855, %v853
      %v1348 = vpack.c.b16 %v858, %v856
      %v1349 = vpack.c.b16 %v859, %v857
      %v1350 = vpack.c.b16 %v862, %v860
      %v1351 = vpack.c.b16 %v863, %v861
      %v1352 = vpack.c.b16 %v866, %v864
      %v1353 = vpack.c.b16 %v867, %v865
      %v1354 = vpack.c.b16 %v870, %v868
      %v1355 = vpack.c.b16 %v871, %v869
      %v1356 = vpack.c.b16 %v874, %v872
      %v1357 = vpack.c.b16 %v875, %v873
      %v1358 = vpack.c.b16 %v878, %v876
      %v1359 = vpack.c.b16 %v879, %v877
      %v1360 = vpack.c.b16 %v882, %v880
      %v1361 = vpack.c.b16 %v883, %v881
      %v1362 = vpack.c.b16 %v886, %v884
      %v1363 = vpack.c.b16 %v887, %v885
      %v1364 = vpack.c.b16 %v890, %v888
      %v1365 = vpack.c.b16 %v891, %v889
      %v1366 = vpack.c.b16 %v894, %v892
      %v1367 = vpack.c.b16 %v895, %v893
      %v1368 = vpack.c.b16 %v898, %v896
      %v1369 = vpack.c.b16 %v899, %v897
      %v1370 = vpack.c.b16 %v902, %v900
      %v1371 = vpack.c.b16 %v903, %v901
      %v1372 = vpack.c.b16 %v906, %v904
      %v1373 = vpack.c.b16 %v907, %v905
      %v1374 = vpack.c.b16 %v910, %v908
      %v1375 = vpack.c.b16 %v911, %v909
      %v1376 = vpack.c.b16 %v914, %v912
      %v1377 = vpack.c.b16 %v915, %v913
      %v1378 = vpack.c.b16 %v918, %v916
      %v1379 = vpack.c.b16 %v919, %v917
      %v1380 = vpack.c.b16 %v922, %v920
      %v1381 = vpack.c.b16 %v923, %v921
      %v1382 = vpack.c.b16 %v926, %v924
      %v1383 = vpack.c.b16 %v927, %v925
      %v1384 = vpack.c.b16 %v930, %v928
      %v1385 = vpack.c.b16 %v931, %v929
      %v1386 = vpack.c.b16 %v934, %v932
      %v1387 = vpack.c.b16 %v935, %v933
      %v1388 = vpack.c.b16 %v938, %v936
      %v1389 = vpack.c.b16 %v939, %v937
      %v1390 = vpack.c.b16 %v942, %v940
      %v1391 = vpack.c.b16 %v943, %v941
      %v1392 = vpack.c.b16 %v946, %v944
      %v1393 = vpack.c.b16 %v947, %v945
      %v1394 = vpack.c.b16 %v950, %v948
      %v1395 = vpack.c.b16 %v951, %v949
      %v1396 = vpack.c.b16 %v954, %v952
      %v1397 = vpack.c.b16 %v955, %v953
      %v1398 = vpack.c.b16 %v958, %v956
      %v1399 = vpack.c.b16 %v959, %v957
      %v1400 = vpack.c.b16 %v962, %v960
      %v1401 = vpack.c.b16 %v963, %v961
      %v1402 = vpack.c.b16 %v966, %v964
      %v1403 = vpack.c.b16 %v967, %v965
      %v1404 = vpack.c.b16 %v970, %v968
      %v1405 = vpack.c.b16 %v971, %v969
      %v1406 = vpack.c.b16 %v974, %v972
      %v1407 = vpack.c.b16 %v975, %v973
      %v1408 = vpack.c.b16 %v978, %v976
      %v1409 = vpack.c.b16 %v979, %v977
      %v1410 = vpack.c.b16 %v982, %v980
      %v1411 = vpack.c.b16 %v983, %v981
      %v1412 = vpack.c.b16 %v986, %v984
      %v1413 = vpack.c.b16 %v987, %v985
      %v1414 = vpack.c.b16 %v990, %v988
      %v1415 = vpack.c.b16 %v991, %v989
      %v1416 = vpack.c.b16 %v994, %v992
      %v1417 = vpack.c.b16 %v995, %v993
      %v1418 = vpack.c.b16 %v998, %v996
      %v1419 = vpack.c.b16 %v999, %v997
      %v1420 = vpack.c.b16 %v1002, %v1000
      %v1421 = vpack.c.b16 %v1003, %v1001
      %v1422 = vpack.c.b16 %v1006, %v1004
      %v1423 = vpack.c.b16 %v1007, %v1005
      %v1424 = vpack.c.b16 %v1010, %v1008
      %v1425 = vpack.c.b16 %v1011, %v1009
      %v1426 = vpack.c.b16 %v1014, %v1012
      %v1427 = vpack.c.b16 %v1015, %v1013
      %v1428 = vpack.c.b16 %v1018, %v1016
      %v1429 = vpack.c.b16 %v1019, %v1017
      %v1430 = vpack.c.b16 %v1022, %v1020
      %v1431 = vpack.c.b16 %v1023, %v1021
      %v1432 = vpack.c.b16 %v1026, %v1024
      %v1433 = vpack.c.b16 %v1027, %v1025
      %v1434 = vpack.c.b16 %v1030, %v1028
      %v1435 = vpack.c.b16 %v1031, %v1029
      %v1436 = vpack.c.b16 %v1034, %v1032
      %v1437 = vpack.c.b16 %v1035, %v1033
      %v1438 = vpack.c.b16 %v1038, %v1036
      %v1439 = vpack.c.b16 %v1039, %v1037
      %v1440 = vpack.c.b16 %v1042, %v1040
      %v1441 = vpack.c.b16 %v1043, %v1041
      %v1442 = vpack.c.b16 %v1046, %v1044
      %v1443 = vpack.c.b16 %v1047, %v1045
      %v1444 = vpack.c.b16 %v1050, %v1048
      %v1445 = vpack.c.b16 %v1051, %v1049
      %v1446 = vpack.c.b16 %v1054, %v1052
      %v1447 = vpack.c.b16 %v1055, %v1053
      %v1448 = vpack.c.b16 %v1058, %v1056
      %v1449 = vpack.c.b16 %v1059, %v1057
      %v1450 = vpack.c.b16 %v1062, %v1060
      %v1451 = vpack.c.b16 %v1063, %v1061
      %v1452 = vpack.c.b16 %v1066, %v1064
      %v1453 = vpack.c.b16 %v1067, %v1065
      %v1454 = vpack.c.b16 %v1070, %v1068
      %v1455 = vpack.c.b16 %v1071, %v1069
      %v1456 = vpack.c.b16 %v1074, %v1072
      %v1457 = vpack.c.b16 %v1075, %v1073
      %v1458 = vpack.c.b16 %v1078, %v1076
      %v1459 = vpack.c.b16 %v1079, %v1077
      %v1460 = vpack.c.b16 %v1082, %v1080
      %v1461 = vpack.c.b16 %v1083, %v1081
      %v1462 = vpack.c.b16 %v1086, %v1084
      %v1463 = vpack.c.b16 %v1087, %v1085
      %v1464 = vpack.c.b16 %v1090, %v1088
      %v1465 = vpack.c.b16 %v1091, %v1089
      %v1466 = vpack.c.b16 %v1094, %v1092
      %v1467 = vpack.c.b16 %v1095, %v1093
      %v1468 = vpack.c.b16 %v1098, %v1096
      %v1469 = vpack.c.b16 %v1099, %v1097
      %v1470 = vpack.c.b16 %v1102, %v1100
      %v1471 = vpack.c.b16 %v1103, %v1101
      %v1472 = vpack.c.b16 %v1106, %v1104
      %v1473 = vpack.c.b16 %v1107, %v1105
      %v1474 = vpack.c.b16 %v1110, %v1108
      %v1475 = vpack.c.b16 %v1111, %v1109
      %v1476 = vpack.c.b16 %v1114, %v1112
      %v1477 = vpack.c.b16 %v1115, %v1113
      %v1478 = vpack.c.b16 %v1118, %v1116
      %v1479 = vpack.c.b16 %v1119, %v1117
      %v1480 = vpack.c.b16 %v1122, %v1120
      %v1481 = vpack.c.b16 %v1123, %v1121
      %v1482 = vpack.c.b16 %v1126, %v1124
      %v1483 = vpack.c.b16 %v1127, %v1125
      %v1484 = vpack.c.b16 %v1130, %v1128
      %v1485 = vpack.c.b16 %v1131, %v1129
      %v1486 = vpack.c.b16 %v1134, %v1132
      %v1487 = vpack.c.b16 %v1135, %v1133
      %v1488 = vpack.c.b16 %v1138, %v1136
      %v1489 = vpack.c.b16 %v1139, %v1137
      %v1490 = vpack.c.b16 %v1142, %v1140
      %v1491 = vpack.c.b16 %v1143, %v1141
      %v1492 = vpack.c.b16 %v1146, %v1144
      %v1493 = vpack.c.b16 %v1147, %v1145
      %v1494 = vpack.c.b16 %v1150, %v1148
      %v1495 = vpack.c.b16 %v1151, %v1149
      %v1496 = vpack.c.b16 %v1154, %v1152
      %v1497 = vpack.c.b16 %v1155, %v1153
      %v1498 = vpack.c.b16 %v1158, %v1156
      %v1499 = vpack.c.b16 %v1159, %v1157
      %v1500 = vpack.c.b16 %v1162, %v1160
      %v1501 = vpack.c.b16 %v1163, %v1161
      %v1502 = vpack.c.b16 %v1166, %v1164
      %v1503 = vpack.c.b16 %v1167, %v1165
      %v1504 = vpack.c.b16 %v1170, %v1168
      %v1505 = vpack.c.b16 %v1171, %v1169
      %v1506 = vpack.c.b16 %v1174, %v1172
      %v1507 = vpack.c.b16 %v1175, %v1173
      %v1508 = vpack.c.b16 %v1178, %v1176
      %v1509 = vpack.c.b16 %v1179, %v1177
      %v1510 = vpack.c.b16 %v1182, %v1180
      %v1511 = vpack.c.b16 %v1183, %v1181
      %v1512 = vpack.c.b16 %v1186, %v1184
      %v1513 = vpack.c.b16 %v1187, %v1185
      %v1514 = vpack.c.b16 %v1190, %v1188
      %v1515 = vpack.c.b16 %v1191, %v1189
      %v1516 = vpack.c.b16 %v1194, %v1192
      %v1517 = vpack.c.b16 %v1195, %v1193
      %v1518 = vpack.c.b16 %v1198, %v1196
      %v1519 = vpack.c.b16 %v1199, %v1197
      %v1520 = vpack.c.b16 %v1202, %v1200
      %v1521 = vpack.c.b16 %v1203, %v1201
      %v1522 = vpack.c.b16 %v1206, %v1204
      %v1523 = vpack.c.b16 %v1207, %v1205
      %v1524 = vpack.c.b16 %v1210, %v1208
      %v1525 = vpack.c.b16 %v1211, %v1209
      %v1526 = vpack.c.b16 %v1214, %v1212
      %v1527 = vpack.c.b16 %v1215, %v1213
      %v1528 = vpack.c.b16 %v1218, %v1216
      %v1529 = vpack.c.b16 %v1219, %v1217
      %v1530 = vpack.c.b16 %v1222, %v1220
      %v1531 = vpack.c.b16 %v1223, %v1221
      %v1532 = vpack.c.b16 %v1226, %v1224
      %v1533 = vpack.c.b16 %v1227, %v1225
      %v1534 = vpack.c.b16 %v1230, %v1228
      %v1535 = vpack.c.b16 %v1231, %v1229
      %v1536 = vpack.c.b16 %v1234, %v1232
      %v1537 = vpack.c.b16 %v1235, %v1233
      %v1538 = vpack.c.b16 %v1238, %v1236
      %v1539 = vpack.c.b16 %v1239, %v1237
      %v1540 = vpack.c.b16 %v1242, %v1240
      %v1541 = vpack.c.b16 %v1243, %v1241
      %v1542 = vpack.c.b16 %v1246, %v1244
      %v1543 = vpack.c.b16 %v1247, %v1245
      %v1544 = vpack.c.b16 %v1250, %v1248
      %v1545 = vpack.c.b16 %v1251, %v1249
      %v1546 = vpack.c.b16 %v1254, %v1252
      %v1547 = vpack.c.b16 %v1255, %v1253
      %v1548 = vpack.c.b16 %v1258, %v1256
      %v1549 = vpack.c.b16 %v1259, %v1257
      %v1550 = vpack.c.b16 %v1262, %v1260
      %v1551 = vpack.c.b16 %v1263, %v1261
      %v1552 = vpack.c.b16 %v1266, %v1264
      %v1553 = vpack.c.b16 %v1267, %v1265
      %v1554 = vpack.c.b16 %v1270, %v1268
      %v1555 = vpack.c.b16 %v1271, %v1269
      %v1556 = vpack.c.b16 %v1274, %v1272
      %v1557 = vpack.c.b16 %v1275, %v1273
      %v1558 = vpack.c.b16 %v1278, %v1276
      %v1559 = vpack.c.b16 %v1279, %v1277
      %v1560 = vpack.c.b16 %v1282, %v1280
      %v1561 = vpack.c.b16 %v1283, %v1281
      %v1562 = vpack.c.b16 %v1286, %v1284
      %v1563 = vpack.c.b16 %v1287, %v1285
      %v1564 = vpack.c.b16 %v1290, %v1288
      %v1565 = vpack.c.b16 %v1291, %v1289
      %v1566 = vpack.c.b16 %v1294, %v1292
      %v1567 = vpack.c.b16 %v1295, %v1293
      %v1568 = vpack.c.b16 %v1298, %v1296
      %v1569 = vpack.c.b16 %v1299, %v1297
      %v1570 = vpack.c.b16 %v1302, %v1300
      %v1571 = vpack.c.b16 %v1303, %v1301
      %v1572 = vpack.c.b16 %v1306, %v1304
      %v1573 = vpack.c.b16 %v1307, %v1305
      %v1574 = vpack.c.b16 %v1310, %v1308
      %v1575 = vpack.c.b16 %v1311, %v1309
      %v1576 = vpack.c.b16 %v1314, %v1312
      %v1577 = vpack.c.b16 %v1315, %v1313
      %v1578 = vpack.c.b16 %v1318, %v1316
      %v1579 = vpack.c.b16 %v1319, %v1317
      %v1580 = vpack.c.b16 %v1322, %v1320
      %v1581 = vpack.c.b16 %v1323, %v1321
      %v1582 = vpack.c.b16 %v1326, %v1324
      %v1583 = vpack.c.b16 %v1327, %v1325
      %v1730 = vunpack.c.l.b16 %v542
      %v1731 = vunpack.c.h.b16 %v542
      %v1732 = vunpack.c.l.b16 %v543
      %v1733 = vunpack.c.h.b16 %v543
      %v1734 = vunpack.c.l.b16 %v544
      %v1735 = vunpack.c.h.b16 %v544
      %v1736 = vunpack.c.l.b16 %v545
      %v1737 = vunpack.c.h.b16 %v545
      %v1738 = vunpack.c.l.b16 %v546
      %v1739 = vunpack.c.h.b16 %v546
      %v1740 = vunpack.c.l.b16 %v547
      %v1741 = vunpack.c.h.b16 %v547
      %v1742 = vunpack.c.l.b16 %v548
      %v1743 = vunpack.c.h.b16 %v548
      %v1744 = vunpack.c.l.b16 %v549
      %v1745 = vunpack.c.h.b16 %v549
      %v1746 = vunpack.c.l.b16 %v550
      %v1747 = vunpack.c.h.b16 %v550
      %v1748 = vunpack.c.l.b16 %v551
      %v1749 = vunpack.c.h.b16 %v551
      %v1750 = vunpack.c.l.b16 %v552
      %v1751 = vunpack.c.h.b16 %v552
      %v1752 = vunpack.c.l.b16 %v553
      %v1753 = vunpack.c.h.b16 %v553
      %v1754 = vunpack.c.l.b16 %v554
      %v1755 = vunpack.c.h.b16 %v554
      %v1756 = vunpack.c.l.b16 %v555
      %v1757 = vunpack.c.h.b16 %v555
      %v1758 = vunpack.c.l.b16 %v556
      %v1759 = vunpack.c.h.b16 %v556
      %v1760 = vunpack.c.l.b16 %v557
      %v1761 = vunpack.c.h.b16 %v557
      %v1762 = vunpack.c.l.b16 %v558
      %v1763 = vunpack.c.h.b16 %v558
      %v1764 = vunpack.c.l.b16 %v559
      %v1765 = vunpack.c.h.b16 %v559
      %v1766 = vpack.c.b16 %v1732, %v1730
      %v1767 = vpack.c.b16 %v1733, %v1731
      %v1768 = vpack.c.b16 %v1736, %v1734
      %v1769 = vpack.c.b16 %v1737, %v1735
      %v1770 = vpack.c.b16 %v1740, %v1738
      %v1771 = vpack.c.b16 %v1741, %v1739
      %v1772 = vpack.c.b16 %v1744, %v1742
      %v1773 = vpack.c.b16 %v1745, %v1743
      %v1774 = vpack.c.b16 %v1748, %v1746
      %v1775 = vpack.c.b16 %v1749, %v1747
      %v1776 = vpack.c.b16 %v1752, %v1750
      %v1777 = vpack.c.b16 %v1753, %v1751
      %v1778 = vpack.c.b16 %v1756, %v1754
      %v1779 = vpack.c.b16 %v1757, %v1755
      %v1780 = vpack.c.b16 %v1760, %v1758
      %v1781 = vpack.c.b16 %v1761, %v1759
      %v1782 = vpack.c.b16 %v1764, %v1762
      %v1783 = vpack.c.b16 %v1765, %v1763
      %vm1800 = vcmask 97280
      %v1802 = vsel %vm1800, %v1329, 0
      %v1805 = vsel %vm1800, %v1331, 0
      %v1808 = vsel %vm1800, %v1333, 0
      %v1811 = vsel %vm1800, %v1335, 0
      %v1814 = vsel %vm1800, %v1337, 0
      %v1817 = vsel %vm1800, %v1339, 0
      %v1820 = vsel %vm1800, %v1341, 0
      %v1823 = vsel %vm1800, %v1343, 0
      %v1826 = vsel %vm1800, %v1345, 0
      %v1829 = vsel %vm1800, %v1347, 0
      %v1832 = vsel %vm1800, %v1349, 0
      %v1835 = vsel %vm1800, %v1351, 0
      %v1838 = vsel %vm1800, %v1353, 0
      %v1841 = vsel %vm1800, %v1355, 0
      %v1844 = vsel %vm1800, %v1357, 0
      %v1847 = vsel %vm1800, %v1359, 0
      %v1850 = vsel %vm1800, %v1361, 0
      %v1853 = vsel %vm1800, %v1363, 0
      %v1856 = vsel %vm1800, %v1365, 0
      %v1859 = vsel %vm1800, %v1367, 0
      %v1862 = vsel %vm1800, %v1369, 0
      %v1865 = vsel %vm1800, %v1371, 0
      %v1868 = vsel %vm1800, %v1373, 0
      %v1871 = vsel %vm1800, %v1375, 0
      %v1874 = vsel %vm1800, %v1377, 0
      %v1877 = vsel %vm1800, %v1379, 0
      %v1880 = vsel %vm1800, %v1381, 0
      %v1883 = vsel %vm1800, %v1383, 0
      %v1886 = vsel %vm1800, %v1385, 0
      %v1889 = vsel %vm1800, %v1387, 0
      %v1892 = vsel %vm1800, %v1389, 0
      %v1895 = vsel %vm1800, %v1391, 0
      %v1898 = vsel %vm1800, %v1393, 0
      %v1901 = vsel %vm1800, %v1395, 0
      %v1904 = vsel %vm1800, %v1397, 0
      %v1907 = vsel %vm1800, %v1399, 0
      %v1910 = vsel %vm1800, %v1401, 0
      %v1913 = vsel %vm1800, %v1403, 0
      %v1916 = vsel %vm1800, %v1405, 0
      %v1919 = vsel %vm1800, %v1407, 0
      %v1922 = vsel %vm1800, %v1409, 0
      %v1925 = vsel %vm1800, %v1411, 0
      %v1928 = vsel %vm1800, %v1413, 0
      %v1931 = vsel %vm1800, %v1415, 0
      %v1934 = vsel %vm1800, %v1417, 0
      %v1937 = vsel %vm1800, %v1419, 0
      %v1940 = vsel %vm1800, %v1421, 0
      %v1943 = vsel %vm1800, %v1423, 0
      %v1946 = vsel %vm1800, %v1425, 0
      %v1949 = vsel %vm1800, %v1427, 0
      %v1952 = vsel %vm1800, %v1429, 0
      %v1955 = vsel %vm1800, %v1431, 0
      %v1958 = vsel %vm1800, %v1433, 0
      %v1961 = vsel %vm1800, %v1435, 0
      %v1964 = vsel %vm1800, %v1437, 0
      %v1967 = vsel %vm1800, %v1439, 0
      %v1970 = vsel %vm1800, %v1441, 0
      %v1973 = vsel %vm1800, %v1443, 0
      %v1976 = vsel %vm1800, %v1445, 0
      %v1979 = vsel %vm1800, %v1447, 0
      %v1982 = vsel %vm1800, %v1449, 0
      %v1985 = vsel %vm1800, %v1451, 0
      %v1988 = vsel %vm1800, %v1453, 0
      %v1991 = vsel %vm1800, %v1455, 0
      %v1994 = vsel %vm1800, %v1457, 0
      %v1997 = vsel %vm1800, %v1459, 0
      %v2000 = vsel %vm1800, %v1461, 0
      %v2003 = vsel %vm1800, %v1463, 0
      %v2006 = vsel %vm1800, %v1465, 0
      %v2009 = vsel %vm1800, %v1467, 0
      %v2012 = vsel %vm1800, %v1469, 0
      %v2015 = vsel %vm1800, %v1471, 0
      %v2018 = vsel %vm1800, %v1473, 0
      %v2021 = vsel %vm1800, %v1475, 0
      %v2024 = vsel %vm1800, %v1477, 0
      %v2027 = vsel %vm1800, %v1479, 0
      %v2030 = vsel %vm1800, %v1481, 0
      %v2033 = vsel %vm1800, %v1483, 0
      %v2036 = vsel %vm1800, %v1485, 0
      %v2039 = vsel %vm1800, %v1487, 0
      %v2042 = vsel %vm1800, %v1489, 0
      %v2045 = vsel %vm1800, %v1491, 0
      %v2048 = vsel %vm1800, %v1493, 0
      %v2051 = vsel %vm1800, %v1495, 0
      %v2054 = vsel %vm1800, %v1497, 0
      %v2057 = vsel %vm1800, %v1499, 0
      %v2060 = vsel %vm1800, %v1501, 0
      %v2063 = vsel %vm1800, %v1503, 0
      %v2066 = vsel %vm1800, %v1505, 0
      %v2069 = vsel %vm1800, %v1507, 0
      %v2072 = vsel %vm1800, %v1509, 0
      %v2075 = vsel %vm1800, %v1511, 0
      %v2078 = vsel %vm1800, %v1513, 0
      %v2081 = vsel %vm1800, %v1515, 0
      %v2084 = vsel %vm1800, %v1517, 0
      %v2087 = vsel %vm1800, %v1519, 0
      %v2090 = vsel %vm1800, %v1521, 0
      %v2093 = vsel %vm1800, %v1523, 0
      %v2096 = vsel %vm1800, %v1525, 0
      %v2099 = vsel %vm1800, %v1527, 0
      %v2102 = vsel %vm1800, %v1529, 0
      %v2105 = vsel %vm1800, %v1531, 0
      %v2108 = vsel %vm1800, %v1533, 0
      %v2111 = vsel %vm1800, %v1535, 0
      %v2114 = vsel %vm1800, %v1537, 0
      %v2117 = vsel %vm1800, %v1539, 0
      %v2120 = vsel %vm1800, %v1541, 0
      %v2123 = vsel %vm1800, %v1543, 0
      %v2126 = vsel %vm1800, %v1545, 0
      %v2129 = vsel %vm1800, %v1547, 0
      %v2132 = vsel %vm1800, %v1549, 0
      %v2135 = vsel %vm1800, %v1551, 0
      %v2138 = vsel %vm1800, %v1553, 0
      %v2141 = vsel %vm1800, %v1555, 0
      %v2144 = vsel %vm1800, %v1557, 0
      %v2147 = vsel %vm1800, %v1559, 0
      %v2150 = vsel %vm1800, %v1561, 0
      %v2153 = vsel %vm1800, %v1563, 0
      %v2156 = vsel %vm1800, %v1565, 0
      %v2159 = vsel %vm1800, %v1567, 0
      %v2162 = vsel %vm1800, %v1569, 0
      %v2165 = vsel %vm1800, %v1571, 0
      %v2168 = vsel %vm1800, %v1573, 0
      %v2171 = vsel %vm1800, %v1575, 0
      %v2174 = vsel %vm1800, %v1577, 0
      %v2177 = vsel %vm1800, %v1579, 0
      %v2180 = vsel %vm1800, %v1581, 0
      %v2183 = vsel %vm1800, %v1583, 0
      %vm2185 = vcmask 1045504
      %v2187 = vsel %vm2185, %v1782, 0
      %v2190 = vsel %vm2185, %v1783, 0
      %2192 = vmatprep.subr.bf16.mxu0 %v1781
      %2193 = vmatpush1.bf16.msra.mxu0 %v1780
      %2194 = vmatprep.subr.bf16.mxu0 %v1779
      %2195 = vmatpush1.bf16.msra.mxu0 %v1778
      %2196 = vmatprep.subr.bf16.mxu0 %v1777
      %2197 = vmatpush1.bf16.msra.mxu0 %v1776
      %2198 = vmatprep.subr.bf16.mxu0 %v1775
      %2199 = vmatpush1.bf16.msra.mxu0 %v1774
      %2200 = vmatprep.subr.bf16.mxu0 %v1773
      %2201 = vmatpush1.bf16.msra.mxu0 %v1772
      %2202 = vmatprep.subr.bf16.mxu0 %v1771
      %2203 = vmatpush1.bf16.msra.mxu0 %v1770
      %2204 = vmatprep.subr.bf16.mxu0 %v1769
      %2205 = vmatpush1.bf16.msra.mxu0 %v1768
      %2206 = vmatprep.subr.bf16.mxu0 %v1767
      %2207 = vmatpush1.bf16.msra.mxu0 %v1766
      %2208 = vmatprep.subr.bf16.mxu0 0
      %2209 = vmatpush2.bf16.msra.mxu0 0
      %2210 = vmatprep.subr.bf16.mxu0 0
      %2211 = vmatpush2.bf16.msra.mxu0 0
      %2212 = vmatprep.subr.bf16.mxu0 0
      %2213 = vmatpush2.bf16.msra.mxu0 0
      %2214 = vmatprep.subr.bf16.mxu0 0
      %2215 = vmatpush2.bf16.msra.mxu0 0
      %2216 = vmatprep.subr.bf16.mxu0 0
      %2217 = vmatpush2.bf16.msra.mxu0 0
      %2218 = vmatprep.subr.bf16.mxu0 0
      %2219 = vmatpush2.bf16.msra.mxu0 0
      %2220 = vmatprep.subr.bf16.mxu0 0
      %2221 = vmatpush2.bf16.msra.mxu0 0
      %2222 = vmatprep.subr.bf16.mxu0 %v2190
      %2223 = vmatpush2.bf16.msra.mxu0 %v2187
      %2224 = vmatprep.mubr.bf16.mxu0 %v1802
      %2225 = vmatmul.mubr.bf16.gmra.mxu0 %v1328
      %v2226 = vpop.f32.mrf.mxu0
      %v2227 = vadd.f32 0.0, %v2226
      %v2228 = vpop.f32.mrf.mxu0
      %v2229 = vadd.f32 0.0, %v2228
      %v2230 = vpop.f32.mrf.mxu0
      %v2231 = vadd.f32 0.0, %v2230
      %v2232 = vpop.f32.mrf.mxu0
      %v2233 = vadd.f32 0.0, %v2232
      %2234 = vmatprep.mubr.bf16.mxu0 %v1805
      %2235 = vmatmul.mubr.bf16.gmra.mxu0 %v1330
      %v2236 = vpop.f32.mrf.mxu0
      %v2237 = vadd.f32 0.0, %v2236
      %v2238 = vpop.f32.mrf.mxu0
      %v2239 = vadd.f32 0.0, %v2238
      %v2240 = vpop.f32.mrf.mxu0
      %v2241 = vadd.f32 0.0, %v2240
      %v2242 = vpop.f32.mrf.mxu0
      %v2243 = vadd.f32 0.0, %v2242
      %2244 = vmatprep.mubr.bf16.mxu0 %v1808
      %2245 = vmatmul.mubr.bf16.gmra.mxu0 %v1332
      %v2246 = vpop.f32.mrf.mxu0
      %v2247 = vadd.f32 0.0, %v2246
      %v2248 = vpop.f32.mrf.mxu0
      %v2249 = vadd.f32 0.0, %v2248
      %v2250 = vpop.f32.mrf.mxu0
      %v2251 = vadd.f32 0.0, %v2250
      %v2252 = vpop.f32.mrf.mxu0
      %v2253 = vadd.f32 0.0, %v2252
      %2254 = vmatprep.mubr.bf16.mxu0 %v1811
      %2255 = vmatmul.mubr.bf16.gmra.mxu0 %v1334
      %v2256 = vpop.f32.mrf.mxu0
      %v2257 = vadd.f32 0.0, %v2256
      %v2258 = vpop.f32.mrf.mxu0
      %v2259 = vadd.f32 0.0, %v2258
      %v2260 = vpop.f32.mrf.mxu0
      %v2261 = vadd.f32 0.0, %v2260
      %v2262 = vpop.f32.mrf.mxu0
      %v2263 = vadd.f32 0.0, %v2262
      %2264 = vmatprep.mubr.bf16.mxu0 %v1814
      %2265 = vmatmul.mubr.bf16.gmra.mxu0 %v1336
      %v2266 = vpop.f32.mrf.mxu0
      %v2267 = vadd.f32 0.0, %v2266
      %v2268 = vpop.f32.mrf.mxu0
      %v2269 = vadd.f32 0.0, %v2268
      %v2270 = vpop.f32.mrf.mxu0
      %v2271 = vadd.f32 0.0, %v2270
      %v2272 = vpop.f32.mrf.mxu0
      %v2273 = vadd.f32 0.0, %v2272
      %2274 = vmatprep.mubr.bf16.mxu0 %v1817
      %2275 = vmatmul.mubr.bf16.gmra.mxu0 %v1338
      %v2276 = vpop.f32.mrf.mxu0
      %v2277 = vadd.f32 0.0, %v2276
      %v2278 = vpop.f32.mrf.mxu0
      %v2279 = vadd.f32 0.0, %v2278
      %v2280 = vpop.f32.mrf.mxu0
      %v2281 = vadd.f32 0.0, %v2280
      %v2282 = vpop.f32.mrf.mxu0
      %v2283 = vadd.f32 0.0, %v2282
      %2284 = vmatprep.mubr.bf16.mxu0 %v1820
      %2285 = vmatmul.mubr.bf16.gmra.mxu0 %v1340
      %v2286 = vpop.f32.mrf.mxu0
      %v2287 = vadd.f32 0.0, %v2286
      %v2288 = vpop.f32.mrf.mxu0
      %v2289 = vadd.f32 0.0, %v2288
      %v2290 = vpop.f32.mrf.mxu0
      %v2291 = vadd.f32 0.0, %v2290
      %v2292 = vpop.f32.mrf.mxu0
      %v2293 = vadd.f32 0.0, %v2292
      %2294 = vmatprep.mubr.bf16.mxu0 %v1823
      %2295 = vmatmul.mubr.bf16.gmra.mxu0 %v1342
      %v2296 = vpop.f32.mrf.mxu0
      %v2297 = vadd.f32 0.0, %v2296
      %v2298 = vpop.f32.mrf.mxu0
      %v2299 = vadd.f32 0.0, %v2298
      %v2300 = vpop.f32.mrf.mxu0
      %v2301 = vadd.f32 0.0, %v2300
      %v2302 = vpop.f32.mrf.mxu0
      %v2303 = vadd.f32 0.0, %v2302
      %2304 = vmatprep.mubr.bf16.mxu0 %v1826
      %2305 = vmatmul.mubr.bf16.gmra.mxu0 %v1344
      %v2306 = vpop.f32.mrf.mxu0
      %v2307 = vadd.f32 0.0, %v2306
      %v2308 = vpop.f32.mrf.mxu0
      %v2309 = vadd.f32 0.0, %v2308
      %v2310 = vpop.f32.mrf.mxu0
      %v2311 = vadd.f32 0.0, %v2310
      %v2312 = vpop.f32.mrf.mxu0
      %v2313 = vadd.f32 0.0, %v2312
      %2314 = vmatprep.mubr.bf16.mxu0 %v1829
      %2315 = vmatmul.mubr.bf16.gmra.mxu0 %v1346
      %v2316 = vpop.f32.mrf.mxu0
      %v2317 = vadd.f32 0.0, %v2316
      %v2318 = vpop.f32.mrf.mxu0
      %v2319 = vadd.f32 0.0, %v2318
      %v2320 = vpop.f32.mrf.mxu0
      %v2321 = vadd.f32 0.0, %v2320
      %v2322 = vpop.f32.mrf.mxu0
      %v2323 = vadd.f32 0.0, %v2322
      %2324 = vmatprep.mubr.bf16.mxu0 %v1832
      %2325 = vmatmul.mubr.bf16.gmra.mxu0 %v1348
      %v2326 = vpop.f32.mrf.mxu0
      %v2327 = vadd.f32 0.0, %v2326
      %v2328 = vpop.f32.mrf.mxu0
      %v2329 = vadd.f32 0.0, %v2328
      %v2330 = vpop.f32.mrf.mxu0
      %v2331 = vadd.f32 0.0, %v2330
      %v2332 = vpop.f32.mrf.mxu0
      %v2333 = vadd.f32 0.0, %v2332
      %2334 = vmatprep.mubr.bf16.mxu0 %v1835
      %2335 = vmatmul.mubr.bf16.gmra.mxu0 %v1350
      %v2336 = vpop.f32.mrf.mxu0
      %v2337 = vadd.f32 0.0, %v2336
      %v2338 = vpop.f32.mrf.mxu0
      %v2339 = vadd.f32 0.0, %v2338
      %v2340 = vpop.f32.mrf.mxu0
      %v2341 = vadd.f32 0.0, %v2340
      %v2342 = vpop.f32.mrf.mxu0
      %v2343 = vadd.f32 0.0, %v2342
      %2344 = vmatprep.mubr.bf16.mxu0 %v1838
      %2345 = vmatmul.mubr.bf16.gmra.mxu0 %v1352
      %v2346 = vpop.f32.mrf.mxu0
      %v2347 = vadd.f32 0.0, %v2346
      %v2348 = vpop.f32.mrf.mxu0
      %v2349 = vadd.f32 0.0, %v2348
      %v2350 = vpop.f32.mrf.mxu0
      %v2351 = vadd.f32 0.0, %v2350
      %v2352 = vpop.f32.mrf.mxu0
      %v2353 = vadd.f32 0.0, %v2352
      %2354 = vmatprep.mubr.bf16.mxu0 %v1841
      %2355 = vmatmul.mubr.bf16.gmra.mxu0 %v1354
      %v2356 = vpop.f32.mrf.mxu0
      %v2357 = vadd.f32 0.0, %v2356
      %v2358 = vpop.f32.mrf.mxu0
      %v2359 = vadd.f32 0.0, %v2358
      %v2360 = vpop.f32.mrf.mxu0
      %v2361 = vadd.f32 0.0, %v2360
      %v2362 = vpop.f32.mrf.mxu0
      %v2363 = vadd.f32 0.0, %v2362
      %2364 = vmatprep.mubr.bf16.mxu0 %v1844
      %2365 = vmatmul.mubr.bf16.gmra.mxu0 %v1356
      %v2366 = vpop.f32.mrf.mxu0
      %v2367 = vadd.f32 0.0, %v2366
      %v2368 = vpop.f32.mrf.mxu0
      %v2369 = vadd.f32 0.0, %v2368
      %v2370 = vpop.f32.mrf.mxu0
      %v2371 = vadd.f32 0.0, %v2370
      %v2372 = vpop.f32.mrf.mxu0
      %v2373 = vadd.f32 0.0, %v2372
      %2374 = vmatprep.mubr.bf16.mxu0 %v1847
      %2375 = vmatmul.mubr.bf16.gmra.mxu0 %v1358
      %v2376 = vpop.f32.mrf.mxu0
      %v2377 = vadd.f32 0.0, %v2376
      %v2378 = vpop.f32.mrf.mxu0
      %v2379 = vadd.f32 0.0, %v2378
      %v2380 = vpop.f32.mrf.mxu0
      %v2381 = vadd.f32 0.0, %v2380
      %v2382 = vpop.f32.mrf.mxu0
      %v2383 = vadd.f32 0.0, %v2382
      %2384 = vmatprep.mubr.bf16.mxu0 %v1850
      %2385 = vmatmul.mubr.bf16.gmra.mxu0 %v1360
      %v2386 = vpop.f32.mrf.mxu0
      %v2387 = vadd.f32 0.0, %v2386
      %v2388 = vpop.f32.mrf.mxu0
      %v2389 = vadd.f32 0.0, %v2388
      %v2390 = vpop.f32.mrf.mxu0
      %v2391 = vadd.f32 0.0, %v2390
      %v2392 = vpop.f32.mrf.mxu0
      %v2393 = vadd.f32 0.0, %v2392
      %2394 = vmatprep.mubr.bf16.mxu0 %v1853
      %2395 = vmatmul.mubr.bf16.gmra.mxu0 %v1362
      %v2396 = vpop.f32.mrf.mxu0
      %v2397 = vadd.f32 0.0, %v2396
      %v2398 = vpop.f32.mrf.mxu0
      %v2399 = vadd.f32 0.0, %v2398
      %v2400 = vpop.f32.mrf.mxu0
      %v2401 = vadd.f32 0.0, %v2400
      %v2402 = vpop.f32.mrf.mxu0
      %v2403 = vadd.f32 0.0, %v2402
      %2404 = vmatprep.mubr.bf16.mxu0 %v1856
      %2405 = vmatmul.mubr.bf16.gmra.mxu0 %v1364
      %v2406 = vpop.f32.mrf.mxu0
      %v2407 = vadd.f32 0.0, %v2406
      %v2408 = vpop.f32.mrf.mxu0
      %v2409 = vadd.f32 0.0, %v2408
      %v2410 = vpop.f32.mrf.mxu0
      %v2411 = vadd.f32 0.0, %v2410
      %v2412 = vpop.f32.mrf.mxu0
      %v2413 = vadd.f32 0.0, %v2412
      %2414 = vmatprep.mubr.bf16.mxu0 %v1859
      %2415 = vmatmul.mubr.bf16.gmra.mxu0 %v1366
      %v2416 = vpop.f32.mrf.mxu0
      %v2417 = vadd.f32 0.0, %v2416
      %v2418 = vpop.f32.mrf.mxu0
      %v2419 = vadd.f32 0.0, %v2418
      %v2420 = vpop.f32.mrf.mxu0
      %v2421 = vadd.f32 0.0, %v2420
      %v2422 = vpop.f32.mrf.mxu0
      %v2423 = vadd.f32 0.0, %v2422
      %2424 = vmatprep.mubr.bf16.mxu0 %v1862
      %2425 = vmatmul.mubr.bf16.gmra.mxu0 %v1368
      %v2426 = vpop.f32.mrf.mxu0
      %v2427 = vadd.f32 0.0, %v2426
      %v2428 = vpop.f32.mrf.mxu0
      %v2429 = vadd.f32 0.0, %v2428
      %v2430 = vpop.f32.mrf.mxu0
      %v2431 = vadd.f32 0.0, %v2430
      %v2432 = vpop.f32.mrf.mxu0
      %v2433 = vadd.f32 0.0, %v2432
      %2434 = vmatprep.mubr.bf16.mxu0 %v1865
      %2435 = vmatmul.mubr.bf16.gmra.mxu0 %v1370
      %v2436 = vpop.f32.mrf.mxu0
      %v2437 = vadd.f32 0.0, %v2436
      %v2438 = vpop.f32.mrf.mxu0
      %v2439 = vadd.f32 0.0, %v2438
      %v2440 = vpop.f32.mrf.mxu0
      %v2441 = vadd.f32 0.0, %v2440
      %v2442 = vpop.f32.mrf.mxu0
      %v2443 = vadd.f32 0.0, %v2442
      %2444 = vmatprep.mubr.bf16.mxu0 %v1868
      %2445 = vmatmul.mubr.bf16.gmra.mxu0 %v1372
      %v2446 = vpop.f32.mrf.mxu0
      %v2447 = vadd.f32 0.0, %v2446
      %v2448 = vpop.f32.mrf.mxu0
      %v2449 = vadd.f32 0.0, %v2448
      %v2450 = vpop.f32.mrf.mxu0
      %v2451 = vadd.f32 0.0, %v2450
      %v2452 = vpop.f32.mrf.mxu0
      %v2453 = vadd.f32 0.0, %v2452
      %2454 = vmatprep.mubr.bf16.mxu0 %v1871
      %2455 = vmatmul.mubr.bf16.gmra.mxu0 %v1374
      %v2456 = vpop.f32.mrf.mxu0
      %v2457 = vadd.f32 0.0, %v2456
      %v2458 = vpop.f32.mrf.mxu0
      %v2459 = vadd.f32 0.0, %v2458
      %v2460 = vpop.f32.mrf.mxu0
      %v2461 = vadd.f32 0.0, %v2460
      %v2462 = vpop.f32.mrf.mxu0
      %v2463 = vadd.f32 0.0, %v2462
      %2464 = vmatprep.mubr.bf16.mxu0 %v1874
      %2465 = vmatmul.mubr.bf16.gmra.mxu0 %v1376
      %v2466 = vpop.f32.mrf.mxu0
      %v2467 = vadd.f32 0.0, %v2466
      %v2468 = vpop.f32.mrf.mxu0
      %v2469 = vadd.f32 0.0, %v2468
      %v2470 = vpop.f32.mrf.mxu0
      %v2471 = vadd.f32 0.0, %v2470
      %v2472 = vpop.f32.mrf.mxu0
      %v2473 = vadd.f32 0.0, %v2472
      %2474 = vmatprep.mubr.bf16.mxu0 %v1877
      %2475 = vmatmul.mubr.bf16.gmra.mxu0 %v1378
      %v2476 = vpop.f32.mrf.mxu0
      %v2477 = vadd.f32 0.0, %v2476
      %v2478 = vpop.f32.mrf.mxu0
      %v2479 = vadd.f32 0.0, %v2478
      %v2480 = vpop.f32.mrf.mxu0
      %v2481 = vadd.f32 0.0, %v2480
      %v2482 = vpop.f32.mrf.mxu0
      %v2483 = vadd.f32 0.0, %v2482
      %2484 = vmatprep.mubr.bf16.mxu0 %v1880
      %2485 = vmatmul.mubr.bf16.gmra.mxu0 %v1380
      %v2486 = vpop.f32.mrf.mxu0
      %v2487 = vadd.f32 0.0, %v2486
      %v2488 = vpop.f32.mrf.mxu0
      %v2489 = vadd.f32 0.0, %v2488
      %v2490 = vpop.f32.mrf.mxu0
      %v2491 = vadd.f32 0.0, %v2490
      %v2492 = vpop.f32.mrf.mxu0
      %v2493 = vadd.f32 0.0, %v2492
      %2494 = vmatprep.mubr.bf16.mxu0 %v1883
      %2495 = vmatmul.mubr.bf16.gmra.mxu0 %v1382
      %v2496 = vpop.f32.mrf.mxu0
      %v2497 = vadd.f32 0.0, %v2496
      %v2498 = vpop.f32.mrf.mxu0
      %v2499 = vadd.f32 0.0, %v2498
      %v2500 = vpop.f32.mrf.mxu0
      %v2501 = vadd.f32 0.0, %v2500
      %v2502 = vpop.f32.mrf.mxu0
      %v2503 = vadd.f32 0.0, %v2502
      %2504 = vmatprep.mubr.bf16.mxu0 %v1886
      %2505 = vmatmul.mubr.bf16.gmra.mxu0 %v1384
      %v2506 = vpop.f32.mrf.mxu0
      %v2507 = vadd.f32 0.0, %v2506
      %v2508 = vpop.f32.mrf.mxu0
      %v2509 = vadd.f32 0.0, %v2508
      %v2510 = vpop.f32.mrf.mxu0
      %v2511 = vadd.f32 0.0, %v2510
      %v2512 = vpop.f32.mrf.mxu0
      %v2513 = vadd.f32 0.0, %v2512
      %2514 = vmatprep.mubr.bf16.mxu0 %v1889
      %2515 = vmatmul.mubr.bf16.gmra.mxu0 %v1386
      %v2516 = vpop.f32.mrf.mxu0
      %v2517 = vadd.f32 0.0, %v2516
      %v2518 = vpop.f32.mrf.mxu0
      %v2519 = vadd.f32 0.0, %v2518
      %v2520 = vpop.f32.mrf.mxu0
      %v2521 = vadd.f32 0.0, %v2520
      %v2522 = vpop.f32.mrf.mxu0
      %v2523 = vadd.f32 0.0, %v2522
      %2524 = vmatprep.mubr.bf16.mxu0 %v1892
      %2525 = vmatmul.mubr.bf16.gmra.mxu0 %v1388
      %v2526 = vpop.f32.mrf.mxu0
      %v2527 = vadd.f32 0.0, %v2526
      %v2528 = vpop.f32.mrf.mxu0
      %v2529 = vadd.f32 0.0, %v2528
      %v2530 = vpop.f32.mrf.mxu0
      %v2531 = vadd.f32 0.0, %v2530
      %v2532 = vpop.f32.mrf.mxu0
      %v2533 = vadd.f32 0.0, %v2532
      %2534 = vmatprep.mubr.bf16.mxu0 %v1895
      %2535 = vmatmul.mubr.bf16.gmra.mxu0 %v1390
      %v2536 = vpop.f32.mrf.mxu0
      %v2537 = vadd.f32 0.0, %v2536
      %v2538 = vpop.f32.mrf.mxu0
      %v2539 = vadd.f32 0.0, %v2538
      %v2540 = vpop.f32.mrf.mxu0
      %v2541 = vadd.f32 0.0, %v2540
      %v2542 = vpop.f32.mrf.mxu0
      %v2543 = vadd.f32 0.0, %v2542
      %2544 = vmatprep.mubr.bf16.mxu0 %v1898
      %2545 = vmatmul.mubr.bf16.gmra.mxu0 %v1392
      %v2546 = vpop.f32.mrf.mxu0
      %v2547 = vadd.f32 0.0, %v2546
      %v2548 = vpop.f32.mrf.mxu0
      %v2549 = vadd.f32 0.0, %v2548
      %v2550 = vpop.f32.mrf.mxu0
      %v2551 = vadd.f32 0.0, %v2550
      %v2552 = vpop.f32.mrf.mxu0
      %v2553 = vadd.f32 0.0, %v2552
      %2554 = vmatprep.mubr.bf16.mxu0 %v1901
      %2555 = vmatmul.mubr.bf16.gmra.mxu0 %v1394
      %v2556 = vpop.f32.mrf.mxu0
      %v2557 = vadd.f32 0.0, %v2556
      %v2558 = vpop.f32.mrf.mxu0
      %v2559 = vadd.f32 0.0, %v2558
      %v2560 = vpop.f32.mrf.mxu0
      %v2561 = vadd.f32 0.0, %v2560
      %v2562 = vpop.f32.mrf.mxu0
      %v2563 = vadd.f32 0.0, %v2562
      %2564 = vmatprep.mubr.bf16.mxu0 %v1904
      %2565 = vmatmul.mubr.bf16.gmra.mxu0 %v1396
      %v2566 = vpop.f32.mrf.mxu0
      %v2567 = vadd.f32 0.0, %v2566
      %v2568 = vpop.f32.mrf.mxu0
      %v2569 = vadd.f32 0.0, %v2568
      %v2570 = vpop.f32.mrf.mxu0
      %v2571 = vadd.f32 0.0, %v2570
      %v2572 = vpop.f32.mrf.mxu0
      %v2573 = vadd.f32 0.0, %v2572
      %2574 = vmatprep.mubr.bf16.mxu0 %v1907
      %2575 = vmatmul.mubr.bf16.gmra.mxu0 %v1398
      %v2576 = vpop.f32.mrf.mxu0
      %v2577 = vadd.f32 0.0, %v2576
      %v2578 = vpop.f32.mrf.mxu0
      %v2579 = vadd.f32 0.0, %v2578
      %v2580 = vpop.f32.mrf.mxu0
      %v2581 = vadd.f32 0.0, %v2580
      %v2582 = vpop.f32.mrf.mxu0
      %v2583 = vadd.f32 0.0, %v2582
      %2584 = vmatprep.mubr.bf16.mxu0 %v1910
      %2585 = vmatmul.mubr.bf16.gmra.mxu0 %v1400
      %v2586 = vpop.f32.mrf.mxu0
      %v2587 = vadd.f32 0.0, %v2586
      %v2588 = vpop.f32.mrf.mxu0
      %v2589 = vadd.f32 0.0, %v2588
      %v2590 = vpop.f32.mrf.mxu0
      %v2591 = vadd.f32 0.0, %v2590
      %v2592 = vpop.f32.mrf.mxu0
      %v2593 = vadd.f32 0.0, %v2592
      %2594 = vmatprep.mubr.bf16.mxu0 %v1913
      %2595 = vmatmul.mubr.bf16.gmra.mxu0 %v1402
      %v2596 = vpop.f32.mrf.mxu0
      %v2597 = vadd.f32 0.0, %v2596
      %v2598 = vpop.f32.mrf.mxu0
      %v2599 = vadd.f32 0.0, %v2598
      %v2600 = vpop.f32.mrf.mxu0
      %v2601 = vadd.f32 0.0, %v2600
      %v2602 = vpop.f32.mrf.mxu0
      %v2603 = vadd.f32 0.0, %v2602
      %2604 = vmatprep.mubr.bf16.mxu0 %v1916
      %2605 = vmatmul.mubr.bf16.gmra.mxu0 %v1404
      %v2606 = vpop.f32.mrf.mxu0
      %v2607 = vadd.f32 0.0, %v2606
      %v2608 = vpop.f32.mrf.mxu0
      %v2609 = vadd.f32 0.0, %v2608
      %v2610 = vpop.f32.mrf.mxu0
      %v2611 = vadd.f32 0.0, %v2610
      %v2612 = vpop.f32.mrf.mxu0
      %v2613 = vadd.f32 0.0, %v2612
      %2614 = vmatprep.mubr.bf16.mxu0 %v1919
      %2615 = vmatmul.mubr.bf16.gmra.mxu0 %v1406
      %v2616 = vpop.f32.mrf.mxu0
      %v2617 = vadd.f32 0.0, %v2616
      %v2618 = vpop.f32.mrf.mxu0
      %v2619 = vadd.f32 0.0, %v2618
      %v2620 = vpop.f32.mrf.mxu0
      %v2621 = vadd.f32 0.0, %v2620
      %v2622 = vpop.f32.mrf.mxu0
      %v2623 = vadd.f32 0.0, %v2622
      %2624 = vmatprep.mubr.bf16.mxu0 %v1922
      %2625 = vmatmul.mubr.bf16.gmra.mxu0 %v1408
      %v2626 = vpop.f32.mrf.mxu0
      %v2627 = vadd.f32 0.0, %v2626
      %v2628 = vpop.f32.mrf.mxu0
      %v2629 = vadd.f32 0.0, %v2628
      %v2630 = vpop.f32.mrf.mxu0
      %v2631 = vadd.f32 0.0, %v2630
      %v2632 = vpop.f32.mrf.mxu0
      %v2633 = vadd.f32 0.0, %v2632
      %2634 = vmatprep.mubr.bf16.mxu0 %v1925
      %2635 = vmatmul.mubr.bf16.gmra.mxu0 %v1410
      %v2636 = vpop.f32.mrf.mxu0
      %v2637 = vadd.f32 0.0, %v2636
      %v2638 = vpop.f32.mrf.mxu0
      %v2639 = vadd.f32 0.0, %v2638
      %v2640 = vpop.f32.mrf.mxu0
      %v2641 = vadd.f32 0.0, %v2640
      %v2642 = vpop.f32.mrf.mxu0
      %v2643 = vadd.f32 0.0, %v2642
      %2644 = vmatprep.mubr.bf16.mxu0 %v1928
      %2645 = vmatmul.mubr.bf16.gmra.mxu0 %v1412
      %v2646 = vpop.f32.mrf.mxu0
      %v2647 = vadd.f32 0.0, %v2646
      %v2648 = vpop.f32.mrf.mxu0
      %v2649 = vadd.f32 0.0, %v2648
      %v2650 = vpop.f32.mrf.mxu0
      %v2651 = vadd.f32 0.0, %v2650
      %v2652 = vpop.f32.mrf.mxu0
      %v2653 = vadd.f32 0.0, %v2652
      %2654 = vmatprep.mubr.bf16.mxu0 %v1931
      %2655 = vmatmul.mubr.bf16.gmra.mxu0 %v1414
      %v2656 = vpop.f32.mrf.mxu0
      %v2657 = vadd.f32 0.0, %v2656
      %v2658 = vpop.f32.mrf.mxu0
      %v2659 = vadd.f32 0.0, %v2658
      %v2660 = vpop.f32.mrf.mxu0
      %v2661 = vadd.f32 0.0, %v2660
      %v2662 = vpop.f32.mrf.mxu0
      %v2663 = vadd.f32 0.0, %v2662
      %2664 = vmatprep.mubr.bf16.mxu0 %v1934
      %2665 = vmatmul.mubr.bf16.gmra.mxu0 %v1416
      %v2666 = vpop.f32.mrf.mxu0
      %v2667 = vadd.f32 0.0, %v2666
      %v2668 = vpop.f32.mrf.mxu0
      %v2669 = vadd.f32 0.0, %v2668
      %v2670 = vpop.f32.mrf.mxu0
      %v2671 = vadd.f32 0.0, %v2670
      %v2672 = vpop.f32.mrf.mxu0
      %v2673 = vadd.f32 0.0, %v2672
      %2674 = vmatprep.mubr.bf16.mxu0 %v1937
      %2675 = vmatmul.mubr.bf16.gmra.mxu0 %v1418
      %v2676 = vpop.f32.mrf.mxu0
      %v2677 = vadd.f32 0.0, %v2676
      %v2678 = vpop.f32.mrf.mxu0
      %v2679 = vadd.f32 0.0, %v2678
      %v2680 = vpop.f32.mrf.mxu0
      %v2681 = vadd.f32 0.0, %v2680
      %v2682 = vpop.f32.mrf.mxu0
      %v2683 = vadd.f32 0.0, %v2682
      %2684 = vmatprep.mubr.bf16.mxu0 %v1940
      %2685 = vmatmul.mubr.bf16.gmra.mxu0 %v1420
      %v2686 = vpop.f32.mrf.mxu0
      %v2687 = vadd.f32 0.0, %v2686
      %v2688 = vpop.f32.mrf.mxu0
      %v2689 = vadd.f32 0.0, %v2688
      %v2690 = vpop.f32.mrf.mxu0
      %v2691 = vadd.f32 0.0, %v2690
      %v2692 = vpop.f32.mrf.mxu0
      %v2693 = vadd.f32 0.0, %v2692
      %2694 = vmatprep.mubr.bf16.mxu0 %v1943
      %2695 = vmatmul.mubr.bf16.gmra.mxu0 %v1422
      %v2696 = vpop.f32.mrf.mxu0
      %v2697 = vadd.f32 0.0, %v2696
      %v2698 = vpop.f32.mrf.mxu0
      %v2699 = vadd.f32 0.0, %v2698
      %v2700 = vpop.f32.mrf.mxu0
      %v2701 = vadd.f32 0.0, %v2700
      %v2702 = vpop.f32.mrf.mxu0
      %v2703 = vadd.f32 0.0, %v2702
      %2704 = vmatprep.mubr.bf16.mxu0 %v1946
      %2705 = vmatmul.mubr.bf16.gmra.mxu0 %v1424
      %v2706 = vpop.f32.mrf.mxu0
      %v2707 = vadd.f32 0.0, %v2706
      %v2708 = vpop.f32.mrf.mxu0
      %v2709 = vadd.f32 0.0, %v2708
      %v2710 = vpop.f32.mrf.mxu0
      %v2711 = vadd.f32 0.0, %v2710
      %v2712 = vpop.f32.mrf.mxu0
      %v2713 = vadd.f32 0.0, %v2712
      %2714 = vmatprep.mubr.bf16.mxu0 %v1949
      %2715 = vmatmul.mubr.bf16.gmra.mxu0 %v1426
      %v2716 = vpop.f32.mrf.mxu0
      %v2717 = vadd.f32 0.0, %v2716
      %v2718 = vpop.f32.mrf.mxu0
      %v2719 = vadd.f32 0.0, %v2718
      %v2720 = vpop.f32.mrf.mxu0
      %v2721 = vadd.f32 0.0, %v2720
      %v2722 = vpop.f32.mrf.mxu0
      %v2723 = vadd.f32 0.0, %v2722
      %2724 = vmatprep.mubr.bf16.mxu0 %v1952
      %2725 = vmatmul.mubr.bf16.gmra.mxu0 %v1428
      %v2726 = vpop.f32.mrf.mxu0
      %v2727 = vadd.f32 0.0, %v2726
      %v2728 = vpop.f32.mrf.mxu0
      %v2729 = vadd.f32 0.0, %v2728
      %v2730 = vpop.f32.mrf.mxu0
      %v2731 = vadd.f32 0.0, %v2730
      %v2732 = vpop.f32.mrf.mxu0
      %v2733 = vadd.f32 0.0, %v2732
      %2734 = vmatprep.mubr.bf16.mxu0 %v1955
      %2735 = vmatmul.mubr.bf16.gmra.mxu0 %v1430
      %v2736 = vpop.f32.mrf.mxu0
      %v2737 = vadd.f32 0.0, %v2736
      %v2738 = vpop.f32.mrf.mxu0
      %v2739 = vadd.f32 0.0, %v2738
      %v2740 = vpop.f32.mrf.mxu0
      %v2741 = vadd.f32 0.0, %v2740
      %v2742 = vpop.f32.mrf.mxu0
      %v2743 = vadd.f32 0.0, %v2742
      %2744 = vmatprep.mubr.bf16.mxu0 %v1958
      %2745 = vmatmul.mubr.bf16.gmra.mxu0 %v1432
      %v2746 = vpop.f32.mrf.mxu0
      %v2747 = vadd.f32 0.0, %v2746
      %v2748 = vpop.f32.mrf.mxu0
      %v2749 = vadd.f32 0.0, %v2748
      %v2750 = vpop.f32.mrf.mxu0
      %v2751 = vadd.f32 0.0, %v2750
      %v2752 = vpop.f32.mrf.mxu0
      %v2753 = vadd.f32 0.0, %v2752
      %2754 = vmatprep.mubr.bf16.mxu0 %v1961
      %2755 = vmatmul.mubr.bf16.gmra.mxu0 %v1434
      %v2756 = vpop.f32.mrf.mxu0
      %v2757 = vadd.f32 0.0, %v2756
      %v2758 = vpop.f32.mrf.mxu0
      %v2759 = vadd.f32 0.0, %v2758
      %v2760 = vpop.f32.mrf.mxu0
      %v2761 = vadd.f32 0.0, %v2760
      %v2762 = vpop.f32.mrf.mxu0
      %v2763 = vadd.f32 0.0, %v2762
      %2764 = vmatprep.mubr.bf16.mxu0 %v1964
      %2765 = vmatmul.mubr.bf16.gmra.mxu0 %v1436
      %v2766 = vpop.f32.mrf.mxu0
      %v2767 = vadd.f32 0.0, %v2766
      %v2768 = vpop.f32.mrf.mxu0
      %v2769 = vadd.f32 0.0, %v2768
      %v2770 = vpop.f32.mrf.mxu0
      %v2771 = vadd.f32 0.0, %v2770
      %v2772 = vpop.f32.mrf.mxu0
      %v2773 = vadd.f32 0.0, %v2772
      %2774 = vmatprep.mubr.bf16.mxu0 %v1967
      %2775 = vmatmul.mubr.bf16.gmra.mxu0 %v1438
      %v2776 = vpop.f32.mrf.mxu0
      %v2777 = vadd.f32 0.0, %v2776
      %v2778 = vpop.f32.mrf.mxu0
      %v2779 = vadd.f32 0.0, %v2778
      %v2780 = vpop.f32.mrf.mxu0
      %v2781 = vadd.f32 0.0, %v2780
      %v2782 = vpop.f32.mrf.mxu0
      %v2783 = vadd.f32 0.0, %v2782
      %2784 = vmatprep.mubr.bf16.mxu0 %v1970
      %2785 = vmatmul.mubr.bf16.gmra.mxu0 %v1440
      %v2786 = vpop.f32.mrf.mxu0
      %v2787 = vadd.f32 0.0, %v2786
      %v2788 = vpop.f32.mrf.mxu0
      %v2789 = vadd.f32 0.0, %v2788
      %v2790 = vpop.f32.mrf.mxu0
      %v2791 = vadd.f32 0.0, %v2790
      %v2792 = vpop.f32.mrf.mxu0
      %v2793 = vadd.f32 0.0, %v2792
      %2794 = vmatprep.mubr.bf16.mxu0 %v1973
      %2795 = vmatmul.mubr.bf16.gmra.mxu0 %v1442
      %v2796 = vpop.f32.mrf.mxu0
      %v2797 = vadd.f32 0.0, %v2796
      %v2798 = vpop.f32.mrf.mxu0
      %v2799 = vadd.f32 0.0, %v2798
      %v2800 = vpop.f32.mrf.mxu0
      %v2801 = vadd.f32 0.0, %v2800
      %v2802 = vpop.f32.mrf.mxu0
      %v2803 = vadd.f32 0.0, %v2802
      %2804 = vmatprep.mubr.bf16.mxu0 %v1976
      %2805 = vmatmul.mubr.bf16.gmra.mxu0 %v1444
      %v2806 = vpop.f32.mrf.mxu0
      %v2807 = vadd.f32 0.0, %v2806
      %v2808 = vpop.f32.mrf.mxu0
      %v2809 = vadd.f32 0.0, %v2808
      %v2810 = vpop.f32.mrf.mxu0
      %v2811 = vadd.f32 0.0, %v2810
      %v2812 = vpop.f32.mrf.mxu0
      %v2813 = vadd.f32 0.0, %v2812
      %2814 = vmatprep.mubr.bf16.mxu0 %v1979
      %2815 = vmatmul.mubr.bf16.gmra.mxu0 %v1446
      %v2816 = vpop.f32.mrf.mxu0
      %v2817 = vadd.f32 0.0, %v2816
      %v2818 = vpop.f32.mrf.mxu0
      %v2819 = vadd.f32 0.0, %v2818
      %v2820 = vpop.f32.mrf.mxu0
      %v2821 = vadd.f32 0.0, %v2820
      %v2822 = vpop.f32.mrf.mxu0
      %v2823 = vadd.f32 0.0, %v2822
      %2824 = vmatprep.mubr.bf16.mxu0 %v1982
      %2825 = vmatmul.mubr.bf16.gmra.mxu0 %v1448
      %v2826 = vpop.f32.mrf.mxu0
      %v2827 = vadd.f32 0.0, %v2826
      %v2828 = vpop.f32.mrf.mxu0
      %v2829 = vadd.f32 0.0, %v2828
      %v2830 = vpop.f32.mrf.mxu0
      %v2831 = vadd.f32 0.0, %v2830
      %v2832 = vpop.f32.mrf.mxu0
      %v2833 = vadd.f32 0.0, %v2832
      %2834 = vmatprep.mubr.bf16.mxu0 %v1985
      %2835 = vmatmul.mubr.bf16.gmra.mxu0 %v1450
      %v2836 = vpop.f32.mrf.mxu0
      %v2837 = vadd.f32 0.0, %v2836
      %v2838 = vpop.f32.mrf.mxu0
      %v2839 = vadd.f32 0.0, %v2838
      %v2840 = vpop.f32.mrf.mxu0
      %v2841 = vadd.f32 0.0, %v2840
      %v2842 = vpop.f32.mrf.mxu0
      %v2843 = vadd.f32 0.0, %v2842
      %2844 = vmatprep.mubr.bf16.mxu0 %v1988
      %2845 = vmatmul.mubr.bf16.gmra.mxu0 %v1452
      %v2846 = vpop.f32.mrf.mxu0
      %v2847 = vadd.f32 0.0, %v2846
      %v2848 = vpop.f32.mrf.mxu0
      %v2849 = vadd.f32 0.0, %v2848
      %v2850 = vpop.f32.mrf.mxu0
      %v2851 = vadd.f32 0.0, %v2850
      %v2852 = vpop.f32.mrf.mxu0
      %v2853 = vadd.f32 0.0, %v2852
      %2854 = vmatprep.mubr.bf16.mxu0 %v1991
      %2855 = vmatmul.mubr.bf16.gmra.mxu0 %v1454
      %v2856 = vpop.f32.mrf.mxu0
      %v2857 = vadd.f32 0.0, %v2856
      %v2858 = vpop.f32.mrf.mxu0
      %v2859 = vadd.f32 0.0, %v2858
      %v2860 = vpop.f32.mrf.mxu0
      %v2861 = vadd.f32 0.0, %v2860
      %v2862 = vpop.f32.mrf.mxu0
      %v2863 = vadd.f32 0.0, %v2862
      %2864 = vmatprep.mubr.bf16.mxu0 %v1994
      %2865 = vmatmul.mubr.bf16.gmra.mxu0 %v1456
      %v2866 = vpop.f32.mrf.mxu0
      %v2867 = vadd.f32 0.0, %v2866
      %v2868 = vpop.f32.mrf.mxu0
      %v2869 = vadd.f32 0.0, %v2868
      %v2870 = vpop.f32.mrf.mxu0
      %v2871 = vadd.f32 0.0, %v2870
      %v2872 = vpop.f32.mrf.mxu0
      %v2873 = vadd.f32 0.0, %v2872
      %2874 = vmatprep.mubr.bf16.mxu0 %v1997
      %2875 = vmatmul.mubr.bf16.gmra.mxu0 %v1458
      %v2876 = vpop.f32.mrf.mxu0
      %v2877 = vadd.f32 0.0, %v2876
      %v2878 = vpop.f32.mrf.mxu0
      %v2879 = vadd.f32 0.0, %v2878
      %v2880 = vpop.f32.mrf.mxu0
      %v2881 = vadd.f32 0.0, %v2880
      %v2882 = vpop.f32.mrf.mxu0
      %v2883 = vadd.f32 0.0, %v2882
      %2884 = vmatprep.mubr.bf16.mxu0 %v2000
      %2885 = vmatmul.mubr.bf16.gmra.mxu0 %v1460
      %v2886 = vpop.f32.mrf.mxu0
      %v2887 = vadd.f32 0.0, %v2886
      %v2888 = vpop.f32.mrf.mxu0
      %v2889 = vadd.f32 0.0, %v2888
      %v2890 = vpop.f32.mrf.mxu0
      %v2891 = vadd.f32 0.0, %v2890
      %v2892 = vpop.f32.mrf.mxu0
      %v2893 = vadd.f32 0.0, %v2892
      %2894 = vmatprep.mubr.bf16.mxu0 %v2003
      %2895 = vmatmul.mubr.bf16.gmra.mxu0 %v1462
      %v2896 = vpop.f32.mrf.mxu0
      %v2897 = vadd.f32 0.0, %v2896
      %v2898 = vpop.f32.mrf.mxu0
      %v2899 = vadd.f32 0.0, %v2898
      %v2900 = vpop.f32.mrf.mxu0
      %v2901 = vadd.f32 0.0, %v2900
      %v2902 = vpop.f32.mrf.mxu0
      %v2903 = vadd.f32 0.0, %v2902
      %2904 = vmatprep.mubr.bf16.mxu0 %v2006
      %2905 = vmatmul.mubr.bf16.gmra.mxu0 %v1464
      %v2906 = vpop.f32.mrf.mxu0
      %v2907 = vadd.f32 0.0, %v2906
      %v2908 = vpop.f32.mrf.mxu0
      %v2909 = vadd.f32 0.0, %v2908
      %v2910 = vpop.f32.mrf.mxu0
      %v2911 = vadd.f32 0.0, %v2910
      %v2912 = vpop.f32.mrf.mxu0
      %v2913 = vadd.f32 0.0, %v2912
      %2914 = vmatprep.mubr.bf16.mxu0 %v2009
      %2915 = vmatmul.mubr.bf16.gmra.mxu0 %v1466
      %v2916 = vpop.f32.mrf.mxu0
      %v2917 = vadd.f32 0.0, %v2916
      %v2918 = vpop.f32.mrf.mxu0
      %v2919 = vadd.f32 0.0, %v2918
      %v2920 = vpop.f32.mrf.mxu0
      %v2921 = vadd.f32 0.0, %v2920
      %v2922 = vpop.f32.mrf.mxu0
      %v2923 = vadd.f32 0.0, %v2922
      %2924 = vmatprep.mubr.bf16.mxu0 %v2012
      %2925 = vmatmul.mubr.bf16.gmra.mxu0 %v1468
      %v2926 = vpop.f32.mrf.mxu0
      %v2927 = vadd.f32 0.0, %v2926
      %v2928 = vpop.f32.mrf.mxu0
      %v2929 = vadd.f32 0.0, %v2928
      %v2930 = vpop.f32.mrf.mxu0
      %v2931 = vadd.f32 0.0, %v2930
      %v2932 = vpop.f32.mrf.mxu0
      %v2933 = vadd.f32 0.0, %v2932
      %2934 = vmatprep.mubr.bf16.mxu0 %v2015
      %2935 = vmatmul.mubr.bf16.gmra.mxu0 %v1470
      %v2936 = vpop.f32.mrf.mxu0
      %v2937 = vadd.f32 0.0, %v2936
      %v2938 = vpop.f32.mrf.mxu0
      %v2939 = vadd.f32 0.0, %v2938
      %v2940 = vpop.f32.mrf.mxu0
      %v2941 = vadd.f32 0.0, %v2940
      %v2942 = vpop.f32.mrf.mxu0
      %v2943 = vadd.f32 0.0, %v2942
      %2944 = vmatprep.mubr.bf16.mxu0 %v2018
      %2945 = vmatmul.mubr.bf16.gmra.mxu0 %v1472
      %v2946 = vpop.f32.mrf.mxu0
      %v2947 = vadd.f32 0.0, %v2946
      %v2948 = vpop.f32.mrf.mxu0
      %v2949 = vadd.f32 0.0, %v2948
      %v2950 = vpop.f32.mrf.mxu0
      %v2951 = vadd.f32 0.0, %v2950
      %v2952 = vpop.f32.mrf.mxu0
      %v2953 = vadd.f32 0.0, %v2952
      %2954 = vmatprep.mubr.bf16.mxu0 %v2021
      %2955 = vmatmul.mubr.bf16.gmra.mxu0 %v1474
      %v2956 = vpop.f32.mrf.mxu0
      %v2957 = vadd.f32 0.0, %v2956
      %v2958 = vpop.f32.mrf.mxu0
      %v2959 = vadd.f32 0.0, %v2958
      %v2960 = vpop.f32.mrf.mxu0
      %v2961 = vadd.f32 0.0, %v2960
      %v2962 = vpop.f32.mrf.mxu0
      %v2963 = vadd.f32 0.0, %v2962
      %2964 = vmatprep.mubr.bf16.mxu0 %v2024
      %2965 = vmatmul.mubr.bf16.gmra.mxu0 %v1476
      %v2966 = vpop.f32.mrf.mxu0
      %v2967 = vadd.f32 0.0, %v2966
      %v2968 = vpop.f32.mrf.mxu0
      %v2969 = vadd.f32 0.0, %v2968
      %v2970 = vpop.f32.mrf.mxu0
      %v2971 = vadd.f32 0.0, %v2970
      %v2972 = vpop.f32.mrf.mxu0
      %v2973 = vadd.f32 0.0, %v2972
      %2974 = vmatprep.mubr.bf16.mxu0 %v2027
      %2975 = vmatmul.mubr.bf16.gmra.mxu0 %v1478
      %v2976 = vpop.f32.mrf.mxu0
      %v2977 = vadd.f32 0.0, %v2976
      %v2978 = vpop.f32.mrf.mxu0
      %v2979 = vadd.f32 0.0, %v2978
      %v2980 = vpop.f32.mrf.mxu0
      %v2981 = vadd.f32 0.0, %v2980
      %v2982 = vpop.f32.mrf.mxu0
      %v2983 = vadd.f32 0.0, %v2982
      %2984 = vmatprep.mubr.bf16.mxu0 %v2030
      %2985 = vmatmul.mubr.bf16.gmra.mxu0 %v1480
      %v2986 = vpop.f32.mrf.mxu0
      %v2987 = vadd.f32 0.0, %v2986
      %v2988 = vpop.f32.mrf.mxu0
      %v2989 = vadd.f32 0.0, %v2988
      %v2990 = vpop.f32.mrf.mxu0
      %v2991 = vadd.f32 0.0, %v2990
      %v2992 = vpop.f32.mrf.mxu0
      %v2993 = vadd.f32 0.0, %v2992
      %2994 = vmatprep.mubr.bf16.mxu0 %v2033
      %2995 = vmatmul.mubr.bf16.gmra.mxu0 %v1482
      %v2996 = vpop.f32.mrf.mxu0
      %v2997 = vadd.f32 0.0, %v2996
      %v2998 = vpop.f32.mrf.mxu0
      %v2999 = vadd.f32 0.0, %v2998
      %v3000 = vpop.f32.mrf.mxu0
      %v3001 = vadd.f32 0.0, %v3000
      %v3002 = vpop.f32.mrf.mxu0
      %v3003 = vadd.f32 0.0, %v3002
      %3004 = vmatprep.mubr.bf16.mxu0 %v2036
      %3005 = vmatmul.mubr.bf16.gmra.mxu0 %v1484
      %v3006 = vpop.f32.mrf.mxu0
      %v3007 = vadd.f32 0.0, %v3006
      %v3008 = vpop.f32.mrf.mxu0
      %v3009 = vadd.f32 0.0, %v3008
      %v3010 = vpop.f32.mrf.mxu0
      %v3011 = vadd.f32 0.0, %v3010
      %v3012 = vpop.f32.mrf.mxu0
      %v3013 = vadd.f32 0.0, %v3012
      %3014 = vmatprep.mubr.bf16.mxu0 %v2039
      %3015 = vmatmul.mubr.bf16.gmra.mxu0 %v1486
      %v3016 = vpop.f32.mrf.mxu0
      %v3017 = vadd.f32 0.0, %v3016
      %v3018 = vpop.f32.mrf.mxu0
      %v3019 = vadd.f32 0.0, %v3018
      %v3020 = vpop.f32.mrf.mxu0
      %v3021 = vadd.f32 0.0, %v3020
      %v3022 = vpop.f32.mrf.mxu0
      %v3023 = vadd.f32 0.0, %v3022
      %3024 = vmatprep.mubr.bf16.mxu0 %v2042
      %3025 = vmatmul.mubr.bf16.gmra.mxu0 %v1488
      %v3026 = vpop.f32.mrf.mxu0
      %v3027 = vadd.f32 0.0, %v3026
      %v3028 = vpop.f32.mrf.mxu0
      %v3029 = vadd.f32 0.0, %v3028
      %v3030 = vpop.f32.mrf.mxu0
      %v3031 = vadd.f32 0.0, %v3030
      %v3032 = vpop.f32.mrf.mxu0
      %v3033 = vadd.f32 0.0, %v3032
      %3034 = vmatprep.mubr.bf16.mxu0 %v2045
      %3035 = vmatmul.mubr.bf16.gmra.mxu0 %v1490
      %v3036 = vpop.f32.mrf.mxu0
      %v3037 = vadd.f32 0.0, %v3036
      %v3038 = vpop.f32.mrf.mxu0
      %v3039 = vadd.f32 0.0, %v3038
      %v3040 = vpop.f32.mrf.mxu0
      %v3041 = vadd.f32 0.0, %v3040
      %v3042 = vpop.f32.mrf.mxu0
      %v3043 = vadd.f32 0.0, %v3042
      %3044 = vmatprep.mubr.bf16.mxu0 %v2048
      %3045 = vmatmul.mubr.bf16.gmra.mxu0 %v1492
      %v3046 = vpop.f32.mrf.mxu0
      %v3047 = vadd.f32 0.0, %v3046
      %v3048 = vpop.f32.mrf.mxu0
      %v3049 = vadd.f32 0.0, %v3048
      %v3050 = vpop.f32.mrf.mxu0
      %v3051 = vadd.f32 0.0, %v3050
      %v3052 = vpop.f32.mrf.mxu0
      %v3053 = vadd.f32 0.0, %v3052
      %3054 = vmatprep.mubr.bf16.mxu0 %v2051
      %3055 = vmatmul.mubr.bf16.gmra.mxu0 %v1494
      %v3056 = vpop.f32.mrf.mxu0
      %v3057 = vadd.f32 0.0, %v3056
      %v3058 = vpop.f32.mrf.mxu0
      %v3059 = vadd.f32 0.0, %v3058
      %v3060 = vpop.f32.mrf.mxu0
      %v3061 = vadd.f32 0.0, %v3060
      %v3062 = vpop.f32.mrf.mxu0
      %v3063 = vadd.f32 0.0, %v3062
      %3064 = vmatprep.mubr.bf16.mxu0 %v2054
      %3065 = vmatmul.mubr.bf16.gmra.mxu0 %v1496
      %v3066 = vpop.f32.mrf.mxu0
      %v3067 = vadd.f32 0.0, %v3066
      %v3068 = vpop.f32.mrf.mxu0
      %v3069 = vadd.f32 0.0, %v3068
      %v3070 = vpop.f32.mrf.mxu0
      %v3071 = vadd.f32 0.0, %v3070
      %v3072 = vpop.f32.mrf.mxu0
      %v3073 = vadd.f32 0.0, %v3072
      %3074 = vmatprep.mubr.bf16.mxu0 %v2057
      %3075 = vmatmul.mubr.bf16.gmra.mxu0 %v1498
      %v3076 = vpop.f32.mrf.mxu0
      %v3077 = vadd.f32 0.0, %v3076
      %v3078 = vpop.f32.mrf.mxu0
      %v3079 = vadd.f32 0.0, %v3078
      %v3080 = vpop.f32.mrf.mxu0
      %v3081 = vadd.f32 0.0, %v3080
      %v3082 = vpop.f32.mrf.mxu0
      %v3083 = vadd.f32 0.0, %v3082
      %3084 = vmatprep.mubr.bf16.mxu0 %v2060
      %3085 = vmatmul.mubr.bf16.gmra.mxu0 %v1500
      %v3086 = vpop.f32.mrf.mxu0
      %v3087 = vadd.f32 0.0, %v3086
      %v3088 = vpop.f32.mrf.mxu0
      %v3089 = vadd.f32 0.0, %v3088
      %v3090 = vpop.f32.mrf.mxu0
      %v3091 = vadd.f32 0.0, %v3090
      %v3092 = vpop.f32.mrf.mxu0
      %v3093 = vadd.f32 0.0, %v3092
      %3094 = vmatprep.mubr.bf16.mxu0 %v2063
      %3095 = vmatmul.mubr.bf16.gmra.mxu0 %v1502
      %v3096 = vpop.f32.mrf.mxu0
      %v3097 = vadd.f32 0.0, %v3096
      %v3098 = vpop.f32.mrf.mxu0
      %v3099 = vadd.f32 0.0, %v3098
      %v3100 = vpop.f32.mrf.mxu0
      %v3101 = vadd.f32 0.0, %v3100
      %v3102 = vpop.f32.mrf.mxu0
      %v3103 = vadd.f32 0.0, %v3102
      %3104 = vmatprep.mubr.bf16.mxu0 %v2066
      %3105 = vmatmul.mubr.bf16.gmra.mxu0 %v1504
      %v3106 = vpop.f32.mrf.mxu0
      %v3107 = vadd.f32 0.0, %v3106
      %v3108 = vpop.f32.mrf.mxu0
      %v3109 = vadd.f32 0.0, %v3108
      %v3110 = vpop.f32.mrf.mxu0
      %v3111 = vadd.f32 0.0, %v3110
      %v3112 = vpop.f32.mrf.mxu0
      %v3113 = vadd.f32 0.0, %v3112
      %3114 = vmatprep.mubr.bf16.mxu0 %v2069
      %3115 = vmatmul.mubr.bf16.gmra.mxu0 %v1506
      %v3116 = vpop.f32.mrf.mxu0
      %v3117 = vadd.f32 0.0, %v3116
      %v3118 = vpop.f32.mrf.mxu0
      %v3119 = vadd.f32 0.0, %v3118
      %v3120 = vpop.f32.mrf.mxu0
      %v3121 = vadd.f32 0.0, %v3120
      %v3122 = vpop.f32.mrf.mxu0
      %v3123 = vadd.f32 0.0, %v3122
      %3124 = vmatprep.mubr.bf16.mxu0 %v2072
      %3125 = vmatmul.mubr.bf16.gmra.mxu0 %v1508
      %v3126 = vpop.f32.mrf.mxu0
      %v3127 = vadd.f32 0.0, %v3126
      %v3128 = vpop.f32.mrf.mxu0
      %v3129 = vadd.f32 0.0, %v3128
      %v3130 = vpop.f32.mrf.mxu0
      %v3131 = vadd.f32 0.0, %v3130
      %v3132 = vpop.f32.mrf.mxu0
      %v3133 = vadd.f32 0.0, %v3132
      %3134 = vmatprep.mubr.bf16.mxu0 %v2075
      %3135 = vmatmul.mubr.bf16.gmra.mxu0 %v1510
      %v3136 = vpop.f32.mrf.mxu0
      %v3137 = vadd.f32 0.0, %v3136
      %v3138 = vpop.f32.mrf.mxu0
      %v3139 = vadd.f32 0.0, %v3138
      %v3140 = vpop.f32.mrf.mxu0
      %v3141 = vadd.f32 0.0, %v3140
      %v3142 = vpop.f32.mrf.mxu0
      %v3143 = vadd.f32 0.0, %v3142
      %3144 = vmatprep.mubr.bf16.mxu0 %v2078
      %3145 = vmatmul.mubr.bf16.gmra.mxu0 %v1512
      %v3146 = vpop.f32.mrf.mxu0
      %v3147 = vadd.f32 0.0, %v3146
      %v3148 = vpop.f32.mrf.mxu0
      %v3149 = vadd.f32 0.0, %v3148
      %v3150 = vpop.f32.mrf.mxu0
      %v3151 = vadd.f32 0.0, %v3150
      %v3152 = vpop.f32.mrf.mxu0
      %v3153 = vadd.f32 0.0, %v3152
      %3154 = vmatprep.mubr.bf16.mxu0 %v2081
      %3155 = vmatmul.mubr.bf16.gmra.mxu0 %v1514
      %v3156 = vpop.f32.mrf.mxu0
      %v3157 = vadd.f32 0.0, %v3156
      %v3158 = vpop.f32.mrf.mxu0
      %v3159 = vadd.f32 0.0, %v3158
      %v3160 = vpop.f32.mrf.mxu0
      %v3161 = vadd.f32 0.0, %v3160
      %v3162 = vpop.f32.mrf.mxu0
      %v3163 = vadd.f32 0.0, %v3162
      %3164 = vmatprep.mubr.bf16.mxu0 %v2084
      %3165 = vmatmul.mubr.bf16.gmra.mxu0 %v1516
      %v3166 = vpop.f32.mrf.mxu0
      %v3167 = vadd.f32 0.0, %v3166
      %v3168 = vpop.f32.mrf.mxu0
      %v3169 = vadd.f32 0.0, %v3168
      %v3170 = vpop.f32.mrf.mxu0
      %v3171 = vadd.f32 0.0, %v3170
      %v3172 = vpop.f32.mrf.mxu0
      %v3173 = vadd.f32 0.0, %v3172
      %3174 = vmatprep.mubr.bf16.mxu0 %v2087
      %3175 = vmatmul.mubr.bf16.gmra.mxu0 %v1518
      %v3176 = vpop.f32.mrf.mxu0
      %v3177 = vadd.f32 0.0, %v3176
      %v3178 = vpop.f32.mrf.mxu0
      %v3179 = vadd.f32 0.0, %v3178
      %v3180 = vpop.f32.mrf.mxu0
      %v3181 = vadd.f32 0.0, %v3180
      %v3182 = vpop.f32.mrf.mxu0
      %v3183 = vadd.f32 0.0, %v3182
      %3184 = vmatprep.mubr.bf16.mxu0 %v2090
      %3185 = vmatmul.mubr.bf16.gmra.mxu0 %v1520
      %v3186 = vpop.f32.mrf.mxu0
      %v3187 = vadd.f32 0.0, %v3186
      %v3188 = vpop.f32.mrf.mxu0
      %v3189 = vadd.f32 0.0, %v3188
      %v3190 = vpop.f32.mrf.mxu0
      %v3191 = vadd.f32 0.0, %v3190
      %v3192 = vpop.f32.mrf.mxu0
      %v3193 = vadd.f32 0.0, %v3192
      %3194 = vmatprep.mubr.bf16.mxu0 %v2093
      %3195 = vmatmul.mubr.bf16.gmra.mxu0 %v1522
      %v3196 = vpop.f32.mrf.mxu0
      %v3197 = vadd.f32 0.0, %v3196
      %v3198 = vpop.f32.mrf.mxu0
      %v3199 = vadd.f32 0.0, %v3198
      %v3200 = vpop.f32.mrf.mxu0
      %v3201 = vadd.f32 0.0, %v3200
      %v3202 = vpop.f32.mrf.mxu0
      %v3203 = vadd.f32 0.0, %v3202
      %3204 = vmatprep.mubr.bf16.mxu0 %v2096
      %3205 = vmatmul.mubr.bf16.gmra.mxu0 %v1524
      %v3206 = vpop.f32.mrf.mxu0
      %v3207 = vadd.f32 0.0, %v3206
      %v3208 = vpop.f32.mrf.mxu0
      %v3209 = vadd.f32 0.0, %v3208
      %v3210 = vpop.f32.mrf.mxu0
      %v3211 = vadd.f32 0.0, %v3210
      %v3212 = vpop.f32.mrf.mxu0
      %v3213 = vadd.f32 0.0, %v3212
      %3214 = vmatprep.mubr.bf16.mxu0 %v2099
      %3215 = vmatmul.mubr.bf16.gmra.mxu0 %v1526
      %v3216 = vpop.f32.mrf.mxu0
      %v3217 = vadd.f32 0.0, %v3216
      %v3218 = vpop.f32.mrf.mxu0
      %v3219 = vadd.f32 0.0, %v3218
      %v3220 = vpop.f32.mrf.mxu0
      %v3221 = vadd.f32 0.0, %v3220
      %v3222 = vpop.f32.mrf.mxu0
      %v3223 = vadd.f32 0.0, %v3222
      %3224 = vmatprep.mubr.bf16.mxu0 %v2102
      %3225 = vmatmul.mubr.bf16.gmra.mxu0 %v1528
      %v3226 = vpop.f32.mrf.mxu0
      %v3227 = vadd.f32 0.0, %v3226
      %v3228 = vpop.f32.mrf.mxu0
      %v3229 = vadd.f32 0.0, %v3228
      %v3230 = vpop.f32.mrf.mxu0
      %v3231 = vadd.f32 0.0, %v3230
      %v3232 = vpop.f32.mrf.mxu0
      %v3233 = vadd.f32 0.0, %v3232
      %3234 = vmatprep.mubr.bf16.mxu0 %v2105
      %3235 = vmatmul.mubr.bf16.gmra.mxu0 %v1530
      %v3236 = vpop.f32.mrf.mxu0
      %v3237 = vadd.f32 0.0, %v3236
      %v3238 = vpop.f32.mrf.mxu0
      %v3239 = vadd.f32 0.0, %v3238
      %v3240 = vpop.f32.mrf.mxu0
      %v3241 = vadd.f32 0.0, %v3240
      %v3242 = vpop.f32.mrf.mxu0
      %v3243 = vadd.f32 0.0, %v3242
      %3244 = vmatprep.mubr.bf16.mxu0 %v2108
      %3245 = vmatmul.mubr.bf16.gmra.mxu0 %v1532
      %v3246 = vpop.f32.mrf.mxu0
      %v3247 = vadd.f32 0.0, %v3246
      %v3248 = vpop.f32.mrf.mxu0
      %v3249 = vadd.f32 0.0, %v3248
      %v3250 = vpop.f32.mrf.mxu0
      %v3251 = vadd.f32 0.0, %v3250
      %v3252 = vpop.f32.mrf.mxu0
      %v3253 = vadd.f32 0.0, %v3252
      %3254 = vmatprep.mubr.bf16.mxu0 %v2111
      %3255 = vmatmul.mubr.bf16.gmra.mxu0 %v1534
      %v3256 = vpop.f32.mrf.mxu0
      %v3257 = vadd.f32 0.0, %v3256
      %v3258 = vpop.f32.mrf.mxu0
      %v3259 = vadd.f32 0.0, %v3258
      %v3260 = vpop.f32.mrf.mxu0
      %v3261 = vadd.f32 0.0, %v3260
      %v3262 = vpop.f32.mrf.mxu0
      %v3263 = vadd.f32 0.0, %v3262
      %3264 = vmatprep.mubr.bf16.mxu0 %v2114
      %3265 = vmatmul.mubr.bf16.gmra.mxu0 %v1536
      %v3266 = vpop.f32.mrf.mxu0
      %v3267 = vadd.f32 0.0, %v3266
      %v3268 = vpop.f32.mrf.mxu0
      %v3269 = vadd.f32 0.0, %v3268
      %v3270 = vpop.f32.mrf.mxu0
      %v3271 = vadd.f32 0.0, %v3270
      %v3272 = vpop.f32.mrf.mxu0
      %v3273 = vadd.f32 0.0, %v3272
      %3274 = vmatprep.mubr.bf16.mxu0 %v2117
      %3275 = vmatmul.mubr.bf16.gmra.mxu0 %v1538
      %v3276 = vpop.f32.mrf.mxu0
      %v3277 = vadd.f32 0.0, %v3276
      %v3278 = vpop.f32.mrf.mxu0
      %v3279 = vadd.f32 0.0, %v3278
      %v3280 = vpop.f32.mrf.mxu0
      %v3281 = vadd.f32 0.0, %v3280
      %v3282 = vpop.f32.mrf.mxu0
      %v3283 = vadd.f32 0.0, %v3282
      %3284 = vmatprep.mubr.bf16.mxu0 %v2120
      %3285 = vmatmul.mubr.bf16.gmra.mxu0 %v1540
      %v3286 = vpop.f32.mrf.mxu0
      %v3287 = vadd.f32 0.0, %v3286
      %v3288 = vpop.f32.mrf.mxu0
      %v3289 = vadd.f32 0.0, %v3288
      %v3290 = vpop.f32.mrf.mxu0
      %v3291 = vadd.f32 0.0, %v3290
      %v3292 = vpop.f32.mrf.mxu0
      %v3293 = vadd.f32 0.0, %v3292
      %3294 = vmatprep.mubr.bf16.mxu0 %v2123
      %3295 = vmatmul.mubr.bf16.gmra.mxu0 %v1542
      %v3296 = vpop.f32.mrf.mxu0
      %v3297 = vadd.f32 0.0, %v3296
      %v3298 = vpop.f32.mrf.mxu0
      %v3299 = vadd.f32 0.0, %v3298
      %v3300 = vpop.f32.mrf.mxu0
      %v3301 = vadd.f32 0.0, %v3300
      %v3302 = vpop.f32.mrf.mxu0
      %v3303 = vadd.f32 0.0, %v3302
      %3304 = vmatprep.mubr.bf16.mxu0 %v2126
      %3305 = vmatmul.mubr.bf16.gmra.mxu0 %v1544
      %v3306 = vpop.f32.mrf.mxu0
      %v3307 = vadd.f32 0.0, %v3306
      %v3308 = vpop.f32.mrf.mxu0
      %v3309 = vadd.f32 0.0, %v3308
      %v3310 = vpop.f32.mrf.mxu0
      %v3311 = vadd.f32 0.0, %v3310
      %v3312 = vpop.f32.mrf.mxu0
      %v3313 = vadd.f32 0.0, %v3312
      %3314 = vmatprep.mubr.bf16.mxu0 %v2129
      %3315 = vmatmul.mubr.bf16.gmra.mxu0 %v1546
      %v3316 = vpop.f32.mrf.mxu0
      %v3317 = vadd.f32 0.0, %v3316
      %v3318 = vpop.f32.mrf.mxu0
      %v3319 = vadd.f32 0.0, %v3318
      %v3320 = vpop.f32.mrf.mxu0
      %v3321 = vadd.f32 0.0, %v3320
      %v3322 = vpop.f32.mrf.mxu0
      %v3323 = vadd.f32 0.0, %v3322
      %3324 = vmatprep.mubr.bf16.mxu0 %v2132
      %3325 = vmatmul.mubr.bf16.gmra.mxu0 %v1548
      %v3326 = vpop.f32.mrf.mxu0
      %v3327 = vadd.f32 0.0, %v3326
      %v3328 = vpop.f32.mrf.mxu0
      %v3329 = vadd.f32 0.0, %v3328
      %v3330 = vpop.f32.mrf.mxu0
      %v3331 = vadd.f32 0.0, %v3330
      %v3332 = vpop.f32.mrf.mxu0
      %v3333 = vadd.f32 0.0, %v3332
      %3334 = vmatprep.mubr.bf16.mxu0 %v2135
      %3335 = vmatmul.mubr.bf16.gmra.mxu0 %v1550
      %v3336 = vpop.f32.mrf.mxu0
      %v3337 = vadd.f32 0.0, %v3336
      %v3338 = vpop.f32.mrf.mxu0
      %v3339 = vadd.f32 0.0, %v3338
      %v3340 = vpop.f32.mrf.mxu0
      %v3341 = vadd.f32 0.0, %v3340
      %v3342 = vpop.f32.mrf.mxu0
      %v3343 = vadd.f32 0.0, %v3342
      %3344 = vmatprep.mubr.bf16.mxu0 %v2138
      %3345 = vmatmul.mubr.bf16.gmra.mxu0 %v1552
      %v3346 = vpop.f32.mrf.mxu0
      %v3347 = vadd.f32 0.0, %v3346
      %v3348 = vpop.f32.mrf.mxu0
      %v3349 = vadd.f32 0.0, %v3348
      %v3350 = vpop.f32.mrf.mxu0
      %v3351 = vadd.f32 0.0, %v3350
      %v3352 = vpop.f32.mrf.mxu0
      %v3353 = vadd.f32 0.0, %v3352
      %3354 = vmatprep.mubr.bf16.mxu0 %v2141
      %3355 = vmatmul.mubr.bf16.gmra.mxu0 %v1554
      %v3356 = vpop.f32.mrf.mxu0
      %v3357 = vadd.f32 0.0, %v3356
      %v3358 = vpop.f32.mrf.mxu0
      %v3359 = vadd.f32 0.0, %v3358
      %v3360 = vpop.f32.mrf.mxu0
      %v3361 = vadd.f32 0.0, %v3360
      %v3362 = vpop.f32.mrf.mxu0
      %v3363 = vadd.f32 0.0, %v3362
      %3364 = vmatprep.mubr.bf16.mxu0 %v2144
      %3365 = vmatmul.mubr.bf16.gmra.mxu0 %v1556
      %v3366 = vpop.f32.mrf.mxu0
      %v3367 = vadd.f32 0.0, %v3366
      %v3368 = vpop.f32.mrf.mxu0
      %v3369 = vadd.f32 0.0, %v3368
      %v3370 = vpop.f32.mrf.mxu0
      %v3371 = vadd.f32 0.0, %v3370
      %v3372 = vpop.f32.mrf.mxu0
      %v3373 = vadd.f32 0.0, %v3372
      %3374 = vmatprep.mubr.bf16.mxu0 %v2147
      %3375 = vmatmul.mubr.bf16.gmra.mxu0 %v1558
      %v3376 = vpop.f32.mrf.mxu0
      %v3377 = vadd.f32 0.0, %v3376
      %v3378 = vpop.f32.mrf.mxu0
      %v3379 = vadd.f32 0.0, %v3378
      %v3380 = vpop.f32.mrf.mxu0
      %v3381 = vadd.f32 0.0, %v3380
      %v3382 = vpop.f32.mrf.mxu0
      %v3383 = vadd.f32 0.0, %v3382
      %3384 = vmatprep.mubr.bf16.mxu0 %v2150
      %3385 = vmatmul.mubr.bf16.gmra.mxu0 %v1560
      %v3386 = vpop.f32.mrf.mxu0
      %v3387 = vadd.f32 0.0, %v3386
      %v3388 = vpop.f32.mrf.mxu0
      %v3389 = vadd.f32 0.0, %v3388
      %v3390 = vpop.f32.mrf.mxu0
      %v3391 = vadd.f32 0.0, %v3390
      %v3392 = vpop.f32.mrf.mxu0
      %v3393 = vadd.f32 0.0, %v3392
      %3394 = vmatprep.mubr.bf16.mxu0 %v2153
      %3395 = vmatmul.mubr.bf16.gmra.mxu0 %v1562
      %v3396 = vpop.f32.mrf.mxu0
      %v3397 = vadd.f32 0.0, %v3396
      %v3398 = vpop.f32.mrf.mxu0
      %v3399 = vadd.f32 0.0, %v3398
      %v3400 = vpop.f32.mrf.mxu0
      %v3401 = vadd.f32 0.0, %v3400
      %v3402 = vpop.f32.mrf.mxu0
      %v3403 = vadd.f32 0.0, %v3402
      %3404 = vmatprep.mubr.bf16.mxu0 %v2156
      %3405 = vmatmul.mubr.bf16.gmra.mxu0 %v1564
      %v3406 = vpop.f32.mrf.mxu0
      %v3407 = vadd.f32 0.0, %v3406
      %v3408 = vpop.f32.mrf.mxu0
      %v3409 = vadd.f32 0.0, %v3408
      %v3410 = vpop.f32.mrf.mxu0
      %v3411 = vadd.f32 0.0, %v3410
      %v3412 = vpop.f32.mrf.mxu0
      %v3413 = vadd.f32 0.0, %v3412
      %3414 = vmatprep.mubr.bf16.mxu0 %v2159
      %3415 = vmatmul.mubr.bf16.gmra.mxu0 %v1566
      %v3416 = vpop.f32.mrf.mxu0
      %v3417 = vadd.f32 0.0, %v3416
      %v3418 = vpop.f32.mrf.mxu0
      %v3419 = vadd.f32 0.0, %v3418
      %v3420 = vpop.f32.mrf.mxu0
      %v3421 = vadd.f32 0.0, %v3420
      %v3422 = vpop.f32.mrf.mxu0
      %v3423 = vadd.f32 0.0, %v3422
      %3424 = vmatprep.mubr.bf16.mxu0 %v2162
      %3425 = vmatmul.mubr.bf16.gmra.mxu0 %v1568
      %v3426 = vpop.f32.mrf.mxu0
      %v3427 = vadd.f32 0.0, %v3426
      %v3428 = vpop.f32.mrf.mxu0
      %v3429 = vadd.f32 0.0, %v3428
      %v3430 = vpop.f32.mrf.mxu0
      %v3431 = vadd.f32 0.0, %v3430
      %v3432 = vpop.f32.mrf.mxu0
      %v3433 = vadd.f32 0.0, %v3432
      %3434 = vmatprep.mubr.bf16.mxu0 %v2165
      %3435 = vmatmul.mubr.bf16.gmra.mxu0 %v1570
      %v3436 = vpop.f32.mrf.mxu0
      %v3437 = vadd.f32 0.0, %v3436
      %v3438 = vpop.f32.mrf.mxu0
      %v3439 = vadd.f32 0.0, %v3438
      %v3440 = vpop.f32.mrf.mxu0
      %v3441 = vadd.f32 0.0, %v3440
      %v3442 = vpop.f32.mrf.mxu0
      %v3443 = vadd.f32 0.0, %v3442
      %3444 = vmatprep.mubr.bf16.mxu0 %v2168
      %3445 = vmatmul.mubr.bf16.gmra.mxu0 %v1572
      %v3446 = vpop.f32.mrf.mxu0
      %v3447 = vadd.f32 0.0, %v3446
      %v3448 = vpop.f32.mrf.mxu0
      %v3449 = vadd.f32 0.0, %v3448
      %v3450 = vpop.f32.mrf.mxu0
      %v3451 = vadd.f32 0.0, %v3450
      %v3452 = vpop.f32.mrf.mxu0
      %v3453 = vadd.f32 0.0, %v3452
      %3454 = vmatprep.mubr.bf16.mxu0 %v2171
      %3455 = vmatmul.mubr.bf16.gmra.mxu0 %v1574
      %v3456 = vpop.f32.mrf.mxu0
      %v3457 = vadd.f32 0.0, %v3456
      %v3458 = vpop.f32.mrf.mxu0
      %v3459 = vadd.f32 0.0, %v3458
      %v3460 = vpop.f32.mrf.mxu0
      %v3461 = vadd.f32 0.0, %v3460
      %v3462 = vpop.f32.mrf.mxu0
      %v3463 = vadd.f32 0.0, %v3462
      %3464 = vmatprep.mubr.bf16.mxu0 %v2174
      %3465 = vmatmul.mubr.bf16.gmra.mxu0 %v1576
      %v3466 = vpop.f32.mrf.mxu0
      %v3467 = vadd.f32 0.0, %v3466
      %v3468 = vpop.f32.mrf.mxu0
      %v3469 = vadd.f32 0.0, %v3468
      %v3470 = vpop.f32.mrf.mxu0
      %v3471 = vadd.f32 0.0, %v3470
      %v3472 = vpop.f32.mrf.mxu0
      %v3473 = vadd.f32 0.0, %v3472
      %3474 = vmatprep.mubr.bf16.mxu0 %v2177
      %3475 = vmatmul.mubr.bf16.gmra.mxu0 %v1578
      %v3476 = vpop.f32.mrf.mxu0
      %v3477 = vadd.f32 0.0, %v3476
      %v3478 = vpop.f32.mrf.mxu0
      %v3479 = vadd.f32 0.0, %v3478
      %v3480 = vpop.f32.mrf.mxu0
      %v3481 = vadd.f32 0.0, %v3480
      %v3482 = vpop.f32.mrf.mxu0
      %v3483 = vadd.f32 0.0, %v3482
      %3484 = vmatprep.mubr.bf16.mxu0 %v2180
      %3485 = vmatmul.mubr.bf16.gmra.mxu0 %v1580
      %v3486 = vpop.f32.mrf.mxu0
      %v3487 = vadd.f32 0.0, %v3486
      %v3488 = vpop.f32.mrf.mxu0
      %v3489 = vadd.f32 0.0, %v3488
      %v3490 = vpop.f32.mrf.mxu0
      %v3491 = vadd.f32 0.0, %v3490
      %v3492 = vpop.f32.mrf.mxu0
      %v3493 = vadd.f32 0.0, %v3492
      %3494 = vmatprep.mubr.bf16.mxu0 %v2183
      %3495 = vmatmul.mubr.bf16.gmra.mxu0 %v1582
      %v3496 = vpop.f32.mrf.mxu0
      %v3497 = vadd.f32 0.0, %v3496
      %v3498 = vpop.f32.mrf.mxu0
      %v3499 = vadd.f32 0.0, %v3498
      %v3500 = vpop.f32.mrf.mxu0
      %v3501 = vadd.f32 0.0, %v3500
      %v3502 = vpop.f32.mrf.mxu0
      %v3503 = vadd.f32 0.0, %v3502
      %3504 = vdwg.mxu0
      %v3505 = vmax.f32 %v2227, %v2229
      %v3506 = vmax.f32 %v2247, %v2249
      %v3507 = vmax.f32 %v2267, %v2269
      %v3508 = vmax.f32 %v2287, %v2289
      %v3509 = vmax.f32 %v2307, %v2309
      %v3510 = vmax.f32 %v2327, %v2329
      %v3511 = vmax.f32 %v2347, %v2349
      %v3512 = vmax.f32 %v2367, %v2369
      %v3513 = vmax.f32 %v2387, %v2389
      %v3514 = vmax.f32 %v2407, %v2409
      %v3515 = vmax.f32 %v2427, %v2429
      %v3516 = vmax.f32 %v2447, %v2449
      %v3517 = vmax.f32 %v2467, %v2469
      %v3518 = vmax.f32 %v2487, %v2489
      %v3519 = vmax.f32 %v2507, %v2509
      %v3520 = vmax.f32 %v2527, %v2529
      %v3521 = vmax.f32 %v2547, %v2549
      %v3522 = vmax.f32 %v2567, %v2569
      %v3523 = vmax.f32 %v2587, %v2589
      %v3524 = vmax.f32 %v2607, %v2609
      %v3525 = vmax.f32 %v2627, %v2629
      %v3526 = vmax.f32 %v2647, %v2649
      %v3527 = vmax.f32 %v2667, %v2669
      %v3528 = vmax.f32 %v2687, %v2689
      %v3529 = vmax.f32 %v2707, %v2709
      %v3530 = vmax.f32 %v2727, %v2729
      %v3531 = vmax.f32 %v2747, %v2749
      %v3532 = vmax.f32 %v2767, %v2769
      %v3533 = vmax.f32 %v2787, %v2789
      %v3534 = vmax.f32 %v2807, %v2809
      %v3535 = vmax.f32 %v2827, %v2829
      %v3536 = vmax.f32 %v2847, %v2849
      %v3537 = vmax.f32 %v2867, %v2869
      %v3538 = vmax.f32 %v2887, %v2889
      %v3539 = vmax.f32 %v2907, %v2909
      %v3540 = vmax.f32 %v2927, %v2929
      %v3541 = vmax.f32 %v2947, %v2949
      %v3542 = vmax.f32 %v2967, %v2969
      %v3543 = vmax.f32 %v2987, %v2989
      %v3544 = vmax.f32 %v3007, %v3009
      %v3545 = vmax.f32 %v3027, %v3029
      %v3546 = vmax.f32 %v3047, %v3049
      %v3547 = vmax.f32 %v3067, %v3069
      %v3548 = vmax.f32 %v3087, %v3089
      %v3549 = vmax.f32 %v3107, %v3109
      %v3550 = vmax.f32 %v3127, %v3129
      %v3551 = vmax.f32 %v3147, %v3149
      %v3552 = vmax.f32 %v3167, %v3169
      %v3553 = vmax.f32 %v3187, %v3189
      %v3554 = vmax.f32 %v3207, %v3209
      %v3555 = vmax.f32 %v3227, %v3229
      %v3556 = vmax.f32 %v3247, %v3249
      %v3557 = vmax.f32 %v3267, %v3269
      %v3558 = vmax.f32 %v3287, %v3289
      %v3559 = vmax.f32 %v3307, %v3309
      %v3560 = vmax.f32 %v3327, %v3329
      %v3561 = vmax.f32 %v3347, %v3349
      %v3562 = vmax.f32 %v3367, %v3369
      %v3563 = vmax.f32 %v3387, %v3389
      %v3564 = vmax.f32 %v3407, %v3409
      %v3565 = vmax.f32 %v3427, %v3429
      %v3566 = vmax.f32 %v3447, %v3449
      %v3567 = vmax.f32 %v3467, %v3469
      %v3568 = vmax.f32 %v3487, %v3489
      %v3569 = vmax.f32 %v2231, %v2233
      %v3570 = vmax.f32 %v2251, %v2253
      %v3571 = vmax.f32 %v2271, %v2273
      %v3572 = vmax.f32 %v2291, %v2293
      %v3573 = vmax.f32 %v2311, %v2313
      %v3574 = vmax.f32 %v2331, %v2333
      %v3575 = vmax.f32 %v2351, %v2353
      %v3576 = vmax.f32 %v2371, %v2373
      %v3577 = vmax.f32 %v2391, %v2393
      %v3578 = vmax.f32 %v2411, %v2413
      %v3579 = vmax.f32 %v2431, %v2433
      %v3580 = vmax.f32 %v2451, %v2453
      %v3581 = vmax.f32 %v2471, %v2473
      %v3582 = vmax.f32 %v2491, %v2493
      %v3583 = vmax.f32 %v2511, %v2513
      %v3584 = vmax.f32 %v2531, %v2533
      %v3585 = vmax.f32 %v2551, %v2553
      %v3586 = vmax.f32 %v2571, %v2573
      %v3587 = vmax.f32 %v2591, %v2593
      %v3588 = vmax.f32 %v2611, %v2613
      %v3589 = vmax.f32 %v2631, %v2633
      %v3590 = vmax.f32 %v2651, %v2653
      %v3591 = vmax.f32 %v2671, %v2673
      %v3592 = vmax.f32 %v2691, %v2693
      %v3593 = vmax.f32 %v2711, %v2713
      %v3594 = vmax.f32 %v2731, %v2733
      %v3595 = vmax.f32 %v2751, %v2753
      %v3596 = vmax.f32 %v2771, %v2773
      %v3597 = vmax.f32 %v2791, %v2793
      %v3598 = vmax.f32 %v2811, %v2813
      %v3599 = vmax.f32 %v2831, %v2833
      %v3600 = vmax.f32 %v2851, %v2853
      %v3601 = vmax.f32 %v2871, %v2873
      %v3602 = vmax.f32 %v2891, %v2893
      %v3603 = vmax.f32 %v2911, %v2913
      %v3604 = vmax.f32 %v2931, %v2933
      %v3605 = vmax.f32 %v2951, %v2953
      %v3606 = vmax.f32 %v2971, %v2973
      %v3607 = vmax.f32 %v2991, %v2993
      %v3608 = vmax.f32 %v3011, %v3013
      %v3609 = vmax.f32 %v3031, %v3033
      %v3610 = vmax.f32 %v3051, %v3053
      %v3611 = vmax.f32 %v3071, %v3073
      %v3612 = vmax.f32 %v3091, %v3093
      %v3613 = vmax.f32 %v3111, %v3113
      %v3614 = vmax.f32 %v3131, %v3133
      %v3615 = vmax.f32 %v3151, %v3153
      %v3616 = vmax.f32 %v3171, %v3173
      %v3617 = vmax.f32 %v3191, %v3193
      %v3618 = vmax.f32 %v3211, %v3213
      %v3619 = vmax.f32 %v3231, %v3233
      %v3620 = vmax.f32 %v3251, %v3253
      %v3621 = vmax.f32 %v3271, %v3273
      %v3622 = vmax.f32 %v3291, %v3293
      %v3623 = vmax.f32 %v3311, %v3313
      %v3624 = vmax.f32 %v3331, %v3333
      %v3625 = vmax.f32 %v3351, %v3353
      %v3626 = vmax.f32 %v3371, %v3373
      %v3627 = vmax.f32 %v3391, %v3393
      %v3628 = vmax.f32 %v3411, %v3413
      %v3629 = vmax.f32 %v3431, %v3433
      %v3630 = vmax.f32 %v3451, %v3453
      %v3631 = vmax.f32 %v3471, %v3473
      %v3632 = vmax.f32 %v3491, %v3493
      %v3633 = vmax.f32 %v3505, %v3569
      %v3634 = vmax.f32 %v3506, %v3570
      %v3635 = vmax.f32 %v3507, %v3571
      %v3636 = vmax.f32 %v3508, %v3572
      %v3637 = vmax.f32 %v3509, %v3573
      %v3638 = vmax.f32 %v3510, %v3574
      %v3639 = vmax.f32 %v3511, %v3575
      %v3640 = vmax.f32 %v3512, %v3576
      %v3641 = vmax.f32 %v3513, %v3577
      %v3642 = vmax.f32 %v3514, %v3578
      %v3643 = vmax.f32 %v3515, %v3579
      %v3644 = vmax.f32 %v3516, %v3580
      %v3645 = vmax.f32 %v3517, %v3581
      %v3646 = vmax.f32 %v3518, %v3582
      %v3647 = vmax.f32 %v3519, %v3583
      %v3648 = vmax.f32 %v3520, %v3584
      %v3649 = vmax.f32 %v3521, %v3585
      %v3650 = vmax.f32 %v3522, %v3586
      %v3651 = vmax.f32 %v3523, %v3587
      %v3652 = vmax.f32 %v3524, %v3588
      %v3653 = vmax.f32 %v3525, %v3589
      %v3654 = vmax.f32 %v3526, %v3590
      %v3655 = vmax.f32 %v3527, %v3591
      %v3656 = vmax.f32 %v3528, %v3592
      %v3657 = vmax.f32 %v3529, %v3593
      %v3658 = vmax.f32 %v3530, %v3594
      %v3659 = vmax.f32 %v3531, %v3595
      %v3660 = vmax.f32 %v3532, %v3596
      %v3661 = vmax.f32 %v3533, %v3597
      %v3662 = vmax.f32 %v3534, %v3598
      %v3663 = vmax.f32 %v3535, %v3599
      %v3664 = vmax.f32 %v3536, %v3600
      %v3665 = vmax.f32 %v3537, %v3601
      %v3666 = vmax.f32 %v3538, %v3602
      %v3667 = vmax.f32 %v3539, %v3603
      %v3668 = vmax.f32 %v3540, %v3604
      %v3669 = vmax.f32 %v3541, %v3605
      %v3670 = vmax.f32 %v3542, %v3606
      %v3671 = vmax.f32 %v3543, %v3607
      %v3672 = vmax.f32 %v3544, %v3608
      %v3673 = vmax.f32 %v3545, %v3609
      %v3674 = vmax.f32 %v3546, %v3610
      %v3675 = vmax.f32 %v3547, %v3611
      %v3676 = vmax.f32 %v3548, %v3612
      %v3677 = vmax.f32 %v3549, %v3613
      %v3678 = vmax.f32 %v3550, %v3614
      %v3679 = vmax.f32 %v3551, %v3615
      %v3680 = vmax.f32 %v3552, %v3616
      %v3681 = vmax.f32 %v3553, %v3617
      %v3682 = vmax.f32 %v3554, %v3618
      %v3683 = vmax.f32 %v3555, %v3619
      %v3684 = vmax.f32 %v3556, %v3620
      %v3685 = vmax.f32 %v3557, %v3621
      %v3686 = vmax.f32 %v3558, %v3622
      %v3687 = vmax.f32 %v3559, %v3623
      %v3688 = vmax.f32 %v3560, %v3624
      %v3689 = vmax.f32 %v3561, %v3625
      %v3690 = vmax.f32 %v3562, %v3626
      %v3691 = vmax.f32 %v3563, %v3627
      %v3692 = vmax.f32 %v3564, %v3628
      %v3693 = vmax.f32 %v3565, %v3629
      %v3694 = vmax.f32 %v3566, %v3630
      %v3695 = vmax.f32 %v3567, %v3631
      %v3696 = vmax.f32 %v3568, %v3632
      %v3697 = vmax.f32 %v2237, %v2239
      %v3698 = vmax.f32 %v2257, %v2259
      %v3699 = vmax.f32 %v2277, %v2279
      %v3700 = vmax.f32 %v2297, %v2299
      %v3701 = vmax.f32 %v2317, %v2319
      %v3702 = vmax.f32 %v2337, %v2339
      %v3703 = vmax.f32 %v2357, %v2359
      %v3704 = vmax.f32 %v2377, %v2379
      %v3705 = vmax.f32 %v2397, %v2399
      %v3706 = vmax.f32 %v2417, %v2419
      %v3707 = vmax.f32 %v2437, %v2439
      %v3708 = vmax.f32 %v2457, %v2459
      %v3709 = vmax.f32 %v2477, %v2479
      %v3710 = vmax.f32 %v2497, %v2499
      %v3711 = vmax.f32 %v2517, %v2519
      %v3712 = vmax.f32 %v2537, %v2539
      %v3713 = vmax.f32 %v2557, %v2559
      %v3714 = vmax.f32 %v2577, %v2579
      %v3715 = vmax.f32 %v2597, %v2599
      %v3716 = vmax.f32 %v2617, %v2619
      %v3717 = vmax.f32 %v2637, %v2639
      %v3718 = vmax.f32 %v2657, %v2659
      %v3719 = vmax.f32 %v2677, %v2679
      %v3720 = vmax.f32 %v2697, %v2699
      %v3721 = vmax.f32 %v2717, %v2719
      %v3722 = vmax.f32 %v2737, %v2739
      %v3723 = vmax.f32 %v2757, %v2759
      %v3724 = vmax.f32 %v2777, %v2779
      %v3725 = vmax.f32 %v2797, %v2799
      %v3726 = vmax.f32 %v2817, %v2819
      %v3727 = vmax.f32 %v2837, %v2839
      %v3728 = vmax.f32 %v2857, %v2859
      %v3729 = vmax.f32 %v2877, %v2879
      %v3730 = vmax.f32 %v2897, %v2899
      %v3731 = vmax.f32 %v2917, %v2919
      %v3732 = vmax.f32 %v2937, %v2939
      %v3733 = vmax.f32 %v2957, %v2959
      %v3734 = vmax.f32 %v2977, %v2979
      %v3735 = vmax.f32 %v2997, %v2999
      %v3736 = vmax.f32 %v3017, %v3019
      %v3737 = vmax.f32 %v3037, %v3039
      %v3738 = vmax.f32 %v3057, %v3059
      %v3739 = vmax.f32 %v3077, %v3079
      %v3740 = vmax.f32 %v3097, %v3099
      %v3741 = vmax.f32 %v3117, %v3119
      %v3742 = vmax.f32 %v3137, %v3139
      %v3743 = vmax.f32 %v3157, %v3159
      %v3744 = vmax.f32 %v3177, %v3179
      %v3745 = vmax.f32 %v3197, %v3199
      %v3746 = vmax.f32 %v3217, %v3219
      %v3747 = vmax.f32 %v3237, %v3239
      %v3748 = vmax.f32 %v3257, %v3259
      %v3749 = vmax.f32 %v3277, %v3279
      %v3750 = vmax.f32 %v3297, %v3299
      %v3751 = vmax.f32 %v3317, %v3319
      %v3752 = vmax.f32 %v3337, %v3339
      %v3753 = vmax.f32 %v3357, %v3359
      %v3754 = vmax.f32 %v3377, %v3379
      %v3755 = vmax.f32 %v3397, %v3399
      %v3756 = vmax.f32 %v3417, %v3419
      %v3757 = vmax.f32 %v3437, %v3439
      %v3758 = vmax.f32 %v3457, %v3459
      %v3759 = vmax.f32 %v3477, %v3479
      %v3760 = vmax.f32 %v3497, %v3499
      %v3761 = vmax.f32 %v2241, %v2243
      %v3762 = vmax.f32 %v2261, %v2263
      %v3763 = vmax.f32 %v2281, %v2283
      %v3764 = vmax.f32 %v2301, %v2303
      %v3765 = vmax.f32 %v2321, %v2323
      %v3766 = vmax.f32 %v2341, %v2343
      %v3767 = vmax.f32 %v2361, %v2363
      %v3768 = vmax.f32 %v2381, %v2383
      %v3769 = vmax.f32 %v2401, %v2403
      %v3770 = vmax.f32 %v2421, %v2423
      %v3771 = vmax.f32 %v2441, %v2443
      %v3772 = vmax.f32 %v2461, %v2463
      %v3773 = vmax.f32 %v2481, %v2483
      %v3774 = vmax.f32 %v2501, %v2503
      %v3775 = vmax.f32 %v2521, %v2523
      %v3776 = vmax.f32 %v2541, %v2543
      %v3777 = vmax.f32 %v2561, %v2563
      %v3778 = vmax.f32 %v2581, %v2583
      %v3779 = vmax.f32 %v2601, %v2603
      %v3780 = vmax.f32 %v2621, %v2623
      %v3781 = vmax.f32 %v2641, %v2643
      %v3782 = vmax.f32 %v2661, %v2663
      %v3783 = vmax.f32 %v2681, %v2683
      %v3784 = vmax.f32 %v2701, %v2703
      %v3785 = vmax.f32 %v2721, %v2723
      %v3786 = vmax.f32 %v2741, %v2743
      %v3787 = vmax.f32 %v2761, %v2763
      %v3788 = vmax.f32 %v2781, %v2783
      %v3789 = vmax.f32 %v2801, %v2803
      %v3790 = vmax.f32 %v2821, %v2823
      %v3791 = vmax.f32 %v2841, %v2843
      %v3792 = vmax.f32 %v2861, %v2863
      %v3793 = vmax.f32 %v2881, %v2883
      %v3794 = vmax.f32 %v2901, %v2903
      %v3795 = vmax.f32 %v2921, %v2923
      %v3796 = vmax.f32 %v2941, %v2943
      %v3797 = vmax.f32 %v2961, %v2963
      %v3798 = vmax.f32 %v2981, %v2983
      %v3799 = vmax.f32 %v3001, %v3003
      %v3800 = vmax.f32 %v3021, %v3023
      %v3801 = vmax.f32 %v3041, %v3043
      %v3802 = vmax.f32 %v3061, %v3063
      %v3803 = vmax.f32 %v3081, %v3083
      %v3804 = vmax.f32 %v3101, %v3103
      %v3805 = vmax.f32 %v3121, %v3123
      %v3806 = vmax.f32 %v3141, %v3143
      %v3807 = vmax.f32 %v3161, %v3163
      %v3808 = vmax.f32 %v3181, %v3183
      %v3809 = vmax.f32 %v3201, %v3203
      %v3810 = vmax.f32 %v3221, %v3223
      %v3811 = vmax.f32 %v3241, %v3243
      %v3812 = vmax.f32 %v3261, %v3263
      %v3813 = vmax.f32 %v3281, %v3283
      %v3814 = vmax.f32 %v3301, %v3303
      %v3815 = vmax.f32 %v3321, %v3323
      %v3816 = vmax.f32 %v3341, %v3343
      %v3817 = vmax.f32 %v3361, %v3363
      %v3818 = vmax.f32 %v3381, %v3383
      %v3819 = vmax.f32 %v3401, %v3403
      %v3820 = vmax.f32 %v3421, %v3423
      %v3821 = vmax.f32 %v3441, %v3443
      %v3822 = vmax.f32 %v3461, %v3463
      %v3823 = vmax.f32 %v3481, %v3483
      %v3824 = vmax.f32 %v3501, %v3503
      %v3825 = vmax.f32 %v3697, %v3761
      %v3826 = vmax.f32 %v3698, %v3762
      %v3827 = vmax.f32 %v3699, %v3763
      %v3828 = vmax.f32 %v3700, %v3764
      %v3829 = vmax.f32 %v3701, %v3765
      %v3830 = vmax.f32 %v3702, %v3766
      %v3831 = vmax.f32 %v3703, %v3767
      %v3832 = vmax.f32 %v3704, %v3768
      %v3833 = vmax.f32 %v3705, %v3769
      %v3834 = vmax.f32 %v3706, %v3770
      %v3835 = vmax.f32 %v3707, %v3771
      %v3836 = vmax.f32 %v3708, %v3772
      %v3837 = vmax.f32 %v3709, %v3773
      %v3838 = vmax.f32 %v3710, %v3774
      %v3839 = vmax.f32 %v3711, %v3775
      %v3840 = vmax.f32 %v3712, %v3776
      %v3841 = vmax.f32 %v3713, %v3777
      %v3842 = vmax.f32 %v3714, %v3778
      %v3843 = vmax.f32 %v3715, %v3779
      %v3844 = vmax.f32 %v3716, %v3780
      %v3845 = vmax.f32 %v3717, %v3781
      %v3846 = vmax.f32 %v3718, %v3782
      %v3847 = vmax.f32 %v3719, %v3783
      %v3848 = vmax.f32 %v3720, %v3784
      %v3849 = vmax.f32 %v3721, %v3785
      %v3850 = vmax.f32 %v3722, %v3786
      %v3851 = vmax.f32 %v3723, %v3787
      %v3852 = vmax.f32 %v3724, %v3788
      %v3853 = vmax.f32 %v3725, %v3789
      %v3854 = vmax.f32 %v3726, %v3790
      %v3855 = vmax.f32 %v3727, %v3791
      %v3856 = vmax.f32 %v3728, %v3792
      %v3857 = vmax.f32 %v3729, %v3793
      %v3858 = vmax.f32 %v3730, %v3794
      %v3859 = vmax.f32 %v3731, %v3795
      %v3860 = vmax.f32 %v3732, %v3796
      %v3861 = vmax.f32 %v3733, %v3797
      %v3862 = vmax.f32 %v3734, %v3798
      %v3863 = vmax.f32 %v3735, %v3799
      %v3864 = vmax.f32 %v3736, %v3800
      %v3865 = vmax.f32 %v3737, %v3801
      %v3866 = vmax.f32 %v3738, %v3802
      %v3867 = vmax.f32 %v3739, %v3803
      %v3868 = vmax.f32 %v3740, %v3804
      %v3869 = vmax.f32 %v3741, %v3805
      %v3870 = vmax.f32 %v3742, %v3806
      %v3871 = vmax.f32 %v3743, %v3807
      %v3872 = vmax.f32 %v3744, %v3808
      %v3873 = vmax.f32 %v3745, %v3809
      %v3874 = vmax.f32 %v3746, %v3810
      %v3875 = vmax.f32 %v3747, %v3811
      %v3876 = vmax.f32 %v3748, %v3812
      %v3877 = vmax.f32 %v3749, %v3813
      %v3878 = vmax.f32 %v3750, %v3814
      %v3879 = vmax.f32 %v3751, %v3815
      %v3880 = vmax.f32 %v3752, %v3816
      %v3881 = vmax.f32 %v3753, %v3817
      %v3882 = vmax.f32 %v3754, %v3818
      %v3883 = vmax.f32 %v3755, %v3819
      %v3884 = vmax.f32 %v3756, %v3820
      %v3885 = vmax.f32 %v3757, %v3821
      %v3886 = vmax.f32 %v3758, %v3822
      %v3887 = vmax.f32 %v3759, %v3823
      %v3888 = vmax.f32 %v3760, %v3824
      %v3889 = vld [vmem:[%s2] sm:$0x1]
      %v3891 = vlaneseq
      %v3892 = vshrl.u32 %v3891, 7
      %v3893 = vsub.s32 0, %v3892
      %v3894 = vrot.slane %v3889, %v3893
      %v3896 = vadd.f32 %v3633, %v3894
      %v3897 = vadd.f32 %v3634, %v3894
      %v3898 = vadd.f32 %v3635, %v3894
      %v3899 = vadd.f32 %v3636, %v3894
      %v3900 = vadd.f32 %v3637, %v3894
      %v3901 = vadd.f32 %v3638, %v3894
      %v3902 = vadd.f32 %v3639, %v3894
      %v3903 = vadd.f32 %v3640, %v3894
      %v3904 = vadd.f32 %v3641, %v3894
      %v3905 = vadd.f32 %v3642, %v3894
      %v3906 = vadd.f32 %v3643, %v3894
      %v3907 = vadd.f32 %v3644, %v3894
      %v3908 = vadd.f32 %v3645, %v3894
      %v3909 = vadd.f32 %v3646, %v3894
      %v3910 = vadd.f32 %v3647, %v3894
      %v3911 = vadd.f32 %v3648, %v3894
      %v3912 = vadd.f32 %v3649, %v3894
      %v3913 = vadd.f32 %v3650, %v3894
      %v3914 = vadd.f32 %v3651, %v3894
      %v3915 = vadd.f32 %v3652, %v3894
      %v3916 = vadd.f32 %v3653, %v3894
      %v3917 = vadd.f32 %v3654, %v3894
      %v3918 = vadd.f32 %v3655, %v3894
      %v3919 = vadd.f32 %v3656, %v3894
      %v3920 = vadd.f32 %v3657, %v3894
      %v3921 = vadd.f32 %v3658, %v3894
      %v3922 = vadd.f32 %v3659, %v3894
      %v3923 = vadd.f32 %v3660, %v3894
      %v3924 = vadd.f32 %v3661, %v3894
      %v3925 = vadd.f32 %v3662, %v3894
      %v3926 = vadd.f32 %v3663, %v3894
      %v3927 = vadd.f32 %v3664, %v3894
      %v3928 = vadd.f32 %v3665, %v3894
      %v3929 = vadd.f32 %v3666, %v3894
      %v3930 = vadd.f32 %v3667, %v3894
      %v3931 = vadd.f32 %v3668, %v3894
      %v3932 = vadd.f32 %v3669, %v3894
      %v3933 = vadd.f32 %v3670, %v3894
      %v3934 = vadd.f32 %v3671, %v3894
      %v3935 = vadd.f32 %v3672, %v3894
      %v3936 = vadd.f32 %v3673, %v3894
      %v3937 = vadd.f32 %v3674, %v3894
      %v3938 = vadd.f32 %v3675, %v3894
      %v3939 = vadd.f32 %v3676, %v3894
      %v3940 = vadd.f32 %v3677, %v3894
      %v3941 = vadd.f32 %v3678, %v3894
      %v3942 = vadd.f32 %v3679, %v3894
      %v3943 = vadd.f32 %v3680, %v3894
      %v3944 = vadd.f32 %v3681, %v3894
      %v3945 = vadd.f32 %v3682, %v3894
      %v3946 = vadd.f32 %v3683, %v3894
      %v3947 = vadd.f32 %v3684, %v3894
      %v3948 = vadd.f32 %v3685, %v3894
      %v3949 = vadd.f32 %v3686, %v3894
      %v3950 = vadd.f32 %v3687, %v3894
      %v3951 = vadd.f32 %v3688, %v3894
      %v3952 = vadd.f32 %v3689, %v3894
      %v3953 = vadd.f32 %v3690, %v3894
      %v3954 = vadd.f32 %v3691, %v3894
      %v3955 = vadd.f32 %v3692, %v3894
      %v3956 = vadd.f32 %v3693, %v3894
      %v3957 = vadd.f32 %v3694, %v3894
      %v3958 = vadd.f32 %v3695, %v3894
      %v3959 = vadd.f32 %v3696, %v3894
      %v3960 = vmax.f32 %v3896, 0.0
      %v3961 = vmax.f32 %v3897, 0.0
      %v3962 = vmax.f32 %v3898, 0.0
      %v3963 = vmax.f32 %v3899, 0.0
      %v3964 = vmax.f32 %v3900, 0.0
      %v3965 = vmax.f32 %v3901, 0.0
      %v3966 = vmax.f32 %v3902, 0.0
      %v3967 = vmax.f32 %v3903, 0.0
      %v3968 = vmax.f32 %v3904, 0.0
      %v3969 = vmax.f32 %v3905, 0.0
      %v3970 = vmax.f32 %v3906, 0.0
      %v3971 = vmax.f32 %v3907, 0.0
      %v3972 = vmax.f32 %v3908, 0.0
      %v3973 = vmax.f32 %v3909, 0.0
      %v3974 = vmax.f32 %v3910, 0.0
      %v3975 = vmax.f32 %v3911, 0.0
      %v3976 = vmax.f32 %v3912, 0.0
      %v3977 = vmax.f32 %v3913, 0.0
      %v3978 = vmax.f32 %v3914, 0.0
      %v3979 = vmax.f32 %v3915, 0.0
      %v3980 = vmax.f32 %v3916, 0.0
      %v3981 = vmax.f32 %v3917, 0.0
      %v3982 = vmax.f32 %v3918, 0.0
      %v3983 = vmax.f32 %v3919, 0.0
      %v3984 = vmax.f32 %v3920, 0.0
      %v3985 = vmax.f32 %v3921, 0.0
      %v3986 = vmax.f32 %v3922, 0.0
      %v3987 = vmax.f32 %v3923, 0.0
      %v3988 = vmax.f32 %v3924, 0.0
      %v3989 = vmax.f32 %v3925, 0.0
      %v3990 = vmax.f32 %v3926, 0.0
      %v3991 = vmax.f32 %v3927, 0.0
      %v3992 = vmax.f32 %v3928, 0.0
      %v3993 = vmax.f32 %v3929, 0.0
      %v3994 = vmax.f32 %v3930, 0.0
      %v3995 = vmax.f32 %v3931, 0.0
      %v3996 = vmax.f32 %v3932, 0.0
      %v3997 = vmax.f32 %v3933, 0.0
      %v3998 = vmax.f32 %v3934, 0.0
      %v3999 = vmax.f32 %v3935, 0.0
      %v4000 = vmax.f32 %v3936, 0.0
      %v4001 = vmax.f32 %v3937, 0.0
      %v4002 = vmax.f32 %v3938, 0.0
      %v4003 = vmax.f32 %v3939, 0.0
      %v4004 = vmax.f32 %v3940, 0.0
      %v4005 = vmax.f32 %v3941, 0.0
      %v4006 = vmax.f32 %v3942, 0.0
      %v4007 = vmax.f32 %v3943, 0.0
      %v4008 = vmax.f32 %v3944, 0.0
      %v4009 = vmax.f32 %v3945, 0.0
      %v4010 = vmax.f32 %v3946, 0.0
      %v4011 = vmax.f32 %v3947, 0.0
      %v4012 = vmax.f32 %v3948, 0.0
      %v4013 = vmax.f32 %v3949, 0.0
      %v4014 = vmax.f32 %v3950, 0.0
      %v4015 = vmax.f32 %v3951, 0.0
      %v4016 = vmax.f32 %v3952, 0.0
      %v4017 = vmax.f32 %v3953, 0.0
      %v4018 = vmax.f32 %v3954, 0.0
      %v4019 = vmax.f32 %v3955, 0.0
      %v4020 = vmax.f32 %v3956, 0.0
      %v4021 = vmax.f32 %v3957, 0.0
      %v4022 = vmax.f32 %v3958, 0.0
      %v4023 = vmax.f32 %v3959, 0.0
      %4024 = vst [vmem:[#allocation2] sm:$0x3f] %v3960
      %4025 = vst [vmem:[#allocation2 + $0x10] sm:$0x3f] %v3961
      %4026 = vst [vmem:[#allocation2 + $0x20] sm:$0x3f] %v3962
      %4027 = vst [vmem:[#allocation2 + $0x30] sm:$0x3f] %v3963
      %4028 = vst [vmem:[#allocation2 + $0x40] sm:$0x3f] %v3964
      %4029 = vst [vmem:[#allocation2 + $0x50] sm:$0x3f] %v3965
      %4030 = vst [vmem:[#allocation2 + $0x60] sm:$0x3f] %v3966
      %4031 = vst [vmem:[#allocation2 + $0x70] sm:$0x3f] %v3967
      %4032 = vst [vmem:[#allocation2 + $0x80] sm:$0x3f] %v3968
      %4033 = vst [vmem:[#allocation2 + $0x90] sm:$0x3f] %v3969
      %4034 = vst [vmem:[#allocation2 + $0xa0] sm:$0x3f] %v3970
      %4035 = vst [vmem:[#allocation2 + $0xb0] sm:$0x3f] %v3971
      %4036 = vst [vmem:[#allocation2 + $0xc0] sm:$0x3f] %v3972
      %4037 = vst [vmem:[#allocation2 + $0xd0] sm:$0x3f] %v3973
      %4038 = vst [vmem:[#allocation2 + $0xe0] sm:$0x3f] %v3974
      %4039 = vst [vmem:[#allocation2 + $0xf0] sm:$0x3f] %v3975
      %4040 = vst [vmem:[#allocation2 + $0x100] sm:$0x3f] %v3976
      %4041 = vst [vmem:[#allocation2 + $0x110] sm:$0x3f] %v3977
      %4042 = vst [vmem:[#allocation2 + $0x120] sm:$0x3f] %v3978
      %4043 = vst [vmem:[#allocation2 + $0x130] sm:$0x3f] %v3979
      %4044 = vst [vmem:[#allocation2 + $0x140] sm:$0x3f] %v3980
      %4045 = vst [vmem:[#allocation2 + $0x150] sm:$0x3f] %v3981
      %4046 = vst [vmem:[#allocation2 + $0x160] sm:$0x3f] %v3982
      %4047 = vst [vmem:[#allocation2 + $0x170] sm:$0x3f] %v3983
      %4048 = vst [vmem:[#allocation2 + $0x180] sm:$0x3f] %v3984
      %4049 = vst [vmem:[#allocation2 + $0x190] sm:$0x3f] %v3985
      %4050 = vst [vmem:[#allocation2 + $0x1a0] sm:$0x3f] %v3986
      %4051 = vst [vmem:[#allocation2 + $0x1b0] sm:$0x3f] %v3987
      %4052 = vst [vmem:[#allocation2 + $0x1c0] sm:$0x3f] %v3988
      %4053 = vst [vmem:[#allocation2 + $0x1d0] sm:$0x3f] %v3989
      %4054 = vst [vmem:[#allocation2 + $0x1e0] sm:$0x3f] %v3990
      %4055 = vst [vmem:[#allocation2 + $0x1f0] sm:$0x3f] %v3991
      %4056 = vst [vmem:[#allocation2 + $0x200] sm:$0x3f] %v3992
      %4057 = vst [vmem:[#allocation2 + $0x210] sm:$0x3f] %v3993
      %4058 = vst [vmem:[#allocation2 + $0x220] sm:$0x3f] %v3994
      %4059 = vst [vmem:[#allocation2 + $0x230] sm:$0x3f] %v3995
      %4060 = vst [vmem:[#allocation2 + $0x240] sm:$0x3f] %v3996
      %4061 = vst [vmem:[#allocation2 + $0x250] sm:$0x3f] %v3997
      %4062 = vst [vmem:[#allocation2 + $0x260] sm:$0x3f] %v3998
      %4063 = vst [vmem:[#allocation2 + $0x270] sm:$0x3f] %v3999
      %4064 = vst [vmem:[#allocation2 + $0x280] sm:$0x3f] %v4000
      %4065 = vst [vmem:[#allocation2 + $0x290] sm:$0x3f] %v4001
      %4066 = vst [vmem:[#allocation2 + $0x2a0] sm:$0x3f] %v4002
      %4067 = vst [vmem:[#allocation2 + $0x2b0] sm:$0x3f] %v4003
      %4068 = vst [vmem:[#allocation2 + $0x2c0] sm:$0x3f] %v4004
      %4069 = vst [vmem:[#allocation2 + $0x2d0] sm:$0x3f] %v4005
      %4070 = vst [vmem:[#allocation2 + $0x2e0] sm:$0x3f] %v4006
      %4071 = vst [vmem:[#allocation2 + $0x2f0] sm:$0x3f] %v4007
      %4072 = vst [vmem:[#allocation2 + $0x300] sm:$0x3f] %v4008
      %4073 = vst [vmem:[#allocation2 + $0x310] sm:$0x3f] %v4009
      %4074 = vst [vmem:[#allocation2 + $0x320] sm:$0x3f] %v4010
      %4075 = vst [vmem:[#allocation2 + $0x330] sm:$0x3f] %v4011
      %4076 = vst [vmem:[#allocation2 + $0x340] sm:$0x3f] %v4012
      %4077 = vst [vmem:[#allocation2 + $0x350] sm:$0x3f] %v4013
      %4078 = vst [vmem:[#allocation2 + $0x360] sm:$0x3f] %v4014
      %4079 = vst [vmem:[#allocation2 + $0x370] sm:$0x3f] %v4015
      %4080 = vst [vmem:[#allocation2 + $0x380] sm:$0x3f] %v4016
      %4081 = vst [vmem:[#allocation2 + $0x390] sm:$0x3f] %v4017
      %4082 = vst [vmem:[#allocation2 + $0x3a0] sm:$0x3f] %v4018
      %4083 = vst [vmem:[#allocation2 + $0x3b0] sm:$0x3f] %v4019
      %4084 = vst [vmem:[#allocation2 + $0x3c0] sm:$0x3f] %v4020
      %4085 = vst [vmem:[#allocation2 + $0x3d0] sm:$0x3f] %v4021
      %4086 = vst [vmem:[#allocation2 + $0x3e0] sm:$0x3f] %v4022
      %4087 = vst [vmem:[#allocation2 + $0x3f0] sm:$0x3f] %v4023
      %v4088 = vld [vmem:[%s2] sm:$0x1]
      %v4090 = vlaneseq
      %v4091 = vshrl.u32 %v4090, 7
      %v4092 = vsub.s32 0, %v4091
      %v4093 = vrot.slane %v4088, %v4092
      %v4095 = vadd.f32 %v3825, %v4093
      %v4096 = vadd.f32 %v3826, %v4093
      %v4097 = vadd.f32 %v3827, %v4093
      %v4098 = vadd.f32 %v3828, %v4093
      %v4099 = vadd.f32 %v3829, %v4093
      %v4100 = vadd.f32 %v3830, %v4093
      %v4101 = vadd.f32 %v3831, %v4093
      %v4102 = vadd.f32 %v3832, %v4093
      %v4103 = vadd.f32 %v3833, %v4093
      %v4104 = vadd.f32 %v3834, %v4093
      %v4105 = vadd.f32 %v3835, %v4093
      %v4106 = vadd.f32 %v3836, %v4093
      %v4107 = vadd.f32 %v3837, %v4093
      %v4108 = vadd.f32 %v3838, %v4093
      %v4109 = vadd.f32 %v3839, %v4093
      %v4110 = vadd.f32 %v3840, %v4093
      %v4111 = vadd.f32 %v3841, %v4093
      %v4112 = vadd.f32 %v3842, %v4093
      %v4113 = vadd.f32 %v3843, %v4093
      %v4114 = vadd.f32 %v3844, %v4093
      %v4115 = vadd.f32 %v3845, %v4093
      %v4116 = vadd.f32 %v3846, %v4093
      %v4117 = vadd.f32 %v3847, %v4093
      %v4118 = vadd.f32 %v3848, %v4093
      %v4119 = vadd.f32 %v3849, %v4093
      %v4120 = vadd.f32 %v3850, %v4093
      %v4121 = vadd.f32 %v3851, %v4093
      %v4122 = vadd.f32 %v3852, %v4093
      %v4123 = vadd.f32 %v3853, %v4093
      %v4124 = vadd.f32 %v3854, %v4093
      %v4125 = vadd.f32 %v3855, %v4093
      %v4126 = vadd.f32 %v3856, %v4093
      %v4127 = vadd.f32 %v3857, %v4093
      %v4128 = vadd.f32 %v3858, %v4093
      %v4129 = vadd.f32 %v3859, %v4093
      %v4130 = vadd.f32 %v3860, %v4093
      %v4131 = vadd.f32 %v3861, %v4093
      %v4132 = vadd.f32 %v3862, %v4093
      %v4133 = vadd.f32 %v3863, %v4093
      %v4134 = vadd.f32 %v3864, %v4093
      %v4135 = vadd.f32 %v3865, %v4093
      %v4136 = vadd.f32 %v3866, %v4093
      %v4137 = vadd.f32 %v3867, %v4093
      %v4138 = vadd.f32 %v3868, %v4093
      %v4139 = vadd.f32 %v3869, %v4093
      %v4140 = vadd.f32 %v3870, %v4093
      %v4141 = vadd.f32 %v3871, %v4093
      %v4142 = vadd.f32 %v3872, %v4093
      %v4143 = vadd.f32 %v3873, %v4093
      %v4144 = vadd.f32 %v3874, %v4093
      %v4145 = vadd.f32 %v3875, %v4093
      %v4146 = vadd.f32 %v3876, %v4093
      %v4147 = vadd.f32 %v3877, %v4093
      %v4148 = vadd.f32 %v3878, %v4093
      %v4149 = vadd.f32 %v3879, %v4093
      %v4150 = vadd.f32 %v3880, %v4093
      %v4151 = vadd.f32 %v3881, %v4093
      %v4152 = vadd.f32 %v3882, %v4093
      %v4153 = vadd.f32 %v3883, %v4093
      %v4154 = vadd.f32 %v3884, %v4093
      %v4155 = vadd.f32 %v3885, %v4093
      %v4156 = vadd.f32 %v3886, %v4093
      %v4157 = vadd.f32 %v3887, %v4093
      %v4158 = vadd.f32 %v3888, %v4093
      %v4159 = vmax.f32 %v4095, 0.0
      %v4160 = vmax.f32 %v4096, 0.0
      %v4161 = vmax.f32 %v4097, 0.0
      %v4162 = vmax.f32 %v4098, 0.0
      %v4163 = vmax.f32 %v4099, 0.0
      %v4164 = vmax.f32 %v4100, 0.0
      %v4165 = vmax.f32 %v4101, 0.0
      %v4166 = vmax.f32 %v4102, 0.0
      %v4167 = vmax.f32 %v4103, 0.0
      %v4168 = vmax.f32 %v4104, 0.0
      %v4169 = vmax.f32 %v4105, 0.0
      %v4170 = vmax.f32 %v4106, 0.0
      %v4171 = vmax.f32 %v4107, 0.0
      %v4172 = vmax.f32 %v4108, 0.0
      %v4173 = vmax.f32 %v4109, 0.0
      %v4174 = vmax.f32 %v4110, 0.0
      %v4175 = vmax.f32 %v4111, 0.0
      %v4176 = vmax.f32 %v4112, 0.0
      %v4177 = vmax.f32 %v4113, 0.0
      %v4178 = vmax.f32 %v4114, 0.0
      %v4179 = vmax.f32 %v4115, 0.0
      %v4180 = vmax.f32 %v4116, 0.0
      %v4181 = vmax.f32 %v4117, 0.0
      %v4182 = vmax.f32 %v4118, 0.0
      %v4183 = vmax.f32 %v4119, 0.0
      %v4184 = vmax.f32 %v4120, 0.0
      %v4185 = vmax.f32 %v4121, 0.0
      %v4186 = vmax.f32 %v4122, 0.0
      %v4187 = vmax.f32 %v4123, 0.0
      %v4188 = vmax.f32 %v4124, 0.0
      %v4189 = vmax.f32 %v4125, 0.0
      %v4190 = vmax.f32 %v4126, 0.0
      %v4191 = vmax.f32 %v4127, 0.0
      %v4192 = vmax.f32 %v4128, 0.0
      %v4193 = vmax.f32 %v4129, 0.0
      %v4194 = vmax.f32 %v4130, 0.0
      %v4195 = vmax.f32 %v4131, 0.0
      %v4196 = vmax.f32 %v4132, 0.0
      %v4197 = vmax.f32 %v4133, 0.0
      %v4198 = vmax.f32 %v4134, 0.0
      %v4199 = vmax.f32 %v4135, 0.0
      %v4200 = vmax.f32 %v4136, 0.0
      %v4201 = vmax.f32 %v4137, 0.0
      %v4202 = vmax.f32 %v4138, 0.0
      %v4203 = vmax.f32 %v4139, 0.0
      %v4204 = vmax.f32 %v4140, 0.0
      %v4205 = vmax.f32 %v4141, 0.0
      %v4206 = vmax.f32 %v4142, 0.0
      %v4207 = vmax.f32 %v4143, 0.0
      %v4208 = vmax.f32 %v4144, 0.0
      %v4209 = vmax.f32 %v4145, 0.0
      %v4210 = vmax.f32 %v4146, 0.0
      %v4211 = vmax.f32 %v4147, 0.0
      %v4212 = vmax.f32 %v4148, 0.0
      %v4213 = vmax.f32 %v4149, 0.0
      %v4214 = vmax.f32 %v4150, 0.0
      %v4215 = vmax.f32 %v4151, 0.0
      %v4216 = vmax.f32 %v4152, 0.0
      %v4217 = vmax.f32 %v4153, 0.0
      %v4218 = vmax.f32 %v4154, 0.0
      %v4219 = vmax.f32 %v4155, 0.0
      %v4220 = vmax.f32 %v4156, 0.0
      %v4221 = vmax.f32 %v4157, 0.0
      %v4222 = vmax.f32 %v4158, 0.0
      %4223 = vst [vmem:[#allocation2 + $0x8] sm:$0x3f] %v4159
      %4224 = vst [vmem:[#allocation2 + $0x18] sm:$0x3f] %v4160
      %4225 = vst [vmem:[#allocation2 + $0x28] sm:$0x3f] %v4161
      %4226 = vst [vmem:[#allocation2 + $0x38] sm:$0x3f] %v4162
      %4227 = vst [vmem:[#allocation2 + $0x48] sm:$0x3f] %v4163
      %4228 = vst [vmem:[#allocation2 + $0x58] sm:$0x3f] %v4164
      %4229 = vst [vmem:[#allocation2 + $0x68] sm:$0x3f] %v4165
      %4230 = vst [vmem:[#allocation2 + $0x78] sm:$0x3f] %v4166
      %4231 = vst [vmem:[#allocation2 + $0x88] sm:$0x3f] %v4167
      %4232 = vst [vmem:[#allocation2 + $0x98] sm:$0x3f] %v4168
      %4233 = vst [vmem:[#allocation2 + $0xa8] sm:$0x3f] %v4169
      %4234 = vst [vmem:[#allocation2 + $0xb8] sm:$0x3f] %v4170
      %4235 = vst [vmem:[#allocation2 + $0xc8] sm:$0x3f] %v4171
      %4236 = vst [vmem:[#allocation2 + $0xd8] sm:$0x3f] %v4172
      %4237 = vst [vmem:[#allocation2 + $0xe8] sm:$0x3f] %v4173
      %4238 = vst [vmem:[#allocation2 + $0xf8] sm:$0x3f] %v4174
      %4239 = vst [vmem:[#allocation2 + $0x108] sm:$0x3f] %v4175
      %4240 = vst [vmem:[#allocation2 + $0x118] sm:$0x3f] %v4176
      %4241 = vst [vmem:[#allocation2 + $0x128] sm:$0x3f] %v4177
      %4242 = vst [vmem:[#allocation2 + $0x138] sm:$0x3f] %v4178
      %4243 = vst [vmem:[#allocation2 + $0x148] sm:$0x3f] %v4179
      %4244 = vst [vmem:[#allocation2 + $0x158] sm:$0x3f] %v4180
      %4245 = vst [vmem:[#allocation2 + $0x168] sm:$0x3f] %v4181
      %4246 = vst [vmem:[#allocation2 + $0x178] sm:$0x3f] %v4182
      %4247 = vst [vmem:[#allocation2 + $0x188] sm:$0x3f] %v4183
      %4248 = vst [vmem:[#allocation2 + $0x198] sm:$0x3f] %v4184
      %4249 = vst [vmem:[#allocation2 + $0x1a8] sm:$0x3f] %v4185
      %4250 = vst [vmem:[#allocation2 + $0x1b8] sm:$0x3f] %v4186
      %4251 = vst [vmem:[#allocation2 + $0x1c8] sm:$0x3f] %v4187
      %4252 = vst [vmem:[#allocation2 + $0x1d8] sm:$0x3f] %v4188
      %4253 = vst [vmem:[#allocation2 + $0x1e8] sm:$0x3f] %v4189
      %4254 = vst [vmem:[#allocation2 + $0x1f8] sm:$0x3f] %v4190
      %4255 = vst [vmem:[#allocation2 + $0x208] sm:$0x3f] %v4191
      %4256 = vst [vmem:[#allocation2 + $0x218] sm:$0x3f] %v4192
      %4257 = vst [vmem:[#allocation2 + $0x228] sm:$0x3f] %v4193
      %4258 = vst [vmem:[#allocation2 + $0x238] sm:$0x3f] %v4194
      %4259 = vst [vmem:[#allocation2 + $0x248] sm:$0x3f] %v4195
      %4260 = vst [vmem:[#allocation2 + $0x258] sm:$0x3f] %v4196
      %4261 = vst [vmem:[#allocation2 + $0x268] sm:$0x3f] %v4197
      %4262 = vst [vmem:[#allocation2 + $0x278] sm:$0x3f] %v4198
      %4263 = vst [vmem:[#allocation2 + $0x288] sm:$0x3f] %v4199
      %4264 = vst [vmem:[#allocation2 + $0x298] sm:$0x3f] %v4200
      %4265 = vst [vmem:[#allocation2 + $0x2a8] sm:$0x3f] %v4201
      %4266 = vst [vmem:[#allocation2 + $0x2b8] sm:$0x3f] %v4202
      %4267 = vst [vmem:[#allocation2 + $0x2c8] sm:$0x3f] %v4203
      %4268 = vst [vmem:[#allocation2 + $0x2d8] sm:$0x3f] %v4204
      %4269 = vst [vmem:[#allocation2 + $0x2e8] sm:$0x3f] %v4205
      %4270 = vst [vmem:[#allocation2 + $0x2f8] sm:$0x3f] %v4206
      %4271 = vst [vmem:[#allocation2 + $0x308] sm:$0x3f] %v4207
      %4272 = vst [vmem:[#allocation2 + $0x318] sm:$0x3f] %v4208
      %4273 = vst [vmem:[#allocation2 + $0x328] sm:$0x3f] %v4209
      %4274 = vst [vmem:[#allocation2 + $0x338] sm:$0x3f] %v4210
      %4275 = vst [vmem:[#allocation2 + $0x348] sm:$0x3f] %v4211
      %4276 = vst [vmem:[#allocation2 + $0x358] sm:$0x3f] %v4212
      %4277 = vst [vmem:[#allocation2 + $0x368] sm:$0x3f] %v4213
      %4278 = vst [vmem:[#allocation2 + $0x378] sm:$0x3f] %v4214
      %4279 = vst [vmem:[#allocation2 + $0x388] sm:$0x3f] %v4215
      %4280 = vst [vmem:[#allocation2 + $0x398] sm:$0x3f] %v4216
      %4281 = vst [vmem:[#allocation2 + $0x3a8] sm:$0x3f] %v4217
      %4282 = vst [vmem:[#allocation2 + $0x3b8] sm:$0x3f] %v4218
      %4283 = vst [vmem:[#allocation2 + $0x3c8] sm:$0x3f] %v4219
      %4284 = vst [vmem:[#allocation2 + $0x3d8] sm:$0x3f] %v4220
      %4285 = vst [vmem:[#allocation2 + $0x3e8] sm:$0x3f] %v4221
      %4286 = vst [vmem:[#allocation2 + $0x3f8] sm:$0x3f] %v4222
      %v4287 = vld [vmem:[#allocation2] sm:$0xf]
      %v4288 = vld [vmem:[#allocation2 + $0x10] sm:$0xf]
      %v4289 = vld [vmem:[#allocation2 + $0x20] sm:$0xf]
      %v4290 = vld [vmem:[#allocation2 + $0x30] sm:$0xf]
      %v4291 = vld [vmem:[#allocation2 + $0x40] sm:$0xf]
      %v4292 = vld [vmem:[#allocation2 + $0x50] sm:$0xf]
      %v4293 = vld [vmem:[#allocation2 + $0x60] sm:$0xf]
      %v4294 = vld [vmem:[#allocation2 + $0x70] sm:$0xf]
      %v4295 = vld [vmem:[#allocation2 + $0x80] sm:$0xf]
      %v4296 = vld [vmem:[#allocation2 + $0x90] sm:$0xf]
      %v4297 = vld [vmem:[#allocation2 + $0xa0] sm:$0xf]
      %v4298 = vld [vmem:[#allocation2 + $0xb0] sm:$0xf]
      %v4299 = vld [vmem:[#allocation2 + $0xc0] sm:$0xf]
      %v4300 = vld [vmem:[#allocation2 + $0xd0] sm:$0xf]
      %v4301 = vld [vmem:[#allocation2 + $0xe0] sm:$0xf]
      %v4302 = vld [vmem:[#allocation2 + $0xf0] sm:$0xf]
      %v4303 = vld [vmem:[#allocation2 + $0x100] sm:$0xf]
      %v4304 = vld [vmem:[#allocation2 + $0x110] sm:$0xf]
      %v4305 = vld [vmem:[#allocation2 + $0x120] sm:$0xf]
      %v4306 = vld [vmem:[#allocation2 + $0x130] sm:$0xf]
      %v4307 = vld [vmem:[#allocation2 + $0x140] sm:$0xf]
      %v4308 = vld [vmem:[#allocation2 + $0x150] sm:$0xf]
      %v4309 = vld [vmem:[#allocation2 + $0x160] sm:$0xf]
      %v4310 = vld [vmem:[#allocation2 + $0x170] sm:$0xf]
      %v4311 = vld [vmem:[#allocation2 + $0x180] sm:$0xf]
      %v4312 = vld [vmem:[#allocation2 + $0x190] sm:$0xf]
      %v4313 = vld [vmem:[#allocation2 + $0x1a0] sm:$0xf]
      %v4314 = vld [vmem:[#allocation2 + $0x1b0] sm:$0xf]
      %v4315 = vld [vmem:[#allocation2 + $0x1c0] sm:$0xf]
      %v4316 = vld [vmem:[#allocation2 + $0x1d0] sm:$0xf]
      %v4317 = vld [vmem:[#allocation2 + $0x1e0] sm:$0xf]
      %v4318 = vld [vmem:[#allocation2 + $0x1f0] sm:$0xf]
      %v4319 = vld [vmem:[#allocation2 + $0x200] sm:$0xf]
      %v4320 = vld [vmem:[#allocation2 + $0x210] sm:$0xf]
      %v4321 = vld [vmem:[#allocation2 + $0x220] sm:$0xf]
      %v4322 = vld [vmem:[#allocation2 + $0x230] sm:$0xf]
      %v4323 = vld [vmem:[#allocation2 + $0x240] sm:$0xf]
      %v4324 = vld [vmem:[#allocation2 + $0x250] sm:$0xf]
      %v4325 = vld [vmem:[#allocation2 + $0x260] sm:$0xf]
      %v4326 = vld [vmem:[#allocation2 + $0x270] sm:$0xf]
      %v4327 = vld [vmem:[#allocation2 + $0x280] sm:$0xf]
      %v4328 = vld [vmem:[#allocation2 + $0x290] sm:$0xf]
      %v4329 = vld [vmem:[#allocation2 + $0x2a0] sm:$0xf]
      %v4330 = vld [vmem:[#allocation2 + $0x2b0] sm:$0xf]
      %v4331 = vld [vmem:[#allocation2 + $0x2c0] sm:$0xf]
      %v4332 = vld [vmem:[#allocation2 + $0x2d0] sm:$0xf]
      %v4333 = vld [vmem:[#allocation2 + $0x2e0] sm:$0xf]
      %v4334 = vld [vmem:[#allocation2 + $0x2f0] sm:$0xf]
      %v4335 = vld [vmem:[#allocation2 + $0x300] sm:$0xf]
      %v4336 = vld [vmem:[#allocation2 + $0x310] sm:$0xf]
      %v4337 = vld [vmem:[#allocation2 + $0x320] sm:$0xf]
      %v4338 = vld [vmem:[#allocation2 + $0x330] sm:$0xf]
      %v4339 = vld [vmem:[#allocation2 + $0x340] sm:$0xf]
      %v4340 = vld [vmem:[#allocation2 + $0x350] sm:$0xf]
      %v4341 = vld [vmem:[#allocation2 + $0x360] sm:$0xf]
      %v4342 = vld [vmem:[#allocation2 + $0x370] sm:$0xf]
      %v4343 = vld [vmem:[#allocation2 + $0x380] sm:$0xf]
      %v4344 = vld [vmem:[#allocation2 + $0x390] sm:$0xf]
      %v4345 = vld [vmem:[#allocation2 + $0x3a0] sm:$0xf]
      %v4346 = vld [vmem:[#allocation2 + $0x3b0] sm:$0xf]
      %v4347 = vld [vmem:[#allocation2 + $0x3c0] sm:$0xf]
      %v4348 = vld [vmem:[#allocation2 + $0x3d0] sm:$0xf]
      %v4349 = vld [vmem:[#allocation2 + $0x3e0] sm:$0xf]
      %v4350 = vld [vmem:[#allocation2 + $0x3f0] sm:$0xf]
      %v4351 = vld [vmem:[#allocation2 + $0x8] sm:$0xf]
      %v4352 = vld [vmem:[#allocation2 + $0x18] sm:$0xf]
      %v4353 = vld [vmem:[#allocation2 + $0x28] sm:$0xf]
      %v4354 = vld [vmem:[#allocation2 + $0x38] sm:$0xf]
      %v4355 = vld [vmem:[#allocation2 + $0x48] sm:$0xf]
      %v4356 = vld [vmem:[#allocation2 + $0x58] sm:$0xf]
      %v4357 = vld [vmem:[#allocation2 + $0x68] sm:$0xf]
      %v4358 = vld [vmem:[#allocation2 + $0x78] sm:$0xf]
      %v4359 = vld [vmem:[#allocation2 + $0x88] sm:$0xf]
      %v4360 = vld [vmem:[#allocation2 + $0x98] sm:$0xf]
      %v4361 = vld [vmem:[#allocation2 + $0xa8] sm:$0xf]
      %v4362 = vld [vmem:[#allocation2 + $0xb8] sm:$0xf]
      %v4363 = vld [vmem:[#allocation2 + $0xc8] sm:$0xf]
      %v4364 = vld [vmem:[#allocation2 + $0xd8] sm:$0xf]
      %v4365 = vld [vmem:[#allocation2 + $0xe8] sm:$0xf]
      %v4366 = vld [vmem:[#allocation2 + $0xf8] sm:$0xf]
      %v4367 = vld [vmem:[#allocation2 + $0x108] sm:$0xf]
      %v4368 = vld [vmem:[#allocation2 + $0x118] sm:$0xf]
      %v4369 = vld [vmem:[#allocation2 + $0x128] sm:$0xf]
      %v4370 = vld [vmem:[#allocation2 + $0x138] sm:$0xf]
      %v4371 = vld [vmem:[#allocation2 + $0x148] sm:$0xf]
      %v4372 = vld [vmem:[#allocation2 + $0x158] sm:$0xf]
      %v4373 = vld [vmem:[#allocation2 + $0x168] sm:$0xf]
      %v4374 = vld [vmem:[#allocation2 + $0x178] sm:$0xf]
      %v4375 = vld [vmem:[#allocation2 + $0x188] sm:$0xf]
      %v4376 = vld [vmem:[#allocation2 + $0x198] sm:$0xf]
      %v4377 = vld [vmem:[#allocation2 + $0x1a8] sm:$0xf]
      %v4378 = vld [vmem:[#allocation2 + $0x1b8] sm:$0xf]
      %v4379 = vld [vmem:[#allocation2 + $0x1c8] sm:$0xf]
      %v4380 = vld [vmem:[#allocation2 + $0x1d8] sm:$0xf]
      %v4381 = vld [vmem:[#allocation2 + $0x1e8] sm:$0xf]
      %v4382 = vld [vmem:[#allocation2 + $0x1f8] sm:$0xf]
      %v4383 = vld [vmem:[#allocation2 + $0x208] sm:$0xf]
      %v4384 = vld [vmem:[#allocation2 + $0x218] sm:$0xf]
      %v4385 = vld [vmem:[#allocation2 + $0x228] sm:$0xf]
      %v4386 = vld [vmem:[#allocation2 + $0x238] sm:$0xf]
      %v4387 = vld [vmem:[#allocation2 + $0x248] sm:$0xf]
      %v4388 = vld [vmem:[#allocation2 + $0x258] sm:$0xf]
      %v4389 = vld [vmem:[#allocation2 + $0x268] sm:$0xf]
      %v4390 = vld [vmem:[#allocation2 + $0x278] sm:$0xf]
      %v4391 = vld [vmem:[#allocation2 + $0x288] sm:$0xf]
      %v4392 = vld [vmem:[#allocation2 + $0x298] sm:$0xf]
      %v4393 = vld [vmem:[#allocation2 + $0x2a8] sm:$0xf]
      %v4394 = vld [vmem:[#allocation2 + $0x2b8] sm:$0xf]
      %v4395 = vld [vmem:[#allocation2 + $0x2c8] sm:$0xf]
      %v4396 = vld [vmem:[#allocation2 + $0x2d8] sm:$0xf]
      %v4397 = vld [vmem:[#allocation2 + $0x2e8] sm:$0xf]
      %v4398 = vld [vmem:[#allocation2 + $0x2f8] sm:$0xf]
      %v4399 = vld [vmem:[#allocation2 + $0x308] sm:$0xf]
      %v4400 = vld [vmem:[#allocation2 + $0x318] sm:$0xf]
      %v4401 = vld [vmem:[#allocation2 + $0x328] sm:$0xf]
      %v4402 = vld [vmem:[#allocation2 + $0x338] sm:$0xf]
      %v4403 = vld [vmem:[#allocation2 + $0x348] sm:$0xf]
      %v4404 = vld [vmem:[#allocation2 + $0x358] sm:$0xf]
      %v4405 = vld [vmem:[#allocation2 + $0x368] sm:$0xf]
      %v4406 = vld [vmem:[#allocation2 + $0x378] sm:$0xf]
      %v4407 = vld [vmem:[#allocation2 + $0x388] sm:$0xf]
      %v4408 = vld [vmem:[#allocation2 + $0x398] sm:$0xf]
      %v4409 = vld [vmem:[#allocation2 + $0x3a8] sm:$0xf]
      %v4410 = vld [vmem:[#allocation2 + $0x3b8] sm:$0xf]
      %v4411 = vld [vmem:[#allocation2 + $0x3c8] sm:$0xf]
      %v4412 = vld [vmem:[#allocation2 + $0x3d8] sm:$0xf]
      %v4413 = vld [vmem:[#allocation2 + $0x3e8] sm:$0xf]
      %v4414 = vld [vmem:[#allocation2 + $0x3f8] sm:$0xf]
      %v4415 = vld [vmem:[#allocation2 + $0x1] sm:$0xf]
      %v4416 = vld [vmem:[#allocation2 + $0x11] sm:$0xf]
      %v4417 = vld [vmem:[#allocation2 + $0x21] sm:$0xf]
      %v4418 = vld [vmem:[#allocation2 + $0x31] sm:$0xf]
      %v4419 = vld [vmem:[#allocation2 + $0x41] sm:$0xf]
      %v4420 = vld [vmem:[#allocation2 + $0x51] sm:$0xf]
      %v4421 = vld [vmem:[#allocation2 + $0x61] sm:$0xf]
      %v4422 = vld [vmem:[#allocation2 + $0x71] sm:$0xf]
      %v4423 = vld [vmem:[#allocation2 + $0x81] sm:$0xf]
      %v4424 = vld [vmem:[#allocation2 + $0x91] sm:$0xf]
      %v4425 = vld [vmem:[#allocation2 + $0xa1] sm:$0xf]
      %v4426 = vld [vmem:[#allocation2 + $0xb1] sm:$0xf]
      %v4427 = vld [vmem:[#allocation2 + $0xc1] sm:$0xf]
      %v4428 = vld [vmem:[#allocation2 + $0xd1] sm:$0xf]
      %v4429 = vld [vmem:[#allocation2 + $0xe1] sm:$0xf]
      %v4430 = vld [vmem:[#allocation2 + $0xf1] sm:$0xf]
      %v4431 = vld [vmem:[#allocation2 + $0x101] sm:$0xf]
      %v4432 = vld [vmem:[#allocation2 + $0x111] sm:$0xf]
      %v4433 = vld [vmem:[#allocation2 + $0x121] sm:$0xf]
      %v4434 = vld [vmem:[#allocation2 + $0x131] sm:$0xf]
      %v4435 = vld [vmem:[#allocation2 + $0x141] sm:$0xf]
      %v4436 = vld [vmem:[#allocation2 + $0x151] sm:$0xf]
      %v4437 = vld [vmem:[#allocation2 + $0x161] sm:$0xf]
      %v4438 = vld [vmem:[#allocation2 + $0x171] sm:$0xf]
      %v4439 = vld [vmem:[#allocation2 + $0x181] sm:$0xf]
      %v4440 = vld [vmem:[#allocation2 + $0x191] sm:$0xf]
      %v4441 = vld [vmem:[#allocation2 + $0x1a1] sm:$0xf]
      %v4442 = vld [vmem:[#allocation2 + $0x1b1] sm:$0xf]
      %v4443 = vld [vmem:[#allocation2 + $0x1c1] sm:$0xf]
      %v4444 = vld [vmem:[#allocation2 + $0x1d1] sm:$0xf]
      %v4445 = vld [vmem:[#allocation2 + $0x1e1] sm:$0xf]
      %v4446 = vld [vmem:[#allocation2 + $0x1f1] sm:$0xf]
      %v4447 = vld [vmem:[#allocation2 + $0x201] sm:$0xf]
      %v4448 = vld [vmem:[#allocation2 + $0x211] sm:$0xf]
      %v4449 = vld [vmem:[#allocation2 + $0x221] sm:$0xf]
      %v4450 = vld [vmem:[#allocation2 + $0x231] sm:$0xf]
      %v4451 = vld [vmem:[#allocation2 + $0x241] sm:$0xf]
      %v4452 = vld [vmem:[#allocation2 + $0x251] sm:$0xf]
      %v4453 = vld [vmem:[#allocation2 + $0x261] sm:$0xf]
      %v4454 = vld [vmem:[#allocation2 + $0x271] sm:$0xf]
      %v4455 = vld [vmem:[#allocation2 + $0x281] sm:$0xf]
      %v4456 = vld [vmem:[#allocation2 + $0x291] sm:$0xf]
      %v4457 = vld [vmem:[#allocation2 + $0x2a1] sm:$0xf]
      %v4458 = vld [vmem:[#allocation2 + $0x2b1] sm:$0xf]
      %v4459 = vld [vmem:[#allocation2 + $0x2c1] sm:$0xf]
      %v4460 = vld [vmem:[#allocation2 + $0x2d1] sm:$0xf]
      %v4461 = vld [vmem:[#allocation2 + $0x2e1] sm:$0xf]
      %v4462 = vld [vmem:[#allocation2 + $0x2f1] sm:$0xf]
      %v4463 = vld [vmem:[#allocation2 + $0x301] sm:$0xf]
      %v4464 = vld [vmem:[#allocation2 + $0x311] sm:$0xf]
      %v4465 = vld [vmem:[#allocation2 + $0x321] sm:$0xf]
      %v4466 = vld [vmem:[#allocation2 + $0x331] sm:$0xf]
      %v4467 = vld [vmem:[#allocation2 + $0x341] sm:$0xf]
      %v4468 = vld [vmem:[#allocation2 + $0x351] sm:$0xf]
      %v4469 = vld [vmem:[#allocation2 + $0x361] sm:$0xf]
      %v4470 = vld [vmem:[#allocation2 + $0x371] sm:$0xf]
      %v4471 = vld [vmem:[#allocation2 + $0x381] sm:$0xf]
      %v4472 = vld [vmem:[#allocation2 + $0x391] sm:$0xf]
      %v4473 = vld [vmem:[#allocation2 + $0x3a1] sm:$0xf]
      %v4474 = vld [vmem:[#allocation2 + $0x3b1] sm:$0xf]
      %v4475 = vld [vmem:[#allocation2 + $0x3c1] sm:$0xf]
      %v4476 = vld [vmem:[#allocation2 + $0x3d1] sm:$0xf]
      %v4477 = vld [vmem:[#allocation2 + $0x3e1] sm:$0xf]
      %v4478 = vld [vmem:[#allocation2 + $0x3f1] sm:$0xf]
      %v4479 = vld [vmem:[#allocation2 + $0x9] sm:$0xf]
      %v4480 = vld [vmem:[#allocation2 + $0x19] sm:$0xf]
      %v4481 = vld [vmem:[#allocation2 + $0x29] sm:$0xf]
      %v4482 = vld [vmem:[#allocation2 + $0x39] sm:$0xf]
      %v4483 = vld [vmem:[#allocation2 + $0x49] sm:$0xf]
      %v4484 = vld [vmem:[#allocation2 + $0x59] sm:$0xf]
      %v4485 = vld [vmem:[#allocation2 + $0x69] sm:$0xf]
      %v4486 = vld [vmem:[#allocation2 + $0x79] sm:$0xf]
      %v4487 = vld [vmem:[#allocation2 + $0x89] sm:$0xf]
      %v4488 = vld [vmem:[#allocation2 + $0x99] sm:$0xf]
      %v4489 = vld [vmem:[#allocation2 + $0xa9] sm:$0xf]
      %v4490 = vld [vmem:[#allocation2 + $0xb9] sm:$0xf]
      %v4491 = vld [vmem:[#allocation2 + $0xc9] sm:$0xf]
      %v4492 = vld [vmem:[#allocation2 + $0xd9] sm:$0xf]
      %v4493 = vld [vmem:[#allocation2 + $0xe9] sm:$0xf]
      %v4494 = vld [vmem:[#allocation2 + $0xf9] sm:$0xf]
      %v4495 = vld [vmem:[#allocation2 + $0x109] sm:$0xf]
      %v4496 = vld [vmem:[#allocation2 + $0x119] sm:$0xf]
      %v4497 = vld [vmem:[#allocation2 + $0x129] sm:$0xf]
      %v4498 = vld [vmem:[#allocation2 + $0x139] sm:$0xf]
      %v4499 = vld [vmem:[#allocation2 + $0x149] sm:$0xf]
      %v4500 = vld [vmem:[#allocation2 + $0x159] sm:$0xf]
      %v4501 = vld [vmem:[#allocation2 + $0x169] sm:$0xf]
      %v4502 = vld [vmem:[#allocation2 + $0x179] sm:$0xf]
      %v4503 = vld [vmem:[#allocation2 + $0x189] sm:$0xf]
      %v4504 = vld [vmem:[#allocation2 + $0x199] sm:$0xf]
      %v4505 = vld [vmem:[#allocation2 + $0x1a9] sm:$0xf]
      %v4506 = vld [vmem:[#allocation2 + $0x1b9] sm:$0xf]
      %v4507 = vld [vmem:[#allocation2 + $0x1c9] sm:$0xf]
      %v4508 = vld [vmem:[#allocation2 + $0x1d9] sm:$0xf]
      %v4509 = vld [vmem:[#allocation2 + $0x1e9] sm:$0xf]
      %v4510 = vld [vmem:[#allocation2 + $0x1f9] sm:$0xf]
      %v4511 = vld [vmem:[#allocation2 + $0x209] sm:$0xf]
      %v4512 = vld [vmem:[#allocation2 + $0x219] sm:$0xf]
      %v4513 = vld [vmem:[#allocation2 + $0x229] sm:$0xf]
      %v4514 = vld [vmem:[#allocation2 + $0x239] sm:$0xf]
      %v4515 = vld [vmem:[#allocation2 + $0x249] sm:$0xf]
      %v4516 = vld [vmem:[#allocation2 + $0x259] sm:$0xf]
      %v4517 = vld [vmem:[#allocation2 + $0x269] sm:$0xf]
      %v4518 = vld [vmem:[#allocation2 + $0x279] sm:$0xf]
      %v4519 = vld [vmem:[#allocation2 + $0x289] sm:$0xf]
      %v4520 = vld [vmem:[#allocation2 + $0x299] sm:$0xf]
      %v4521 = vld [vmem:[#allocation2 + $0x2a9] sm:$0xf]
      %v4522 = vld [vmem:[#allocation2 + $0x2b9] sm:$0xf]
      %v4523 = vld [vmem:[#allocation2 + $0x2c9] sm:$0xf]
      %v4524 = vld [vmem:[#allocation2 + $0x2d9] sm:$0xf]
      %v4525 = vld [vmem:[#allocation2 + $0x2e9] sm:$0xf]
      %v4526 = vld [vmem:[#allocation2 + $0x2f9] sm:$0xf]
      %v4527 = vld [vmem:[#allocation2 + $0x309] sm:$0xf]
      %v4528 = vld [vmem:[#allocation2 + $0x319] sm:$0xf]
      %v4529 = vld [vmem:[#allocation2 + $0x329] sm:$0xf]
      %v4530 = vld [vmem:[#allocation2 + $0x339] sm:$0xf]
      %v4531 = vld [vmem:[#allocation2 + $0x349] sm:$0xf]
      %v4532 = vld [vmem:[#allocation2 + $0x359] sm:$0xf]
      %v4533 = vld [vmem:[#allocation2 + $0x369] sm:$0xf]
      %v4534 = vld [vmem:[#allocation2 + $0x379] sm:$0xf]
      %v4535 = vld [vmem:[#allocation2 + $0x389] sm:$0xf]
      %v4536 = vld [vmem:[#allocation2 + $0x399] sm:$0xf]
      %v4537 = vld [vmem:[#allocation2 + $0x3a9] sm:$0xf]
      %v4538 = vld [vmem:[#allocation2 + $0x3b9] sm:$0xf]
      %v4539 = vld [vmem:[#allocation2 + $0x3c9] sm:$0xf]
      %v4540 = vld [vmem:[#allocation2 + $0x3d9] sm:$0xf]
      %v4541 = vld [vmem:[#allocation2 + $0x3e9] sm:$0xf]
      %v4542 = vld [vmem:[#allocation2 + $0x3f9] sm:$0xf]
      %v4543 = vld [vmem:[#allocation2 + $0x2] sm:$0xf]
      %v4544 = vld [vmem:[#allocation2 + $0x12] sm:$0xf]
      %v4545 = vld [vmem:[#allocation2 + $0x22] sm:$0xf]
      %v4546 = vld [vmem:[#allocation2 + $0x32] sm:$0xf]
      %v4547 = vld [vmem:[#allocation2 + $0x42] sm:$0xf]
      %v4548 = vld [vmem:[#allocation2 + $0x52] sm:$0xf]
      %v4549 = vld [vmem:[#allocation2 + $0x62] sm:$0xf]
      %v4550 = vld [vmem:[#allocation2 + $0x72] sm:$0xf]
      %v4551 = vld [vmem:[#allocation2 + $0x82] sm:$0xf]
      %v4552 = vld [vmem:[#allocation2 + $0x92] sm:$0xf]
      %v4553 = vld [vmem:[#allocation2 + $0xa2] sm:$0xf]
      %v4554 = vld [vmem:[#allocation2 + $0xb2] sm:$0xf]
      %v4555 = vld [vmem:[#allocation2 + $0xc2] sm:$0xf]
      %v4556 = vld [vmem:[#allocation2 + $0xd2] sm:$0xf]
      %v4557 = vld [vmem:[#allocation2 + $0xe2] sm:$0xf]
      %v4558 = vld [vmem:[#allocation2 + $0xf2] sm:$0xf]
      %v4559 = vld [vmem:[#allocation2 + $0x102] sm:$0xf]
      %v4560 = vld [vmem:[#allocation2 + $0x112] sm:$0xf]
      %v4561 = vld [vmem:[#allocation2 + $0x122] sm:$0xf]
      %v4562 = vld [vmem:[#allocation2 + $0x132] sm:$0xf]
      %v4563 = vld [vmem:[#allocation2 + $0x142] sm:$0xf]
      %v4564 = vld [vmem:[#allocation2 + $0x152] sm:$0xf]
      %v4565 = vld [vmem:[#allocation2 + $0x162] sm:$0xf]
      %v4566 = vld [vmem:[#allocation2 + $0x172] sm:$0xf]
      %v4567 = vld [vmem:[#allocation2 + $0x182] sm:$0xf]
      %v4568 = vld [vmem:[#allocation2 + $0x192] sm:$0xf]
      %v4569 = vld [vmem:[#allocation2 + $0x1a2] sm:$0xf]
      %v4570 = vld [vmem:[#allocation2 + $0x1b2] sm:$0xf]
      %v4571 = vld [vmem:[#allocation2 + $0x1c2] sm:$0xf]
      %v4572 = vld [vmem:[#allocation2 + $0x1d2] sm:$0xf]
      %v4573 = vld [vmem:[#allocation2 + $0x1e2] sm:$0xf]
      %v4574 = vld [vmem:[#allocation2 + $0x1f2] sm:$0xf]
      %v4575 = vld [vmem:[#allocation2 + $0x202] sm:$0xf]
      %v4576 = vld [vmem:[#allocation2 + $0x212] sm:$0xf]
      %v4577 = vld [vmem:[#allocation2 + $0x222] sm:$0xf]
      %v4578 = vld [vmem:[#allocation2 + $0x232] sm:$0xf]
      %v4579 = vld [vmem:[#allocation2 + $0x242] sm:$0xf]
      %v4580 = vld [vmem:[#allocation2 + $0x252] sm:$0xf]
      %v4581 = vld [vmem:[#allocation2 + $0x262] sm:$0xf]
      %v4582 = vld [vmem:[#allocation2 + $0x272] sm:$0xf]
      %v4583 = vld [vmem:[#allocation2 + $0x282] sm:$0xf]
      %v4584 = vld [vmem:[#allocation2 + $0x292] sm:$0xf]
      %v4585 = vld [vmem:[#allocation2 + $0x2a2] sm:$0xf]
      %v4586 = vld [vmem:[#allocation2 + $0x2b2] sm:$0xf]
      %v4587 = vld [vmem:[#allocation2 + $0x2c2] sm:$0xf]
      %v4588 = vld [vmem:[#allocation2 + $0x2d2] sm:$0xf]
      %v4589 = vld [vmem:[#allocation2 + $0x2e2] sm:$0xf]
      %v4590 = vld [vmem:[#allocation2 + $0x2f2] sm:$0xf]
      %v4591 = vld [vmem:[#allocation2 + $0x302] sm:$0xf]
      %v4592 = vld [vmem:[#allocation2 + $0x312] sm:$0xf]
      %v4593 = vld [vmem:[#allocation2 + $0x322] sm:$0xf]
      %v4594 = vld [vmem:[#allocation2 + $0x332] sm:$0xf]
      %v4595 = vld [vmem:[#allocation2 + $0x342] sm:$0xf]
      %v4596 = vld [vmem:[#allocation2 + $0x352] sm:$0xf]
      %v4597 = vld [vmem:[#allocation2 + $0x362] sm:$0xf]
      %v4598 = vld [vmem:[#allocation2 + $0x372] sm:$0xf]
      %v4599 = vld [vmem:[#allocation2 + $0x382] sm:$0xf]
      %v4600 = vld [vmem:[#allocation2 + $0x392] sm:$0xf]
      %v4601 = vld [vmem:[#allocation2 + $0x3a2] sm:$0xf]
      %v4602 = vld [vmem:[#allocation2 + $0x3b2] sm:$0xf]
      %v4603 = vld [vmem:[#allocation2 + $0x3c2] sm:$0xf]
      %v4604 = vld [vmem:[#allocation2 + $0x3d2] sm:$0xf]
      %v4605 = vld [vmem:[#allocation2 + $0x3e2] sm:$0xf]
      %v4606 = vld [vmem:[#allocation2 + $0x3f2] sm:$0xf]
      %v4927 = vcombine.low %v4287, %v4351
      %v4928 = vcombine.low %v4415, %v4479
      %v4929 = vcombine.low %v4288, %v4352
      %v4930 = vcombine.low %v4416, %v4480
      %v4931 = vcombine.low %v4289, %v4353
      %v4932 = vcombine.low %v4417, %v4481
      %v4933 = vcombine.low %v4290, %v4354
      %v4934 = vcombine.low %v4418, %v4482
      %v4935 = vcombine.low %v4291, %v4355
      %v4936 = vcombine.low %v4419, %v4483
      %v4937 = vcombine.low %v4292, %v4356
      %v4938 = vcombine.low %v4420, %v4484
      %v4939 = vcombine.low %v4293, %v4357
      %v4940 = vcombine.low %v4421, %v4485
      %v4941 = vcombine.low %v4294, %v4358
      %v4942 = vcombine.low %v4422, %v4486
      %v4943 = vcombine.low %v4295, %v4359
      %v4944 = vcombine.low %v4423, %v4487
      %v4945 = vcombine.low %v4296, %v4360
      %v4946 = vcombine.low %v4424, %v4488
      %v4947 = vcombine.low %v4297, %v4361
      %v4948 = vcombine.low %v4425, %v4489
      %v4949 = vcombine.low %v4298, %v4362
      %v4950 = vcombine.low %v4426, %v4490
      %v4951 = vcombine.low %v4299, %v4363
      %v4952 = vcombine.low %v4427, %v4491
      %v4953 = vcombine.low %v4300, %v4364
      %v4954 = vcombine.low %v4428, %v4492
      %v4955 = vcombine.low %v4301, %v4365
      %v4956 = vcombine.low %v4429, %v4493
      %v4957 = vcombine.low %v4302, %v4366
      %v4958 = vcombine.low %v4430, %v4494
      %v4959 = vcombine.low %v4303, %v4367
      %v4960 = vcombine.low %v4431, %v4495
      %v4961 = vcombine.low %v4304, %v4368
      %v4962 = vcombine.low %v4432, %v4496
      %v4963 = vcombine.low %v4305, %v4369
      %v4964 = vcombine.low %v4433, %v4497
      %v4965 = vcombine.low %v4306, %v4370
      %v4966 = vcombine.low %v4434, %v4498
      %v4967 = vcombine.low %v4307, %v4371
      %v4968 = vcombine.low %v4435, %v4499
      %v4969 = vcombine.low %v4308, %v4372
      %v4970 = vcombine.low %v4436, %v4500
      %v4971 = vcombine.low %v4309, %v4373
      %v4972 = vcombine.low %v4437, %v4501
      %v4973 = vcombine.low %v4310, %v4374
      %v4974 = vcombine.low %v4438, %v4502
      %v4975 = vcombine.low %v4311, %v4375
      %v4976 = vcombine.low %v4439, %v4503
      %v4977 = vcombine.low %v4312, %v4376
      %v4978 = vcombine.low %v4440, %v4504
      %v4979 = vcombine.low %v4313, %v4377
      %v4980 = vcombine.low %v4441, %v4505
      %v4981 = vcombine.low %v4314, %v4378
      %v4982 = vcombine.low %v4442, %v4506
      %v4983 = vcombine.low %v4315, %v4379
      %v4984 = vcombine.low %v4443, %v4507
      %v4985 = vcombine.low %v4316, %v4380
      %v4986 = vcombine.low %v4444, %v4508
      %v4987 = vcombine.low %v4317, %v4381
      %v4988 = vcombine.low %v4445, %v4509
      %v4989 = vcombine.low %v4318, %v4382
      %v4990 = vcombine.low %v4446, %v4510
      %v4991 = vcombine.low %v4319, %v4383
      %v4992 = vcombine.low %v4447, %v4511
      %v4993 = vcombine.low %v4320, %v4384
      %v4994 = vcombine.low %v4448, %v4512
      %v4995 = vcombine.low %v4321, %v4385
      %v4996 = vcombine.low %v4449, %v4513
      %v4997 = vcombine.low %v4322, %v4386
      %v4998 = vcombine.low %v4450, %v4514
      %v4999 = vcombine.low %v4323, %v4387
      %v5000 = vcombine.low %v4451, %v4515
      %v5001 = vcombine.low %v4324, %v4388
      %v5002 = vcombine.low %v4452, %v4516
      %v5003 = vcombine.low %v4325, %v4389
      %v5004 = vcombine.low %v4453, %v4517
      %v5005 = vcombine.low %v4326, %v4390
      %v5006 = vcombine.low %v4454, %v4518
      %v5007 = vcombine.low %v4327, %v4391
      %v5008 = vcombine.low %v4455, %v4519
      %v5009 = vcombine.low %v4328, %v4392
      %v5010 = vcombine.low %v4456, %v4520
      %v5011 = vcombine.low %v4329, %v4393
      %v5012 = vcombine.low %v4457, %v4521
      %v5013 = vcombine.low %v4330, %v4394
      %v5014 = vcombine.low %v4458, %v4522
      %v5015 = vcombine.low %v4331, %v4395
      %v5016 = vcombine.low %v4459, %v4523
      %v5017 = vcombine.low %v4332, %v4396
      %v5018 = vcombine.low %v4460, %v4524
      %v5019 = vcombine.low %v4333, %v4397
      %v5020 = vcombine.low %v4461, %v4525
      %v5021 = vcombine.low %v4334, %v4398
      %v5022 = vcombine.low %v4462, %v4526
      %v5023 = vcombine.low %v4335, %v4399
      %v5024 = vcombine.low %v4463, %v4527
      %v5025 = vcombine.low %v4336, %v4400
      %v5026 = vcombine.low %v4464, %v4528
      %v5027 = vcombine.low %v4337, %v4401
      %v5028 = vcombine.low %v4465, %v4529
      %v5029 = vcombine.low %v4338, %v4402
      %v5030 = vcombine.low %v4466, %v4530
      %v5031 = vcombine.low %v4339, %v4403
      %v5032 = vcombine.low %v4467, %v4531
      %v5033 = vcombine.low %v4340, %v4404
      %v5034 = vcombine.low %v4468, %v4532
      %v5035 = vcombine.low %v4341, %v4405
      %v5036 = vcombine.low %v4469, %v4533
      %v5037 = vcombine.low %v4342, %v4406
      %v5038 = vcombine.low %v4470, %v4534
      %v5039 = vcombine.low %v4343, %v4407
      %v5040 = vcombine.low %v4471, %v4535
      %v5041 = vcombine.low %v4344, %v4408
      %v5042 = vcombine.low %v4472, %v4536
      %v5043 = vcombine.low %v4345, %v4409
      %v5044 = vcombine.low %v4473, %v4537
      %v5045 = vcombine.low %v4346, %v4410
      %v5046 = vcombine.low %v4474, %v4538
      %v5047 = vcombine.low %v4347, %v4411
      %v5048 = vcombine.low %v4475, %v4539
      %v5049 = vcombine.low %v4348, %v4412
      %v5050 = vcombine.low %v4476, %v4540
      %v5051 = vcombine.low %v4349, %v4413
      %v5052 = vcombine.low %v4477, %v4541
      %v5053 = vcombine.low %v4350, %v4414
      %v5054 = vcombine.low %v4478, %v4542
      %v5055 = vcombine.low %v4927, %v4929
      %v5056 = vcombine.high %v4927, %v4929
      %v5057 = vcombine.low %v4928, %v4930
      %v5058 = vcombine.high %v4928, %v4930
      %v5059 = vcombine.low %v4543, %v4544
      %v5060 = vcombine.low %v4931, %v4933
      %v5061 = vcombine.high %v4931, %v4933
      %v5062 = vcombine.low %v4932, %v4934
      %v5063 = vcombine.high %v4932, %v4934
      %v5064 = vcombine.low %v4545, %v4546
      %v5065 = vcombine.low %v4935, %v4937
      %v5066 = vcombine.high %v4935, %v4937
      %v5067 = vcombine.low %v4936, %v4938
      %v5068 = vcombine.high %v4936, %v4938
      %v5069 = vcombine.low %v4547, %v4548
      %v5070 = vcombine.low %v4939, %v4941
      %v5071 = vcombine.high %v4939, %v4941
      %v5072 = vcombine.low %v4940, %v4942
      %v5073 = vcombine.high %v4940, %v4942
      %v5074 = vcombine.low %v4549, %v4550
      %v5075 = vcombine.low %v4943, %v4945
      %v5076 = vcombine.high %v4943, %v4945
      %v5077 = vcombine.low %v4944, %v4946
      %v5078 = vcombine.high %v4944, %v4946
      %v5079 = vcombine.low %v4551, %v4552
      %v5080 = vcombine.low %v4947, %v4949
      %v5081 = vcombine.high %v4947, %v4949
      %v5082 = vcombine.low %v4948, %v4950
      %v5083 = vcombine.high %v4948, %v4950
      %v5084 = vcombine.low %v4553, %v4554
      %v5085 = vcombine.low %v4951, %v4953
      %v5086 = vcombine.high %v4951, %v4953
      %v5087 = vcombine.low %v4952, %v4954
      %v5088 = vcombine.high %v4952, %v4954
      %v5089 = vcombine.low %v4555, %v4556
      %v5090 = vcombine.low %v4955, %v4957
      %v5091 = vcombine.high %v4955, %v4957
      %v5092 = vcombine.low %v4956, %v4958
      %v5093 = vcombine.high %v4956, %v4958
      %v5094 = vcombine.low %v4557, %v4558
      %v5095 = vcombine.low %v4959, %v4961
      %v5096 = vcombine.high %v4959, %v4961
      %v5097 = vcombine.low %v4960, %v4962
      %v5098 = vcombine.high %v4960, %v4962
      %v5099 = vcombine.low %v4559, %v4560
      %v5100 = vcombine.low %v4963, %v4965
      %v5101 = vcombine.high %v4963, %v4965
      %v5102 = vcombine.low %v4964, %v4966
      %v5103 = vcombine.high %v4964, %v4966
      %v5104 = vcombine.low %v4561, %v4562
      %v5105 = vcombine.low %v4967, %v4969
      %v5106 = vcombine.high %v4967, %v4969
      %v5107 = vcombine.low %v4968, %v4970
      %v5108 = vcombine.high %v4968, %v4970
      %v5109 = vcombine.low %v4563, %v4564
      %v5110 = vcombine.low %v4971, %v4973
      %v5111 = vcombine.high %v4971, %v4973
      %v5112 = vcombine.low %v4972, %v4974
      %v5113 = vcombine.high %v4972, %v4974
      %v5114 = vcombine.low %v4565, %v4566
      %v5115 = vcombine.low %v4975, %v4977
      %v5116 = vcombine.high %v4975, %v4977
      %v5117 = vcombine.low %v4976, %v4978
      %v5118 = vcombine.high %v4976, %v4978
      %v5119 = vcombine.low %v4567, %v4568
      %v5120 = vcombine.low %v4979, %v4981
      %v5121 = vcombine.high %v4979, %v4981
      %v5122 = vcombine.low %v4980, %v4982
      %v5123 = vcombine.high %v4980, %v4982
      %v5124 = vcombine.low %v4569, %v4570
      %v5125 = vcombine.low %v4983, %v4985
      %v5126 = vcombine.high %v4983, %v4985
      %v5127 = vcombine.low %v4984, %v4986
      %v5128 = vcombine.high %v4984, %v4986
      %v5129 = vcombine.low %v4571, %v4572
      %v5130 = vcombine.low %v4987, %v4989
      %v5131 = vcombine.high %v4987, %v4989
      %v5132 = vcombine.low %v4988, %v4990
      %v5133 = vcombine.high %v4988, %v4990
      %v5134 = vcombine.low %v4573, %v4574
      %v5135 = vcombine.low %v4991, %v4993
      %v5136 = vcombine.high %v4991, %v4993
      %v5137 = vcombine.low %v4992, %v4994
      %v5138 = vcombine.high %v4992, %v4994
      %v5139 = vcombine.low %v4575, %v4576
      %v5140 = vcombine.low %v4995, %v4997
      %v5141 = vcombine.high %v4995, %v4997
      %v5142 = vcombine.low %v4996, %v4998
      %v5143 = vcombine.high %v4996, %v4998
      %v5144 = vcombine.low %v4577, %v4578
      %v5145 = vcombine.low %v4999, %v5001
      %v5146 = vcombine.high %v4999, %v5001
      %v5147 = vcombine.low %v5000, %v5002
      %v5148 = vcombine.high %v5000, %v5002
      %v5149 = vcombine.low %v4579, %v4580
      %v5150 = vcombine.low %v5003, %v5005
      %v5151 = vcombine.high %v5003, %v5005
      %v5152 = vcombine.low %v5004, %v5006
      %v5153 = vcombine.high %v5004, %v5006
      %v5154 = vcombine.low %v4581, %v4582
      %v5155 = vcombine.low %v5007, %v5009
      %v5156 = vcombine.high %v5007, %v5009
      %v5157 = vcombine.low %v5008, %v5010
      %v5158 = vcombine.high %v5008, %v5010
      %v5159 = vcombine.low %v4583, %v4584
      %v5160 = vcombine.low %v5011, %v5013
      %v5161 = vcombine.high %v5011, %v5013
      %v5162 = vcombine.low %v5012, %v5014
      %v5163 = vcombine.high %v5012, %v5014
      %v5164 = vcombine.low %v4585, %v4586
      %v5165 = vcombine.low %v5015, %v5017
      %v5166 = vcombine.high %v5015, %v5017
      %v5167 = vcombine.low %v5016, %v5018
      %v5168 = vcombine.high %v5016, %v5018
      %v5169 = vcombine.low %v4587, %v4588
      %v5170 = vcombine.low %v5019, %v5021
      %v5171 = vcombine.high %v5019, %v5021
      %v5172 = vcombine.low %v5020, %v5022
      %v5173 = vcombine.high %v5020, %v5022
      %v5174 = vcombine.low %v4589, %v4590
      %v5175 = vcombine.low %v5023, %v5025
      %v5176 = vcombine.high %v5023, %v5025
      %v5177 = vcombine.low %v5024, %v5026
      %v5178 = vcombine.high %v5024, %v5026
      %v5179 = vcombine.low %v4591, %v4592
      %v5180 = vcombine.low %v5027, %v5029
      %v5181 = vcombine.high %v5027, %v5029
      %v5182 = vcombine.low %v5028, %v5030
      %v5183 = vcombine.high %v5028, %v5030
      %v5184 = vcombine.low %v4593, %v4594
      %v5185 = vcombine.low %v5031, %v5033
      %v5186 = vcombine.high %v5031, %v5033
      %v5187 = vcombine.low %v5032, %v5034
      %v5188 = vcombine.high %v5032, %v5034
      %v5189 = vcombine.low %v4595, %v4596
      %v5190 = vcombine.low %v5035, %v5037
      %v5191 = vcombine.high %v5035, %v5037
      %v5192 = vcombine.low %v5036, %v5038
      %v5193 = vcombine.high %v5036, %v5038
      %v5194 = vcombine.low %v4597, %v4598
      %v5195 = vcombine.low %v5039, %v5041
      %v5196 = vcombine.high %v5039, %v5041
      %v5197 = vcombine.low %v5040, %v5042
      %v5198 = vcombine.high %v5040, %v5042
      %v5199 = vcombine.low %v4599, %v4600
      %v5200 = vcombine.low %v5043, %v5045
      %v5201 = vcombine.high %v5043, %v5045
      %v5202 = vcombine.low %v5044, %v5046
      %v5203 = vcombine.high %v5044, %v5046
      %v5204 = vcombine.low %v4601, %v4602
      %v5205 = vcombine.low %v5047, %v5049
      %v5206 = vcombine.high %v5047, %v5049
      %v5207 = vcombine.low %v5048, %v5050
      %v5208 = vcombine.high %v5048, %v5050
      %v5209 = vcombine.low %v4603, %v4604
      %v5210 = vcombine.low %v5051, %v5053
      %v5211 = vcombine.high %v5051, %v5053
      %v5212 = vcombine.low %v5052, %v5054
      %v5213 = vcombine.high %v5052, %v5054
      %v5214 = vcombine.low %v4605, %v4606
      %v5375 = vpack.c.bf16 %v5060, %v5055
      %v5376 = vpack.c.bf16 %v5061, %v5056
      %v5377 = vpack.c.bf16 %v5062, %v5057
      %v5378 = vpack.c.bf16 %v5063, %v5058
      %v5379 = vpack.c.bf16 %v5064, %v5059
      %v5380 = vpack.c.bf16 %v5070, %v5065
      %v5381 = vpack.c.bf16 %v5071, %v5066
      %v5382 = vpack.c.bf16 %v5072, %v5067
      %v5383 = vpack.c.bf16 %v5073, %v5068
      %v5384 = vpack.c.bf16 %v5074, %v5069
      %v5385 = vpack.c.bf16 %v5080, %v5075
      %v5386 = vpack.c.bf16 %v5081, %v5076
      %v5387 = vpack.c.bf16 %v5082, %v5077
      %v5388 = vpack.c.bf16 %v5083, %v5078
      %v5389 = vpack.c.bf16 %v5084, %v5079
      %v5390 = vpack.c.bf16 %v5090, %v5085
      %v5391 = vpack.c.bf16 %v5091, %v5086
      %v5392 = vpack.c.bf16 %v5092, %v5087
      %v5393 = vpack.c.bf16 %v5093, %v5088
      %v5394 = vpack.c.bf16 %v5094, %v5089
      %v5395 = vpack.c.bf16 %v5100, %v5095
      %v5396 = vpack.c.bf16 %v5101, %v5096
      %v5397 = vpack.c.bf16 %v5102, %v5097
      %v5398 = vpack.c.bf16 %v5103, %v5098
      %v5399 = vpack.c.bf16 %v5104, %v5099
      %v5400 = vpack.c.bf16 %v5110, %v5105
      %v5401 = vpack.c.bf16 %v5111, %v5106
      %v5402 = vpack.c.bf16 %v5112, %v5107
      %v5403 = vpack.c.bf16 %v5113, %v5108
      %v5404 = vpack.c.bf16 %v5114, %v5109
      %v5405 = vpack.c.bf16 %v5120, %v5115
      %v5406 = vpack.c.bf16 %v5121, %v5116
      %v5407 = vpack.c.bf16 %v5122, %v5117
      %v5408 = vpack.c.bf16 %v5123, %v5118
      %v5409 = vpack.c.bf16 %v5124, %v5119
      %v5410 = vpack.c.bf16 %v5130, %v5125
      %v5411 = vpack.c.bf16 %v5131, %v5126
      %v5412 = vpack.c.bf16 %v5132, %v5127
      %v5413 = vpack.c.bf16 %v5133, %v5128
      %v5414 = vpack.c.bf16 %v5134, %v5129
      %v5415 = vpack.c.bf16 %v5140, %v5135
      %v5416 = vpack.c.bf16 %v5141, %v5136
      %v5417 = vpack.c.bf16 %v5142, %v5137
      %v5418 = vpack.c.bf16 %v5143, %v5138
      %v5419 = vpack.c.bf16 %v5144, %v5139
      %v5420 = vpack.c.bf16 %v5150, %v5145
      %v5421 = vpack.c.bf16 %v5151, %v5146
      %v5422 = vpack.c.bf16 %v5152, %v5147
      %v5423 = vpack.c.bf16 %v5153, %v5148
      %v5424 = vpack.c.bf16 %v5154, %v5149
      %v5425 = vpack.c.bf16 %v5160, %v5155
      %v5426 = vpack.c.bf16 %v5161, %v5156
      %v5427 = vpack.c.bf16 %v5162, %v5157
      %v5428 = vpack.c.bf16 %v5163, %v5158
      %v5429 = vpack.c.bf16 %v5164, %v5159
      %v5430 = vpack.c.bf16 %v5170, %v5165
      %v5431 = vpack.c.bf16 %v5171, %v5166
      %v5432 = vpack.c.bf16 %v5172, %v5167
      %v5433 = vpack.c.bf16 %v5173, %v5168
      %v5434 = vpack.c.bf16 %v5174, %v5169
      %v5435 = vpack.c.bf16 %v5180, %v5175
      %v5436 = vpack.c.bf16 %v5181, %v5176
      %v5437 = vpack.c.bf16 %v5182, %v5177
      %v5438 = vpack.c.bf16 %v5183, %v5178
      %v5439 = vpack.c.bf16 %v5184, %v5179
      %v5440 = vpack.c.bf16 %v5190, %v5185
      %v5441 = vpack.c.bf16 %v5191, %v5186
      %v5442 = vpack.c.bf16 %v5192, %v5187
      %v5443 = vpack.c.bf16 %v5193, %v5188
      %v5444 = vpack.c.bf16 %v5194, %v5189
      %v5445 = vpack.c.bf16 %v5200, %v5195
      %v5446 = vpack.c.bf16 %v5201, %v5196
      %v5447 = vpack.c.bf16 %v5202, %v5197
      %v5448 = vpack.c.bf16 %v5203, %v5198
      %v5449 = vpack.c.bf16 %v5204, %v5199
      %v5450 = vpack.c.bf16 %v5210, %v5205
      %v5451 = vpack.c.bf16 %v5211, %v5206
      %v5452 = vpack.c.bf16 %v5212, %v5207
      %v5453 = vpack.c.bf16 %v5213, %v5208
      %v5454 = vpack.c.bf16 %v5214, %v5209
      %v5455 = vld [vmem:[%s3] sm:$0xff]
      %v5456 = vld [vmem:[%s3 + $0x8] sm:$0xff]
      %v5457 = vld [vmem:[%s3 + $0x10] sm:$0xff]
      %v5458 = vld [vmem:[%s3 + $0x18] sm:$0xff]
      %v5459 = vld [vmem:[%s3 + $0x20] sm:$0xff]
      %v5460 = vld [vmem:[%s3 + $0x28] sm:$0xff]
      %v5461 = vld [vmem:[%s3 + $0x30] sm:$0xff]
      %v5462 = vld [vmem:[%s3 + $0x38] sm:$0xff]
      %v5463 = vld [vmem:[%s3 + $0x40] sm:$0xff]
      %v5464 = vld [vmem:[%s3 + $0x48] sm:$0xff]
      %v5465 = vld [vmem:[%s3 + $0x50] sm:$0xff]
      %v5466 = vld [vmem:[%s3 + $0x58] sm:$0xff]
      %v5467 = vld [vmem:[%s3 + $0x60] sm:$0xff]
      %v5468 = vld [vmem:[%s3 + $0x68] sm:$0xff]
      %v5469 = vld [vmem:[%s3 + $0x70] sm:$0xff]
      %v5470 = vld [vmem:[%s3 + $0x78] sm:$0xff]
      %v5471 = vld [vmem:[%s3 + $0x80] sm:$0xff]
      %v5472 = vld [vmem:[%s3 + $0x88] sm:$0xff]
      %v5473 = vld [vmem:[%s3 + $0x90] sm:$0xff]
      %v5474 = vld [vmem:[%s3 + $0x98] sm:$0xff]
      %v5475 = vld [vmem:[%s3 + $0xa0] sm:$0xff]
      %v5476 = vld [vmem:[%s3 + $0xa8] sm:$0xff]
      %v5477 = vld [vmem:[%s3 + $0xb0] sm:$0xff]
      %v5478 = vld [vmem:[%s3 + $0xb8] sm:$0xff]
      %v5479 = vld [vmem:[%s3 + $0xc0] sm:$0xff]
      %v5480 = vld [vmem:[%s3 + $0xc8] sm:$0xff]
      %v5481 = vld [vmem:[%s3 + $0xd0] sm:$0xff]
      %v5482 = vld [vmem:[%s3 + $0xd8] sm:$0xff]
      %v5483 = vld [vmem:[%s3 + $0xe0] sm:$0xff]
      %v5484 = vld [vmem:[%s3 + $0xe8] sm:$0xff]
      %v5485 = vld [vmem:[%s3 + $0xf0] sm:$0xff]
      %v5486 = vld [vmem:[%s3 + $0xf8] sm:$0xff]
      %v5487 = vld [vmem:[%s3 + $0x100] sm:$0xff]
      %v5488 = vld [vmem:[%s3 + $0x108] sm:$0xff]
      %v5489 = vld [vmem:[%s3 + $0x110] sm:$0xff]
      %v5490 = vld [vmem:[%s3 + $0x118] sm:$0xff]
      %v5491 = vld [vmem:[%s3 + $0x120] sm:$0xff]
      %v5492 = vld [vmem:[%s3 + $0x128] sm:$0xff]
      %v5493 = vld [vmem:[%s3 + $0x130] sm:$0xff]
      %v5494 = vld [vmem:[%s3 + $0x138] sm:$0xff]
      %v5495 = vld [vmem:[%s3 + $0x140] sm:$0xff]
      %v5496 = vld [vmem:[%s3 + $0x148] sm:$0xff]
      %v5497 = vld [vmem:[%s3 + $0x150] sm:$0xff]
      %v5498 = vld [vmem:[%s3 + $0x158] sm:$0xff]
      %v5499 = vld [vmem:[%s3 + $0x160] sm:$0xff]
      %v5500 = vld [vmem:[%s3 + $0x168] sm:$0xff]
      %v5501 = vld [vmem:[%s3 + $0x170] sm:$0xff]
      %v5502 = vld [vmem:[%s3 + $0x178] sm:$0xff]
      %v5503 = vld [vmem:[%s3 + $0x180] sm:$0xff]
      %v5504 = vld [vmem:[%s3 + $0x188] sm:$0xff]
      %v5505 = vld [vmem:[%s3 + $0x190] sm:$0xff]
      %v5506 = vld [vmem:[%s3 + $0x198] sm:$0xff]
      %v5507 = vld [vmem:[%s3 + $0x1a0] sm:$0xff]
      %v5508 = vld [vmem:[%s3 + $0x1a8] sm:$0xff]
      %v5509 = vld [vmem:[%s3 + $0x1b0] sm:$0xff]
      %v5510 = vld [vmem:[%s3 + $0x1b8] sm:$0xff]
      %v5511 = vld [vmem:[%s3 + $0x1c0] sm:$0xff]
      %v5512 = vld [vmem:[%s3 + $0x1c8] sm:$0xff]
      %v5513 = vld [vmem:[%s3 + $0x1d0] sm:$0xff]
      %v5514 = vld [vmem:[%s3 + $0x1d8] sm:$0xff]
      %v5515 = vld [vmem:[%s3 + $0x1e0] sm:$0xff]
      %v5516 = vld [vmem:[%s3 + $0x1e8] sm:$0xff]
      %v5517 = vld [vmem:[%s3 + $0x1f0] sm:$0xff]
      %v5518 = vld [vmem:[%s3 + $0x1f8] sm:$0xff]
      %v5519 = vld [vmem:[%s3 + $0x200] sm:$0xff]
      %v5520 = vld [vmem:[%s3 + $0x208] sm:$0xff]
      %v5521 = vld [vmem:[%s3 + $0x210] sm:$0xff]
      %v5522 = vld [vmem:[%s3 + $0x218] sm:$0xff]
      %v5523 = vld [vmem:[%s3 + $0x220] sm:$0xff]
      %v5524 = vld [vmem:[%s3 + $0x228] sm:$0xff]
      %v5525 = vld [vmem:[%s3 + $0x230] sm:$0xff]
      %v5526 = vld [vmem:[%s3 + $0x238] sm:$0xff]
      %v5527 = vld [vmem:[%s3 + $0x240] sm:$0xff]
      %v5528 = vld [vmem:[%s3 + $0x248] sm:$0xff]
      %v5529 = vld [vmem:[%s3 + $0x250] sm:$0xff]
      %v5530 = vld [vmem:[%s3 + $0x258] sm:$0xff]
      %v5531 = vld [vmem:[%s3 + $0x260] sm:$0xff]
      %v5532 = vld [vmem:[%s3 + $0x268] sm:$0xff]
      %v5533 = vld [vmem:[%s3 + $0x270] sm:$0xff]
      %v5534 = vld [vmem:[%s3 + $0x278] sm:$0xff]
      %v5615 = vunpack.c.l.b16 %v5455
      %v5616 = vunpack.c.h.b16 %v5455
      %v5617 = vunpack.c.l.b16 %v5456
      %v5618 = vunpack.c.h.b16 %v5456
      %v5619 = vunpack.c.l.b16 %v5457
      %v5620 = vunpack.c.h.b16 %v5457
      %v5621 = vunpack.c.l.b16 %v5458
      %v5622 = vunpack.c.h.b16 %v5458
      %v5623 = vunpack.c.l.b16 %v5459
      %v5624 = vunpack.c.h.b16 %v5459
      %v5625 = vunpack.c.l.b16 %v5460
      %v5626 = vunpack.c.h.b16 %v5460
      %v5627 = vunpack.c.l.b16 %v5461
      %v5628 = vunpack.c.h.b16 %v5461
      %v5629 = vunpack.c.l.b16 %v5462
      %v5630 = vunpack.c.h.b16 %v5462
      %v5631 = vunpack.c.l.b16 %v5463
      %v5632 = vunpack.c.h.b16 %v5463
      %v5633 = vunpack.c.l.b16 %v5464
      %v5634 = vunpack.c.h.b16 %v5464
      %v5635 = vunpack.c.l.b16 %v5465
      %v5636 = vunpack.c.h.b16 %v5465
      %v5637 = vunpack.c.l.b16 %v5466
      %v5638 = vunpack.c.h.b16 %v5466
      %v5639 = vunpack.c.l.b16 %v5467
      %v5640 = vunpack.c.h.b16 %v5467
      %v5641 = vunpack.c.l.b16 %v5468
      %v5642 = vunpack.c.h.b16 %v5468
      %v5643 = vunpack.c.l.b16 %v5469
      %v5644 = vunpack.c.h.b16 %v5469
      %v5645 = vunpack.c.l.b16 %v5470
      %v5646 = vunpack.c.h.b16 %v5470
      %v5647 = vunpack.c.l.b16 %v5471
      %v5648 = vunpack.c.h.b16 %v5471
      %v5649 = vunpack.c.l.b16 %v5472
      %v5650 = vunpack.c.h.b16 %v5472
      %v5651 = vunpack.c.l.b16 %v5473
      %v5652 = vunpack.c.h.b16 %v5473
      %v5653 = vunpack.c.l.b16 %v5474
      %v5654 = vunpack.c.h.b16 %v5474
      %v5655 = vunpack.c.l.b16 %v5475
      %v5656 = vunpack.c.h.b16 %v5475
      %v5657 = vunpack.c.l.b16 %v5476
      %v5658 = vunpack.c.h.b16 %v5476
      %v5659 = vunpack.c.l.b16 %v5477
      %v5660 = vunpack.c.h.b16 %v5477
      %v5661 = vunpack.c.l.b16 %v5478
      %v5662 = vunpack.c.h.b16 %v5478
      %v5663 = vunpack.c.l.b16 %v5479
      %v5664 = vunpack.c.h.b16 %v5479
      %v5665 = vunpack.c.l.b16 %v5480
      %v5666 = vunpack.c.h.b16 %v5480
      %v5667 = vunpack.c.l.b16 %v5481
      %v5668 = vunpack.c.h.b16 %v5481
      %v5669 = vunpack.c.l.b16 %v5482
      %v5670 = vunpack.c.h.b16 %v5482
      %v5671 = vunpack.c.l.b16 %v5483
      %v5672 = vunpack.c.h.b16 %v5483
      %v5673 = vunpack.c.l.b16 %v5484
      %v5674 = vunpack.c.h.b16 %v5484
      %v5675 = vunpack.c.l.b16 %v5485
      %v5676 = vunpack.c.h.b16 %v5485
      %v5677 = vunpack.c.l.b16 %v5486
      %v5678 = vunpack.c.h.b16 %v5486
      %v5679 = vunpack.c.l.b16 %v5487
      %v5680 = vunpack.c.h.b16 %v5487
      %v5681 = vunpack.c.l.b16 %v5488
      %v5682 = vunpack.c.h.b16 %v5488
      %v5683 = vunpack.c.l.b16 %v5489
      %v5684 = vunpack.c.h.b16 %v5489
      %v5685 = vunpack.c.l.b16 %v5490
      %v5686 = vunpack.c.h.b16 %v5490
      %v5687 = vunpack.c.l.b16 %v5491
      %v5688 = vunpack.c.h.b16 %v5491
      %v5689 = vunpack.c.l.b16 %v5492
      %v5690 = vunpack.c.h.b16 %v5492
      %v5691 = vunpack.c.l.b16 %v5493
      %v5692 = vunpack.c.h.b16 %v5493
      %v5693 = vunpack.c.l.b16 %v5494
      %v5694 = vunpack.c.h.b16 %v5494
      %v5695 = vunpack.c.l.b16 %v5495
      %v5696 = vunpack.c.h.b16 %v5495
      %v5697 = vunpack.c.l.b16 %v5496
      %v5698 = vunpack.c.h.b16 %v5496
      %v5699 = vunpack.c.l.b16 %v5497
      %v5700 = vunpack.c.h.b16 %v5497
      %v5701 = vunpack.c.l.b16 %v5498
      %v5702 = vunpack.c.h.b16 %v5498
      %v5703 = vunpack.c.l.b16 %v5499
      %v5704 = vunpack.c.h.b16 %v5499
      %v5705 = vunpack.c.l.b16 %v5500
      %v5706 = vunpack.c.h.b16 %v5500
      %v5707 = vunpack.c.l.b16 %v5501
      %v5708 = vunpack.c.h.b16 %v5501
      %v5709 = vunpack.c.l.b16 %v5502
      %v5710 = vunpack.c.h.b16 %v5502
      %v5711 = vunpack.c.l.b16 %v5503
      %v5712 = vunpack.c.h.b16 %v5503
      %v5713 = vunpack.c.l.b16 %v5504
      %v5714 = vunpack.c.h.b16 %v5504
      %v5715 = vunpack.c.l.b16 %v5505
      %v5716 = vunpack.c.h.b16 %v5505
      %v5717 = vunpack.c.l.b16 %v5506
      %v5718 = vunpack.c.h.b16 %v5506
      %v5719 = vunpack.c.l.b16 %v5507
      %v5720 = vunpack.c.h.b16 %v5507
      %v5721 = vunpack.c.l.b16 %v5508
      %v5722 = vunpack.c.h.b16 %v5508
      %v5723 = vunpack.c.l.b16 %v5509
      %v5724 = vunpack.c.h.b16 %v5509
      %v5725 = vunpack.c.l.b16 %v5510
      %v5726 = vunpack.c.h.b16 %v5510
      %v5727 = vunpack.c.l.b16 %v5511
      %v5728 = vunpack.c.h.b16 %v5511
      %v5729 = vunpack.c.l.b16 %v5512
      %v5730 = vunpack.c.h.b16 %v5512
      %v5731 = vunpack.c.l.b16 %v5513
      %v5732 = vunpack.c.h.b16 %v5513
      %v5733 = vunpack.c.l.b16 %v5514
      %v5734 = vunpack.c.h.b16 %v5514
      %v5735 = vunpack.c.l.b16 %v5515
      %v5736 = vunpack.c.h.b16 %v5515
      %v5737 = vunpack.c.l.b16 %v5516
      %v5738 = vunpack.c.h.b16 %v5516
      %v5739 = vunpack.c.l.b16 %v5517
      %v5740 = vunpack.c.h.b16 %v5517
      %v5741 = vunpack.c.l.b16 %v5518
      %v5742 = vunpack.c.h.b16 %v5518
      %v5743 = vunpack.c.l.b16 %v5519
      %v5744 = vunpack.c.h.b16 %v5519
      %v5745 = vunpack.c.l.b16 %v5520
      %v5746 = vunpack.c.h.b16 %v5520
      %v5747 = vunpack.c.l.b16 %v5521
      %v5748 = vunpack.c.h.b16 %v5521
      %v5749 = vunpack.c.l.b16 %v5522
      %v5750 = vunpack.c.h.b16 %v5522
      %v5751 = vunpack.c.l.b16 %v5523
      %v5752 = vunpack.c.h.b16 %v5523
      %v5753 = vunpack.c.l.b16 %v5524
      %v5754 = vunpack.c.h.b16 %v5524
      %v5755 = vunpack.c.l.b16 %v5525
      %v5756 = vunpack.c.h.b16 %v5525
      %v5757 = vunpack.c.l.b16 %v5526
      %v5758 = vunpack.c.h.b16 %v5526
      %v5759 = vunpack.c.l.b16 %v5527
      %v5760 = vunpack.c.h.b16 %v5527
      %v5761 = vunpack.c.l.b16 %v5528
      %v5762 = vunpack.c.h.b16 %v5528
      %v5763 = vunpack.c.l.b16 %v5529
      %v5764 = vunpack.c.h.b16 %v5529
      %v5765 = vunpack.c.l.b16 %v5530
      %v5766 = vunpack.c.h.b16 %v5530
      %v5767 = vunpack.c.l.b16 %v5531
      %v5768 = vunpack.c.h.b16 %v5531
      %v5769 = vunpack.c.l.b16 %v5532
      %v5770 = vunpack.c.h.b16 %v5532
      %v5771 = vunpack.c.l.b16 %v5533
      %v5772 = vunpack.c.h.b16 %v5533
      %v5773 = vunpack.c.l.b16 %v5534
      %v5774 = vunpack.c.h.b16 %v5534
      %v5775 = vpack.c.b16 %v5617, %v5615
      %v5776 = vpack.c.b16 %v5618, %v5616
      %v5777 = vpack.c.b16 %v5621, %v5619
      %v5778 = vpack.c.b16 %v5622, %v5620
      %v5779 = vpack.c.b16 %v5625, %v5623
      %v5780 = vpack.c.b16 %v5626, %v5624
      %v5781 = vpack.c.b16 %v5629, %v5627
      %v5782 = vpack.c.b16 %v5630, %v5628
      %v5783 = vpack.c.b16 %v5633, %v5631
      %v5784 = vpack.c.b16 %v5634, %v5632
      %v5785 = vpack.c.b16 %v5637, %v5635
      %v5786 = vpack.c.b16 %v5638, %v5636
      %v5787 = vpack.c.b16 %v5641, %v5639
      %v5788 = vpack.c.b16 %v5642, %v5640
      %v5789 = vpack.c.b16 %v5645, %v5643
      %v5790 = vpack.c.b16 %v5646, %v5644
      %v5791 = vpack.c.b16 %v5649, %v5647
      %v5792 = vpack.c.b16 %v5650, %v5648
      %v5793 = vpack.c.b16 %v5653, %v5651
      %v5794 = vpack.c.b16 %v5654, %v5652
      %v5795 = vpack.c.b16 %v5657, %v5655
      %v5796 = vpack.c.b16 %v5658, %v5656
      %v5797 = vpack.c.b16 %v5661, %v5659
      %v5798 = vpack.c.b16 %v5662, %v5660
      %v5799 = vpack.c.b16 %v5665, %v5663
      %v5800 = vpack.c.b16 %v5666, %v5664
      %v5801 = vpack.c.b16 %v5669, %v5667
      %v5802 = vpack.c.b16 %v5670, %v5668
      %v5803 = vpack.c.b16 %v5673, %v5671
      %v5804 = vpack.c.b16 %v5674, %v5672
      %v5805 = vpack.c.b16 %v5677, %v5675
      %v5806 = vpack.c.b16 %v5678, %v5676
      %v5807 = vpack.c.b16 %v5681, %v5679
      %v5808 = vpack.c.b16 %v5682, %v5680
      %v5809 = vpack.c.b16 %v5685, %v5683
      %v5810 = vpack.c.b16 %v5686, %v5684
      %v5811 = vpack.c.b16 %v5689, %v5687
      %v5812 = vpack.c.b16 %v5690, %v5688
      %v5813 = vpack.c.b16 %v5693, %v5691
      %v5814 = vpack.c.b16 %v5694, %v5692
      %v5815 = vpack.c.b16 %v5697, %v5695
      %v5816 = vpack.c.b16 %v5698, %v5696
      %v5817 = vpack.c.b16 %v5701, %v5699
      %v5818 = vpack.c.b16 %v5702, %v5700
      %v5819 = vpack.c.b16 %v5705, %v5703
      %v5820 = vpack.c.b16 %v5706, %v5704
      %v5821 = vpack.c.b16 %v5709, %v5707
      %v5822 = vpack.c.b16 %v5710, %v5708
      %v5823 = vpack.c.b16 %v5713, %v5711
      %v5824 = vpack.c.b16 %v5714, %v5712
      %v5825 = vpack.c.b16 %v5717, %v5715
      %v5826 = vpack.c.b16 %v5718, %v5716
      %v5827 = vpack.c.b16 %v5721, %v5719
      %v5828 = vpack.c.b16 %v5722, %v5720
      %v5829 = vpack.c.b16 %v5725, %v5723
      %v5830 = vpack.c.b16 %v5726, %v5724
      %v5831 = vpack.c.b16 %v5729, %v5727
      %v5832 = vpack.c.b16 %v5730, %v5728
      %v5833 = vpack.c.b16 %v5733, %v5731
      %v5834 = vpack.c.b16 %v5734, %v5732
      %v5835 = vpack.c.b16 %v5737, %v5735
      %v5836 = vpack.c.b16 %v5738, %v5736
      %v5837 = vpack.c.b16 %v5741, %v5739
      %v5838 = vpack.c.b16 %v5742, %v5740
      %v5839 = vpack.c.b16 %v5745, %v5743
      %v5840 = vpack.c.b16 %v5746, %v5744
      %v5841 = vpack.c.b16 %v5749, %v5747
      %v5842 = vpack.c.b16 %v5750, %v5748
      %v5843 = vpack.c.b16 %v5753, %v5751
      %v5844 = vpack.c.b16 %v5754, %v5752
      %v5845 = vpack.c.b16 %v5757, %v5755
      %v5846 = vpack.c.b16 %v5758, %v5756
      %v5847 = vpack.c.b16 %v5761, %v5759
      %v5848 = vpack.c.b16 %v5762, %v5760
      %v5849 = vpack.c.b16 %v5765, %v5763
      %v5850 = vpack.c.b16 %v5766, %v5764
      %v5851 = vpack.c.b16 %v5769, %v5767
      %v5852 = vpack.c.b16 %v5770, %v5768
      %v5853 = vpack.c.b16 %v5773, %v5771
      %v5854 = vpack.c.b16 %v5774, %v5772
      %5935 = vmatprep.subr.bf16.mxu0 %v5790
      %5936 = vmatpush1.bf16.msra.mxu0 %v5789
      %5937 = vmatprep.subr.bf16.mxu0 %v5788
      %5938 = vmatpush1.bf16.msra.mxu0 %v5787
      %5939 = vmatprep.subr.bf16.mxu0 %v5786
      %5940 = vmatpush1.bf16.msra.mxu0 %v5785
      %5941 = vmatprep.subr.bf16.mxu0 %v5784
      %5942 = vmatpush1.bf16.msra.mxu0 %v5783
      %5943 = vmatprep.subr.bf16.mxu0 %v5782
      %5944 = vmatpush1.bf16.msra.mxu0 %v5781
      %5945 = vmatprep.subr.bf16.mxu0 %v5780
      %5946 = vmatpush1.bf16.msra.mxu0 %v5779
      %5947 = vmatprep.subr.bf16.mxu0 %v5778
      %5948 = vmatpush1.bf16.msra.mxu0 %v5777
      %5949 = vmatprep.subr.bf16.mxu0 %v5776
      %5950 = vmatpush1.bf16.msra.mxu0 %v5775
      %5951 = vmatprep.subr.bf16.mxu0 %v5806
      %5952 = vmatpush2.bf16.msra.mxu0 %v5805
      %5953 = vmatprep.subr.bf16.mxu0 %v5804
      %5954 = vmatpush2.bf16.msra.mxu0 %v5803
      %5955 = vmatprep.subr.bf16.mxu0 %v5802
      %5956 = vmatpush2.bf16.msra.mxu0 %v5801
      %5957 = vmatprep.subr.bf16.mxu0 %v5800
      %5958 = vmatpush2.bf16.msra.mxu0 %v5799
      %5959 = vmatprep.subr.bf16.mxu0 %v5798
      %5960 = vmatpush2.bf16.msra.mxu0 %v5797
      %5961 = vmatprep.subr.bf16.mxu0 %v5796
      %5962 = vmatpush2.bf16.msra.mxu0 %v5795
      %5963 = vmatprep.subr.bf16.mxu0 %v5794
      %5964 = vmatpush2.bf16.msra.mxu0 %v5793
      %5965 = vmatprep.subr.bf16.mxu0 %v5792
      %5966 = vmatpush2.bf16.msra.mxu0 %v5791
      %5967 = vmatprep.mubr.bf16.mxu0 %v5376
      %5968 = vmatmul.mubr.bf16.gmra.mxu0 %v5375
      %v5969 = vpop.f32.mrf.mxu0
      %v5970 = vadd.f32 0.0, %v5969
      %v5971 = vpop.f32.mrf.mxu0
      %v5972 = vadd.f32 0.0, %v5971
      %v5973 = vpop.f32.mrf.mxu0
      %v5974 = vadd.f32 0.0, %v5973
      %v5975 = vpop.f32.mrf.mxu0
      %v5976 = vadd.f32 0.0, %v5975
      %5977 = vmatprep.mubr.bf16.mxu0 %v5381
      %5978 = vmatmul.mubr.bf16.gmra.mxu0 %v5380
      %v5979 = vpop.f32.mrf.mxu0
      %v5980 = vadd.f32 0.0, %v5979
      %v5981 = vpop.f32.mrf.mxu0
      %v5982 = vadd.f32 0.0, %v5981
      %v5983 = vpop.f32.mrf.mxu0
      %v5984 = vadd.f32 0.0, %v5983
      %v5985 = vpop.f32.mrf.mxu0
      %v5986 = vadd.f32 0.0, %v5985
      %5987 = vmatprep.mubr.bf16.mxu0 %v5386
      %5988 = vmatmul.mubr.bf16.gmra.mxu0 %v5385
      %v5989 = vpop.f32.mrf.mxu0
      %v5990 = vadd.f32 0.0, %v5989
      %v5991 = vpop.f32.mrf.mxu0
      %v5992 = vadd.f32 0.0, %v5991
      %v5993 = vpop.f32.mrf.mxu0
      %v5994 = vadd.f32 0.0, %v5993
      %v5995 = vpop.f32.mrf.mxu0
      %v5996 = vadd.f32 0.0, %v5995
      %5997 = vmatprep.mubr.bf16.mxu0 %v5391
      %5998 = vmatmul.mubr.bf16.gmra.mxu0 %v5390
      %v5999 = vpop.f32.mrf.mxu0
      %v6000 = vadd.f32 0.0, %v5999
      %v6001 = vpop.f32.mrf.mxu0
      %v6002 = vadd.f32 0.0, %v6001
      %v6003 = vpop.f32.mrf.mxu0
      %v6004 = vadd.f32 0.0, %v6003
      %v6005 = vpop.f32.mrf.mxu0
      %v6006 = vadd.f32 0.0, %v6005
      %6007 = vmatprep.mubr.bf16.mxu0 %v5396
      %6008 = vmatmul.mubr.bf16.gmra.mxu0 %v5395
      %v6009 = vpop.f32.mrf.mxu0
      %v6010 = vadd.f32 0.0, %v6009
      %v6011 = vpop.f32.mrf.mxu0
      %v6012 = vadd.f32 0.0, %v6011
      %v6013 = vpop.f32.mrf.mxu0
      %v6014 = vadd.f32 0.0, %v6013
      %v6015 = vpop.f32.mrf.mxu0
      %v6016 = vadd.f32 0.0, %v6015
      %6017 = vmatprep.mubr.bf16.mxu0 %v5401
      %6018 = vmatmul.mubr.bf16.gmra.mxu0 %v5400
      %v6019 = vpop.f32.mrf.mxu0
      %v6020 = vadd.f32 0.0, %v6019
      %v6021 = vpop.f32.mrf.mxu0
      %v6022 = vadd.f32 0.0, %v6021
      %v6023 = vpop.f32.mrf.mxu0
      %v6024 = vadd.f32 0.0, %v6023
      %v6025 = vpop.f32.mrf.mxu0
      %v6026 = vadd.f32 0.0, %v6025
      %6027 = vmatprep.mubr.bf16.mxu0 %v5406
      %6028 = vmatmul.mubr.bf16.gmra.mxu0 %v5405
      %v6029 = vpop.f32.mrf.mxu0
      %v6030 = vadd.f32 0.0, %v6029
      %v6031 = vpop.f32.mrf.mxu0
      %v6032 = vadd.f32 0.0, %v6031
      %v6033 = vpop.f32.mrf.mxu0
      %v6034 = vadd.f32 0.0, %v6033
      %v6035 = vpop.f32.mrf.mxu0
      %v6036 = vadd.f32 0.0, %v6035
      %6037 = vmatprep.mubr.bf16.mxu0 %v5411
      %6038 = vmatmul.mubr.bf16.gmra.mxu0 %v5410
      %v6039 = vpop.f32.mrf.mxu0
      %v6040 = vadd.f32 0.0, %v6039
      %v6041 = vpop.f32.mrf.mxu0
      %v6042 = vadd.f32 0.0, %v6041
      %v6043 = vpop.f32.mrf.mxu0
      %v6044 = vadd.f32 0.0, %v6043
      %v6045 = vpop.f32.mrf.mxu0
      %v6046 = vadd.f32 0.0, %v6045
      %6047 = vmatprep.mubr.bf16.mxu0 %v5416
      %6048 = vmatmul.mubr.bf16.gmra.mxu0 %v5415
      %v6049 = vpop.f32.mrf.mxu0
      %v6050 = vadd.f32 0.0, %v6049
      %v6051 = vpop.f32.mrf.mxu0
      %v6052 = vadd.f32 0.0, %v6051
      %v6053 = vpop.f32.mrf.mxu0
      %v6054 = vadd.f32 0.0, %v6053
      %v6055 = vpop.f32.mrf.mxu0
      %v6056 = vadd.f32 0.0, %v6055
      %6057 = vmatprep.mubr.bf16.mxu0 %v5421
      %6058 = vmatmul.mubr.bf16.gmra.mxu0 %v5420
      %v6059 = vpop.f32.mrf.mxu0
      %v6060 = vadd.f32 0.0, %v6059
      %v6061 = vpop.f32.mrf.mxu0
      %v6062 = vadd.f32 0.0, %v6061
      %v6063 = vpop.f32.mrf.mxu0
      %v6064 = vadd.f32 0.0, %v6063
      %v6065 = vpop.f32.mrf.mxu0
      %v6066 = vadd.f32 0.0, %v6065
      %6067 = vmatprep.mubr.bf16.mxu0 %v5426
      %6068 = vmatmul.mubr.bf16.gmra.mxu0 %v5425
      %v6069 = vpop.f32.mrf.mxu0
      %v6070 = vadd.f32 0.0, %v6069
      %v6071 = vpop.f32.mrf.mxu0
      %v6072 = vadd.f32 0.0, %v6071
      %v6073 = vpop.f32.mrf.mxu0
      %v6074 = vadd.f32 0.0, %v6073
      %v6075 = vpop.f32.mrf.mxu0
      %v6076 = vadd.f32 0.0, %v6075
      %6077 = vmatprep.mubr.bf16.mxu0 %v5431
      %6078 = vmatmul.mubr.bf16.gmra.mxu0 %v5430
      %v6079 = vpop.f32.mrf.mxu0
      %v6080 = vadd.f32 0.0, %v6079
      %v6081 = vpop.f32.mrf.mxu0
      %v6082 = vadd.f32 0.0, %v6081
      %v6083 = vpop.f32.mrf.mxu0
      %v6084 = vadd.f32 0.0, %v6083
      %v6085 = vpop.f32.mrf.mxu0
      %v6086 = vadd.f32 0.0, %v6085
      %6087 = vmatprep.mubr.bf16.mxu0 %v5436
      %6088 = vmatmul.mubr.bf16.gmra.mxu0 %v5435
      %v6089 = vpop.f32.mrf.mxu0
      %v6090 = vadd.f32 0.0, %v6089
      %v6091 = vpop.f32.mrf.mxu0
      %v6092 = vadd.f32 0.0, %v6091
      %v6093 = vpop.f32.mrf.mxu0
      %v6094 = vadd.f32 0.0, %v6093
      %v6095 = vpop.f32.mrf.mxu0
      %v6096 = vadd.f32 0.0, %v6095
      %6097 = vmatprep.mubr.bf16.mxu0 %v5441
      %6098 = vmatmul.mubr.bf16.gmra.mxu0 %v5440
      %v6099 = vpop.f32.mrf.mxu0
      %v6100 = vadd.f32 0.0, %v6099
      %v6101 = vpop.f32.mrf.mxu0
      %v6102 = vadd.f32 0.0, %v6101
      %v6103 = vpop.f32.mrf.mxu0
      %v6104 = vadd.f32 0.0, %v6103
      %v6105 = vpop.f32.mrf.mxu0
      %v6106 = vadd.f32 0.0, %v6105
      %6107 = vmatprep.mubr.bf16.mxu0 %v5446
      %6108 = vmatmul.mubr.bf16.gmra.mxu0 %v5445
      %v6109 = vpop.f32.mrf.mxu0
      %v6110 = vadd.f32 0.0, %v6109
      %v6111 = vpop.f32.mrf.mxu0
      %v6112 = vadd.f32 0.0, %v6111
      %v6113 = vpop.f32.mrf.mxu0
      %v6114 = vadd.f32 0.0, %v6113
      %v6115 = vpop.f32.mrf.mxu0
      %v6116 = vadd.f32 0.0, %v6115
      %6117 = vmatprep.mubr.bf16.mxu0 %v5451
      %6118 = vmatmul.mubr.bf16.gmra.mxu0 %v5450
      %v6119 = vpop.f32.mrf.mxu0
      %v6120 = vadd.f32 0.0, %v6119
      %v6121 = vpop.f32.mrf.mxu0
      %v6122 = vadd.f32 0.0, %v6121
      %v6123 = vpop.f32.mrf.mxu0
      %v6124 = vadd.f32 0.0, %v6123
      %v6125 = vpop.f32.mrf.mxu0
      %v6126 = vadd.f32 0.0, %v6125
      %6127 = vdwg.mxu0
      %6128 = vmatprep.subr.bf16.mxu0 %v5822
      %6129 = vmatpush1.bf16.msra.mxu0 %v5821
      %6130 = vmatprep.subr.bf16.mxu0 %v5820
      %6131 = vmatpush1.bf16.msra.mxu0 %v5819
      %6132 = vmatprep.subr.bf16.mxu0 %v5818
      %6133 = vmatpush1.bf16.msra.mxu0 %v5817
      %6134 = vmatprep.subr.bf16.mxu0 %v5816
      %6135 = vmatpush1.bf16.msra.mxu0 %v5815
      %6136 = vmatprep.subr.bf16.mxu0 %v5814
      %6137 = vmatpush1.bf16.msra.mxu0 %v5813
      %6138 = vmatprep.subr.bf16.mxu0 %v5812
      %6139 = vmatpush1.bf16.msra.mxu0 %v5811
      %6140 = vmatprep.subr.bf16.mxu0 %v5810
      %6141 = vmatpush1.bf16.msra.mxu0 %v5809
      %6142 = vmatprep.subr.bf16.mxu0 %v5808
      %6143 = vmatpush1.bf16.msra.mxu0 %v5807
      %6144 = vmatprep.subr.bf16.mxu0 %v5838
      %6145 = vmatpush2.bf16.msra.mxu0 %v5837
      %6146 = vmatprep.subr.bf16.mxu0 %v5836
      %6147 = vmatpush2.bf16.msra.mxu0 %v5835
      %6148 = vmatprep.subr.bf16.mxu0 %v5834
      %6149 = vmatpush2.bf16.msra.mxu0 %v5833
      %6150 = vmatprep.subr.bf16.mxu0 %v5832
      %6151 = vmatpush2.bf16.msra.mxu0 %v5831
      %6152 = vmatprep.subr.bf16.mxu0 %v5830
      %6153 = vmatpush2.bf16.msra.mxu0 %v5829
      %6154 = vmatprep.subr.bf16.mxu0 %v5828
      %6155 = vmatpush2.bf16.msra.mxu0 %v5827
      %6156 = vmatprep.subr.bf16.mxu0 %v5826
      %6157 = vmatpush2.bf16.msra.mxu0 %v5825
      %6158 = vmatprep.subr.bf16.mxu0 %v5824
      %6159 = vmatpush2.bf16.msra.mxu0 %v5823
      %6160 = vmatprep.mubr.bf16.mxu0 %v5378
      %6161 = vmatmul.mubr.bf16.gmra.mxu0 %v5377
      %v6162 = vpop.f32.mrf.mxu0
      %v6163 = vadd.f32 %v5970, %v6162
      %v6164 = vpop.f32.mrf.mxu0
      %v6165 = vadd.f32 %v5972, %v6164
      %v6166 = vpop.f32.mrf.mxu0
      %v6167 = vadd.f32 %v5974, %v6166
      %v6168 = vpop.f32.mrf.mxu0
      %v6169 = vadd.f32 %v5976, %v6168
      %6170 = vmatprep.mubr.bf16.mxu0 %v5383
      %6171 = vmatmul.mubr.bf16.gmra.mxu0 %v5382
      %v6172 = vpop.f32.mrf.mxu0
      %v6173 = vadd.f32 %v5980, %v6172
      %v6174 = vpop.f32.mrf.mxu0
      %v6175 = vadd.f32 %v5982, %v6174
      %v6176 = vpop.f32.mrf.mxu0
      %v6177 = vadd.f32 %v5984, %v6176
      %v6178 = vpop.f32.mrf.mxu0
      %v6179 = vadd.f32 %v5986, %v6178
      %6180 = vmatprep.mubr.bf16.mxu0 %v5388
      %6181 = vmatmul.mubr.bf16.gmra.mxu0 %v5387
      %v6182 = vpop.f32.mrf.mxu0
      %v6183 = vadd.f32 %v5990, %v6182
      %v6184 = vpop.f32.mrf.mxu0
      %v6185 = vadd.f32 %v5992, %v6184
      %v6186 = vpop.f32.mrf.mxu0
      %v6187 = vadd.f32 %v5994, %v6186
      %v6188 = vpop.f32.mrf.mxu0
      %v6189 = vadd.f32 %v5996, %v6188
      %6190 = vmatprep.mubr.bf16.mxu0 %v5393
      %6191 = vmatmul.mubr.bf16.gmra.mxu0 %v5392
      %v6192 = vpop.f32.mrf.mxu0
      %v6193 = vadd.f32 %v6000, %v6192
      %v6194 = vpop.f32.mrf.mxu0
      %v6195 = vadd.f32 %v6002, %v6194
      %v6196 = vpop.f32.mrf.mxu0
      %v6197 = vadd.f32 %v6004, %v6196
      %v6198 = vpop.f32.mrf.mxu0
      %v6199 = vadd.f32 %v6006, %v6198
      %6200 = vmatprep.mubr.bf16.mxu0 %v5398
      %6201 = vmatmul.mubr.bf16.gmra.mxu0 %v5397
      %v6202 = vpop.f32.mrf.mxu0
      %v6203 = vadd.f32 %v6010, %v6202
      %v6204 = vpop.f32.mrf.mxu0
      %v6205 = vadd.f32 %v6012, %v6204
      %v6206 = vpop.f32.mrf.mxu0
      %v6207 = vadd.f32 %v6014, %v6206
      %v6208 = vpop.f32.mrf.mxu0
      %v6209 = vadd.f32 %v6016, %v6208
      %6210 = vmatprep.mubr.bf16.mxu0 %v5403
      %6211 = vmatmul.mubr.bf16.gmra.mxu0 %v5402
      %v6212 = vpop.f32.mrf.mxu0
      %v6213 = vadd.f32 %v6020, %v6212
      %v6214 = vpop.f32.mrf.mxu0
      %v6215 = vadd.f32 %v6022, %v6214
      %v6216 = vpop.f32.mrf.mxu0
      %v6217 = vadd.f32 %v6024, %v6216
      %v6218 = vpop.f32.mrf.mxu0
      %v6219 = vadd.f32 %v6026, %v6218
      %6220 = vmatprep.mubr.bf16.mxu0 %v5408
      %6221 = vmatmul.mubr.bf16.gmra.mxu0 %v5407
      %v6222 = vpop.f32.mrf.mxu0
      %v6223 = vadd.f32 %v6030, %v6222
      %v6224 = vpop.f32.mrf.mxu0
      %v6225 = vadd.f32 %v6032, %v6224
      %v6226 = vpop.f32.mrf.mxu0
      %v6227 = vadd.f32 %v6034, %v6226
      %v6228 = vpop.f32.mrf.mxu0
      %v6229 = vadd.f32 %v6036, %v6228
      %6230 = vmatprep.mubr.bf16.mxu0 %v5413
      %6231 = vmatmul.mubr.bf16.gmra.mxu0 %v5412
      %v6232 = vpop.f32.mrf.mxu0
      %v6233 = vadd.f32 %v6040, %v6232
      %v6234 = vpop.f32.mrf.mxu0
      %v6235 = vadd.f32 %v6042, %v6234
      %v6236 = vpop.f32.mrf.mxu0
      %v6237 = vadd.f32 %v6044, %v6236
      %v6238 = vpop.f32.mrf.mxu0
      %v6239 = vadd.f32 %v6046, %v6238
      %6240 = vmatprep.mubr.bf16.mxu0 %v5418
      %6241 = vmatmul.mubr.bf16.gmra.mxu0 %v5417
      %v6242 = vpop.f32.mrf.mxu0
      %v6243 = vadd.f32 %v6050, %v6242
      %v6244 = vpop.f32.mrf.mxu0
      %v6245 = vadd.f32 %v6052, %v6244
      %v6246 = vpop.f32.mrf.mxu0
      %v6247 = vadd.f32 %v6054, %v6246
      %v6248 = vpop.f32.mrf.mxu0
      %v6249 = vadd.f32 %v6056, %v6248
      %6250 = vmatprep.mubr.bf16.mxu0 %v5423
      %6251 = vmatmul.mubr.bf16.gmra.mxu0 %v5422
      %v6252 = vpop.f32.mrf.mxu0
      %v6253 = vadd.f32 %v6060, %v6252
      %v6254 = vpop.f32.mrf.mxu0
      %v6255 = vadd.f32 %v6062, %v6254
      %v6256 = vpop.f32.mrf.mxu0
      %v6257 = vadd.f32 %v6064, %v6256
      %v6258 = vpop.f32.mrf.mxu0
      %v6259 = vadd.f32 %v6066, %v6258
      %6260 = vmatprep.mubr.bf16.mxu0 %v5428
      %6261 = vmatmul.mubr.bf16.gmra.mxu0 %v5427
      %v6262 = vpop.f32.mrf.mxu0
      %v6263 = vadd.f32 %v6070, %v6262
      %v6264 = vpop.f32.mrf.mxu0
      %v6265 = vadd.f32 %v6072, %v6264
      %v6266 = vpop.f32.mrf.mxu0
      %v6267 = vadd.f32 %v6074, %v6266
      %v6268 = vpop.f32.mrf.mxu0
      %v6269 = vadd.f32 %v6076, %v6268
      %6270 = vmatprep.mubr.bf16.mxu0 %v5433
      %6271 = vmatmul.mubr.bf16.gmra.mxu0 %v5432
      %v6272 = vpop.f32.mrf.mxu0
      %v6273 = vadd.f32 %v6080, %v6272
      %v6274 = vpop.f32.mrf.mxu0
      %v6275 = vadd.f32 %v6082, %v6274
      %v6276 = vpop.f32.mrf.mxu0
      %v6277 = vadd.f32 %v6084, %v6276
      %v6278 = vpop.f32.mrf.mxu0
      %v6279 = vadd.f32 %v6086, %v6278
      %6280 = vmatprep.mubr.bf16.mxu0 %v5438
      %6281 = vmatmul.mubr.bf16.gmra.mxu0 %v5437
      %v6282 = vpop.f32.mrf.mxu0
      %v6283 = vadd.f32 %v6090, %v6282
      %v6284 = vpop.f32.mrf.mxu0
      %v6285 = vadd.f32 %v6092, %v6284
      %v6286 = vpop.f32.mrf.mxu0
      %v6287 = vadd.f32 %v6094, %v6286
      %v6288 = vpop.f32.mrf.mxu0
      %v6289 = vadd.f32 %v6096, %v6288
      %6290 = vmatprep.mubr.bf16.mxu0 %v5443
      %6291 = vmatmul.mubr.bf16.gmra.mxu0 %v5442
      %v6292 = vpop.f32.mrf.mxu0
      %v6293 = vadd.f32 %v6100, %v6292
      %v6294 = vpop.f32.mrf.mxu0
      %v6295 = vadd.f32 %v6102, %v6294
      %v6296 = vpop.f32.mrf.mxu0
      %v6297 = vadd.f32 %v6104, %v6296
      %v6298 = vpop.f32.mrf.mxu0
      %v6299 = vadd.f32 %v6106, %v6298
      %6300 = vmatprep.mubr.bf16.mxu0 %v5448
      %6301 = vmatmul.mubr.bf16.gmra.mxu0 %v5447
      %v6302 = vpop.f32.mrf.mxu0
      %v6303 = vadd.f32 %v6110, %v6302
      %v6304 = vpop.f32.mrf.mxu0
      %v6305 = vadd.f32 %v6112, %v6304
      %v6306 = vpop.f32.mrf.mxu0
      %v6307 = vadd.f32 %v6114, %v6306
      %v6308 = vpop.f32.mrf.mxu0
      %v6309 = vadd.f32 %v6116, %v6308
      %6310 = vmatprep.mubr.bf16.mxu0 %v5453
      %6311 = vmatmul.mubr.bf16.gmra.mxu0 %v5452
      %v6312 = vpop.f32.mrf.mxu0
      %v6313 = vadd.f32 %v6120, %v6312
      %v6314 = vpop.f32.mrf.mxu0
      %v6315 = vadd.f32 %v6122, %v6314
      %v6316 = vpop.f32.mrf.mxu0
      %v6317 = vadd.f32 %v6124, %v6316
      %v6318 = vpop.f32.mrf.mxu0
      %v6319 = vadd.f32 %v6126, %v6318
      %6320 = vdwg.mxu0
      %6321 = vmatprep.subr.bf16.mxu0 %v5854
      %6322 = vmatpush1.bf16.msra.mxu0 %v5853
      %6323 = vmatprep.subr.bf16.mxu0 %v5852
      %6324 = vmatpush1.bf16.msra.mxu0 %v5851
      %6325 = vmatprep.subr.bf16.mxu0 %v5850
      %6326 = vmatpush1.bf16.msra.mxu0 %v5849
      %6327 = vmatprep.subr.bf16.mxu0 %v5848
      %6328 = vmatpush1.bf16.msra.mxu0 %v5847
      %6329 = vmatprep.subr.bf16.mxu0 %v5846
      %6330 = vmatpush1.bf16.msra.mxu0 %v5845
      %6331 = vmatprep.subr.bf16.mxu0 %v5844
      %6332 = vmatpush1.bf16.msra.mxu0 %v5843
      %6333 = vmatprep.subr.bf16.mxu0 %v5842
      %6334 = vmatpush1.bf16.msra.mxu0 %v5841
      %6335 = vmatprep.subr.bf16.mxu0 %v5840
      %6336 = vmatpush1.bf16.msra.mxu0 %v5839
      %6337 = vmatprep.subr.bf16.mxu0 0
      %6338 = vmatpush2.bf16.msra.mxu0 0
      %6339 = vmatprep.subr.bf16.mxu0 0
      %6340 = vmatpush2.bf16.msra.mxu0 0
      %6341 = vmatprep.subr.bf16.mxu0 0
      %6342 = vmatpush2.bf16.msra.mxu0 0
      %6343 = vmatprep.subr.bf16.mxu0 0
      %6344 = vmatpush2.bf16.msra.mxu0 0
      %6345 = vmatprep.subr.bf16.mxu0 0
      %6346 = vmatpush2.bf16.msra.mxu0 0
      %6347 = vmatprep.subr.bf16.mxu0 0
      %6348 = vmatpush2.bf16.msra.mxu0 0
      %6349 = vmatprep.subr.bf16.mxu0 0
      %6350 = vmatpush2.bf16.msra.mxu0 0
      %6351 = vmatprep.subr.bf16.mxu0 0
      %6352 = vmatpush2.bf16.msra.mxu0 0
      %6353 = vmatprep.mubr.bf16.mxu0 0
      %6354 = vmatmul.mubr.bf16.gmra.mxu0 %v5379
      %v6355 = vpop.f32.mrf.mxu0
      %v6356 = vadd.f32 %v6163, %v6355
      %v6357 = vpop.f32.mrf.mxu0
      %v6358 = vadd.f32 %v6165, %v6357
      %v6359 = vpop.f32.mrf.mxu0
      %v6360 = vadd.f32 %v6167, %v6359
      %v6361 = vpop.f32.mrf.mxu0
      %v6362 = vadd.f32 %v6169, %v6361
      %6363 = vmatprep.mubr.bf16.mxu0 0
      %6364 = vmatmul.mubr.bf16.gmra.mxu0 %v5384
      %v6365 = vpop.f32.mrf.mxu0
      %v6366 = vadd.f32 %v6173, %v6365
      %v6367 = vpop.f32.mrf.mxu0
      %v6368 = vadd.f32 %v6175, %v6367
      %v6369 = vpop.f32.mrf.mxu0
      %v6370 = vadd.f32 %v6177, %v6369
      %v6371 = vpop.f32.mrf.mxu0
      %v6372 = vadd.f32 %v6179, %v6371
      %6373 = vmatprep.mubr.bf16.mxu0 0
      %6374 = vmatmul.mubr.bf16.gmra.mxu0 %v5389
      %v6375 = vpop.f32.mrf.mxu0
      %v6376 = vadd.f32 %v6183, %v6375
      %v6377 = vpop.f32.mrf.mxu0
      %v6378 = vadd.f32 %v6185, %v6377
      %v6379 = vpop.f32.mrf.mxu0
      %v6380 = vadd.f32 %v6187, %v6379
      %v6381 = vpop.f32.mrf.mxu0
      %v6382 = vadd.f32 %v6189, %v6381
      %6383 = vmatprep.mubr.bf16.mxu0 0
      %6384 = vmatmul.mubr.bf16.gmra.mxu0 %v5394
      %v6385 = vpop.f32.mrf.mxu0
      %v6386 = vadd.f32 %v6193, %v6385
      %v6387 = vpop.f32.mrf.mxu0
      %v6388 = vadd.f32 %v6195, %v6387
      %v6389 = vpop.f32.mrf.mxu0
      %v6390 = vadd.f32 %v6197, %v6389
      %v6391 = vpop.f32.mrf.mxu0
      %v6392 = vadd.f32 %v6199, %v6391
      %6393 = vmatprep.mubr.bf16.mxu0 0
      %6394 = vmatmul.mubr.bf16.gmra.mxu0 %v5399
      %v6395 = vpop.f32.mrf.mxu0
      %v6396 = vadd.f32 %v6203, %v6395
      %v6397 = vpop.f32.mrf.mxu0
      %v6398 = vadd.f32 %v6205, %v6397
      %v6399 = vpop.f32.mrf.mxu0
      %v6400 = vadd.f32 %v6207, %v6399
      %v6401 = vpop.f32.mrf.mxu0
      %v6402 = vadd.f32 %v6209, %v6401
      %6403 = vmatprep.mubr.bf16.mxu0 0
      %6404 = vmatmul.mubr.bf16.gmra.mxu0 %v5404
      %v6405 = vpop.f32.mrf.mxu0
      %v6406 = vadd.f32 %v6213, %v6405
      %v6407 = vpop.f32.mrf.mxu0
      %v6408 = vadd.f32 %v6215, %v6407
      %v6409 = vpop.f32.mrf.mxu0
      %v6410 = vadd.f32 %v6217, %v6409
      %v6411 = vpop.f32.mrf.mxu0
      %v6412 = vadd.f32 %v6219, %v6411
      %6413 = vmatprep.mubr.bf16.mxu0 0
      %6414 = vmatmul.mubr.bf16.gmra.mxu0 %v5409
      %v6415 = vpop.f32.mrf.mxu0
      %v6416 = vadd.f32 %v6223, %v6415
      %v6417 = vpop.f32.mrf.mxu0
      %v6418 = vadd.f32 %v6225, %v6417
      %v6419 = vpop.f32.mrf.mxu0
      %v6420 = vadd.f32 %v6227, %v6419
      %v6421 = vpop.f32.mrf.mxu0
      %v6422 = vadd.f32 %v6229, %v6421
      %6423 = vmatprep.mubr.bf16.mxu0 0
      %6424 = vmatmul.mubr.bf16.gmra.mxu0 %v5414
      %v6425 = vpop.f32.mrf.mxu0
      %v6426 = vadd.f32 %v6233, %v6425
      %v6427 = vpop.f32.mrf.mxu0
      %v6428 = vadd.f32 %v6235, %v6427
      %v6429 = vpop.f32.mrf.mxu0
      %v6430 = vadd.f32 %v6237, %v6429
      %v6431 = vpop.f32.mrf.mxu0
      %v6432 = vadd.f32 %v6239, %v6431
      %6433 = vmatprep.mubr.bf16.mxu0 0
      %6434 = vmatmul.mubr.bf16.gmra.mxu0 %v5419
      %v6435 = vpop.f32.mrf.mxu0
      %v6436 = vadd.f32 %v6243, %v6435
      %v6437 = vpop.f32.mrf.mxu0
      %v6438 = vadd.f32 %v6245, %v6437
      %v6439 = vpop.f32.mrf.mxu0
      %v6440 = vadd.f32 %v6247, %v6439
      %v6441 = vpop.f32.mrf.mxu0
      %v6442 = vadd.f32 %v6249, %v6441
      %6443 = vmatprep.mubr.bf16.mxu0 0
      %6444 = vmatmul.mubr.bf16.gmra.mxu0 %v5424
      %v6445 = vpop.f32.mrf.mxu0
      %v6446 = vadd.f32 %v6253, %v6445
      %v6447 = vpop.f32.mrf.mxu0
      %v6448 = vadd.f32 %v6255, %v6447
      %v6449 = vpop.f32.mrf.mxu0
      %v6450 = vadd.f32 %v6257, %v6449
      %v6451 = vpop.f32.mrf.mxu0
      %v6452 = vadd.f32 %v6259, %v6451
      %6453 = vmatprep.mubr.bf16.mxu0 0
      %6454 = vmatmul.mubr.bf16.gmra.mxu0 %v5429
      %v6455 = vpop.f32.mrf.mxu0
      %v6456 = vadd.f32 %v6263, %v6455
      %v6457 = vpop.f32.mrf.mxu0
      %v6458 = vadd.f32 %v6265, %v6457
      %v6459 = vpop.f32.mrf.mxu0
      %v6460 = vadd.f32 %v6267, %v6459
      %v6461 = vpop.f32.mrf.mxu0
      %v6462 = vadd.f32 %v6269, %v6461
      %6463 = vmatprep.mubr.bf16.mxu0 0
      %6464 = vmatmul.mubr.bf16.gmra.mxu0 %v5434
      %v6465 = vpop.f32.mrf.mxu0
      %v6466 = vadd.f32 %v6273, %v6465
      %v6467 = vpop.f32.mrf.mxu0
      %v6468 = vadd.f32 %v6275, %v6467
      %v6469 = vpop.f32.mrf.mxu0
      %v6470 = vadd.f32 %v6277, %v6469
      %v6471 = vpop.f32.mrf.mxu0
      %v6472 = vadd.f32 %v6279, %v6471
      %6473 = vmatprep.mubr.bf16.mxu0 0
      %6474 = vmatmul.mubr.bf16.gmra.mxu0 %v5439
      %v6475 = vpop.f32.mrf.mxu0
      %v6476 = vadd.f32 %v6283, %v6475
      %v6477 = vpop.f32.mrf.mxu0
      %v6478 = vadd.f32 %v6285, %v6477
      %v6479 = vpop.f32.mrf.mxu0
      %v6480 = vadd.f32 %v6287, %v6479
      %v6481 = vpop.f32.mrf.mxu0
      %v6482 = vadd.f32 %v6289, %v6481
      %6483 = vmatprep.mubr.bf16.mxu0 0
      %6484 = vmatmul.mubr.bf16.gmra.mxu0 %v5444
      %v6485 = vpop.f32.mrf.mxu0
      %v6486 = vadd.f32 %v6293, %v6485
      %v6487 = vpop.f32.mrf.mxu0
      %v6488 = vadd.f32 %v6295, %v6487
      %v6489 = vpop.f32.mrf.mxu0
      %v6490 = vadd.f32 %v6297, %v6489
      %v6491 = vpop.f32.mrf.mxu0
      %v6492 = vadd.f32 %v6299, %v6491
      %6493 = vmatprep.mubr.bf16.mxu0 0
      %6494 = vmatmul.mubr.bf16.gmra.mxu0 %v5449
      %v6495 = vpop.f32.mrf.mxu0
      %v6496 = vadd.f32 %v6303, %v6495
      %v6497 = vpop.f32.mrf.mxu0
      %v6498 = vadd.f32 %v6305, %v6497
      %v6499 = vpop.f32.mrf.mxu0
      %v6500 = vadd.f32 %v6307, %v6499
      %v6501 = vpop.f32.mrf.mxu0
      %v6502 = vadd.f32 %v6309, %v6501
      %6503 = vmatprep.mubr.bf16.mxu0 0
      %6504 = vmatmul.mubr.bf16.gmra.mxu0 %v5454
      %v6505 = vpop.f32.mrf.mxu0
      %v6506 = vadd.f32 %v6313, %v6505
      %v6507 = vpop.f32.mrf.mxu0
      %v6508 = vadd.f32 %v6315, %v6507
      %v6509 = vpop.f32.mrf.mxu0
      %v6510 = vadd.f32 %v6317, %v6509
      %v6511 = vpop.f32.mrf.mxu0
      %v6512 = vadd.f32 %v6319, %v6511
      %6513 = vdwg.mxu0
      %v6578 = vcombine.low %v6356, %v6358
      %v6579 = vcombine.high %v6356, %v6358
      %v6580 = vcombine.low %v6360, %v6362
      %v6581 = vcombine.high %v6360, %v6362
      %v6582 = vcombine.low %v6366, %v6368
      %v6583 = vcombine.high %v6366, %v6368
      %v6584 = vcombine.low %v6370, %v6372
      %v6585 = vcombine.high %v6370, %v6372
      %v6586 = vcombine.low %v6376, %v6378
      %v6587 = vcombine.high %v6376, %v6378
      %v6588 = vcombine.low %v6380, %v6382
      %v6589 = vcombine.high %v6380, %v6382
      %v6590 = vcombine.low %v6386, %v6388
      %v6591 = vcombine.high %v6386, %v6388
      %v6592 = vcombine.low %v6390, %v6392
      %v6593 = vcombine.high %v6390, %v6392
      %v6594 = vcombine.low %v6396, %v6398
      %v6595 = vcombine.high %v6396, %v6398
      %v6596 = vcombine.low %v6400, %v6402
      %v6597 = vcombine.high %v6400, %v6402
      %v6598 = vcombine.low %v6406, %v6408
      %v6599 = vcombine.high %v6406, %v6408
      %v6600 = vcombine.low %v6410, %v6412
      %v6601 = vcombine.high %v6410, %v6412
      %v6602 = vcombine.low %v6416, %v6418
      %v6603 = vcombine.high %v6416, %v6418
      %v6604 = vcombine.low %v6420, %v6422
      %v6605 = vcombine.high %v6420, %v6422
      %v6606 = vcombine.low %v6426, %v6428
      %v6607 = vcombine.high %v6426, %v6428
      %v6608 = vcombine.low %v6430, %v6432
      %v6609 = vcombine.high %v6430, %v6432
      %v6610 = vcombine.low %v6436, %v6438
      %v6611 = vcombine.high %v6436, %v6438
      %v6612 = vcombine.low %v6440, %v6442
      %v6613 = vcombine.high %v6440, %v6442
      %v6614 = vcombine.low %v6446, %v6448
      %v6615 = vcombine.high %v6446, %v6448
      %v6616 = vcombine.low %v6450, %v6452
      %v6617 = vcombine.high %v6450, %v6452
      %v6618 = vcombine.low %v6456, %v6458
      %v6619 = vcombine.high %v6456, %v6458
      %v6620 = vcombine.low %v6460, %v6462
      %v6621 = vcombine.high %v6460, %v6462
      %v6622 = vcombine.low %v6466, %v6468
      %v6623 = vcombine.high %v6466, %v6468
      %v6624 = vcombine.low %v6470, %v6472
      %v6625 = vcombine.high %v6470, %v6472
      %v6626 = vcombine.low %v6476, %v6478
      %v6627 = vcombine.high %v6476, %v6478
      %v6628 = vcombine.low %v6480, %v6482
      %v6629 = vcombine.high %v6480, %v6482
      %v6630 = vcombine.low %v6486, %v6488
      %v6631 = vcombine.high %v6486, %v6488
      %v6632 = vcombine.low %v6490, %v6492
      %v6633 = vcombine.high %v6490, %v6492
      %v6634 = vcombine.low %v6496, %v6498
      %v6635 = vcombine.high %v6496, %v6498
      %v6636 = vcombine.low %v6500, %v6502
      %v6637 = vcombine.high %v6500, %v6502
      %v6638 = vcombine.low %v6506, %v6508
      %v6639 = vcombine.high %v6506, %v6508
      %v6640 = vcombine.low %v6510, %v6512
      %v6641 = vcombine.high %v6510, %v6512
      %v6706 = vld [vmem:[#allocation2 + $0xa] sm:$0xf]
      %v6707 = vld [vmem:[#allocation2 + $0x1a] sm:$0xf]
      %v6708 = vld [vmem:[#allocation2 + $0x2a] sm:$0xf]
      %v6709 = vld [vmem:[#allocation2 + $0x3a] sm:$0xf]
      %v6710 = vld [vmem:[#allocation2 + $0x4a] sm:$0xf]
      %v6711 = vld [vmem:[#allocation2 + $0x5a] sm:$0xf]
      %v6712 = vld [vmem:[#allocation2 + $0x6a] sm:$0xf]
      %v6713 = vld [vmem:[#allocation2 + $0x7a] sm:$0xf]
      %v6714 = vld [vmem:[#allocation2 + $0x8a] sm:$0xf]
      %v6715 = vld [vmem:[#allocation2 + $0x9a] sm:$0xf]
      %v6716 = vld [vmem:[#allocation2 + $0xaa] sm:$0xf]
      %v6717 = vld [vmem:[#allocation2 + $0xba] sm:$0xf]
      %v6718 = vld [vmem:[#allocation2 + $0xca] sm:$0xf]
      %v6719 = vld [vmem:[#allocation2 + $0xda] sm:$0xf]
      %v6720 = vld [vmem:[#allocation2 + $0xea] sm:$0xf]
      %v6721 = vld [vmem:[#allocation2 + $0xfa] sm:$0xf]
      %v6722 = vld [vmem:[#allocation2 + $0x10a] sm:$0xf]
      %v6723 = vld [vmem:[#allocation2 + $0x11a] sm:$0xf]
      %v6724 = vld [vmem:[#allocation2 + $0x12a] sm:$0xf]
      %v6725 = vld [vmem:[#allocation2 + $0x13a] sm:$0xf]
      %v6726 = vld [vmem:[#allocation2 + $0x14a] sm:$0xf]
      %v6727 = vld [vmem:[#allocation2 + $0x15a] sm:$0xf]
      %v6728 = vld [vmem:[#allocation2 + $0x16a] sm:$0xf]
      %v6729 = vld [vmem:[#allocation2 + $0x17a] sm:$0xf]
      %v6730 = vld [vmem:[#allocation2 + $0x18a] sm:$0xf]
      %v6731 = vld [vmem:[#allocation2 + $0x19a] sm:$0xf]
      %v6732 = vld [vmem:[#allocation2 + $0x1aa] sm:$0xf]
      %v6733 = vld [vmem:[#allocation2 + $0x1ba] sm:$0xf]
      %v6734 = vld [vmem:[#allocation2 + $0x1ca] sm:$0xf]
      %v6735 = vld [vmem:[#allocation2 + $0x1da] sm:$0xf]
      %v6736 = vld [vmem:[#allocation2 + $0x1ea] sm:$0xf]
      %v6737 = vld [vmem:[#allocation2 + $0x1fa] sm:$0xf]
      %v6738 = vld [vmem:[#allocation2 + $0x20a] sm:$0xf]
      %v6739 = vld [vmem:[#allocation2 + $0x21a] sm:$0xf]
      %v6740 = vld [vmem:[#allocation2 + $0x22a] sm:$0xf]
      %v6741 = vld [vmem:[#allocation2 + $0x23a] sm:$0xf]
      %v6742 = vld [vmem:[#allocation2 + $0x24a] sm:$0xf]
      %v6743 = vld [vmem:[#allocation2 + $0x25a] sm:$0xf]
      %v6744 = vld [vmem:[#allocation2 + $0x26a] sm:$0xf]
      %v6745 = vld [vmem:[#allocation2 + $0x27a] sm:$0xf]
      %v6746 = vld [vmem:[#allocation2 + $0x28a] sm:$0xf]
      %v6747 = vld [vmem:[#allocation2 + $0x29a] sm:$0xf]
      %v6748 = vld [vmem:[#allocation2 + $0x2aa] sm:$0xf]
      %v6749 = vld [vmem:[#allocation2 + $0x2ba] sm:$0xf]
      %v6750 = vld [vmem:[#allocation2 + $0x2ca] sm:$0xf]
      %v6751 = vld [vmem:[#allocation2 + $0x2da] sm:$0xf]
      %v6752 = vld [vmem:[#allocation2 + $0x2ea] sm:$0xf]
      %v6753 = vld [vmem:[#allocation2 + $0x2fa] sm:$0xf]
      %v6754 = vld [vmem:[#allocation2 + $0x30a] sm:$0xf]
      %v6755 = vld [vmem:[#allocation2 + $0x31a] sm:$0xf]
      %v6756 = vld [vmem:[#allocation2 + $0x32a] sm:$0xf]
      %v6757 = vld [vmem:[#allocation2 + $0x33a] sm:$0xf]
      %v6758 = vld [vmem:[#allocation2 + $0x34a] sm:$0xf]
      %v6759 = vld [vmem:[#allocation2 + $0x35a] sm:$0xf]
      %v6760 = vld [vmem:[#allocation2 + $0x36a] sm:$0xf]
      %v6761 = vld [vmem:[#allocation2 + $0x37a] sm:$0xf]
      %v6762 = vld [vmem:[#allocation2 + $0x38a] sm:$0xf]
      %v6763 = vld [vmem:[#allocation2 + $0x39a] sm:$0xf]
      %v6764 = vld [vmem:[#allocation2 + $0x3aa] sm:$0xf]
      %v6765 = vld [vmem:[#allocation2 + $0x3ba] sm:$0xf]
      %v6766 = vld [vmem:[#allocation2 + $0x3ca] sm:$0xf]
      %v6767 = vld [vmem:[#allocation2 + $0x3da] sm:$0xf]
      %v6768 = vld [vmem:[#allocation2 + $0x3ea] sm:$0xf]
      %v6769 = vld [vmem:[#allocation2 + $0x3fa] sm:$0xf]
      %v6834 = vcombine.low %v4351, %v4415
      %v6835 = vcombine.low %v4479, %v4543
      %v6836 = vcombine.low %v4352, %v4416
      %v6837 = vcombine.low %v4480, %v4544
      %v6838 = vcombine.low %v4353, %v4417
      %v6839 = vcombine.low %v4481, %v4545
      %v6840 = vcombine.low %v4354, %v4418
      %v6841 = vcombine.low %v4482, %v4546
      %v6842 = vcombine.low %v4355, %v4419
      %v6843 = vcombine.low %v4483, %v4547
      %v6844 = vcombine.low %v4356, %v4420
      %v6845 = vcombine.low %v4484, %v4548
      %v6846 = vcombine.low %v4357, %v4421
      %v6847 = vcombine.low %v4485, %v4549
      %v6848 = vcombine.low %v4358, %v4422
      %v6849 = vcombine.low %v4486, %v4550
      %v6850 = vcombine.low %v4359, %v4423
      %v6851 = vcombine.low %v4487, %v4551
      %v6852 = vcombine.low %v4360, %v4424
      %v6853 = vcombine.low %v4488, %v4552
      %v6854 = vcombine.low %v4361, %v4425
      %v6855 = vcombine.low %v4489, %v4553
      %v6856 = vcombine.low %v4362, %v4426
      %v6857 = vcombine.low %v4490, %v4554
      %v6858 = vcombine.low %v4363, %v4427
      %v6859 = vcombine.low %v4491, %v4555
      %v6860 = vcombine.low %v4364, %v4428
      %v6861 = vcombine.low %v4492, %v4556
      %v6862 = vcombine.low %v4365, %v4429
      %v6863 = vcombine.low %v4493, %v4557
      %v6864 = vcombine.low %v4366, %v4430
      %v6865 = vcombine.low %v4494, %v4558
      %v6866 = vcombine.low %v4367, %v4431
      %v6867 = vcombine.low %v4495, %v4559
      %v6868 = vcombine.low %v4368, %v4432
      %v6869 = vcombine.low %v4496, %v4560
      %v6870 = vcombine.low %v4369, %v4433
      %v6871 = vcombine.low %v4497, %v4561
      %v6872 = vcombine.low %v4370, %v4434
      %v6873 = vcombine.low %v4498, %v4562
      %v6874 = vcombine.low %v4371, %v4435
      %v6875 = vcombine.low %v4499, %v4563
      %v6876 = vcombine.low %v4372, %v4436
      %v6877 = vcombine.low %v4500, %v4564
      %v6878 = vcombine.low %v4373, %v4437
      %v6879 = vcombine.low %v4501, %v4565
      %v6880 = vcombine.low %v4374, %v4438
      %v6881 = vcombine.low %v4502, %v4566
      %v6882 = vcombine.low %v4375, %v4439
      %v6883 = vcombine.low %v4503, %v4567
      %v6884 = vcombine.low %v4376, %v4440
      %v6885 = vcombine.low %v4504, %v4568
      %v6886 = vcombine.low %v4377, %v4441
      %v6887 = vcombine.low %v4505, %v4569
      %v6888 = vcombine.low %v4378, %v4442
      %v6889 = vcombine.low %v4506, %v4570
      %v6890 = vcombine.low %v4379, %v4443
      %v6891 = vcombine.low %v4507, %v4571
      %v6892 = vcombine.low %v4380, %v4444
      %v6893 = vcombine.low %v4508, %v4572
      %v6894 = vcombine.low %v4381, %v4445
      %v6895 = vcombine.low %v4509, %v4573
      %v6896 = vcombine.low %v4382, %v4446
      %v6897 = vcombine.low %v4510, %v4574
      %v6898 = vcombine.low %v4383, %v4447
      %v6899 = vcombine.low %v4511, %v4575
      %v6900 = vcombine.low %v4384, %v4448
      %v6901 = vcombine.low %v4512, %v4576
      %v6902 = vcombine.low %v4385, %v4449
      %v6903 = vcombine.low %v4513, %v4577
      %v6904 = vcombine.low %v4386, %v4450
      %v6905 = vcombine.low %v4514, %v4578
      %v6906 = vcombine.low %v4387, %v4451
      %v6907 = vcombine.low %v4515, %v4579
      %v6908 = vcombine.low %v4388, %v4452
      %v6909 = vcombine.low %v4516, %v4580
      %v6910 = vcombine.low %v4389, %v4453
      %v6911 = vcombine.low %v4517, %v4581
      %v6912 = vcombine.low %v4390, %v4454
      %v6913 = vcombine.low %v4518, %v4582
      %v6914 = vcombine.low %v4391, %v4455
      %v6915 = vcombine.low %v4519, %v4583
      %v6916 = vcombine.low %v4392, %v4456
      %v6917 = vcombine.low %v4520, %v4584
      %v6918 = vcombine.low %v4393, %v4457
      %v6919 = vcombine.low %v4521, %v4585
      %v6920 = vcombine.low %v4394, %v4458
      %v6921 = vcombine.low %v4522, %v4586
      %v6922 = vcombine.low %v4395, %v4459
      %v6923 = vcombine.low %v4523, %v4587
      %v6924 = vcombine.low %v4396, %v4460
      %v6925 = vcombine.low %v4524, %v4588
      %v6926 = vcombine.low %v4397, %v4461
      %v6927 = vcombine.low %v4525, %v4589
      %v6928 = vcombine.low %v4398, %v4462
      %v6929 = vcombine.low %v4526, %v4590
      %v6930 = vcombine.low %v4399, %v4463
      %v6931 = vcombine.low %v4527, %v4591
      %v6932 = vcombine.low %v4400, %v4464
      %v6933 = vcombine.low %v4528, %v4592
      %v6934 = vcombine.low %v4401, %v4465
      %v6935 = vcombine.low %v4529, %v4593
      %v6936 = vcombine.low %v4402, %v4466
      %v6937 = vcombine.low %v4530, %v4594
      %v6938 = vcombine.low %v4403, %v4467
      %v6939 = vcombine.low %v4531, %v4595
      %v6940 = vcombine.low %v4404, %v4468
      %v6941 = vcombine.low %v4532, %v4596
      %v6942 = vcombine.low %v4405, %v4469
      %v6943 = vcombine.low %v4533, %v4597
      %v6944 = vcombine.low %v4406, %v4470
      %v6945 = vcombine.low %v4534, %v4598
      %v6946 = vcombine.low %v4407, %v4471
      %v6947 = vcombine.low %v4535, %v4599
      %v6948 = vcombine.low %v4408, %v4472
      %v6949 = vcombine.low %v4536, %v4600
      %v6950 = vcombine.low %v4409, %v4473
      %v6951 = vcombine.low %v4537, %v4601
      %v6952 = vcombine.low %v4410, %v4474
      %v6953 = vcombine.low %v4538, %v4602
      %v6954 = vcombine.low %v4411, %v4475
      %v6955 = vcombine.low %v4539, %v4603
      %v6956 = vcombine.low %v4412, %v4476
      %v6957 = vcombine.low %v4540, %v4604
      %v6958 = vcombine.low %v4413, %v4477
      %v6959 = vcombine.low %v4541, %v4605
      %v6960 = vcombine.low %v4414, %v4478
      %v6961 = vcombine.low %v4542, %v4606
      %v6962 = vcombine.low %v6834, %v6836
      %v6963 = vcombine.high %v6834, %v6836
      %v6964 = vcombine.low %v6835, %v6837
      %v6965 = vcombine.high %v6835, %v6837
      %v6966 = vcombine.low %v6706, %v6707
      %v6967 = vcombine.low %v6838, %v6840
      %v6968 = vcombine.high %v6838, %v6840
      %v6969 = vcombine.low %v6839, %v6841
      %v6970 = vcombine.high %v6839, %v6841
      %v6971 = vcombine.low %v6708, %v6709
      %v6972 = vcombine.low %v6842, %v6844
      %v6973 = vcombine.high %v6842, %v6844
      %v6974 = vcombine.low %v6843, %v6845
      %v6975 = vcombine.high %v6843, %v6845
      %v6976 = vcombine.low %v6710, %v6711
      %v6977 = vcombine.low %v6846, %v6848
      %v6978 = vcombine.high %v6846, %v6848
      %v6979 = vcombine.low %v6847, %v6849
      %v6980 = vcombine.high %v6847, %v6849
      %v6981 = vcombine.low %v6712, %v6713
      %v6982 = vcombine.low %v6850, %v6852
      %v6983 = vcombine.high %v6850, %v6852
      %v6984 = vcombine.low %v6851, %v6853
      %v6985 = vcombine.high %v6851, %v6853
      %v6986 = vcombine.low %v6714, %v6715
      %v6987 = vcombine.low %v6854, %v6856
      %v6988 = vcombine.high %v6854, %v6856
      %v6989 = vcombine.low %v6855, %v6857
      %v6990 = vcombine.high %v6855, %v6857
      %v6991 = vcombine.low %v6716, %v6717
      %v6992 = vcombine.low %v6858, %v6860
      %v6993 = vcombine.high %v6858, %v6860
      %v6994 = vcombine.low %v6859, %v6861
      %v6995 = vcombine.high %v6859, %v6861
      %v6996 = vcombine.low %v6718, %v6719
      %v6997 = vcombine.low %v6862, %v6864
      %v6998 = vcombine.high %v6862, %v6864
      %v6999 = vcombine.low %v6863, %v6865
      %v7000 = vcombine.high %v6863, %v6865
      %v7001 = vcombine.low %v6720, %v6721
      %v7002 = vcombine.low %v6866, %v6868
      %v7003 = vcombine.high %v6866, %v6868
      %v7004 = vcombine.low %v6867, %v6869
      %v7005 = vcombine.high %v6867, %v6869
      %v7006 = vcombine.low %v6722, %v6723
      %v7007 = vcombine.low %v6870, %v6872
      %v7008 = vcombine.high %v6870, %v6872
      %v7009 = vcombine.low %v6871, %v6873
      %v7010 = vcombine.high %v6871, %v6873
      %v7011 = vcombine.low %v6724, %v6725
      %v7012 = vcombine.low %v6874, %v6876
      %v7013 = vcombine.high %v6874, %v6876
      %v7014 = vcombine.low %v6875, %v6877
      %v7015 = vcombine.high %v6875, %v6877
      %v7016 = vcombine.low %v6726, %v6727
      %v7017 = vcombine.low %v6878, %v6880
      %v7018 = vcombine.high %v6878, %v6880
      %v7019 = vcombine.low %v6879, %v6881
      %v7020 = vcombine.high %v6879, %v6881
      %v7021 = vcombine.low %v6728, %v6729
      %v7022 = vcombine.low %v6882, %v6884
      %v7023 = vcombine.high %v6882, %v6884
      %v7024 = vcombine.low %v6883, %v6885
      %v7025 = vcombine.high %v6883, %v6885
      %v7026 = vcombine.low %v6730, %v6731
      %v7027 = vcombine.low %v6886, %v6888
      %v7028 = vcombine.high %v6886, %v6888
      %v7029 = vcombine.low %v6887, %v6889
      %v7030 = vcombine.high %v6887, %v6889
      %v7031 = vcombine.low %v6732, %v6733
      %v7032 = vcombine.low %v6890, %v6892
      %v7033 = vcombine.high %v6890, %v6892
      %v7034 = vcombine.low %v6891, %v6893
      %v7035 = vcombine.high %v6891, %v6893
      %v7036 = vcombine.low %v6734, %v6735
      %v7037 = vcombine.low %v6894, %v6896
      %v7038 = vcombine.high %v6894, %v6896
      %v7039 = vcombine.low %v6895, %v6897
      %v7040 = vcombine.high %v6895, %v6897
      %v7041 = vcombine.low %v6736, %v6737
      %v7042 = vcombine.low %v6898, %v6900
      %v7043 = vcombine.high %v6898, %v6900
      %v7044 = vcombine.low %v6899, %v6901
      %v7045 = vcombine.high %v6899, %v6901
      %v7046 = vcombine.low %v6738, %v6739
      %v7047 = vcombine.low %v6902, %v6904
      %v7048 = vcombine.high %v6902, %v6904
      %v7049 = vcombine.low %v6903, %v6905
      %v7050 = vcombine.high %v6903, %v6905
      %v7051 = vcombine.low %v6740, %v6741
      %v7052 = vcombine.low %v6906, %v6908
      %v7053 = vcombine.high %v6906, %v6908
      %v7054 = vcombine.low %v6907, %v6909
      %v7055 = vcombine.high %v6907, %v6909
      %v7056 = vcombine.low %v6742, %v6743
      %v7057 = vcombine.low %v6910, %v6912
      %v7058 = vcombine.high %v6910, %v6912
      %v7059 = vcombine.low %v6911, %v6913
      %v7060 = vcombine.high %v6911, %v6913
      %v7061 = vcombine.low %v6744, %v6745
      %v7062 = vcombine.low %v6914, %v6916
      %v7063 = vcombine.high %v6914, %v6916
      %v7064 = vcombine.low %v6915, %v6917
      %v7065 = vcombine.high %v6915, %v6917
      %v7066 = vcombine.low %v6746, %v6747
      %v7067 = vcombine.low %v6918, %v6920
      %v7068 = vcombine.high %v6918, %v6920
      %v7069 = vcombine.low %v6919, %v6921
      %v7070 = vcombine.high %v6919, %v6921
      %v7071 = vcombine.low %v6748, %v6749
      %v7072 = vcombine.low %v6922, %v6924
      %v7073 = vcombine.high %v6922, %v6924
      %v7074 = vcombine.low %v6923, %v6925
      %v7075 = vcombine.high %v6923, %v6925
      %v7076 = vcombine.low %v6750, %v6751
      %v7077 = vcombine.low %v6926, %v6928
      %v7078 = vcombine.high %v6926, %v6928
      %v7079 = vcombine.low %v6927, %v6929
      %v7080 = vcombine.high %v6927, %v6929
      %v7081 = vcombine.low %v6752, %v6753
      %v7082 = vcombine.low %v6930, %v6932
      %v7083 = vcombine.high %v6930, %v6932
      %v7084 = vcombine.low %v6931, %v6933
      %v7085 = vcombine.high %v6931, %v6933
      %v7086 = vcombine.low %v6754, %v6755
      %v7087 = vcombine.low %v6934, %v6936
      %v7088 = vcombine.high %v6934, %v6936
      %v7089 = vcombine.low %v6935, %v6937
      %v7090 = vcombine.high %v6935, %v6937
      %v7091 = vcombine.low %v6756, %v6757
      %v7092 = vcombine.low %v6938, %v6940
      %v7093 = vcombine.high %v6938, %v6940
      %v7094 = vcombine.low %v6939, %v6941
      %v7095 = vcombine.high %v6939, %v6941
      %v7096 = vcombine.low %v6758, %v6759
      %v7097 = vcombine.low %v6942, %v6944
      %v7098 = vcombine.high %v6942, %v6944
      %v7099 = vcombine.low %v6943, %v6945
      %v7100 = vcombine.high %v6943, %v6945
      %v7101 = vcombine.low %v6760, %v6761
      %v7102 = vcombine.low %v6946, %v6948
      %v7103 = vcombine.high %v6946, %v6948
      %v7104 = vcombine.low %v6947, %v6949
      %v7105 = vcombine.high %v6947, %v6949
      %v7106 = vcombine.low %v6762, %v6763
      %v7107 = vcombine.low %v6950, %v6952
      %v7108 = vcombine.high %v6950, %v6952
      %v7109 = vcombine.low %v6951, %v6953
      %v7110 = vcombine.high %v6951, %v6953
      %v7111 = vcombine.low %v6764, %v6765
      %v7112 = vcombine.low %v6954, %v6956
      %v7113 = vcombine.high %v6954, %v6956
      %v7114 = vcombine.low %v6955, %v6957
      %v7115 = vcombine.high %v6955, %v6957
      %v7116 = vcombine.low %v6766, %v6767
      %v7117 = vcombine.low %v6958, %v6960
      %v7118 = vcombine.high %v6958, %v6960
      %v7119 = vcombine.low %v6959, %v6961
      %v7120 = vcombine.high %v6959, %v6961
      %v7121 = vcombine.low %v6768, %v6769
      %v7282 = vpack.c.bf16 %v6967, %v6962
      %v7283 = vpack.c.bf16 %v6968, %v6963
      %v7284 = vpack.c.bf16 %v6969, %v6964
      %v7285 = vpack.c.bf16 %v6970, %v6965
      %v7286 = vpack.c.bf16 %v6971, %v6966
      %v7287 = vpack.c.bf16 %v6977, %v6972
      %v7288 = vpack.c.bf16 %v6978, %v6973
      %v7289 = vpack.c.bf16 %v6979, %v6974
      %v7290 = vpack.c.bf16 %v6980, %v6975
      %v7291 = vpack.c.bf16 %v6981, %v6976
      %v7292 = vpack.c.bf16 %v6987, %v6982
      %v7293 = vpack.c.bf16 %v6988, %v6983
      %v7294 = vpack.c.bf16 %v6989, %v6984
      %v7295 = vpack.c.bf16 %v6990, %v6985
      %v7296 = vpack.c.bf16 %v6991, %v6986
      %v7297 = vpack.c.bf16 %v6997, %v6992
      %v7298 = vpack.c.bf16 %v6998, %v6993
      %v7299 = vpack.c.bf16 %v6999, %v6994
      %v7300 = vpack.c.bf16 %v7000, %v6995
      %v7301 = vpack.c.bf16 %v7001, %v6996
      %v7302 = vpack.c.bf16 %v7007, %v7002
      %v7303 = vpack.c.bf16 %v7008, %v7003
      %v7304 = vpack.c.bf16 %v7009, %v7004
      %v7305 = vpack.c.bf16 %v7010, %v7005
      %v7306 = vpack.c.bf16 %v7011, %v7006
      %v7307 = vpack.c.bf16 %v7017, %v7012
      %v7308 = vpack.c.bf16 %v7018, %v7013
      %v7309 = vpack.c.bf16 %v7019, %v7014
      %v7310 = vpack.c.bf16 %v7020, %v7015
      %v7311 = vpack.c.bf16 %v7021, %v7016
      %v7312 = vpack.c.bf16 %v7027, %v7022
      %v7313 = vpack.c.bf16 %v7028, %v7023
      %v7314 = vpack.c.bf16 %v7029, %v7024
      %v7315 = vpack.c.bf16 %v7030, %v7025
      %v7316 = vpack.c.bf16 %v7031, %v7026
      %v7317 = vpack.c.bf16 %v7037, %v7032
      %v7318 = vpack.c.bf16 %v7038, %v7033
      %v7319 = vpack.c.bf16 %v7039, %v7034
      %v7320 = vpack.c.bf16 %v7040, %v7035
      %v7321 = vpack.c.bf16 %v7041, %v7036
      %v7322 = vpack.c.bf16 %v7047, %v7042
      %v7323 = vpack.c.bf16 %v7048, %v7043
      %v7324 = vpack.c.bf16 %v7049, %v7044
      %v7325 = vpack.c.bf16 %v7050, %v7045
      %v7326 = vpack.c.bf16 %v7051, %v7046
      %v7327 = vpack.c.bf16 %v7057, %v7052
      %v7328 = vpack.c.bf16 %v7058, %v7053
      %v7329 = vpack.c.bf16 %v7059, %v7054
      %v7330 = vpack.c.bf16 %v7060, %v7055
      %v7331 = vpack.c.bf16 %v7061, %v7056
      %v7332 = vpack.c.bf16 %v7067, %v7062
      %v7333 = vpack.c.bf16 %v7068, %v7063
      %v7334 = vpack.c.bf16 %v7069, %v7064
      %v7335 = vpack.c.bf16 %v7070, %v7065
      %v7336 = vpack.c.bf16 %v7071, %v7066
      %v7337 = vpack.c.bf16 %v7077, %v7072
      %v7338 = vpack.c.bf16 %v7078, %v7073
      %v7339 = vpack.c.bf16 %v7079, %v7074
      %v7340 = vpack.c.bf16 %v7080, %v7075
      %v7341 = vpack.c.bf16 %v7081, %v7076
      %v7342 = vpack.c.bf16 %v7087, %v7082
      %v7343 = vpack.c.bf16 %v7088, %v7083
      %v7344 = vpack.c.bf16 %v7089, %v7084
      %v7345 = vpack.c.bf16 %v7090, %v7085
      %v7346 = vpack.c.bf16 %v7091, %v7086
      %v7347 = vpack.c.bf16 %v7097, %v7092
      %v7348 = vpack.c.bf16 %v7098, %v7093
      %v7349 = vpack.c.bf16 %v7099, %v7094
      %v7350 = vpack.c.bf16 %v7100, %v7095
      %v7351 = vpack.c.bf16 %v7101, %v7096
      %v7352 = vpack.c.bf16 %v7107, %v7102
      %v7353 = vpack.c.bf16 %v7108, %v7103
      %v7354 = vpack.c.bf16 %v7109, %v7104
      %v7355 = vpack.c.bf16 %v7110, %v7105
      %v7356 = vpack.c.bf16 %v7111, %v7106
      %v7357 = vpack.c.bf16 %v7117, %v7112
      %v7358 = vpack.c.bf16 %v7118, %v7113
      %v7359 = vpack.c.bf16 %v7119, %v7114
      %v7360 = vpack.c.bf16 %v7120, %v7115
      %v7361 = vpack.c.bf16 %v7121, %v7116
      %7362 = vmatprep.subr.bf16.mxu0 %v5790
      %7363 = vmatpush1.bf16.msra.mxu0 %v5789
      %7364 = vmatprep.subr.bf16.mxu0 %v5788
      %7365 = vmatpush1.bf16.msra.mxu0 %v5787
      %7366 = vmatprep.subr.bf16.mxu0 %v5786
      %7367 = vmatpush1.bf16.msra.mxu0 %v5785
      %7368 = vmatprep.subr.bf16.mxu0 %v5784
      %7369 = vmatpush1.bf16.msra.mxu0 %v5783
      %7370 = vmatprep.subr.bf16.mxu0 %v5782
      %7371 = vmatpush1.bf16.msra.mxu0 %v5781
      %7372 = vmatprep.subr.bf16.mxu0 %v5780
      %7373 = vmatpush1.bf16.msra.mxu0 %v5779
      %7374 = vmatprep.subr.bf16.mxu0 %v5778
      %7375 = vmatpush1.bf16.msra.mxu0 %v5777
      %7376 = vmatprep.subr.bf16.mxu0 %v5776
      %7377 = vmatpush1.bf16.msra.mxu0 %v5775
      %7378 = vmatprep.subr.bf16.mxu0 %v5806
      %7379 = vmatpush2.bf16.msra.mxu0 %v5805
      %7380 = vmatprep.subr.bf16.mxu0 %v5804
      %7381 = vmatpush2.bf16.msra.mxu0 %v5803
      %7382 = vmatprep.subr.bf16.mxu0 %v5802
      %7383 = vmatpush2.bf16.msra.mxu0 %v5801
      %7384 = vmatprep.subr.bf16.mxu0 %v5800
      %7385 = vmatpush2.bf16.msra.mxu0 %v5799
      %7386 = vmatprep.subr.bf16.mxu0 %v5798
      %7387 = vmatpush2.bf16.msra.mxu0 %v5797
      %7388 = vmatprep.subr.bf16.mxu0 %v5796
      %7389 = vmatpush2.bf16.msra.mxu0 %v5795
      %7390 = vmatprep.subr.bf16.mxu0 %v5794
      %7391 = vmatpush2.bf16.msra.mxu0 %v5793
      %7392 = vmatprep.subr.bf16.mxu0 %v5792
      %7393 = vmatpush2.bf16.msra.mxu0 %v5791
      %7394 = vmatprep.mubr.bf16.mxu0 %v7283
      %7395 = vmatmul.mubr.bf16.gmra.mxu0 %v7282
      %v7396 = vpop.f32.mrf.mxu0
      %v7397 = vadd.f32 0.0, %v7396
      %v7398 = vpop.f32.mrf.mxu0
      %v7399 = vadd.f32 0.0, %v7398
      %v7400 = vpop.f32.mrf.mxu0
      %v7401 = vadd.f32 0.0, %v7400
      %v7402 = vpop.f32.mrf.mxu0
      %v7403 = vadd.f32 0.0, %v7402
      %7404 = vmatprep.mubr.bf16.mxu0 %v7288
      %7405 = vmatmul.mubr.bf16.gmra.mxu0 %v7287
      %v7406 = vpop.f32.mrf.mxu0
      %v7407 = vadd.f32 0.0, %v7406
      %v7408 = vpop.f32.mrf.mxu0
      %v7409 = vadd.f32 0.0, %v7408
      %v7410 = vpop.f32.mrf.mxu0
      %v7411 = vadd.f32 0.0, %v7410
      %v7412 = vpop.f32.mrf.mxu0
      %v7413 = vadd.f32 0.0, %v7412
      %7414 = vmatprep.mubr.bf16.mxu0 %v7293
      %7415 = vmatmul.mubr.bf16.gmra.mxu0 %v7292
      %v7416 = vpop.f32.mrf.mxu0
      %v7417 = vadd.f32 0.0, %v7416
      %v7418 = vpop.f32.mrf.mxu0
      %v7419 = vadd.f32 0.0, %v7418
      %v7420 = vpop.f32.mrf.mxu0
      %v7421 = vadd.f32 0.0, %v7420
      %v7422 = vpop.f32.mrf.mxu0
      %v7423 = vadd.f32 0.0, %v7422
      %7424 = vmatprep.mubr.bf16.mxu0 %v7298
      %7425 = vmatmul.mubr.bf16.gmra.mxu0 %v7297
      %v7426 = vpop.f32.mrf.mxu0
      %v7427 = vadd.f32 0.0, %v7426
      %v7428 = vpop.f32.mrf.mxu0
      %v7429 = vadd.f32 0.0, %v7428
      %v7430 = vpop.f32.mrf.mxu0
      %v7431 = vadd.f32 0.0, %v7430
      %v7432 = vpop.f32.mrf.mxu0
      %v7433 = vadd.f32 0.0, %v7432
      %7434 = vmatprep.mubr.bf16.mxu0 %v7303
      %7435 = vmatmul.mubr.bf16.gmra.mxu0 %v7302
      %v7436 = vpop.f32.mrf.mxu0
      %v7437 = vadd.f32 0.0, %v7436
      %v7438 = vpop.f32.mrf.mxu0
      %v7439 = vadd.f32 0.0, %v7438
      %v7440 = vpop.f32.mrf.mxu0
      %v7441 = vadd.f32 0.0, %v7440
      %v7442 = vpop.f32.mrf.mxu0
      %v7443 = vadd.f32 0.0, %v7442
      %7444 = vmatprep.mubr.bf16.mxu0 %v7308
      %7445 = vmatmul.mubr.bf16.gmra.mxu0 %v7307
      %v7446 = vpop.f32.mrf.mxu0
      %v7447 = vadd.f32 0.0, %v7446
      %v7448 = vpop.f32.mrf.mxu0
      %v7449 = vadd.f32 0.0, %v7448
      %v7450 = vpop.f32.mrf.mxu0
      %v7451 = vadd.f32 0.0, %v7450
      %v7452 = vpop.f32.mrf.mxu0
      %v7453 = vadd.f32 0.0, %v7452
      %7454 = vmatprep.mubr.bf16.mxu0 %v7313
      %7455 = vmatmul.mubr.bf16.gmra.mxu0 %v7312
      %v7456 = vpop.f32.mrf.mxu0
      %v7457 = vadd.f32 0.0, %v7456
      %v7458 = vpop.f32.mrf.mxu0
      %v7459 = vadd.f32 0.0, %v7458
      %v7460 = vpop.f32.mrf.mxu0
      %v7461 = vadd.f32 0.0, %v7460
      %v7462 = vpop.f32.mrf.mxu0
      %v7463 = vadd.f32 0.0, %v7462
      %7464 = vmatprep.mubr.bf16.mxu0 %v7318
      %7465 = vmatmul.mubr.bf16.gmra.mxu0 %v7317
      %v7466 = vpop.f32.mrf.mxu0
      %v7467 = vadd.f32 0.0, %v7466
      %v7468 = vpop.f32.mrf.mxu0
      %v7469 = vadd.f32 0.0, %v7468
      %v7470 = vpop.f32.mrf.mxu0
      %v7471 = vadd.f32 0.0, %v7470
      %v7472 = vpop.f32.mrf.mxu0
      %v7473 = vadd.f32 0.0, %v7472
      %7474 = vmatprep.mubr.bf16.mxu0 %v7323
      %7475 = vmatmul.mubr.bf16.gmra.mxu0 %v7322
      %v7476 = vpop.f32.mrf.mxu0
      %v7477 = vadd.f32 0.0, %v7476
      %v7478 = vpop.f32.mrf.mxu0
      %v7479 = vadd.f32 0.0, %v7478
      %v7480 = vpop.f32.mrf.mxu0
      %v7481 = vadd.f32 0.0, %v7480
      %v7482 = vpop.f32.mrf.mxu0
      %v7483 = vadd.f32 0.0, %v7482
      %7484 = vmatprep.mubr.bf16.mxu0 %v7328
      %7485 = vmatmul.mubr.bf16.gmra.mxu0 %v7327
      %v7486 = vpop.f32.mrf.mxu0
      %v7487 = vadd.f32 0.0, %v7486
      %v7488 = vpop.f32.mrf.mxu0
      %v7489 = vadd.f32 0.0, %v7488
      %v7490 = vpop.f32.mrf.mxu0
      %v7491 = vadd.f32 0.0, %v7490
      %v7492 = vpop.f32.mrf.mxu0
      %v7493 = vadd.f32 0.0, %v7492
      %7494 = vmatprep.mubr.bf16.mxu0 %v7333
      %7495 = vmatmul.mubr.bf16.gmra.mxu0 %v7332
      %v7496 = vpop.f32.mrf.mxu0
      %v7497 = vadd.f32 0.0, %v7496
      %v7498 = vpop.f32.mrf.mxu0
      %v7499 = vadd.f32 0.0, %v7498
      %v7500 = vpop.f32.mrf.mxu0
      %v7501 = vadd.f32 0.0, %v7500
      %v7502 = vpop.f32.mrf.mxu0
      %v7503 = vadd.f32 0.0, %v7502
      %7504 = vmatprep.mubr.bf16.mxu0 %v7338
      %7505 = vmatmul.mubr.bf16.gmra.mxu0 %v7337
      %v7506 = vpop.f32.mrf.mxu0
      %v7507 = vadd.f32 0.0, %v7506
      %v7508 = vpop.f32.mrf.mxu0
      %v7509 = vadd.f32 0.0, %v7508
      %v7510 = vpop.f32.mrf.mxu0
      %v7511 = vadd.f32 0.0, %v7510
      %v7512 = vpop.f32.mrf.mxu0
      %v7513 = vadd.f32 0.0, %v7512
      %7514 = vmatprep.mubr.bf16.mxu0 %v7343
      %7515 = vmatmul.mubr.bf16.gmra.mxu0 %v7342
      %v7516 = vpop.f32.mrf.mxu0
      %v7517 = vadd.f32 0.0, %v7516
      %v7518 = vpop.f32.mrf.mxu0
      %v7519 = vadd.f32 0.0, %v7518
      %v7520 = vpop.f32.mrf.mxu0
      %v7521 = vadd.f32 0.0, %v7520
      %v7522 = vpop.f32.mrf.mxu0
      %v7523 = vadd.f32 0.0, %v7522
      %7524 = vmatprep.mubr.bf16.mxu0 %v7348
      %7525 = vmatmul.mubr.bf16.gmra.mxu0 %v7347
      %v7526 = vpop.f32.mrf.mxu0
      %v7527 = vadd.f32 0.0, %v7526
      %v7528 = vpop.f32.mrf.mxu0
      %v7529 = vadd.f32 0.0, %v7528
      %v7530 = vpop.f32.mrf.mxu0
      %v7531 = vadd.f32 0.0, %v7530
      %v7532 = vpop.f32.mrf.mxu0
      %v7533 = vadd.f32 0.0, %v7532
      %7534 = vmatprep.mubr.bf16.mxu0 %v7353
      %7535 = vmatmul.mubr.bf16.gmra.mxu0 %v7352
      %v7536 = vpop.f32.mrf.mxu0
      %v7537 = vadd.f32 0.0, %v7536
      %v7538 = vpop.f32.mrf.mxu0
      %v7539 = vadd.f32 0.0, %v7538
      %v7540 = vpop.f32.mrf.mxu0
      %v7541 = vadd.f32 0.0, %v7540
      %v7542 = vpop.f32.mrf.mxu0
      %v7543 = vadd.f32 0.0, %v7542
      %7544 = vmatprep.mubr.bf16.mxu0 %v7358
      %7545 = vmatmul.mubr.bf16.gmra.mxu0 %v7357
      %v7546 = vpop.f32.mrf.mxu0
      %v7547 = vadd.f32 0.0, %v7546
      %v7548 = vpop.f32.mrf.mxu0
      %v7549 = vadd.f32 0.0, %v7548
      %v7550 = vpop.f32.mrf.mxu0
      %v7551 = vadd.f32 0.0, %v7550
      %v7552 = vpop.f32.mrf.mxu0
      %v7553 = vadd.f32 0.0, %v7552
      %7554 = vdwg.mxu0
      %7555 = vmatprep.subr.bf16.mxu0 %v5822
      %7556 = vmatpush1.bf16.msra.mxu0 %v5821
      %7557 = vmatprep.subr.bf16.mxu0 %v5820
      %7558 = vmatpush1.bf16.msra.mxu0 %v5819
      %7559 = vmatprep.subr.bf16.mxu0 %v5818
      %7560 = vmatpush1.bf16.msra.mxu0 %v5817
      %7561 = vmatprep.subr.bf16.mxu0 %v5816
      %7562 = vmatpush1.bf16.msra.mxu0 %v5815
      %7563 = vmatprep.subr.bf16.mxu0 %v5814
      %7564 = vmatpush1.bf16.msra.mxu0 %v5813
      %7565 = vmatprep.subr.bf16.mxu0 %v5812
      %7566 = vmatpush1.bf16.msra.mxu0 %v5811
      %7567 = vmatprep.subr.bf16.mxu0 %v5810
      %7568 = vmatpush1.bf16.msra.mxu0 %v5809
      %7569 = vmatprep.subr.bf16.mxu0 %v5808
      %7570 = vmatpush1.bf16.msra.mxu0 %v5807
      %7571 = vmatprep.subr.bf16.mxu0 %v5838
      %7572 = vmatpush2.bf16.msra.mxu0 %v5837
      %7573 = vmatprep.subr.bf16.mxu0 %v5836
      %7574 = vmatpush2.bf16.msra.mxu0 %v5835
      %7575 = vmatprep.subr.bf16.mxu0 %v5834
      %7576 = vmatpush2.bf16.msra.mxu0 %v5833
      %7577 = vmatprep.subr.bf16.mxu0 %v5832
      %7578 = vmatpush2.bf16.msra.mxu0 %v5831
      %7579 = vmatprep.subr.bf16.mxu0 %v5830
      %7580 = vmatpush2.bf16.msra.mxu0 %v5829
      %7581 = vmatprep.subr.bf16.mxu0 %v5828
      %7582 = vmatpush2.bf16.msra.mxu0 %v5827
      %7583 = vmatprep.subr.bf16.mxu0 %v5826
      %7584 = vmatpush2.bf16.msra.mxu0 %v5825
      %7585 = vmatprep.subr.bf16.mxu0 %v5824
      %7586 = vmatpush2.bf16.msra.mxu0 %v5823
      %7587 = vmatprep.mubr.bf16.mxu0 %v7285
      %7588 = vmatmul.mubr.bf16.gmra.mxu0 %v7284
      %v7589 = vpop.f32.mrf.mxu0
      %v7590 = vadd.f32 %v7397, %v7589
      %v7591 = vpop.f32.mrf.mxu0
      %v7592 = vadd.f32 %v7399, %v7591
      %v7593 = vpop.f32.mrf.mxu0
      %v7594 = vadd.f32 %v7401, %v7593
      %v7595 = vpop.f32.mrf.mxu0
      %v7596 = vadd.f32 %v7403, %v7595
      %7597 = vmatprep.mubr.bf16.mxu0 %v7290
      %7598 = vmatmul.mubr.bf16.gmra.mxu0 %v7289
      %v7599 = vpop.f32.mrf.mxu0
      %v7600 = vadd.f32 %v7407, %v7599
      %v7601 = vpop.f32.mrf.mxu0
      %v7602 = vadd.f32 %v7409, %v7601
      %v7603 = vpop.f32.mrf.mxu0
      %v7604 = vadd.f32 %v7411, %v7603
      %v7605 = vpop.f32.mrf.mxu0
      %v7606 = vadd.f32 %v7413, %v7605
      %7607 = vmatprep.mubr.bf16.mxu0 %v7295
      %7608 = vmatmul.mubr.bf16.gmra.mxu0 %v7294
      %v7609 = vpop.f32.mrf.mxu0
      %v7610 = vadd.f32 %v7417, %v7609
      %v7611 = vpop.f32.mrf.mxu0
      %v7612 = vadd.f32 %v7419, %v7611
      %v7613 = vpop.f32.mrf.mxu0
      %v7614 = vadd.f32 %v7421, %v7613
      %v7615 = vpop.f32.mrf.mxu0
      %v7616 = vadd.f32 %v7423, %v7615
      %7617 = vmatprep.mubr.bf16.mxu0 %v7300
      %7618 = vmatmul.mubr.bf16.gmra.mxu0 %v7299
      %v7619 = vpop.f32.mrf.mxu0
      %v7620 = vadd.f32 %v7427, %v7619
      %v7621 = vpop.f32.mrf.mxu0
      %v7622 = vadd.f32 %v7429, %v7621
      %v7623 = vpop.f32.mrf.mxu0
      %v7624 = vadd.f32 %v7431, %v7623
      %v7625 = vpop.f32.mrf.mxu0
      %v7626 = vadd.f32 %v7433, %v7625
      %7627 = vmatprep.mubr.bf16.mxu0 %v7305
      %7628 = vmatmul.mubr.bf16.gmra.mxu0 %v7304
      %v7629 = vpop.f32.mrf.mxu0
      %v7630 = vadd.f32 %v7437, %v7629
      %v7631 = vpop.f32.mrf.mxu0
      %v7632 = vadd.f32 %v7439, %v7631
      %v7633 = vpop.f32.mrf.mxu0
      %v7634 = vadd.f32 %v7441, %v7633
      %v7635 = vpop.f32.mrf.mxu0
      %v7636 = vadd.f32 %v7443, %v7635
      %7637 = vmatprep.mubr.bf16.mxu0 %v7310
      %7638 = vmatmul.mubr.bf16.gmra.mxu0 %v7309
      %v7639 = vpop.f32.mrf.mxu0
      %v7640 = vadd.f32 %v7447, %v7639
      %v7641 = vpop.f32.mrf.mxu0
      %v7642 = vadd.f32 %v7449, %v7641
      %v7643 = vpop.f32.mrf.mxu0
      %v7644 = vadd.f32 %v7451, %v7643
      %v7645 = vpop.f32.mrf.mxu0
      %v7646 = vadd.f32 %v7453, %v7645
      %7647 = vmatprep.mubr.bf16.mxu0 %v7315
      %7648 = vmatmul.mubr.bf16.gmra.mxu0 %v7314
      %v7649 = vpop.f32.mrf.mxu0
      %v7650 = vadd.f32 %v7457, %v7649
      %v7651 = vpop.f32.mrf.mxu0
      %v7652 = vadd.f32 %v7459, %v7651
      %v7653 = vpop.f32.mrf.mxu0
      %v7654 = vadd.f32 %v7461, %v7653
      %v7655 = vpop.f32.mrf.mxu0
      %v7656 = vadd.f32 %v7463, %v7655
      %7657 = vmatprep.mubr.bf16.mxu0 %v7320
      %7658 = vmatmul.mubr.bf16.gmra.mxu0 %v7319
      %v7659 = vpop.f32.mrf.mxu0
      %v7660 = vadd.f32 %v7467, %v7659
      %v7661 = vpop.f32.mrf.mxu0
      %v7662 = vadd.f32 %v7469, %v7661
      %v7663 = vpop.f32.mrf.mxu0
      %v7664 = vadd.f32 %v7471, %v7663
      %v7665 = vpop.f32.mrf.mxu0
      %v7666 = vadd.f32 %v7473, %v7665
      %7667 = vmatprep.mubr.bf16.mxu0 %v7325
      %7668 = vmatmul.mubr.bf16.gmra.mxu0 %v7324
      %v7669 = vpop.f32.mrf.mxu0
      %v7670 = vadd.f32 %v7477, %v7669
      %v7671 = vpop.f32.mrf.mxu0
      %v7672 = vadd.f32 %v7479, %v7671
      %v7673 = vpop.f32.mrf.mxu0
      %v7674 = vadd.f32 %v7481, %v7673
      %v7675 = vpop.f32.mrf.mxu0
      %v7676 = vadd.f32 %v7483, %v7675
      %7677 = vmatprep.mubr.bf16.mxu0 %v7330
      %7678 = vmatmul.mubr.bf16.gmra.mxu0 %v7329
      %v7679 = vpop.f32.mrf.mxu0
      %v7680 = vadd.f32 %v7487, %v7679
      %v7681 = vpop.f32.mrf.mxu0
      %v7682 = vadd.f32 %v7489, %v7681
      %v7683 = vpop.f32.mrf.mxu0
      %v7684 = vadd.f32 %v7491, %v7683
      %v7685 = vpop.f32.mrf.mxu0
      %v7686 = vadd.f32 %v7493, %v7685
      %7687 = vmatprep.mubr.bf16.mxu0 %v7335
      %7688 = vmatmul.mubr.bf16.gmra.mxu0 %v7334
      %v7689 = vpop.f32.mrf.mxu0
      %v7690 = vadd.f32 %v7497, %v7689
      %v7691 = vpop.f32.mrf.mxu0
      %v7692 = vadd.f32 %v7499, %v7691
      %v7693 = vpop.f32.mrf.mxu0
      %v7694 = vadd.f32 %v7501, %v7693
      %v7695 = vpop.f32.mrf.mxu0
      %v7696 = vadd.f32 %v7503, %v7695
      %7697 = vmatprep.mubr.bf16.mxu0 %v7340
      %7698 = vmatmul.mubr.bf16.gmra.mxu0 %v7339
      %v7699 = vpop.f32.mrf.mxu0
      %v7700 = vadd.f32 %v7507, %v7699
      %v7701 = vpop.f32.mrf.mxu0
      %v7702 = vadd.f32 %v7509, %v7701
      %v7703 = vpop.f32.mrf.mxu0
      %v7704 = vadd.f32 %v7511, %v7703
      %v7705 = vpop.f32.mrf.mxu0
      %v7706 = vadd.f32 %v7513, %v7705
      %7707 = vmatprep.mubr.bf16.mxu0 %v7345
      %7708 = vmatmul.mubr.bf16.gmra.mxu0 %v7344
      %v7709 = vpop.f32.mrf.mxu0
      %v7710 = vadd.f32 %v7517, %v7709
      %v7711 = vpop.f32.mrf.mxu0
      %v7712 = vadd.f32 %v7519, %v7711
      %v7713 = vpop.f32.mrf.mxu0
      %v7714 = vadd.f32 %v7521, %v7713
      %v7715 = vpop.f32.mrf.mxu0
      %v7716 = vadd.f32 %v7523, %v7715
      %7717 = vmatprep.mubr.bf16.mxu0 %v7350
      %7718 = vmatmul.mubr.bf16.gmra.mxu0 %v7349
      %v7719 = vpop.f32.mrf.mxu0
      %v7720 = vadd.f32 %v7527, %v7719
      %v7721 = vpop.f32.mrf.mxu0
      %v7722 = vadd.f32 %v7529, %v7721
      %v7723 = vpop.f32.mrf.mxu0
      %v7724 = vadd.f32 %v7531, %v7723
      %v7725 = vpop.f32.mrf.mxu0
      %v7726 = vadd.f32 %v7533, %v7725
      %7727 = vmatprep.mubr.bf16.mxu0 %v7355
      %7728 = vmatmul.mubr.bf16.gmra.mxu0 %v7354
      %v7729 = vpop.f32.mrf.mxu0
      %v7730 = vadd.f32 %v7537, %v7729
      %v7731 = vpop.f32.mrf.mxu0
      %v7732 = vadd.f32 %v7539, %v7731
      %v7733 = vpop.f32.mrf.mxu0
      %v7734 = vadd.f32 %v7541, %v7733
      %v7735 = vpop.f32.mrf.mxu0
      %v7736 = vadd.f32 %v7543, %v7735
      %7737 = vmatprep.mubr.bf16.mxu0 %v7360
      %7738 = vmatmul.mubr.bf16.gmra.mxu0 %v7359
      %v7739 = vpop.f32.mrf.mxu0
      %v7740 = vadd.f32 %v7547, %v7739
      %v7741 = vpop.f32.mrf.mxu0
      %v7742 = vadd.f32 %v7549, %v7741
      %v7743 = vpop.f32.mrf.mxu0
      %v7744 = vadd.f32 %v7551, %v7743
      %v7745 = vpop.f32.mrf.mxu0
      %v7746 = vadd.f32 %v7553, %v7745
      %7747 = vdwg.mxu0
      %7748 = vmatprep.subr.bf16.mxu0 %v5854
      %7749 = vmatpush1.bf16.msra.mxu0 %v5853
      %7750 = vmatprep.subr.bf16.mxu0 %v5852
      %7751 = vmatpush1.bf16.msra.mxu0 %v5851
      %7752 = vmatprep.subr.bf16.mxu0 %v5850
      %7753 = vmatpush1.bf16.msra.mxu0 %v5849
      %7754 = vmatprep.subr.bf16.mxu0 %v5848
      %7755 = vmatpush1.bf16.msra.mxu0 %v5847
      %7756 = vmatprep.subr.bf16.mxu0 %v5846
      %7757 = vmatpush1.bf16.msra.mxu0 %v5845
      %7758 = vmatprep.subr.bf16.mxu0 %v5844
      %7759 = vmatpush1.bf16.msra.mxu0 %v5843
      %7760 = vmatprep.subr.bf16.mxu0 %v5842
      %7761 = vmatpush1.bf16.msra.mxu0 %v5841
      %7762 = vmatprep.subr.bf16.mxu0 %v5840
      %7763 = vmatpush1.bf16.msra.mxu0 %v5839
      %7764 = vmatprep.subr.bf16.mxu0 0
      %7765 = vmatpush2.bf16.msra.mxu0 0
      %7766 = vmatprep.subr.bf16.mxu0 0
      %7767 = vmatpush2.bf16.msra.mxu0 0
      %7768 = vmatprep.subr.bf16.mxu0 0
      %7769 = vmatpush2.bf16.msra.mxu0 0
      %7770 = vmatprep.subr.bf16.mxu0 0
      %7771 = vmatpush2.bf16.msra.mxu0 0
      %7772 = vmatprep.subr.bf16.mxu0 0
      %7773 = vmatpush2.bf16.msra.mxu0 0
      %7774 = vmatprep.subr.bf16.mxu0 0
      %7775 = vmatpush2.bf16.msra.mxu0 0
      %7776 = vmatprep.subr.bf16.mxu0 0
      %7777 = vmatpush2.bf16.msra.mxu0 0
      %7778 = vmatprep.subr.bf16.mxu0 0
      %7779 = vmatpush2.bf16.msra.mxu0 0
      %7780 = vmatprep.mubr.bf16.mxu0 0
      %7781 = vmatmul.mubr.bf16.gmra.mxu0 %v7286
      %v7782 = vpop.f32.mrf.mxu0
      %v7783 = vadd.f32 %v7590, %v7782
      %v7784 = vpop.f32.mrf.mxu0
      %v7785 = vadd.f32 %v7592, %v7784
      %v7786 = vpop.f32.mrf.mxu0
      %v7787 = vadd.f32 %v7594, %v7786
      %v7788 = vpop.f32.mrf.mxu0
      %v7789 = vadd.f32 %v7596, %v7788
      %7790 = vmatprep.mubr.bf16.mxu0 0
      %7791 = vmatmul.mubr.bf16.gmra.mxu0 %v7291
      %v7792 = vpop.f32.mrf.mxu0
      %v7793 = vadd.f32 %v7600, %v7792
      %v7794 = vpop.f32.mrf.mxu0
      %v7795 = vadd.f32 %v7602, %v7794
      %v7796 = vpop.f32.mrf.mxu0
      %v7797 = vadd.f32 %v7604, %v7796
      %v7798 = vpop.f32.mrf.mxu0
      %v7799 = vadd.f32 %v7606, %v7798
      %7800 = vmatprep.mubr.bf16.mxu0 0
      %7801 = vmatmul.mubr.bf16.gmra.mxu0 %v7296
      %v7802 = vpop.f32.mrf.mxu0
      %v7803 = vadd.f32 %v7610, %v7802
      %v7804 = vpop.f32.mrf.mxu0
      %v7805 = vadd.f32 %v7612, %v7804
      %v7806 = vpop.f32.mrf.mxu0
      %v7807 = vadd.f32 %v7614, %v7806
      %v7808 = vpop.f32.mrf.mxu0
      %v7809 = vadd.f32 %v7616, %v7808
      %7810 = vmatprep.mubr.bf16.mxu0 0
      %7811 = vmatmul.mubr.bf16.gmra.mxu0 %v7301
      %v7812 = vpop.f32.mrf.mxu0
      %v7813 = vadd.f32 %v7620, %v7812
      %v7814 = vpop.f32.mrf.mxu0
      %v7815 = vadd.f32 %v7622, %v7814
      %v7816 = vpop.f32.mrf.mxu0
      %v7817 = vadd.f32 %v7624, %v7816
      %v7818 = vpop.f32.mrf.mxu0
      %v7819 = vadd.f32 %v7626, %v7818
      %7820 = vmatprep.mubr.bf16.mxu0 0
      %7821 = vmatmul.mubr.bf16.gmra.mxu0 %v7306
      %v7822 = vpop.f32.mrf.mxu0
      %v7823 = vadd.f32 %v7630, %v7822
      %v7824 = vpop.f32.mrf.mxu0
      %v7825 = vadd.f32 %v7632, %v7824
      %v7826 = vpop.f32.mrf.mxu0
      %v7827 = vadd.f32 %v7634, %v7826
      %v7828 = vpop.f32.mrf.mxu0
      %v7829 = vadd.f32 %v7636, %v7828
      %7830 = vmatprep.mubr.bf16.mxu0 0
      %7831 = vmatmul.mubr.bf16.gmra.mxu0 %v7311
      %v7832 = vpop.f32.mrf.mxu0
      %v7833 = vadd.f32 %v7640, %v7832
      %v7834 = vpop.f32.mrf.mxu0
      %v7835 = vadd.f32 %v7642, %v7834
      %v7836 = vpop.f32.mrf.mxu0
      %v7837 = vadd.f32 %v7644, %v7836
      %v7838 = vpop.f32.mrf.mxu0
      %v7839 = vadd.f32 %v7646, %v7838
      %7840 = vmatprep.mubr.bf16.mxu0 0
      %7841 = vmatmul.mubr.bf16.gmra.mxu0 %v7316
      %v7842 = vpop.f32.mrf.mxu0
      %v7843 = vadd.f32 %v7650, %v7842
      %v7844 = vpop.f32.mrf.mxu0
      %v7845 = vadd.f32 %v7652, %v7844
      %v7846 = vpop.f32.mrf.mxu0
      %v7847 = vadd.f32 %v7654, %v7846
      %v7848 = vpop.f32.mrf.mxu0
      %v7849 = vadd.f32 %v7656, %v7848
      %7850 = vmatprep.mubr.bf16.mxu0 0
      %7851 = vmatmul.mubr.bf16.gmra.mxu0 %v7321
      %v7852 = vpop.f32.mrf.mxu0
      %v7853 = vadd.f32 %v7660, %v7852
      %v7854 = vpop.f32.mrf.mxu0
      %v7855 = vadd.f32 %v7662, %v7854
      %v7856 = vpop.f32.mrf.mxu0
      %v7857 = vadd.f32 %v7664, %v7856
      %v7858 = vpop.f32.mrf.mxu0
      %v7859 = vadd.f32 %v7666, %v7858
      %7860 = vmatprep.mubr.bf16.mxu0 0
      %7861 = vmatmul.mubr.bf16.gmra.mxu0 %v7326
      %v7862 = vpop.f32.mrf.mxu0
      %v7863 = vadd.f32 %v7670, %v7862
      %v7864 = vpop.f32.mrf.mxu0
      %v7865 = vadd.f32 %v7672, %v7864
      %v7866 = vpop.f32.mrf.mxu0
      %v7867 = vadd.f32 %v7674, %v7866
      %v7868 = vpop.f32.mrf.mxu0
      %v7869 = vadd.f32 %v7676, %v7868
      %7870 = vmatprep.mubr.bf16.mxu0 0
      %7871 = vmatmul.mubr.bf16.gmra.mxu0 %v7331
      %v7872 = vpop.f32.mrf.mxu0
      %v7873 = vadd.f32 %v7680, %v7872
      %v7874 = vpop.f32.mrf.mxu0
      %v7875 = vadd.f32 %v7682, %v7874
      %v7876 = vpop.f32.mrf.mxu0
      %v7877 = vadd.f32 %v7684, %v7876
      %v7878 = vpop.f32.mrf.mxu0
      %v7879 = vadd.f32 %v7686, %v7878
      %7880 = vmatprep.mubr.bf16.mxu0 0
      %7881 = vmatmul.mubr.bf16.gmra.mxu0 %v7336
      %v7882 = vpop.f32.mrf.mxu0
      %v7883 = vadd.f32 %v7690, %v7882
      %v7884 = vpop.f32.mrf.mxu0
      %v7885 = vadd.f32 %v7692, %v7884
      %v7886 = vpop.f32.mrf.mxu0
      %v7887 = vadd.f32 %v7694, %v7886
      %v7888 = vpop.f32.mrf.mxu0
      %v7889 = vadd.f32 %v7696, %v7888
      %7890 = vmatprep.mubr.bf16.mxu0 0
      %7891 = vmatmul.mubr.bf16.gmra.mxu0 %v7341
      %v7892 = vpop.f32.mrf.mxu0
      %v7893 = vadd.f32 %v7700, %v7892
      %v7894 = vpop.f32.mrf.mxu0
      %v7895 = vadd.f32 %v7702, %v7894
      %v7896 = vpop.f32.mrf.mxu0
      %v7897 = vadd.f32 %v7704, %v7896
      %v7898 = vpop.f32.mrf.mxu0
      %v7899 = vadd.f32 %v7706, %v7898
      %7900 = vmatprep.mubr.bf16.mxu0 0
      %7901 = vmatmul.mubr.bf16.gmra.mxu0 %v7346
      %v7902 = vpop.f32.mrf.mxu0
      %v7903 = vadd.f32 %v7710, %v7902
      %v7904 = vpop.f32.mrf.mxu0
      %v7905 = vadd.f32 %v7712, %v7904
      %v7906 = vpop.f32.mrf.mxu0
      %v7907 = vadd.f32 %v7714, %v7906
      %v7908 = vpop.f32.mrf.mxu0
      %v7909 = vadd.f32 %v7716, %v7908
      %7910 = vmatprep.mubr.bf16.mxu0 0
      %7911 = vmatmul.mubr.bf16.gmra.mxu0 %v7351
      %v7912 = vpop.f32.mrf.mxu0
      %v7913 = vadd.f32 %v7720, %v7912
      %v7914 = vpop.f32.mrf.mxu0
      %v7915 = vadd.f32 %v7722, %v7914
      %v7916 = vpop.f32.mrf.mxu0
      %v7917 = vadd.f32 %v7724, %v7916
      %v7918 = vpop.f32.mrf.mxu0
      %v7919 = vadd.f32 %v7726, %v7918
      %7920 = vmatprep.mubr.bf16.mxu0 0
      %7921 = vmatmul.mubr.bf16.gmra.mxu0 %v7356
      %v7922 = vpop.f32.mrf.mxu0
      %v7923 = vadd.f32 %v7730, %v7922
      %v7924 = vpop.f32.mrf.mxu0
      %v7925 = vadd.f32 %v7732, %v7924
      %v7926 = vpop.f32.mrf.mxu0
      %v7927 = vadd.f32 %v7734, %v7926
      %v7928 = vpop.f32.mrf.mxu0
      %v7929 = vadd.f32 %v7736, %v7928
      %7930 = vmatprep.mubr.bf16.mxu0 0
      %7931 = vmatmul.mubr.bf16.gmra.mxu0 %v7361
      %v7932 = vpop.f32.mrf.mxu0
      %v7933 = vadd.f32 %v7740, %v7932
      %v7934 = vpop.f32.mrf.mxu0
      %v7935 = vadd.f32 %v7742, %v7934
      %v7936 = vpop.f32.mrf.mxu0
      %v7937 = vadd.f32 %v7744, %v7936
      %v7938 = vpop.f32.mrf.mxu0
      %v7939 = vadd.f32 %v7746, %v7938
      %7940 = vdwg.mxu0
      %v8005 = vcombine.low %v7783, %v7785
      %v8006 = vcombine.high %v7783, %v7785
      %v8007 = vcombine.low %v7787, %v7789
      %v8008 = vcombine.high %v7787, %v7789
      %v8009 = vcombine.low %v7793, %v7795
      %v8010 = vcombine.high %v7793, %v7795
      %v8011 = vcombine.low %v7797, %v7799
      %v8012 = vcombine.high %v7797, %v7799
      %v8013 = vcombine.low %v7803, %v7805
      %v8014 = vcombine.high %v7803, %v7805
      %v8015 = vcombine.low %v7807, %v7809
      %v8016 = vcombine.high %v7807, %v7809
      %v8017 = vcombine.low %v7813, %v7815
      %v8018 = vcombine.high %v7813, %v7815
      %v8019 = vcombine.low %v7817, %v7819
      %v8020 = vcombine.high %v7817, %v7819
      %v8021 = vcombine.low %v7823, %v7825
      %v8022 = vcombine.high %v7823, %v7825
      %v8023 = vcombine.low %v7827, %v7829
      %v8024 = vcombine.high %v7827, %v7829
      %v8025 = vcombine.low %v7833, %v7835
      %v8026 = vcombine.high %v7833, %v7835
      %v8027 = vcombine.low %v7837, %v7839
      %v8028 = vcombine.high %v7837, %v7839
      %v8029 = vcombine.low %v7843, %v7845
      %v8030 = vcombine.high %v7843, %v7845
      %v8031 = vcombine.low %v7847, %v7849
      %v8032 = vcombine.high %v7847, %v7849
      %v8033 = vcombine.low %v7853, %v7855
      %v8034 = vcombine.high %v7853, %v7855
      %v8035 = vcombine.low %v7857, %v7859
      %v8036 = vcombine.high %v7857, %v7859
      %v8037 = vcombine.low %v7863, %v7865
      %v8038 = vcombine.high %v7863, %v7865
      %v8039 = vcombine.low %v7867, %v7869
      %v8040 = vcombine.high %v7867, %v7869
      %v8041 = vcombine.low %v7873, %v7875
      %v8042 = vcombine.high %v7873, %v7875
      %v8043 = vcombine.low %v7877, %v7879
      %v8044 = vcombine.high %v7877, %v7879
      %v8045 = vcombine.low %v7883, %v7885
      %v8046 = vcombine.high %v7883, %v7885
      %v8047 = vcombine.low %v7887, %v7889
      %v8048 = vcombine.high %v7887, %v7889
      %v8049 = vcombine.low %v7893, %v7895
      %v8050 = vcombine.high %v7893, %v7895
      %v8051 = vcombine.low %v7897, %v7899
      %v8052 = vcombine.high %v7897, %v7899
      %v8053 = vcombine.low %v7903, %v7905
      %v8054 = vcombine.high %v7903, %v7905
      %v8055 = vcombine.low %v7907, %v7909
      %v8056 = vcombine.high %v7907, %v7909
      %v8057 = vcombine.low %v7913, %v7915
      %v8058 = vcombine.high %v7913, %v7915
      %v8059 = vcombine.low %v7917, %v7919
      %v8060 = vcombine.high %v7917, %v7919
      %v8061 = vcombine.low %v7923, %v7925
      %v8062 = vcombine.high %v7923, %v7925
      %v8063 = vcombine.low %v7927, %v7929
      %v8064 = vcombine.high %v7927, %v7929
      %v8065 = vcombine.low %v7933, %v7935
      %v8066 = vcombine.high %v7933, %v7935
      %v8067 = vcombine.low %v7937, %v7939
      %v8068 = vcombine.high %v7937, %v7939
      %v8133 = vrot.slane %v6578, 4
      %v8134 = vrot.slane %v6579, 4
      %v8135 = vrot.slane %v6580, 4
      %v8136 = vrot.slane %v6581, 4
      %v8137 = vrot.slane %v6582, 4
      %v8138 = vrot.slane %v6583, 4
      %v8139 = vrot.slane %v6584, 4
      %v8140 = vrot.slane %v6585, 4
      %v8141 = vrot.slane %v6586, 4
      %v8142 = vrot.slane %v6587, 4
      %v8143 = vrot.slane %v6588, 4
      %v8144 = vrot.slane %v6589, 4
      %v8145 = vrot.slane %v6590, 4
      %v8146 = vrot.slane %v6591, 4
      %v8147 = vrot.slane %v6592, 4
      %v8148 = vrot.slane %v6593, 4
      %v8149 = vrot.slane %v6594, 4
      %v8150 = vrot.slane %v6595, 4
      %v8151 = vrot.slane %v6596, 4
      %v8152 = vrot.slane %v6597, 4
      %v8153 = vrot.slane %v6598, 4
      %v8154 = vrot.slane %v6599, 4
      %v8155 = vrot.slane %v6600, 4
      %v8156 = vrot.slane %v6601, 4
      %v8157 = vrot.slane %v6602, 4
      %v8158 = vrot.slane %v6603, 4
      %v8159 = vrot.slane %v6604, 4
      %v8160 = vrot.slane %v6605, 4
      %v8161 = vrot.slane %v6606, 4
      %v8162 = vrot.slane %v6607, 4
      %v8163 = vrot.slane %v6608, 4
      %v8164 = vrot.slane %v6609, 4
      %v8165 = vrot.slane %v6610, 4
      %v8166 = vrot.slane %v6611, 4
      %v8167 = vrot.slane %v6612, 4
      %v8168 = vrot.slane %v6613, 4
      %v8169 = vrot.slane %v6614, 4
      %v8170 = vrot.slane %v6615, 4
      %v8171 = vrot.slane %v6616, 4
      %v8172 = vrot.slane %v6617, 4
      %v8173 = vrot.slane %v6618, 4
      %v8174 = vrot.slane %v6619, 4
      %v8175 = vrot.slane %v6620, 4
      %v8176 = vrot.slane %v6621, 4
      %v8177 = vrot.slane %v6622, 4
      %v8178 = vrot.slane %v6623, 4
      %v8179 = vrot.slane %v6624, 4
      %v8180 = vrot.slane %v6625, 4
      %v8181 = vrot.slane %v6626, 4
      %v8182 = vrot.slane %v6627, 4
      %v8183 = vrot.slane %v6628, 4
      %v8184 = vrot.slane %v6629, 4
      %v8185 = vrot.slane %v6630, 4
      %v8186 = vrot.slane %v6631, 4
      %v8187 = vrot.slane %v6632, 4
      %v8188 = vrot.slane %v6633, 4
      %v8189 = vrot.slane %v6634, 4
      %v8190 = vrot.slane %v6635, 4
      %v8191 = vrot.slane %v6636, 4
      %v8192 = vrot.slane %v6637, 4
      %v8193 = vrot.slane %v6638, 4
      %v8194 = vrot.slane %v6639, 4
      %v8195 = vrot.slane %v6640, 4
      %v8196 = vrot.slane %v6641, 4
      %v8261 = vmax.f32 %v6578, %v8133
      %v8262 = vmax.f32 %v6579, %v8134
      %v8263 = vmax.f32 %v6580, %v8135
      %v8264 = vmax.f32 %v6581, %v8136
      %v8265 = vmax.f32 %v6582, %v8137
      %v8266 = vmax.f32 %v6583, %v8138
      %v8267 = vmax.f32 %v6584, %v8139
      %v8268 = vmax.f32 %v6585, %v8140
      %v8269 = vmax.f32 %v6586, %v8141
      %v8270 = vmax.f32 %v6587, %v8142
      %v8271 = vmax.f32 %v6588, %v8143
      %v8272 = vmax.f32 %v6589, %v8144
      %v8273 = vmax.f32 %v6590, %v8145
      %v8274 = vmax.f32 %v6591, %v8146
      %v8275 = vmax.f32 %v6592, %v8147
      %v8276 = vmax.f32 %v6593, %v8148
      %v8277 = vmax.f32 %v6594, %v8149
      %v8278 = vmax.f32 %v6595, %v8150
      %v8279 = vmax.f32 %v6596, %v8151
      %v8280 = vmax.f32 %v6597, %v8152
      %v8281 = vmax.f32 %v6598, %v8153
      %v8282 = vmax.f32 %v6599, %v8154
      %v8283 = vmax.f32 %v6600, %v8155
      %v8284 = vmax.f32 %v6601, %v8156
      %v8285 = vmax.f32 %v6602, %v8157
      %v8286 = vmax.f32 %v6603, %v8158
      %v8287 = vmax.f32 %v6604, %v8159
      %v8288 = vmax.f32 %v6605, %v8160
      %v8289 = vmax.f32 %v6606, %v8161
      %v8290 = vmax.f32 %v6607, %v8162
      %v8291 = vmax.f32 %v6608, %v8163
      %v8292 = vmax.f32 %v6609, %v8164
      %v8293 = vmax.f32 %v6610, %v8165
      %v8294 = vmax.f32 %v6611, %v8166
      %v8295 = vmax.f32 %v6612, %v8167
      %v8296 = vmax.f32 %v6613, %v8168
      %v8297 = vmax.f32 %v6614, %v8169
      %v8298 = vmax.f32 %v6615, %v8170
      %v8299 = vmax.f32 %v6616, %v8171
      %v8300 = vmax.f32 %v6617, %v8172
      %v8301 = vmax.f32 %v6618, %v8173
      %v8302 = vmax.f32 %v6619, %v8174
      %v8303 = vmax.f32 %v6620, %v8175
      %v8304 = vmax.f32 %v6621, %v8176
      %v8305 = vmax.f32 %v6622, %v8177
      %v8306 = vmax.f32 %v6623, %v8178
      %v8307 = vmax.f32 %v6624, %v8179
      %v8308 = vmax.f32 %v6625, %v8180
      %v8309 = vmax.f32 %v6626, %v8181
      %v8310 = vmax.f32 %v6627, %v8182
      %v8311 = vmax.f32 %v6628, %v8183
      %v8312 = vmax.f32 %v6629, %v8184
      %v8313 = vmax.f32 %v6630, %v8185
      %v8314 = vmax.f32 %v6631, %v8186
      %v8315 = vmax.f32 %v6632, %v8187
      %v8316 = vmax.f32 %v6633, %v8188
      %v8317 = vmax.f32 %v6634, %v8189
      %v8318 = vmax.f32 %v6635, %v8190
      %v8319 = vmax.f32 %v6636, %v8191
      %v8320 = vmax.f32 %v6637, %v8192
      %v8321 = vmax.f32 %v6638, %v8193
      %v8322 = vmax.f32 %v6639, %v8194
      %v8323 = vmax.f32 %v6640, %v8195
      %v8324 = vmax.f32 %v6641, %v8196
      %v8325 = vrot.slane %v8005, 4
      %v8326 = vrot.slane %v8006, 4
      %v8327 = vrot.slane %v8007, 4
      %v8328 = vrot.slane %v8008, 4
      %v8329 = vrot.slane %v8009, 4
      %v8330 = vrot.slane %v8010, 4
      %v8331 = vrot.slane %v8011, 4
      %v8332 = vrot.slane %v8012, 4
      %v8333 = vrot.slane %v8013, 4
      %v8334 = vrot.slane %v8014, 4
      %v8335 = vrot.slane %v8015, 4
      %v8336 = vrot.slane %v8016, 4
      %v8337 = vrot.slane %v8017, 4
      %v8338 = vrot.slane %v8018, 4
      %v8339 = vrot.slane %v8019, 4
      %v8340 = vrot.slane %v8020, 4
      %v8341 = vrot.slane %v8021, 4
      %v8342 = vrot.slane %v8022, 4
      %v8343 = vrot.slane %v8023, 4
      %v8344 = vrot.slane %v8024, 4
      %v8345 = vrot.slane %v8025, 4
      %v8346 = vrot.slane %v8026, 4
      %v8347 = vrot.slane %v8027, 4
      %v8348 = vrot.slane %v8028, 4
      %v8349 = vrot.slane %v8029, 4
      %v8350 = vrot.slane %v8030, 4
      %v8351 = vrot.slane %v8031, 4
      %v8352 = vrot.slane %v8032, 4
      %v8353 = vrot.slane %v8033, 4
      %v8354 = vrot.slane %v8034, 4
      %v8355 = vrot.slane %v8035, 4
      %v8356 = vrot.slane %v8036, 4
      %v8357 = vrot.slane %v8037, 4
      %v8358 = vrot.slane %v8038, 4
      %v8359 = vrot.slane %v8039, 4
      %v8360 = vrot.slane %v8040, 4
      %v8361 = vrot.slane %v8041, 4
      %v8362 = vrot.slane %v8042, 4
      %v8363 = vrot.slane %v8043, 4
      %v8364 = vrot.slane %v8044, 4
      %v8365 = vrot.slane %v8045, 4
      %v8366 = vrot.slane %v8046, 4
      %v8367 = vrot.slane %v8047, 4
      %v8368 = vrot.slane %v8048, 4
      %v8369 = vrot.slane %v8049, 4
      %v8370 = vrot.slane %v8050, 4
      %v8371 = vrot.slane %v8051, 4
      %v8372 = vrot.slane %v8052, 4
      %v8373 = vrot.slane %v8053, 4
      %v8374 = vrot.slane %v8054, 4
      %v8375 = vrot.slane %v8055, 4
      %v8376 = vrot.slane %v8056, 4
      %v8377 = vrot.slane %v8057, 4
      %v8378 = vrot.slane %v8058, 4
      %v8379 = vrot.slane %v8059, 4
      %v8380 = vrot.slane %v8060, 4
      %v8381 = vrot.slane %v8061, 4
      %v8382 = vrot.slane %v8062, 4
      %v8383 = vrot.slane %v8063, 4
      %v8384 = vrot.slane %v8064, 4
      %v8385 = vrot.slane %v8065, 4
      %v8386 = vrot.slane %v8066, 4
      %v8387 = vrot.slane %v8067, 4
      %v8388 = vrot.slane %v8068, 4
      %v8453 = vmax.f32 %v8005, %v8325
      %v8454 = vmax.f32 %v8006, %v8326
      %v8455 = vmax.f32 %v8007, %v8327
      %v8456 = vmax.f32 %v8008, %v8328
      %v8457 = vmax.f32 %v8009, %v8329
      %v8458 = vmax.f32 %v8010, %v8330
      %v8459 = vmax.f32 %v8011, %v8331
      %v8460 = vmax.f32 %v8012, %v8332
      %v8461 = vmax.f32 %v8013, %v8333
      %v8462 = vmax.f32 %v8014, %v8334
      %v8463 = vmax.f32 %v8015, %v8335
      %v8464 = vmax.f32 %v8016, %v8336
      %v8465 = vmax.f32 %v8017, %v8337
      %v8466 = vmax.f32 %v8018, %v8338
      %v8467 = vmax.f32 %v8019, %v8339
      %v8468 = vmax.f32 %v8020, %v8340
      %v8469 = vmax.f32 %v8021, %v8341
      %v8470 = vmax.f32 %v8022, %v8342
      %v8471 = vmax.f32 %v8023, %v8343
      %v8472 = vmax.f32 %v8024, %v8344
      %v8473 = vmax.f32 %v8025, %v8345
      %v8474 = vmax.f32 %v8026, %v8346
      %v8475 = vmax.f32 %v8027, %v8347
      %v8476 = vmax.f32 %v8028, %v8348
      %v8477 = vmax.f32 %v8029, %v8349
      %v8478 = vmax.f32 %v8030, %v8350
      %v8479 = vmax.f32 %v8031, %v8351
      %v8480 = vmax.f32 %v8032, %v8352
      %v8481 = vmax.f32 %v8033, %v8353
      %v8482 = vmax.f32 %v8034, %v8354
      %v8483 = vmax.f32 %v8035, %v8355
      %v8484 = vmax.f32 %v8036, %v8356
      %v8485 = vmax.f32 %v8037, %v8357
      %v8486 = vmax.f32 %v8038, %v8358
      %v8487 = vmax.f32 %v8039, %v8359
      %v8488 = vmax.f32 %v8040, %v8360
      %v8489 = vmax.f32 %v8041, %v8361
      %v8490 = vmax.f32 %v8042, %v8362
      %v8491 = vmax.f32 %v8043, %v8363
      %v8492 = vmax.f32 %v8044, %v8364
      %v8493 = vmax.f32 %v8045, %v8365
      %v8494 = vmax.f32 %v8046, %v8366
      %v8495 = vmax.f32 %v8047, %v8367
      %v8496 = vmax.f32 %v8048, %v8368
      %v8497 = vmax.f32 %v8049, %v8369
      %v8498 = vmax.f32 %v8050, %v8370
      %v8499 = vmax.f32 %v8051, %v8371
      %v8500 = vmax.f32 %v8052, %v8372
      %v8501 = vmax.f32 %v8053, %v8373
      %v8502 = vmax.f32 %v8054, %v8374
      %v8503 = vmax.f32 %v8055, %v8375
      %v8504 = vmax.f32 %v8056, %v8376
      %v8505 = vmax.f32 %v8057, %v8377
      %v8506 = vmax.f32 %v8058, %v8378
      %v8507 = vmax.f32 %v8059, %v8379
      %v8508 = vmax.f32 %v8060, %v8380
      %v8509 = vmax.f32 %v8061, %v8381
      %v8510 = vmax.f32 %v8062, %v8382
      %v8511 = vmax.f32 %v8063, %v8383
      %v8512 = vmax.f32 %v8064, %v8384
      %v8513 = vmax.f32 %v8065, %v8385
      %v8514 = vmax.f32 %v8066, %v8386
      %v8515 = vmax.f32 %v8067, %v8387
      %v8516 = vmax.f32 %v8068, %v8388
      %v8517 = vmax.f32 %v8261, %v8453
      %v8518 = vmax.f32 %v8262, %v8454
      %v8519 = vmax.f32 %v8263, %v8455
      %v8520 = vmax.f32 %v8264, %v8456
      %v8521 = vmax.f32 %v8265, %v8457
      %v8522 = vmax.f32 %v8266, %v8458
      %v8523 = vmax.f32 %v8267, %v8459
      %v8524 = vmax.f32 %v8268, %v8460
      %v8525 = vmax.f32 %v8269, %v8461
      %v8526 = vmax.f32 %v8270, %v8462
      %v8527 = vmax.f32 %v8271, %v8463
      %v8528 = vmax.f32 %v8272, %v8464
      %v8529 = vmax.f32 %v8273, %v8465
      %v8530 = vmax.f32 %v8274, %v8466
      %v8531 = vmax.f32 %v8275, %v8467
      %v8532 = vmax.f32 %v8276, %v8468
      %v8533 = vmax.f32 %v8277, %v8469
      %v8534 = vmax.f32 %v8278, %v8470
      %v8535 = vmax.f32 %v8279, %v8471
      %v8536 = vmax.f32 %v8280, %v8472
      %v8537 = vmax.f32 %v8281, %v8473
      %v8538 = vmax.f32 %v8282, %v8474
      %v8539 = vmax.f32 %v8283, %v8475
      %v8540 = vmax.f32 %v8284, %v8476
      %v8541 = vmax.f32 %v8285, %v8477
      %v8542 = vmax.f32 %v8286, %v8478
      %v8543 = vmax.f32 %v8287, %v8479
      %v8544 = vmax.f32 %v8288, %v8480
      %v8545 = vmax.f32 %v8289, %v8481
      %v8546 = vmax.f32 %v8290, %v8482
      %v8547 = vmax.f32 %v8291, %v8483
      %v8548 = vmax.f32 %v8292, %v8484
      %v8549 = vmax.f32 %v8293, %v8485
      %v8550 = vmax.f32 %v8294, %v8486
      %v8551 = vmax.f32 %v8295, %v8487
      %v8552 = vmax.f32 %v8296, %v8488
      %v8553 = vmax.f32 %v8297, %v8489
      %v8554 = vmax.f32 %v8298, %v8490
      %v8555 = vmax.f32 %v8299, %v8491
      %v8556 = vmax.f32 %v8300, %v8492
      %v8557 = vmax.f32 %v8301, %v8493
      %v8558 = vmax.f32 %v8302, %v8494
      %v8559 = vmax.f32 %v8303, %v8495
      %v8560 = vmax.f32 %v8304, %v8496
      %v8561 = vmax.f32 %v8305, %v8497
      %v8562 = vmax.f32 %v8306, %v8498
      %v8563 = vmax.f32 %v8307, %v8499
      %v8564 = vmax.f32 %v8308, %v8500
      %v8565 = vmax.f32 %v8309, %v8501
      %v8566 = vmax.f32 %v8310, %v8502
      %v8567 = vmax.f32 %v8311, %v8503
      %v8568 = vmax.f32 %v8312, %v8504
      %v8569 = vmax.f32 %v8313, %v8505
      %v8570 = vmax.f32 %v8314, %v8506
      %v8571 = vmax.f32 %v8315, %v8507
      %v8572 = vmax.f32 %v8316, %v8508
      %v8573 = vmax.f32 %v8317, %v8509
      %v8574 = vmax.f32 %v8318, %v8510
      %v8575 = vmax.f32 %v8319, %v8511
      %v8576 = vmax.f32 %v8320, %v8512
      %v8577 = vmax.f32 %v8321, %v8513
      %v8578 = vmax.f32 %v8322, %v8514
      %v8579 = vmax.f32 %v8323, %v8515
      %v8580 = vmax.f32 %v8324, %v8516
      %v8581 = vld [vmem:[%s4] sm:$0x1]
      %v8583 = vlaneseq
      %v8584 = vshrl.u32 %v8583, 7
      %v8585 = vsub.s32 0, %v8584
      %v8586 = vrot.slane %v8581, %v8585
      %v8588 = vadd.f32 %v8517, %v8586
      %v8589 = vadd.f32 %v8518, %v8586
      %v8590 = vadd.f32 %v8519, %v8586
      %v8591 = vadd.f32 %v8520, %v8586
      %v8592 = vadd.f32 %v8521, %v8586
      %v8593 = vadd.f32 %v8522, %v8586
      %v8594 = vadd.f32 %v8523, %v8586
      %v8595 = vadd.f32 %v8524, %v8586
      %v8596 = vadd.f32 %v8525, %v8586
      %v8597 = vadd.f32 %v8526, %v8586
      %v8598 = vadd.f32 %v8527, %v8586
      %v8599 = vadd.f32 %v8528, %v8586
      %v8600 = vadd.f32 %v8529, %v8586
      %v8601 = vadd.f32 %v8530, %v8586
      %v8602 = vadd.f32 %v8531, %v8586
      %v8603 = vadd.f32 %v8532, %v8586
      %v8604 = vadd.f32 %v8533, %v8586
      %v8605 = vadd.f32 %v8534, %v8586
      %v8606 = vadd.f32 %v8535, %v8586
      %v8607 = vadd.f32 %v8536, %v8586
      %v8608 = vadd.f32 %v8537, %v8586
      %v8609 = vadd.f32 %v8538, %v8586
      %v8610 = vadd.f32 %v8539, %v8586
      %v8611 = vadd.f32 %v8540, %v8586
      %v8612 = vadd.f32 %v8541, %v8586
      %v8613 = vadd.f32 %v8542, %v8586
      %v8614 = vadd.f32 %v8543, %v8586
      %v8615 = vadd.f32 %v8544, %v8586
      %v8616 = vadd.f32 %v8545, %v8586
      %v8617 = vadd.f32 %v8546, %v8586
      %v8618 = vadd.f32 %v8547, %v8586
      %v8619 = vadd.f32 %v8548, %v8586
      %v8620 = vadd.f32 %v8549, %v8586
      %v8621 = vadd.f32 %v8550, %v8586
      %v8622 = vadd.f32 %v8551, %v8586
      %v8623 = vadd.f32 %v8552, %v8586
      %v8624 = vadd.f32 %v8553, %v8586
      %v8625 = vadd.f32 %v8554, %v8586
      %v8626 = vadd.f32 %v8555, %v8586
      %v8627 = vadd.f32 %v8556, %v8586
      %v8628 = vadd.f32 %v8557, %v8586
      %v8629 = vadd.f32 %v8558, %v8586
      %v8630 = vadd.f32 %v8559, %v8586
      %v8631 = vadd.f32 %v8560, %v8586
      %v8632 = vadd.f32 %v8561, %v8586
      %v8633 = vadd.f32 %v8562, %v8586
      %v8634 = vadd.f32 %v8563, %v8586
      %v8635 = vadd.f32 %v8564, %v8586
      %v8636 = vadd.f32 %v8565, %v8586
      %v8637 = vadd.f32 %v8566, %v8586
      %v8638 = vadd.f32 %v8567, %v8586
      %v8639 = vadd.f32 %v8568, %v8586
      %v8640 = vadd.f32 %v8569, %v8586
      %v8641 = vadd.f32 %v8570, %v8586
      %v8642 = vadd.f32 %v8571, %v8586
      %v8643 = vadd.f32 %v8572, %v8586
      %v8644 = vadd.f32 %v8573, %v8586
      %v8645 = vadd.f32 %v8574, %v8586
      %v8646 = vadd.f32 %v8575, %v8586
      %v8647 = vadd.f32 %v8576, %v8586
      %v8648 = vadd.f32 %v8577, %v8586
      %v8649 = vadd.f32 %v8578, %v8586
      %v8650 = vadd.f32 %v8579, %v8586
      %v8651 = vadd.f32 %v8580, %v8586
      %v8652 = vmax.f32 %v8588, 0.0
      %v8653 = vmax.f32 %v8589, 0.0
      %v8654 = vmax.f32 %v8590, 0.0
      %v8655 = vmax.f32 %v8591, 0.0
      %v8656 = vmax.f32 %v8592, 0.0
      %v8657 = vmax.f32 %v8593, 0.0
      %v8658 = vmax.f32 %v8594, 0.0
      %v8659 = vmax.f32 %v8595, 0.0
      %v8660 = vmax.f32 %v8596, 0.0
      %v8661 = vmax.f32 %v8597, 0.0
      %v8662 = vmax.f32 %v8598, 0.0
      %v8663 = vmax.f32 %v8599, 0.0
      %v8664 = vmax.f32 %v8600, 0.0
      %v8665 = vmax.f32 %v8601, 0.0
      %v8666 = vmax.f32 %v8602, 0.0
      %v8667 = vmax.f32 %v8603, 0.0
      %v8668 = vmax.f32 %v8604, 0.0
      %v8669 = vmax.f32 %v8605, 0.0
      %v8670 = vmax.f32 %v8606, 0.0
      %v8671 = vmax.f32 %v8607, 0.0
      %v8672 = vmax.f32 %v8608, 0.0
      %v8673 = vmax.f32 %v8609, 0.0
      %v8674 = vmax.f32 %v8610, 0.0
      %v8675 = vmax.f32 %v8611, 0.0
      %v8676 = vmax.f32 %v8612, 0.0
      %v8677 = vmax.f32 %v8613, 0.0
      %v8678 = vmax.f32 %v8614, 0.0
      %v8679 = vmax.f32 %v8615, 0.0
      %v8680 = vmax.f32 %v8616, 0.0
      %v8681 = vmax.f32 %v8617, 0.0
      %v8682 = vmax.f32 %v8618, 0.0
      %v8683 = vmax.f32 %v8619, 0.0
      %v8684 = vmax.f32 %v8620, 0.0
      %v8685 = vmax.f32 %v8621, 0.0
      %v8686 = vmax.f32 %v8622, 0.0
      %v8687 = vmax.f32 %v8623, 0.0
      %v8688 = vmax.f32 %v8624, 0.0
      %v8689 = vmax.f32 %v8625, 0.0
      %v8690 = vmax.f32 %v8626, 0.0
      %v8691 = vmax.f32 %v8627, 0.0
      %v8692 = vmax.f32 %v8628, 0.0
      %v8693 = vmax.f32 %v8629, 0.0
      %v8694 = vmax.f32 %v8630, 0.0
      %v8695 = vmax.f32 %v8631, 0.0
      %v8696 = vmax.f32 %v8632, 0.0
      %v8697 = vmax.f32 %v8633, 0.0
      %v8698 = vmax.f32 %v8634, 0.0
      %v8699 = vmax.f32 %v8635, 0.0
      %v8700 = vmax.f32 %v8636, 0.0
      %v8701 = vmax.f32 %v8637, 0.0
      %v8702 = vmax.f32 %v8638, 0.0
      %v8703 = vmax.f32 %v8639, 0.0
      %v8704 = vmax.f32 %v8640, 0.0
      %v8705 = vmax.f32 %v8641, 0.0
      %v8706 = vmax.f32 %v8642, 0.0
      %v8707 = vmax.f32 %v8643, 0.0
      %v8708 = vmax.f32 %v8644, 0.0
      %v8709 = vmax.f32 %v8645, 0.0
      %v8710 = vmax.f32 %v8646, 0.0
      %v8711 = vmax.f32 %v8647, 0.0
      %v8712 = vmax.f32 %v8648, 0.0
      %v8713 = vmax.f32 %v8649, 0.0
      %v8714 = vmax.f32 %v8650, 0.0
      %v8715 = vmax.f32 %v8651, 0.0
      %v8716 = vcombine.low %v8652, %v8654
      %v8718 = vunpack.c.l.s4 1983009808
      %v8719 = vunpack.c.0.s8 %v8718
      %v8720 = vlaneseq
      %v8721 = vshrl.u32 %v8720, 7
      %v8722 = vsub.s32 %v8719, %v8721
      %v8723 = vrot.slane %v8716, %v8722
      %v8724 = vcombine.low %v8653, %v8655
      %v8726 = vunpack.c.l.s4 1983009808
      %v8727 = vunpack.c.0.s8 %v8726
      %v8728 = vlaneseq
      %v8729 = vshrl.u32 %v8728, 7
      %v8730 = vsub.s32 %v8727, %v8729
      %v8731 = vrot.slane %v8724, %v8730
      %v8732 = vcombine.low %v8723, %v8731
      %v8733 = vcombine.high %v8723, %v8731
      %v8735 = vunpack.c.l.s4 1934713408
      %v8736 = vunpack.c.0.s8 %v8735
      %v8737 = vlaneseq
      %v8738 = vshrl.u32 %v8737, 7
      %v8739 = vsub.s32 %v8736, %v8738
      %v8740 = vrot.slane %v8732, %v8739
      %v8742 = vunpack.c.l.s4 1934713408
      %v8743 = vunpack.c.0.s8 %v8742
      %v8744 = vlaneseq
      %v8745 = vshrl.u32 %v8744, 7
      %v8746 = vsub.s32 %v8743, %v8745
      %v8747 = vrot.slane %v8733, %v8746
      %v8748 = vcombine.high %v8740, 0.0
      %v8749 = vcombine.high %v8747, 0.0
      %v8750 = vcombine.low %v8656, %v8658
      %v8752 = vunpack.c.l.s4 1983009808
      %v8753 = vunpack.c.0.s8 %v8752
      %v8754 = vlaneseq
      %v8755 = vshrl.u32 %v8754, 7
      %v8756 = vsub.s32 %v8753, %v8755
      %v8757 = vrot.slane %v8750, %v8756
      %v8758 = vcombine.low %v8657, %v8659
      %v8760 = vunpack.c.l.s4 1983009808
      %v8761 = vunpack.c.0.s8 %v8760
      %v8762 = vlaneseq
      %v8763 = vshrl.u32 %v8762, 7
      %v8764 = vsub.s32 %v8761, %v8763
      %v8765 = vrot.slane %v8758, %v8764
      %v8766 = vcombine.low %v8757, %v8765
      %v8767 = vcombine.high %v8757, %v8765
      %v8769 = vunpack.c.l.s4 1934713408
      %v8770 = vunpack.c.0.s8 %v8769
      %v8771 = vlaneseq
      %v8772 = vshrl.u32 %v8771, 7
      %v8773 = vsub.s32 %v8770, %v8772
      %v8774 = vrot.slane %v8766, %v8773
      %v8776 = vunpack.c.l.s4 1934713408
      %v8777 = vunpack.c.0.s8 %v8776
      %v8778 = vlaneseq
      %v8779 = vshrl.u32 %v8778, 7
      %v8780 = vsub.s32 %v8777, %v8779
      %v8781 = vrot.slane %v8767, %v8780
      %v8782 = vcombine.high %v8774, 0.0
      %v8783 = vcombine.high %v8781, 0.0
      %v8784 = vcombine.low %v8660, %v8662
      %v8786 = vunpack.c.l.s4 1983009808
      %v8787 = vunpack.c.0.s8 %v8786
      %v8788 = vlaneseq
      %v8789 = vshrl.u32 %v8788, 7
      %v8790 = vsub.s32 %v8787, %v8789
      %v8791 = vrot.slane %v8784, %v8790
      %v8792 = vcombine.low %v8661, %v8663
      %v8794 = vunpack.c.l.s4 1983009808
      %v8795 = vunpack.c.0.s8 %v8794
      %v8796 = vlaneseq
      %v8797 = vshrl.u32 %v8796, 7
      %v8798 = vsub.s32 %v8795, %v8797
      %v8799 = vrot.slane %v8792, %v8798
      %v8800 = vcombine.low %v8791, %v8799
      %v8801 = vcombine.high %v8791, %v8799
      %v8803 = vunpack.c.l.s4 1934713408
      %v8804 = vunpack.c.0.s8 %v8803
      %v8805 = vlaneseq
      %v8806 = vshrl.u32 %v8805, 7
      %v8807 = vsub.s32 %v8804, %v8806
      %v8808 = vrot.slane %v8800, %v8807
      %v8810 = vunpack.c.l.s4 1934713408
      %v8811 = vunpack.c.0.s8 %v8810
      %v8812 = vlaneseq
      %v8813 = vshrl.u32 %v8812, 7
      %v8814 = vsub.s32 %v8811, %v8813
      %v8815 = vrot.slane %v8801, %v8814
      %v8816 = vcombine.high %v8808, 0.0
      %v8817 = vcombine.high %v8815, 0.0
      %v8818 = vcombine.low %v8664, %v8666
      %v8820 = vunpack.c.l.s4 1983009808
      %v8821 = vunpack.c.0.s8 %v8820
      %v8822 = vlaneseq
      %v8823 = vshrl.u32 %v8822, 7
      %v8824 = vsub.s32 %v8821, %v8823
      %v8825 = vrot.slane %v8818, %v8824
      %v8826 = vcombine.low %v8665, %v8667
      %v8828 = vunpack.c.l.s4 1983009808
      %v8829 = vunpack.c.0.s8 %v8828
      %v8830 = vlaneseq
      %v8831 = vshrl.u32 %v8830, 7
      %v8832 = vsub.s32 %v8829, %v8831
      %v8833 = vrot.slane %v8826, %v8832
      %v8834 = vcombine.low %v8825, %v8833
      %v8835 = vcombine.high %v8825, %v8833
      %v8837 = vunpack.c.l.s4 1934713408
      %v8838 = vunpack.c.0.s8 %v8837
      %v8839 = vlaneseq
      %v8840 = vshrl.u32 %v8839, 7
      %v8841 = vsub.s32 %v8838, %v8840
      %v8842 = vrot.slane %v8834, %v8841
      %v8844 = vunpack.c.l.s4 1934713408
      %v8845 = vunpack.c.0.s8 %v8844
      %v8846 = vlaneseq
      %v8847 = vshrl.u32 %v8846, 7
      %v8848 = vsub.s32 %v8845, %v8847
      %v8849 = vrot.slane %v8835, %v8848
      %v8850 = vcombine.high %v8842, 0.0
      %v8851 = vcombine.high %v8849, 0.0
      %v8852 = vcombine.low %v8668, %v8670
      %v8854 = vunpack.c.l.s4 1983009808
      %v8855 = vunpack.c.0.s8 %v8854
      %v8856 = vlaneseq
      %v8857 = vshrl.u32 %v8856, 7
      %v8858 = vsub.s32 %v8855, %v8857
      %v8859 = vrot.slane %v8852, %v8858
      %v8860 = vcombine.low %v8669, %v8671
      %v8862 = vunpack.c.l.s4 1983009808
      %v8863 = vunpack.c.0.s8 %v8862
      %v8864 = vlaneseq
      %v8865 = vshrl.u32 %v8864, 7
      %v8866 = vsub.s32 %v8863, %v8865
      %v8867 = vrot.slane %v8860, %v8866
      %v8868 = vcombine.low %v8859, %v8867
      %v8869 = vcombine.high %v8859, %v8867
      %v8871 = vunpack.c.l.s4 1934713408
      %v8872 = vunpack.c.0.s8 %v8871
      %v8873 = vlaneseq
      %v8874 = vshrl.u32 %v8873, 7
      %v8875 = vsub.s32 %v8872, %v8874
      %v8876 = vrot.slane %v8868, %v8875
      %v8878 = vunpack.c.l.s4 1934713408
      %v8879 = vunpack.c.0.s8 %v8878
      %v8880 = vlaneseq
      %v8881 = vshrl.u32 %v8880, 7
      %v8882 = vsub.s32 %v8879, %v8881
      %v8883 = vrot.slane %v8869, %v8882
      %v8884 = vcombine.high %v8876, 0.0
      %v8885 = vcombine.high %v8883, 0.0
      %v8886 = vcombine.low %v8672, %v8674
      %v8888 = vunpack.c.l.s4 1983009808
      %v8889 = vunpack.c.0.s8 %v8888
      %v8890 = vlaneseq
      %v8891 = vshrl.u32 %v8890, 7
      %v8892 = vsub.s32 %v8889, %v8891
      %v8893 = vrot.slane %v8886, %v8892
      %v8894 = vcombine.low %v8673, %v8675
      %v8896 = vunpack.c.l.s4 1983009808
      %v8897 = vunpack.c.0.s8 %v8896
      %v8898 = vlaneseq
      %v8899 = vshrl.u32 %v8898, 7
      %v8900 = vsub.s32 %v8897, %v8899
      %v8901 = vrot.slane %v8894, %v8900
      %v8902 = vcombine.low %v8893, %v8901
      %v8903 = vcombine.high %v8893, %v8901
      %v8905 = vunpack.c.l.s4 1934713408
      %v8906 = vunpack.c.0.s8 %v8905
      %v8907 = vlaneseq
      %v8908 = vshrl.u32 %v8907, 7
      %v8909 = vsub.s32 %v8906, %v8908
      %v8910 = vrot.slane %v8902, %v8909
      %v8912 = vunpack.c.l.s4 1934713408
      %v8913 = vunpack.c.0.s8 %v8912
      %v8914 = vlaneseq
      %v8915 = vshrl.u32 %v8914, 7
      %v8916 = vsub.s32 %v8913, %v8915
      %v8917 = vrot.slane %v8903, %v8916
      %v8918 = vcombine.high %v8910, 0.0
      %v8919 = vcombine.high %v8917, 0.0
      %v8920 = vcombine.low %v8676, %v8678
      %v8922 = vunpack.c.l.s4 1983009808
      %v8923 = vunpack.c.0.s8 %v8922
      %v8924 = vlaneseq
      %v8925 = vshrl.u32 %v8924, 7
      %v8926 = vsub.s32 %v8923, %v8925
      %v8927 = vrot.slane %v8920, %v8926
      %v8928 = vcombine.low %v8677, %v8679
      %v8930 = vunpack.c.l.s4 1983009808
      %v8931 = vunpack.c.0.s8 %v8930
      %v8932 = vlaneseq
      %v8933 = vshrl.u32 %v8932, 7
      %v8934 = vsub.s32 %v8931, %v8933
      %v8935 = vrot.slane %v8928, %v8934
      %v8936 = vcombine.low %v8927, %v8935
      %v8937 = vcombine.high %v8927, %v8935
      %v8939 = vunpack.c.l.s4 1934713408
      %v8940 = vunpack.c.0.s8 %v8939
      %v8941 = vlaneseq
      %v8942 = vshrl.u32 %v8941, 7
      %v8943 = vsub.s32 %v8940, %v8942
      %v8944 = vrot.slane %v8936, %v8943
      %v8946 = vunpack.c.l.s4 1934713408
      %v8947 = vunpack.c.0.s8 %v8946
      %v8948 = vlaneseq
      %v8949 = vshrl.u32 %v8948, 7
      %v8950 = vsub.s32 %v8947, %v8949
      %v8951 = vrot.slane %v8937, %v8950
      %v8952 = vcombine.high %v8944, 0.0
      %v8953 = vcombine.high %v8951, 0.0
      %v8954 = vcombine.low %v8680, %v8682
      %v8956 = vunpack.c.l.s4 1983009808
      %v8957 = vunpack.c.0.s8 %v8956
      %v8958 = vlaneseq
      %v8959 = vshrl.u32 %v8958, 7
      %v8960 = vsub.s32 %v8957, %v8959
      %v8961 = vrot.slane %v8954, %v8960
      %v8962 = vcombine.low %v8681, %v8683
      %v8964 = vunpack.c.l.s4 1983009808
      %v8965 = vunpack.c.0.s8 %v8964
      %v8966 = vlaneseq
      %v8967 = vshrl.u32 %v8966, 7
      %v8968 = vsub.s32 %v8965, %v8967
      %v8969 = vrot.slane %v8962, %v8968
      %v8970 = vcombine.low %v8961, %v8969
      %v8971 = vcombine.high %v8961, %v8969
      %v8973 = vunpack.c.l.s4 1934713408
      %v8974 = vunpack.c.0.s8 %v8973
      %v8975 = vlaneseq
      %v8976 = vshrl.u32 %v8975, 7
      %v8977 = vsub.s32 %v8974, %v8976
      %v8978 = vrot.slane %v8970, %v8977
      %v8980 = vunpack.c.l.s4 1934713408
      %v8981 = vunpack.c.0.s8 %v8980
      %v8982 = vlaneseq
      %v8983 = vshrl.u32 %v8982, 7
      %v8984 = vsub.s32 %v8981, %v8983
      %v8985 = vrot.slane %v8971, %v8984
      %v8986 = vcombine.high %v8978, 0.0
      %v8987 = vcombine.high %v8985, 0.0
      %v8988 = vcombine.low %v8684, %v8686
      %v8990 = vunpack.c.l.s4 1983009808
      %v8991 = vunpack.c.0.s8 %v8990
      %v8992 = vlaneseq
      %v8993 = vshrl.u32 %v8992, 7
      %v8994 = vsub.s32 %v8991, %v8993
      %v8995 = vrot.slane %v8988, %v8994
      %v8996 = vcombine.low %v8685, %v8687
      %v8998 = vunpack.c.l.s4 1983009808
      %v8999 = vunpack.c.0.s8 %v8998
      %v9000 = vlaneseq
      %v9001 = vshrl.u32 %v9000, 7
      %v9002 = vsub.s32 %v8999, %v9001
      %v9003 = vrot.slane %v8996, %v9002
      %v9004 = vcombine.low %v8995, %v9003
      %v9005 = vcombine.high %v8995, %v9003
      %v9007 = vunpack.c.l.s4 1934713408
      %v9008 = vunpack.c.0.s8 %v9007
      %v9009 = vlaneseq
      %v9010 = vshrl.u32 %v9009, 7
      %v9011 = vsub.s32 %v9008, %v9010
      %v9012 = vrot.slane %v9004, %v9011
      %v9014 = vunpack.c.l.s4 1934713408
      %v9015 = vunpack.c.0.s8 %v9014
      %v9016 = vlaneseq
      %v9017 = vshrl.u32 %v9016, 7
      %v9018 = vsub.s32 %v9015, %v9017
      %v9019 = vrot.slane %v9005, %v9018
      %v9020 = vcombine.high %v9012, 0.0
      %v9021 = vcombine.high %v9019, 0.0
      %v9022 = vcombine.low %v8688, %v8690
      %v9024 = vunpack.c.l.s4 1983009808
      %v9025 = vunpack.c.0.s8 %v9024
      %v9026 = vlaneseq
      %v9027 = vshrl.u32 %v9026, 7
      %v9028 = vsub.s32 %v9025, %v9027
      %v9029 = vrot.slane %v9022, %v9028
      %v9030 = vcombine.low %v8689, %v8691
      %v9032 = vunpack.c.l.s4 1983009808
      %v9033 = vunpack.c.0.s8 %v9032
      %v9034 = vlaneseq
      %v9035 = vshrl.u32 %v9034, 7
      %v9036 = vsub.s32 %v9033, %v9035
      %v9037 = vrot.slane %v9030, %v9036
      %v9038 = vcombine.low %v9029, %v9037
      %v9039 = vcombine.high %v9029, %v9037
      %v9041 = vunpack.c.l.s4 1934713408
      %v9042 = vunpack.c.0.s8 %v9041
      %v9043 = vlaneseq
      %v9044 = vshrl.u32 %v9043, 7
      %v9045 = vsub.s32 %v9042, %v9044
      %v9046 = vrot.slane %v9038, %v9045
      %v9048 = vunpack.c.l.s4 1934713408
      %v9049 = vunpack.c.0.s8 %v9048
      %v9050 = vlaneseq
      %v9051 = vshrl.u32 %v9050, 7
      %v9052 = vsub.s32 %v9049, %v9051
      %v9053 = vrot.slane %v9039, %v9052
      %v9054 = vcombine.high %v9046, 0.0
      %v9055 = vcombine.high %v9053, 0.0
      %v9056 = vcombine.low %v8692, %v8694
      %v9058 = vunpack.c.l.s4 1983009808
      %v9059 = vunpack.c.0.s8 %v9058
      %v9060 = vlaneseq
      %v9061 = vshrl.u32 %v9060, 7
      %v9062 = vsub.s32 %v9059, %v9061
      %v9063 = vrot.slane %v9056, %v9062
      %v9064 = vcombine.low %v8693, %v8695
      %v9066 = vunpack.c.l.s4 1983009808
      %v9067 = vunpack.c.0.s8 %v9066
      %v9068 = vlaneseq
      %v9069 = vshrl.u32 %v9068, 7
      %v9070 = vsub.s32 %v9067, %v9069
      %v9071 = vrot.slane %v9064, %v9070
      %v9072 = vcombine.low %v9063, %v9071
      %v9073 = vcombine.high %v9063, %v9071
      %v9075 = vunpack.c.l.s4 1934713408
      %v9076 = vunpack.c.0.s8 %v9075
      %v9077 = vlaneseq
      %v9078 = vshrl.u32 %v9077, 7
      %v9079 = vsub.s32 %v9076, %v9078
      %v9080 = vrot.slane %v9072, %v9079
      %v9082 = vunpack.c.l.s4 1934713408
      %v9083 = vunpack.c.0.s8 %v9082
      %v9084 = vlaneseq
      %v9085 = vshrl.u32 %v9084, 7
      %v9086 = vsub.s32 %v9083, %v9085
      %v9087 = vrot.slane %v9073, %v9086
      %v9088 = vcombine.high %v9080, 0.0
      %v9089 = vcombine.high %v9087, 0.0
      %v9090 = vcombine.low %v8696, %v8698
      %v9092 = vunpack.c.l.s4 1983009808
      %v9093 = vunpack.c.0.s8 %v9092
      %v9094 = vlaneseq
      %v9095 = vshrl.u32 %v9094, 7
      %v9096 = vsub.s32 %v9093, %v9095
      %v9097 = vrot.slane %v9090, %v9096
      %v9098 = vcombine.low %v8697, %v8699
      %v9100 = vunpack.c.l.s4 1983009808
      %v9101 = vunpack.c.0.s8 %v9100
      %v9102 = vlaneseq
      %v9103 = vshrl.u32 %v9102, 7
      %v9104 = vsub.s32 %v9101, %v9103
      %v9105 = vrot.slane %v9098, %v9104
      %v9106 = vcombine.low %v9097, %v9105
      %v9107 = vcombine.high %v9097, %v9105
      %v9109 = vunpack.c.l.s4 1934713408
      %v9110 = vunpack.c.0.s8 %v9109
      %v9111 = vlaneseq
      %v9112 = vshrl.u32 %v9111, 7
      %v9113 = vsub.s32 %v9110, %v9112
      %v9114 = vrot.slane %v9106, %v9113
      %v9116 = vunpack.c.l.s4 1934713408
      %v9117 = vunpack.c.0.s8 %v9116
      %v9118 = vlaneseq
      %v9119 = vshrl.u32 %v9118, 7
      %v9120 = vsub.s32 %v9117, %v9119
      %v9121 = vrot.slane %v9107, %v9120
      %v9122 = vcombine.high %v9114, 0.0
      %v9123 = vcombine.high %v9121, 0.0
      %v9124 = vcombine.low %v8700, %v8702
      %v9126 = vunpack.c.l.s4 1983009808
      %v9127 = vunpack.c.0.s8 %v9126
      %v9128 = vlaneseq
      %v9129 = vshrl.u32 %v9128, 7
      %v9130 = vsub.s32 %v9127, %v9129
      %v9131 = vrot.slane %v9124, %v9130
      %v9132 = vcombine.low %v8701, %v8703
      %v9134 = vunpack.c.l.s4 1983009808
      %v9135 = vunpack.c.0.s8 %v9134
      %v9136 = vlaneseq
      %v9137 = vshrl.u32 %v9136, 7
      %v9138 = vsub.s32 %v9135, %v9137
      %v9139 = vrot.slane %v9132, %v9138
      %v9140 = vcombine.low %v9131, %v9139
      %v9141 = vcombine.high %v9131, %v9139
      %v9143 = vunpack.c.l.s4 1934713408
      %v9144 = vunpack.c.0.s8 %v9143
      %v9145 = vlaneseq
      %v9146 = vshrl.u32 %v9145, 7
      %v9147 = vsub.s32 %v9144, %v9146
      %v9148 = vrot.slane %v9140, %v9147
      %v9150 = vunpack.c.l.s4 1934713408
      %v9151 = vunpack.c.0.s8 %v9150
      %v9152 = vlaneseq
      %v9153 = vshrl.u32 %v9152, 7
      %v9154 = vsub.s32 %v9151, %v9153
      %v9155 = vrot.slane %v9141, %v9154
      %v9156 = vcombine.high %v9148, 0.0
      %v9157 = vcombine.high %v9155, 0.0
      %v9158 = vcombine.low %v8704, %v8706
      %v9160 = vunpack.c.l.s4 1983009808
      %v9161 = vunpack.c.0.s8 %v9160
      %v9162 = vlaneseq
      %v9163 = vshrl.u32 %v9162, 7
      %v9164 = vsub.s32 %v9161, %v9163
      %v9165 = vrot.slane %v9158, %v9164
      %v9166 = vcombine.low %v8705, %v8707
      %v9168 = vunpack.c.l.s4 1983009808
      %v9169 = vunpack.c.0.s8 %v9168
      %v9170 = vlaneseq
      %v9171 = vshrl.u32 %v9170, 7
      %v9172 = vsub.s32 %v9169, %v9171
      %v9173 = vrot.slane %v9166, %v9172
      %v9174 = vcombine.low %v9165, %v9173
      %v9175 = vcombine.high %v9165, %v9173
      %v9177 = vunpack.c.l.s4 1934713408
      %v9178 = vunpack.c.0.s8 %v9177
      %v9179 = vlaneseq
      %v9180 = vshrl.u32 %v9179, 7
      %v9181 = vsub.s32 %v9178, %v9180
      %v9182 = vrot.slane %v9174, %v9181
      %v9184 = vunpack.c.l.s4 1934713408
      %v9185 = vunpack.c.0.s8 %v9184
      %v9186 = vlaneseq
      %v9187 = vshrl.u32 %v9186, 7
      %v9188 = vsub.s32 %v9185, %v9187
      %v9189 = vrot.slane %v9175, %v9188
      %v9190 = vcombine.high %v9182, 0.0
      %v9191 = vcombine.high %v9189, 0.0
      %v9192 = vcombine.low %v8708, %v8710
      %v9194 = vunpack.c.l.s4 1983009808
      %v9195 = vunpack.c.0.s8 %v9194
      %v9196 = vlaneseq
      %v9197 = vshrl.u32 %v9196, 7
      %v9198 = vsub.s32 %v9195, %v9197
      %v9199 = vrot.slane %v9192, %v9198
      %v9200 = vcombine.low %v8709, %v8711
      %v9202 = vunpack.c.l.s4 1983009808
      %v9203 = vunpack.c.0.s8 %v9202
      %v9204 = vlaneseq
      %v9205 = vshrl.u32 %v9204, 7
      %v9206 = vsub.s32 %v9203, %v9205
      %v9207 = vrot.slane %v9200, %v9206
      %v9208 = vcombine.low %v9199, %v9207
      %v9209 = vcombine.high %v9199, %v9207
      %v9211 = vunpack.c.l.s4 1934713408
      %v9212 = vunpack.c.0.s8 %v9211
      %v9213 = vlaneseq
      %v9214 = vshrl.u32 %v9213, 7
      %v9215 = vsub.s32 %v9212, %v9214
      %v9216 = vrot.slane %v9208, %v9215
      %v9218 = vunpack.c.l.s4 1934713408
      %v9219 = vunpack.c.0.s8 %v9218
      %v9220 = vlaneseq
      %v9221 = vshrl.u32 %v9220, 7
      %v9222 = vsub.s32 %v9219, %v9221
      %v9223 = vrot.slane %v9209, %v9222
      %v9224 = vcombine.high %v9216, 0.0
      %v9225 = vcombine.high %v9223, 0.0
      %v9226 = vcombine.low %v8712, %v8714
      %v9228 = vunpack.c.l.s4 1983009808
      %v9229 = vunpack.c.0.s8 %v9228
      %v9230 = vlaneseq
      %v9231 = vshrl.u32 %v9230, 7
      %v9232 = vsub.s32 %v9229, %v9231
      %v9233 = vrot.slane %v9226, %v9232
      %v9234 = vcombine.low %v8713, %v8715
      %v9236 = vunpack.c.l.s4 1983009808
      %v9237 = vunpack.c.0.s8 %v9236
      %v9238 = vlaneseq
      %v9239 = vshrl.u32 %v9238, 7
      %v9240 = vsub.s32 %v9237, %v9239
      %v9241 = vrot.slane %v9234, %v9240
      %v9242 = vcombine.low %v9233, %v9241
      %v9243 = vcombine.high %v9233, %v9241
      %v9245 = vunpack.c.l.s4 1934713408
      %v9246 = vunpack.c.0.s8 %v9245
      %v9247 = vlaneseq
      %v9248 = vshrl.u32 %v9247, 7
      %v9249 = vsub.s32 %v9246, %v9248
      %v9250 = vrot.slane %v9242, %v9249
      %v9252 = vunpack.c.l.s4 1934713408
      %v9253 = vunpack.c.0.s8 %v9252
      %v9254 = vlaneseq
      %v9255 = vshrl.u32 %v9254, 7
      %v9256 = vsub.s32 %v9253, %v9255
      %v9257 = vrot.slane %v9243, %v9256
      %v9258 = vcombine.high %v9250, 0.0
      %v9259 = vcombine.high %v9257, 0.0
      %v9276 = vcombine.low %v8740, %v8774
      %v9277 = vcombine.low %v8808, %v8842
      %v9278 = vcombine.low %v8876, %v8910
      %v9279 = vcombine.low %v8944, %v8978
      %v9280 = vcombine.low %v9012, %v9046
      %v9281 = vcombine.low %v9080, %v9114
      %v9282 = vcombine.low %v9148, %v9182
      %v9283 = vcombine.low %v9216, %v9250
      %v9308 = vcombine.low %v8748, %v8782
      %v9309 = vcombine.low %v8816, %v8850
      %v9310 = vcombine.low %v8884, %v8918
      %v9311 = vcombine.low %v8952, %v8986
      %v9312 = vcombine.low %v9020, %v9054
      %v9313 = vcombine.low %v9088, %v9122
      %v9314 = vcombine.low %v9156, %v9190
      %v9315 = vcombine.low %v9224, %v9258
      %v9340 = vcombine.low %v8747, %v8781
      %v9341 = vcombine.low %v8815, %v8849
      %v9342 = vcombine.low %v8883, %v8917
      %v9343 = vcombine.low %v8951, %v8985
      %v9344 = vcombine.low %v9019, %v9053
      %v9345 = vcombine.low %v9087, %v9121
      %v9346 = vcombine.low %v9155, %v9189
      %v9347 = vcombine.low %v9223, %v9257
      %v9372 = vcombine.low %v8749, %v8783
      %v9373 = vcombine.low %v8817, %v8851
      %v9374 = vcombine.low %v8885, %v8919
      %v9375 = vcombine.low %v8953, %v8987
      %v9376 = vcombine.low %v9021, %v9055
      %v9377 = vcombine.low %v9089, %v9123
      %v9378 = vcombine.low %v9157, %v9191
      %v9379 = vcombine.low %v9225, %v9259
      %v9388 = vpack.c.bf16 %v9277, %v9276
      %v9389 = vpack.c.bf16 %v9309, %v9308
      %v9390 = vpack.c.bf16 %v9341, %v9340
      %v9391 = vpack.c.bf16 %v9373, %v9372
      %v9392 = vpack.c.bf16 %v9279, %v9278
      %v9393 = vpack.c.bf16 %v9311, %v9310
      %v9394 = vpack.c.bf16 %v9343, %v9342
      %v9395 = vpack.c.bf16 %v9375, %v9374
      %v9396 = vpack.c.bf16 %v9281, %v9280
      %v9397 = vpack.c.bf16 %v9313, %v9312
      %v9398 = vpack.c.bf16 %v9345, %v9344
      %v9399 = vpack.c.bf16 %v9377, %v9376
      %v9400 = vpack.c.bf16 %v9283, %v9282
      %v9401 = vpack.c.bf16 %v9315, %v9314
      %v9402 = vpack.c.bf16 %v9347, %v9346
      %v9403 = vpack.c.bf16 %v9379, %v9378
      %v9404 = vld [vmem:[%s5] sm:$0xf]
      %v9405 = vld [vmem:[%s5 + $0x4] sm:$0xf]
      %v9406 = vld [vmem:[%s5 + $0x8] sm:$0xf]
      %v9407 = vld [vmem:[%s5 + $0xc] sm:$0xf]
      %v9408 = vld [vmem:[%s5 + $0x10] sm:$0xf]
      %v9409 = vld [vmem:[%s5 + $0x14] sm:$0xf]
      %v9410 = vld [vmem:[%s5 + $0x18] sm:$0xf]
      %v9411 = vld [vmem:[%s5 + $0x1c] sm:$0xf]
      %v9412 = vld [vmem:[%s5 + $0x20] sm:$0xf]
      %v9413 = vld [vmem:[%s5 + $0x24] sm:$0xf]
      %v9414 = vld [vmem:[%s5 + $0x28] sm:$0xf]
      %v9415 = vld [vmem:[%s5 + $0x2c] sm:$0xf]
      %v9416 = vld [vmem:[%s5 + $0x30] sm:$0xf]
      %v9417 = vld [vmem:[%s5 + $0x34] sm:$0xf]
      %v9418 = vld [vmem:[%s5 + $0x38] sm:$0xf]
      %v9419 = vld [vmem:[%s5 + $0x3c] sm:$0xf]
      %v9420 = vld [vmem:[%s5 + $0x40] sm:$0xf]
      %v9421 = vld [vmem:[%s5 + $0x44] sm:$0xf]
      %v9422 = vld [vmem:[%s5 + $0x48] sm:$0xf]
      %v9423 = vld [vmem:[%s5 + $0x4c] sm:$0xf]
      %v9424 = vld [vmem:[%s5 + $0x50] sm:$0xf]
      %v9425 = vld [vmem:[%s5 + $0x54] sm:$0xf]
      %v9426 = vld [vmem:[%s5 + $0x58] sm:$0xf]
      %v9427 = vld [vmem:[%s5 + $0x5c] sm:$0xf]
      %v9428 = vld [vmem:[%s5 + $0x60] sm:$0xf]
      %v9429 = vld [vmem:[%s5 + $0x64] sm:$0xf]
      %v9430 = vld [vmem:[%s5 + $0x68] sm:$0xf]
      %v9431 = vld [vmem:[%s5 + $0x6c] sm:$0xf]
      %v9432 = vld [vmem:[%s5 + $0x70] sm:$0xf]
      %v9433 = vld [vmem:[%s5 + $0x74] sm:$0xf]
      %v9434 = vld [vmem:[%s5 + $0x78] sm:$0xf]
      %v9435 = vld [vmem:[%s5 + $0x7c] sm:$0xf]
      %v9436 = vld [vmem:[%s5 + $0x80] sm:$0xf]
      %v9437 = vld [vmem:[%s5 + $0x84] sm:$0xf]
      %v9438 = vld [vmem:[%s5 + $0x88] sm:$0xf]
      %v9439 = vld [vmem:[%s5 + $0x8c] sm:$0xf]
      %v9440 = vld [vmem:[%s5 + $0x90] sm:$0xf]
      %v9441 = vld [vmem:[%s5 + $0x94] sm:$0xf]
      %v9442 = vld [vmem:[%s5 + $0x98] sm:$0xf]
      %v9443 = vld [vmem:[%s5 + $0x9c] sm:$0xf]
      %v9444 = vld [vmem:[%s5 + $0xa0] sm:$0xf]
      %v9445 = vld [vmem:[%s5 + $0xa4] sm:$0xf]
      %v9446 = vld [vmem:[%s5 + $0xa8] sm:$0xf]
      %v9447 = vld [vmem:[%s5 + $0xac] sm:$0xf]
      %v9448 = vld [vmem:[%s5 + $0xb0] sm:$0xf]
      %v9449 = vld [vmem:[%s5 + $0xb4] sm:$0xf]
      %v9450 = vld [vmem:[%s5 + $0xb8] sm:$0xf]
      %v9451 = vld [vmem:[%s5 + $0xbc] sm:$0xf]
      %v9452 = vld [vmem:[%s5 + $0xc0] sm:$0xf]
      %v9453 = vld [vmem:[%s5 + $0xc4] sm:$0xf]
      %v9454 = vld [vmem:[%s5 + $0xc8] sm:$0xf]
      %v9455 = vld [vmem:[%s5 + $0xcc] sm:$0xf]
      %v9456 = vld [vmem:[%s5 + $0xd0] sm:$0xf]
      %v9457 = vld [vmem:[%s5 + $0xd4] sm:$0xf]
      %v9458 = vld [vmem:[%s5 + $0xd8] sm:$0xf]
      %v9459 = vld [vmem:[%s5 + $0xdc] sm:$0xf]
      %v9460 = vld [vmem:[%s5 + $0xe0] sm:$0xf]
      %v9461 = vld [vmem:[%s5 + $0xe4] sm:$0xf]
      %v9462 = vld [vmem:[%s5 + $0xe8] sm:$0xf]
      %v9463 = vld [vmem:[%s5 + $0xec] sm:$0xf]
      %v9464 = vld [vmem:[%s5 + $0xf0] sm:$0xf]
      %v9465 = vld [vmem:[%s5 + $0xf4] sm:$0xf]
      %v9466 = vld [vmem:[%s5 + $0xf8] sm:$0xf]
      %v9467 = vld [vmem:[%s5 + $0xfc] sm:$0xf]
      %v9468 = vld [vmem:[%s6] sm:$0x1]
      %v9470 = vlaneseq
      %v9471 = vshrl.u32 %v9470, 7
      %v9472 = vsub.s32 0, %v9471
      %v9473 = vrot.slane %v9468, %v9472
      %v9539 = vunpack.c.l.b16 %v9404
      %v9540 = vunpack.c.l.b16 %v9405
      %v9541 = vunpack.c.l.b16 %v9406
      %v9542 = vunpack.c.l.b16 %v9407
      %v9543 = vunpack.c.l.b16 %v9408
      %v9544 = vunpack.c.l.b16 %v9409
      %v9545 = vunpack.c.l.b16 %v9410
      %v9546 = vunpack.c.l.b16 %v9411
      %v9547 = vunpack.c.l.b16 %v9412
      %v9548 = vunpack.c.l.b16 %v9413
      %v9549 = vunpack.c.l.b16 %v9414
      %v9550 = vunpack.c.l.b16 %v9415
      %v9551 = vunpack.c.l.b16 %v9416
      %v9552 = vunpack.c.l.b16 %v9417
      %v9553 = vunpack.c.l.b16 %v9418
      %v9554 = vunpack.c.l.b16 %v9419
      %v9555 = vunpack.c.l.b16 %v9420
      %v9556 = vunpack.c.l.b16 %v9421
      %v9557 = vunpack.c.l.b16 %v9422
      %v9558 = vunpack.c.l.b16 %v9423
      %v9559 = vunpack.c.l.b16 %v9424
      %v9560 = vunpack.c.l.b16 %v9425
      %v9561 = vunpack.c.l.b16 %v9426
      %v9562 = vunpack.c.l.b16 %v9427
      %v9563 = vunpack.c.l.b16 %v9428
      %v9564 = vunpack.c.l.b16 %v9429
      %v9565 = vunpack.c.l.b16 %v9430
      %v9566 = vunpack.c.l.b16 %v9431
      %v9567 = vunpack.c.l.b16 %v9432
      %v9568 = vunpack.c.l.b16 %v9433
      %v9569 = vunpack.c.l.b16 %v9434
      %v9570 = vunpack.c.l.b16 %v9435
      %v9571 = vunpack.c.l.b16 %v9436
      %v9572 = vunpack.c.l.b16 %v9437
      %v9573 = vunpack.c.l.b16 %v9438
      %v9574 = vunpack.c.l.b16 %v9439
      %v9575 = vunpack.c.l.b16 %v9440
      %v9576 = vunpack.c.l.b16 %v9441
      %v9577 = vunpack.c.l.b16 %v9442
      %v9578 = vunpack.c.l.b16 %v9443
      %v9579 = vunpack.c.l.b16 %v9444
      %v9580 = vunpack.c.l.b16 %v9445
      %v9581 = vunpack.c.l.b16 %v9446
      %v9582 = vunpack.c.l.b16 %v9447
      %v9583 = vunpack.c.l.b16 %v9448
      %v9584 = vunpack.c.l.b16 %v9449
      %v9585 = vunpack.c.l.b16 %v9450
      %v9586 = vunpack.c.l.b16 %v9451
      %v9587 = vunpack.c.l.b16 %v9452
      %v9588 = vunpack.c.l.b16 %v9453
      %v9589 = vunpack.c.l.b16 %v9454
      %v9590 = vunpack.c.l.b16 %v9455
      %v9591 = vunpack.c.l.b16 %v9456
      %v9592 = vunpack.c.l.b16 %v9457
      %v9593 = vunpack.c.l.b16 %v9458
      %v9594 = vunpack.c.l.b16 %v9459
      %v9595 = vunpack.c.l.b16 %v9460
      %v9596 = vunpack.c.l.b16 %v9461
      %v9597 = vunpack.c.l.b16 %v9462
      %v9598 = vunpack.c.l.b16 %v9463
      %v9599 = vunpack.c.l.b16 %v9464
      %v9600 = vunpack.c.l.b16 %v9465
      %v9601 = vunpack.c.l.b16 %v9466
      %v9602 = vunpack.c.l.b16 %v9467
      %v9603 = vpack.c.b16 %v9540, %v9539
      %v9604 = vpack.c.b16 %v9542, %v9541
      %v9605 = vpack.c.b16 %v9544, %v9543
      %v9606 = vpack.c.b16 %v9546, %v9545
      %v9607 = vpack.c.b16 %v9548, %v9547
      %v9608 = vpack.c.b16 %v9550, %v9549
      %v9609 = vpack.c.b16 %v9552, %v9551
      %v9610 = vpack.c.b16 %v9554, %v9553
      %v9611 = vpack.c.b16 %v9556, %v9555
      %v9612 = vpack.c.b16 %v9558, %v9557
      %v9613 = vpack.c.b16 %v9560, %v9559
      %v9614 = vpack.c.b16 %v9562, %v9561
      %v9615 = vpack.c.b16 %v9564, %v9563
      %v9616 = vpack.c.b16 %v9566, %v9565
      %v9617 = vpack.c.b16 %v9568, %v9567
      %v9618 = vpack.c.b16 %v9570, %v9569
      %v9619 = vpack.c.b16 %v9572, %v9571
      %v9620 = vpack.c.b16 %v9574, %v9573
      %v9621 = vpack.c.b16 %v9576, %v9575
      %v9622 = vpack.c.b16 %v9578, %v9577
      %v9623 = vpack.c.b16 %v9580, %v9579
      %v9624 = vpack.c.b16 %v9582, %v9581
      %v9625 = vpack.c.b16 %v9584, %v9583
      %v9626 = vpack.c.b16 %v9586, %v9585
      %v9627 = vpack.c.b16 %v9588, %v9587
      %v9628 = vpack.c.b16 %v9590, %v9589
      %v9629 = vpack.c.b16 %v9592, %v9591
      %v9630 = vpack.c.b16 %v9594, %v9593
      %v9631 = vpack.c.b16 %v9596, %v9595
      %v9632 = vpack.c.b16 %v9598, %v9597
      %v9633 = vpack.c.b16 %v9600, %v9599
      %v9634 = vpack.c.b16 %v9602, %v9601
      %9667 = vmatprep.subr.bf16.mxu0 0
      %9668 = vmatpush1.bf16.msra.mxu0 %v9610
      %9669 = vmatprep.subr.bf16.mxu0 0
      %9670 = vmatpush1.bf16.msra.mxu0 %v9609
      %9671 = vmatprep.subr.bf16.mxu0 0
      %9672 = vmatpush1.bf16.msra.mxu0 %v9608
      %9673 = vmatprep.subr.bf16.mxu0 0
      %9674 = vmatpush1.bf16.msra.mxu0 %v9607
      %9675 = vmatprep.subr.bf16.mxu0 0
      %9676 = vmatpush1.bf16.msra.mxu0 %v9606
      %9677 = vmatprep.subr.bf16.mxu0 0
      %9678 = vmatpush1.bf16.msra.mxu0 %v9605
      %9679 = vmatprep.subr.bf16.mxu0 0
      %9680 = vmatpush1.bf16.msra.mxu0 %v9604
      %9681 = vmatprep.subr.bf16.mxu0 0
      %9682 = vmatpush1.bf16.msra.mxu0 %v9603
      %9683 = vmatprep.subr.bf16.mxu0 0
      %9684 = vmatpush2.bf16.msra.mxu0 %v9618
      %9685 = vmatprep.subr.bf16.mxu0 0
      %9686 = vmatpush2.bf16.msra.mxu0 %v9617
      %9687 = vmatprep.subr.bf16.mxu0 0
      %9688 = vmatpush2.bf16.msra.mxu0 %v9616
      %9689 = vmatprep.subr.bf16.mxu0 0
      %9690 = vmatpush2.bf16.msra.mxu0 %v9615
      %9691 = vmatprep.subr.bf16.mxu0 0
      %9692 = vmatpush2.bf16.msra.mxu0 %v9614
      %9693 = vmatprep.subr.bf16.mxu0 0
      %9694 = vmatpush2.bf16.msra.mxu0 %v9613
      %9695 = vmatprep.subr.bf16.mxu0 0
      %9696 = vmatpush2.bf16.msra.mxu0 %v9612
      %9697 = vmatprep.subr.bf16.mxu0 0
      %9698 = vmatpush2.bf16.msra.mxu0 %v9611
      %9699 = vmatprep.mubr.bf16.mxu0 %v9389
      %9700 = vmatmul.mubr.bf16.gmra.mxu0 %v9388
      %v9701 = vpop.f32.mrf.mxu0
      %v9702 = vadd.f32 %v9473, %v9701
      %v9703 = vpop.f32.mrf.mxu0
      %v9704 = vpop.f32.mrf.mxu0
      %v9705 = vadd.f32 %v9473, %v9704
      %v9706 = vpop.f32.mrf.mxu0
      %9707 = vmatprep.mubr.bf16.mxu0 %v9393
      %9708 = vmatmul.mubr.bf16.gmra.mxu0 %v9392
      %v9709 = vpop.f32.mrf.mxu0
      %v9710 = vadd.f32 %v9473, %v9709
      %v9711 = vpop.f32.mrf.mxu0
      %v9712 = vpop.f32.mrf.mxu0
      %v9713 = vadd.f32 %v9473, %v9712
      %v9714 = vpop.f32.mrf.mxu0
      %9715 = vmatprep.mubr.bf16.mxu0 %v9397
      %9716 = vmatmul.mubr.bf16.gmra.mxu0 %v9396
      %v9717 = vpop.f32.mrf.mxu0
      %v9718 = vadd.f32 %v9473, %v9717
      %v9719 = vpop.f32.mrf.mxu0
      %v9720 = vpop.f32.mrf.mxu0
      %v9721 = vadd.f32 %v9473, %v9720
      %v9722 = vpop.f32.mrf.mxu0
      %9723 = vmatprep.mubr.bf16.mxu0 %v9401
      %9724 = vmatmul.mubr.bf16.gmra.mxu0 %v9400
      %v9725 = vpop.f32.mrf.mxu0
      %v9726 = vadd.f32 %v9473, %v9725
      %v9727 = vpop.f32.mrf.mxu0
      %v9728 = vpop.f32.mrf.mxu0
      %v9729 = vadd.f32 %v9473, %v9728
      %v9730 = vpop.f32.mrf.mxu0
      %9731 = vdwg.mxu0
      %9732 = vmatprep.subr.bf16.mxu0 0
      %9733 = vmatpush1.bf16.msra.mxu0 %v9626
      %9734 = vmatprep.subr.bf16.mxu0 0
      %9735 = vmatpush1.bf16.msra.mxu0 %v9625
      %9736 = vmatprep.subr.bf16.mxu0 0
      %9737 = vmatpush1.bf16.msra.mxu0 %v9624
      %9738 = vmatprep.subr.bf16.mxu0 0
      %9739 = vmatpush1.bf16.msra.mxu0 %v9623
      %9740 = vmatprep.subr.bf16.mxu0 0
      %9741 = vmatpush1.bf16.msra.mxu0 %v9622
      %9742 = vmatprep.subr.bf16.mxu0 0
      %9743 = vmatpush1.bf16.msra.mxu0 %v9621
      %9744 = vmatprep.subr.bf16.mxu0 0
      %9745 = vmatpush1.bf16.msra.mxu0 %v9620
      %9746 = vmatprep.subr.bf16.mxu0 0
      %9747 = vmatpush1.bf16.msra.mxu0 %v9619
      %9748 = vmatprep.subr.bf16.mxu0 0
      %9749 = vmatpush2.bf16.msra.mxu0 %v9634
      %9750 = vmatprep.subr.bf16.mxu0 0
      %9751 = vmatpush2.bf16.msra.mxu0 %v9633
      %9752 = vmatprep.subr.bf16.mxu0 0
      %9753 = vmatpush2.bf16.msra.mxu0 %v9632
      %9754 = vmatprep.subr.bf16.mxu0 0
      %9755 = vmatpush2.bf16.msra.mxu0 %v9631
      %9756 = vmatprep.subr.bf16.mxu0 0
      %9757 = vmatpush2.bf16.msra.mxu0 %v9630
      %9758 = vmatprep.subr.bf16.mxu0 0
      %9759 = vmatpush2.bf16.msra.mxu0 %v9629
      %9760 = vmatprep.subr.bf16.mxu0 0
      %9761 = vmatpush2.bf16.msra.mxu0 %v9628
      %9762 = vmatprep.subr.bf16.mxu0 0
      %9763 = vmatpush2.bf16.msra.mxu0 %v9627
      %9764 = vmatprep.mubr.bf16.mxu0 %v9391
      %9765 = vmatmul.mubr.bf16.gmra.mxu0 %v9390
      %v9766 = vpop.f32.mrf.mxu0
      %v9767 = vadd.f32 %v9702, %v9766
      %v9768 = vpop.f32.mrf.mxu0
      %v9769 = vpop.f32.mrf.mxu0
      %v9770 = vadd.f32 %v9705, %v9769
      %v9771 = vpop.f32.mrf.mxu0
      %9772 = vmatprep.mubr.bf16.mxu0 %v9395
      %9773 = vmatmul.mubr.bf16.gmra.mxu0 %v9394
      %v9774 = vpop.f32.mrf.mxu0
      %v9775 = vadd.f32 %v9710, %v9774
      %v9776 = vpop.f32.mrf.mxu0
      %v9777 = vpop.f32.mrf.mxu0
      %v9778 = vadd.f32 %v9713, %v9777
      %v9779 = vpop.f32.mrf.mxu0
      %9780 = vmatprep.mubr.bf16.mxu0 %v9399
      %9781 = vmatmul.mubr.bf16.gmra.mxu0 %v9398
      %v9782 = vpop.f32.mrf.mxu0
      %v9783 = vadd.f32 %v9718, %v9782
      %v9784 = vpop.f32.mrf.mxu0
      %v9785 = vpop.f32.mrf.mxu0
      %v9786 = vadd.f32 %v9721, %v9785
      %v9787 = vpop.f32.mrf.mxu0
      %9788 = vmatprep.mubr.bf16.mxu0 %v9403
      %9789 = vmatmul.mubr.bf16.gmra.mxu0 %v9402
      %v9790 = vpop.f32.mrf.mxu0
      %v9791 = vadd.f32 %v9726, %v9790
      %v9792 = vpop.f32.mrf.mxu0
      %v9793 = vpop.f32.mrf.mxu0
      %v9794 = vadd.f32 %v9729, %v9793
      %v9795 = vpop.f32.mrf.mxu0
      %9796 = vdwg.mxu0
      %9797 = vmax.xlane.f32.xlu0 %v9767
      %v9798 = vpop.xlane.xlu0 %9797
      %9799 = vmax.xlane.f32.xlu0 %v9770
      %v9800 = vpop.xlane.xlu0 %9799
      %9801 = vmax.xlane.f32.xlu0 %v9775
      %v9802 = vpop.xlane.xlu0 %9801
      %9803 = vmax.xlane.f32.xlu0 %v9778
      %v9804 = vpop.xlane.xlu0 %9803
      %9805 = vmax.xlane.f32.xlu0 %v9783
      %v9806 = vpop.xlane.xlu0 %9805
      %9807 = vmax.xlane.f32.xlu0 %v9786
      %v9808 = vpop.xlane.xlu0 %9807
      %9809 = vmax.xlane.f32.xlu0 %v9791
      %v9810 = vpop.xlane.xlu0 %9809
      %9811 = vmax.xlane.f32.xlu0 %v9794
      %v9812 = vpop.xlane.xlu0 %9811
      %v9813 = vsub.f32 %v9767, %v9798
      %v9814 = vsub.f32 %v9770, %v9800
      %v9815 = vsub.f32 %v9775, %v9802
      %v9816 = vsub.f32 %v9778, %v9804
      %v9817 = vsub.f32 %v9783, %v9806
      %v9818 = vsub.f32 %v9786, %v9808
      %v9819 = vsub.f32 %v9791, %v9810
      %v9820 = vsub.f32 %v9794, %v9812
      %v9821 = vmul.f32 %v9813, 1.442695
      %v9822 = vpow.pop %v9821
      %v9823 = vmul.f32 %v9814, 1.442695
      %v9824 = vpow.pop %v9823
      %v9825 = vmul.f32 %v9815, 1.442695
      %v9826 = vpow.pop %v9825
      %v9827 = vmul.f32 %v9816, 1.442695
      %v9828 = vpow.pop %v9827
      %v9829 = vmul.f32 %v9817, 1.442695
      %v9830 = vpow.pop %v9829
      %v9831 = vmul.f32 %v9818, 1.442695
      %v9832 = vpow.pop %v9831
      %v9833 = vmul.f32 %v9819, 1.442695
      %v9834 = vpow.pop %v9833
      %v9835 = vmul.f32 %v9820, 1.442695
      %v9836 = vpow.pop %v9835
      %9837 = vadd.xlane.f32.xlu0 %v9822
      %v9838 = vpop.xlane.xlu0 %9837
      %9839 = vadd.xlane.f32.xlu0 %v9824
      %v9840 = vpop.xlane.xlu0 %9839
      %9841 = vadd.xlane.f32.xlu0 %v9826
      %v9842 = vpop.xlane.xlu0 %9841
      %9843 = vadd.xlane.f32.xlu0 %v9828
      %v9844 = vpop.xlane.xlu0 %9843
      %9845 = vadd.xlane.f32.xlu0 %v9830
      %v9846 = vpop.xlane.xlu0 %9845
      %9847 = vadd.xlane.f32.xlu0 %v9832
      %v9848 = vpop.xlane.xlu0 %9847
      %9849 = vadd.xlane.f32.xlu0 %v9834
      %v9850 = vpop.xlane.xlu0 %9849
      %9851 = vadd.xlane.f32.xlu0 %v9836
      %v9852 = vpop.xlane.xlu0 %9851
      %v9853 = vlog2.pop %v9838
      %v9854 = vmul.f32 %v9853, 0.6931472
      %v9855 = vlog2.pop %v9840
      %v9856 = vmul.f32 %v9855, 0.6931472
      %v9857 = vlog2.pop %v9842
      %v9858 = vmul.f32 %v9857, 0.6931472
      %v9859 = vlog2.pop %v9844
      %v9860 = vmul.f32 %v9859, 0.6931472
      %v9861 = vlog2.pop %v9846
      %v9862 = vmul.f32 %v9861, 0.6931472
      %v9863 = vlog2.pop %v9848
      %v9864 = vmul.f32 %v9863, 0.6931472
      %v9865 = vlog2.pop %v9850
      %v9866 = vmul.f32 %v9865, 0.6931472
      %v9867 = vlog2.pop %v9852
      %v9868 = vmul.f32 %v9867, 0.6931472
      %v9869 = vsub.f32 %v9813, %v9854
      %v9870 = vsub.f32 %v9814, %v9856
      %v9871 = vsub.f32 %v9815, %v9858
      %v9872 = vsub.f32 %v9816, %v9860
      %v9873 = vsub.f32 %v9817, %v9862
      %v9874 = vsub.f32 %v9818, %v9864
      %v9875 = vsub.f32 %v9819, %v9866
      %v9876 = vsub.f32 %v9820, %v9868
      %9877 = vst [vmem:[%s283] sm:$0xff] %v9869
      %9878 = vst [vmem:[%s283 + $0x8] sm:$0xff] %v9870
      %9879 = vst [vmem:[%s283 + $0x10] sm:$0xff] %v9871
      %9880 = vst [vmem:[%s283 + $0x18] sm:$0xff] %v9872
      %9881 = vst [vmem:[%s283 + $0x20] sm:$0xff] %v9873
      %9882 = vst [vmem:[%s283 + $0x28] sm:$0xff] %v9874
      %9883 = vst [vmem:[%s283 + $0x30] sm:$0xff] %v9875
      %9884 = vst [vmem:[%s283 + $0x38] sm:$0xff] %v9876
      %s9885 = smul.u32 8, %s18
      %p9886 = scmp.lt.s32.totalorder %s9885, 15
      %s9887 = scalar_select %p9886, %s9885, 15
      %s9888 = smul.addr %s9887, 8
      %s9889 = scalar_lea.vmem %s7, %s9888
      // Predicated region
      $region49: #{net_forward.1} parent=47 // pred_check
        %p9890 = pneg %p188
      $region50: #{net_forward.1} parent=47 // pred_check_branch
        %9892 = sbr.rel (%p9890) target = $region52
      $region51: #{net_forward.1} parent=47 // pred_region
        %s9893 = smul.u32 8, %s18
      $region52: #{net_forward.1} parent=47 // pred_fallthru
        _
    $region48: #{net_forward.1} parent=5 // pred_fallthru
      _
    %p9894 = scmp.le.s32.totalorder 2, %s13
    // Predicated region
    $region53: #{net_forward.1} parent=5 // pred_check
      %p9895 = pneg %p9894
    $region54: #{net_forward.1} parent=5 // pred_check_branch
      %9897 = sbr.rel (%p9895) target = $region56
    $region55: #{net_forward.1} parent=5 // pred_region
      %s9898 = ssub.s32 %s13, 2
      // Predicated region
      $region57: #{net_forward.1} parent=55 // pred_check
        %p9899 = pneg %p194
      $region58: #{net_forward.1} parent=55 // pred_check_branch
        %9901 = sbr.rel (%p9899) target = $region60
      $region59: #{net_forward.1} parent=55 // pred_region
        %s9902 = smul.u32 8, %s19
        %p9903 = scmp.lt.s32.totalorder %s9902, 15
        %s9904 = scalar_select %p9903, %s9902, 15
        %s9905 = smul.addr %s9904, 8
        %s9906 = scalar_lea.vmem %s7, %s9905
      $region60: #{net_forward.1} parent=55 // pred_fallthru
        _
    $region56: #{net_forward.1} parent=5 // pred_fallthru
      _
  $region6: #{net_forward.1} parent=0 // loop_footer
    %s17 = sadd.s32 1, %s13
  $region7: #{net_forward.1} parent=0 // loop_footer_branch
    %12 = sbr.rel target = $region3
  $region8: #{net_forward.1} parent=0 // loop_exit
    _

</llo_original>
